<compile_context>
chip_gen: v6e
topology: v6e:2x2x1
jax: 0.10.0
libtpu: 0.0.40
codegen_flags: <defaults>
</compile_context>

<pallas_src>
import functools

import jax
import jax.numpy as jnp
from jax.experimental import pallas as pl
from jax.experimental.pallas import tpu as pltpu

VMEM_SPEC = pl.BlockSpec(memory_space=pltpu.MemorySpace.VMEM)
LANES = 128


def _round_up(x, m):
    return ((x + m - 1) // m) * m


# ----------------------------------------------------------------------------
# Fused encoder kernel: fc_l1 + ReLU + 4x GATv2Conv (heads averaged) + concat
# ----------------------------------------------------------------------------
def _encoder_fused_kernel(x_ref, cat_ref, wx_ref, wc_ref, bfc_ref,
                          wl_ref, bl_ref, wr_ref, br_ref, att_ref,
                          adj_ref, bout_ref, out_ref,
                          *, heads, conv_channels, out_pad):
    # fc_l1 + ReLU (dropout p=0 -> identity). The 'input' cat-covariates concat
    # is folded into a split weight: concat(x, cat) @ W == x @ Wx + cat @ Wc.
    hidden = jnp.maximum(
        jnp.dot(x_ref[...], wx_ref[...], preferred_element_type=jnp.float32)
        + jnp.dot(cat_ref[...], wc_ref[...], preferred_element_type=jnp.float32)
        + bfc_ref[...],
        0.0,
    )
    n = hidden.shape[0]

    # GATv2 source / target projections for ALL 4 convs & heads at once
    # (column-stacked weights -> 2 wide MXU matmuls).
    gl = jnp.dot(hidden, wl_ref[...], preferred_element_type=jnp.float32) + bl_ref[...]
    gr = jnp.dot(hidden, wr_ref[...], preferred_element_type=jnp.float32) + br_ref[...]

    att = att_ref[...]                    # [4*heads, C_max] (one row per (conv, head))
    adj_mask = adj_ref[...] > 0           # [N_tgt, N_src], loaded into VMEM once
    inv_h = 1.0 / heads                   # same head count for every conv

    outs = []
    col = 0      # running column offset into gl / gr
    grp = 0      # running (conv, head) group index into att rows
    for c in conv_channels:               # 4 convs, static unroll
        alphas = []
        gl_heads = []
        for _ in range(heads):            # static unroll
            gl_h = gl[:, col:col + c]     # [N, C]  source projection
            gr_h = gr[:, col:col + c]     # [N, C]  target projection
            att_h = att[grp:grp + 1, :c]  # [1, C]
            # e[i, j] = att_h . leaky_relu(gr_h[i] + gl_h[j], slope=0.2)
            s = gr_h[:, None, :] + gl_h[None, :, :]        # [N_tgt, N_src, C]
            s = jnp.maximum(s, 0.2 * s)                    # leaky_relu(0.2)
            e = jnp.sum(s * att_h, axis=-1)                # [N, N] logits
            # masked softmax over incoming edges (self-loops => >=1 valid lane)
            e = jnp.where(adj_mask, e, -1e30)
            e = e - jnp.max(e, axis=-1, keepdims=True)
            p = jnp.exp(e)                                 # masked lanes underflow to 0
            alpha = p * pl.reciprocal(jnp.sum(p, axis=-1, keepdims=True), approx=True)
            alphas.append(alpha)
            gl_heads.append(gl_h)
            col += c
            grp += 1
        # one aggregation matmul per conv (sum over heads; /heads applied below):
        #   [N, H*N] @ [H*N, C]  ==  sum_h alpha_h @ gl_h
        alpha_wide = jnp.concatenate(alphas, axis=1)
        gl_stack = jnp.concatenate(gl_heads, axis=0)
        outs.append(jnp.dot(alpha_wide, gl_stack, preferred_element_type=jnp.float32))

    # lane-dense output slab: [mu | mu_addon | logstd | logstd_addon | 0-pad];
    # one head-mean scale + one bias add + one unmasked 128-wide store
    # (bias row is pre-padded with zeros, zero pad columns are unaffected).
    pad = out_pad - sum(conv_channels)
    outs.append(jnp.zeros((n, pad), jnp.float32))
    out_ref[...] = jnp.concatenate(outs, axis=1) * inv_h + bout_ref[...]


# ----------------------------------------------------------------------------
# Parameter construction (deterministic, synthetic)
# ----------------------------------------------------------------------------
def _glorot(key, shape):
    fan_in, fan_out = shape[0], shape[1]
    lim = jnp.sqrt(6.0 / (fan_in + fan_out))
    return jax.random.uniform(key, shape, jnp.float32, -lim, lim)


def make_gat_params(key, in_ch, out_ch, heads):
    ks = jax.random.split(key, 6)
    return {
        "wl": _glorot(ks[0], (in_ch, heads * out_ch)),
        "bl": 0.05 * jax.random.normal(ks[1], (heads * out_ch,), jnp.float32),
        "wr": _glorot(ks[2], (in_ch, heads * out_ch)),
        "br": 0.05 * jax.random.normal(ks[3], (heads * out_ch,), jnp.float32),
        "att": _glorot(ks[4], (heads, out_ch)),
        "bias": 0.05 * jax.random.normal(ks[5], (out_ch,), jnp.float32),
    }


def make_encoder_params(key, n_input, n_cat, n_hidden, n_latent, n_addon, heads):
    n_in_total = n_input + n_cat          # cat_covariates_embed_mode == 'input'
    ks = jax.random.split(key, 6)
    return {
        "fc_w": _glorot(ks[0], (n_in_total, n_hidden)),
        "fc_b": 0.05 * jax.random.normal(ks[1], (n_hidden,), jnp.float32),
        "conv_mu": make_gat_params(ks[2], n_hidden, n_latent, heads),
        "conv_logstd": make_gat_params(ks[3], n_hidden, n_latent, heads),
        "addon_mu": make_gat_params(ks[4], n_hidden, n_addon, heads),
        "addon_logstd": make_gat_params(ks[5], n_hidden, n_addon, heads),
    }


# Output column order of the fused kernel: [mu | mu_addon | logstd | logstd_addon].
_CONV_ORDER = ("conv_mu", "addon_mu", "conv_logstd", "addon_logstd")


def make_fused_params(params, n_input, heads, n_latent, n_addon):
    """Stack the 4 convs' parameters for the single fused kernel (done once)."""
    chans = (n_latent, n_addon, n_latent, n_addon)
    out_used = sum(chans)
    out_pad = max(LANES, _round_up(out_used, LANES))
    wl = jnp.concatenate([params[c]["wl"] for c in _CONV_ORDER], axis=1)
    bl = jnp.concatenate([params[c]["bl"] for c in _CONV_ORDER]).reshape(1, -1)
    wr = jnp.concatenate([params[c]["wr"] for c in _CONV_ORDER], axis=1)
    br = jnp.concatenate([params[c]["br"] for c in _CONV_ORDER]).reshape(1, -1)
    cmax = max(chans)
    att = jnp.concatenate(
        [jnp.pad(params[c]["att"], ((0, 0), (0, cmax - ch)))
         for c, ch in zip(_CONV_ORDER, chans)], axis=0)               # [4*H, cmax]
    bias = jnp.concatenate([params[c]["bias"] for c in _CONV_ORDER])  # [out_used]
    bias_row = jnp.pad(bias, (0, out_pad - out_used)).reshape(1, -1)  # [1, out_pad]
    return {
        "wx": params["fc_w"][:n_input],       # fc weight split: x part
        "wc": params["fc_w"][n_input:],       # fc weight split: cat-embed part
        "bfc": params["fc_b"].reshape(1, -1),
        "wl": wl, "bl": bl, "wr": wr, "br": br,
        "att": att, "bias_row": bias_row,
        "conv_channels": chans, "out_pad": out_pad,
    }


# ----------------------------------------------------------------------------
# Encoder forward: ONE fused pallas_call
# ----------------------------------------------------------------------------
def encoder_forward(fused, x, cat_embed, adj, *, heads, n_latent, n_addon):
    n = x.shape[0]
    out_pad = fused["out_pad"]
    chans = fused["conv_channels"]
    t_cols = fused["wl"].shape[1]
    n_hidden = fused["wx"].shape[1]

    kern = functools.partial(_encoder_fused_kernel, heads=heads,
                             conv_channels=chans, out_pad=out_pad)

    param_bytes = 4 * sum(int(fused[k].size) for k in
                          ("wx", "wc", "bfc", "wl", "bl", "wr", "br", "att", "bias_row"))
    cost = pl.CostEstimate(
        flops=int(2 * n * (fused["wx"].shape[0] + fused["wc"].shape[0]) * n_hidden
                  + 4 * n * n_hidden * t_cols          # gl, gr projections
                  + 6 * n * n * t_cols                 # logit build (VPU)
                  + 2 * n * heads * n * sum(chans)),   # per-conv aggregation matmuls
        transcendentals=int(n * n * heads * len(chans)),
        bytes_accessed=int(param_bytes
                           + 4 * (x.size + cat_embed.size + adj.size + n * out_pad)),
    )

    out = pl.pallas_call(
        kern,
        out_shape=jax.ShapeDtypeStruct((n, out_pad), jnp.float32),
        in_specs=[VMEM_SPEC] * 12,
        out_specs=VMEM_SPEC,
        compiler_params=pltpu.CompilerParams(vmem_limit_bytes=32 * 1024 * 1024),
        cost_estimate=cost,
    )(x, cat_embed, fused["wx"], fused["wc"], fused["bfc"],
      fused["wl"], fused["bl"], fused["wr"], fused["br"], fused["att"],
      adj, fused["bias_row"])

    d = n_latent + n_addon
    return out[:, :d], out[:, d:2 * d]


# ----------------------------------------------------------------------------
# Pure-JAX reference (for correctness check of the fused Pallas lowering)
# ----------------------------------------------------------------------------
def _gatv2_ref(h, p, adj, heads, out_ch):
    gl = h @ p["wl"] + p["bl"]
    gr = h @ p["wr"] + p["br"]
    n = h.shape[0]
    mask = adj > 0
    acc = jnp.zeros((n, out_ch), jnp.float32)
    for hd in range(heads):
        gl_h = gl[:, hd * out_ch:(hd + 1) * out_ch]
        gr_h = gr[:, hd * out_ch:(hd + 1) * out_ch]
        s = gr_h[:, None, :] + gl_h[None, :, :]
        s = jnp.where(s > 0, s, 0.2 * s)
        e = jnp.sum(s * p["att"][hd], axis=-1)
        e = jnp.where(mask, e, -1e30)
        e = e - jnp.max(e, axis=-1, keepdims=True)
        pr = jnp.exp(e) * mask
        alpha = pr / jnp.sum(pr, axis=-1, keepdims=True)
        acc = acc + alpha @ gl_h
    return acc / heads + p["bias"]


def encoder_ref(params, x, cat_embed, adj, *, heads, n_latent, n_addon):
    x_full = jnp.concatenate([x, cat_embed], axis=1)
    hidden = jnp.maximum(x_full @ params["fc_w"] + params["fc_b"], 0.0)
    mu = _gatv2_ref(hidden, params["conv_mu"], adj, heads, n_latent)
    logstd = _gatv2_ref(hidden, params["conv_logstd"], adj, heads, n_latent)
    mu = jnp.concatenate(
        [mu, _gatv2_ref(hidden, params["addon_mu"], adj, heads, n_addon)], axis=1)
    logstd = jnp.concatenate(
        [logstd, _gatv2_ref(hidden, params["addon_logstd"], adj, heads, n_addon)], axis=1)
    return mu, logstd


# ----------------------------------------------------------------------------
if __name__ == "__main__":
    N = 16              # number of graph nodes
    N_INPUT = 20        # omics features
    N_CAT = 12          # categorical covariate embedding dim
    N_HIDDEN = 32
    N_LATENT = 8
    N_ADDON = 6
    HEADS = 4

    key = jax.random.PRNGKey(0)
    k_par, k_x, k_cat = jax.random.split(key, 3)

    params = make_encoder_params(k_par, N_INPUT, N_CAT, N_HIDDEN,
                                 N_LATENT, N_ADDON, HEADS)
    fused = make_fused_params(params, N_INPUT, HEADS, N_LATENT, N_ADDON)

    x = jax.random.normal(k_x, (N, N_INPUT), jnp.float32)
    cat_embed = jax.random.normal(k_cat, (N, N_CAT), jnp.float32)

    # edge_index: bidirectional ring graph; dense adjacency with
    # adj[target, source] = 1, plus self-loops (GATv2Conv default).
    src = jnp.concatenate([jnp.arange(N), (jnp.arange(N) + 1) % N])
    tgt = jnp.concatenate([(jnp.arange(N) + 1) % N, jnp.arange(N)])
    adj = jnp.zeros((N, N), jnp.float32).at[tgt, src].set(1.0)
    adj = jnp.maximum(adj, jnp.eye(N, dtype=jnp.float32))   # add self-loops

    mu, logstd = encoder_forward(fused, x, cat_embed, adj,
                                 heads=HEADS, n_latent=N_LATENT, n_addon=N_ADDON)
    jax.block_until_ready((mu, logstd))

    mu_r, logstd_r = encoder_ref(params, x, cat_embed, adj,
                                 heads=HEADS, n_latent=N_LATENT, n_addon=N_ADDON)

    assert mu.shape == (N, N_LATENT + N_ADDON)
    assert logstd.shape == (N, N_LATENT + N_ADDON)
    # tolerance accounts for the EUP approximate reciprocal in the softmax
    assert jnp.allclose(mu, mu_r, rtol=2e-3, atol=2e-3)
    assert jnp.allclose(logstd, logstd_r, rtol=2e-3, atol=2e-3)

    print("KERNEL_OK")
</pallas_src>

<mosaic_0001>
module attributes {stable_mosaic.version = 11 : i64} {
  func.func @_encoder_fused_kernel(%arg0: memref<16x20xf32, #tpu.memory_space<vmem>>, %arg1: memref<16x12xf32, #tpu.memory_space<vmem>>, %arg2: memref<20x32xf32, #tpu.memory_space<vmem>>, %arg3: memref<12x32xf32, #tpu.memory_space<vmem>>, %arg4: memref<1x32xf32, #tpu.memory_space<vmem>>, %arg5: memref<32x112xf32, #tpu.memory_space<vmem>>, %arg6: memref<1x112xf32, #tpu.memory_space<vmem>>, %arg7: memref<32x112xf32, #tpu.memory_space<vmem>>, %arg8: memref<1x112xf32, #tpu.memory_space<vmem>>, %arg9: memref<16x8xf32, #tpu.memory_space<vmem>>, %arg10: memref<16x16xf32, #tpu.memory_space<vmem>>, %arg11: memref<1x128xf32, #tpu.memory_space<vmem>>, %arg12: memref<16x128xf32, #tpu.memory_space<vmem>>) attributes {dimension_semantics = [], scalar_prefetch = 0 : i64, scratch_operands = 0 : i64, tpu.core_type = #tpu.core_type<tc>} {
    %c0 = arith.constant 0 : index
    %c0_0 = arith.constant 0 : index
    %0 = vector.load %arg0[%c0, %c0_0] : memref<16x20xf32, #tpu.memory_space<vmem>>, vector<16x20xf32>
    %c0_1 = arith.constant 0 : index
    %c0_2 = arith.constant 0 : index
    %1 = vector.load %arg2[%c0_1, %c0_2] : memref<20x32xf32, #tpu.memory_space<vmem>>, vector<20x32xf32>
    %cst = arith.constant dense<0.000000e+00> : vector<16x32xf32>
    %2 = tpu.matmul %0, %1, %cst {dimension_numbers = #tpu.dot_dimension_numbers<[1], [0], [0], [1], [0, 0, 1, 1], [], []>} : vector<16x20xf32>, vector<20x32xf32>, vector<16x32xf32> -> vector<16x32xf32>
    %c0_3 = arith.constant 0 : index
    %c0_4 = arith.constant 0 : index
    %3 = vector.load %arg1[%c0_3, %c0_4] : memref<16x12xf32, #tpu.memory_space<vmem>>, vector<16x12xf32>
    %c0_5 = arith.constant 0 : index
    %c0_6 = arith.constant 0 : index
    %4 = vector.load %arg3[%c0_5, %c0_6] : memref<12x32xf32, #tpu.memory_space<vmem>>, vector<12x32xf32>
    %cst_7 = arith.constant dense<0.000000e+00> : vector<16x32xf32>
    %5 = tpu.matmul %3, %4, %cst_7 {dimension_numbers = #tpu.dot_dimension_numbers<[1], [0], [0], [1], [0, 0, 1, 1], [], []>} : vector<16x12xf32>, vector<12x32xf32>, vector<16x32xf32> -> vector<16x32xf32>
    %6 = arith.addf %2, %5 : vector<16x32xf32>
    %c0_8 = arith.constant 0 : index
    %c0_9 = arith.constant 0 : index
    %7 = vector.load %arg4[%c0_8, %c0_9] : memref<1x32xf32, #tpu.memory_space<vmem>>, vector<1x32xf32>
    %8 = vector.broadcast %7 : vector<1x32xf32> to vector<16x32xf32>
    %9 = arith.addf %6, %8 : vector<16x32xf32>
    %cst_10 = arith.constant 0.000000e+00 : f32
    %10 = vector.broadcast %cst_10 : f32 to vector<16x32xf32>
    %11 = arith.maximumf %9, %10 : vector<16x32xf32>
    %c0_11 = arith.constant 0 : index
    %c0_12 = arith.constant 0 : index
    %12 = vector.load %arg5[%c0_11, %c0_12] : memref<32x112xf32, #tpu.memory_space<vmem>>, vector<32x112xf32>
    %cst_13 = arith.constant dense<0.000000e+00> : vector<16x112xf32>
    %13 = tpu.matmul %11, %12, %cst_13 {dimension_numbers = #tpu.dot_dimension_numbers<[1], [0], [0], [1], [0, 0, 1, 1], [], []>} : vector<16x32xf32>, vector<32x112xf32>, vector<16x112xf32> -> vector<16x112xf32>
    %c0_14 = arith.constant 0 : index
    %c0_15 = arith.constant 0 : index
    %14 = vector.load %arg6[%c0_14, %c0_15] : memref<1x112xf32, #tpu.memory_space<vmem>>, vector<1x112xf32>
    %15 = vector.broadcast %14 : vector<1x112xf32> to vector<16x112xf32>
    %16 = arith.addf %13, %15 : vector<16x112xf32>
    %c0_16 = arith.constant 0 : index
    %c0_17 = arith.constant 0 : index
    %17 = vector.load %arg7[%c0_16, %c0_17] : memref<32x112xf32, #tpu.memory_space<vmem>>, vector<32x112xf32>
    %cst_18 = arith.constant dense<0.000000e+00> : vector<16x112xf32>
    %18 = tpu.matmul %11, %17, %cst_18 {dimension_numbers = #tpu.dot_dimension_numbers<[1], [0], [0], [1], [0, 0, 1, 1], [], []>} : vector<16x32xf32>, vector<32x112xf32>, vector<16x112xf32> -> vector<16x112xf32>
    %c0_19 = arith.constant 0 : index
    %c0_20 = arith.constant 0 : index
    %19 = vector.load %arg8[%c0_19, %c0_20] : memref<1x112xf32, #tpu.memory_space<vmem>>, vector<1x112xf32>
    %20 = vector.broadcast %19 : vector<1x112xf32> to vector<16x112xf32>
    %21 = arith.addf %18, %20 : vector<16x112xf32>
    %c0_21 = arith.constant 0 : index
    %c0_22 = arith.constant 0 : index
    %22 = vector.load %arg9[%c0_21, %c0_22] : memref<16x8xf32, #tpu.memory_space<vmem>>, vector<16x8xf32>
    %c0_23 = arith.constant 0 : index
    %c0_24 = arith.constant 0 : index
    %23 = vector.load %arg10[%c0_23, %c0_24] : memref<16x16xf32, #tpu.memory_space<vmem>>, vector<16x16xf32>
    %cst_25 = arith.constant 0.000000e+00 : f32
    %24 = vector.broadcast %cst_25 : f32 to vector<16x16xf32>
    %25 = arith.cmpf ogt, %23, %24 : vector<16x16xf32>
    %26 = vector.extract_strided_slice %16 {offsets = [0, 0], sizes = [16, 8], strides = [1, 1]} : vector<16x112xf32> to vector<16x8xf32>
    %27 = vector.extract_strided_slice %21 {offsets = [0, 0], sizes = [16, 8], strides = [1, 1]} : vector<16x112xf32> to vector<16x8xf32>
    %28 = vector.extract_strided_slice %22 {offsets = [0, 0], sizes = [1, 8], strides = [1, 1]} : vector<16x8xf32> to vector<1x8xf32>
    %29 = vector.shape_cast %27 : vector<16x8xf32> to vector<16x1x8xf32>
    %30 = vector.shape_cast %26 : vector<16x8xf32> to vector<1x16x8xf32>
    %31 = vector.broadcast %29 : vector<16x1x8xf32> to vector<16x16x8xf32>
    %32 = vector.broadcast %30 : vector<1x16x8xf32> to vector<16x16x8xf32>
    %33 = arith.addf %31, %32 : vector<16x16x8xf32>
    %cst_26 = arith.constant 2.000000e-01 : f32
    %34 = vector.broadcast %cst_26 : f32 to vector<16x16x8xf32>
    %35 = arith.mulf %34, %33 : vector<16x16x8xf32>
    %36 = arith.maximumf %33, %35 : vector<16x16x8xf32>
    %37 = vector.shape_cast %28 : vector<1x8xf32> to vector<1x1x8xf32>
    %38 = vector.broadcast %37 : vector<1x1x8xf32> to vector<16x16x8xf32>
    %39 = arith.mulf %36, %38 : vector<16x16x8xf32>
    %cst_27 = arith.constant dense<0.000000e+00> : vector<16x16xf32>
    %40 = vector.multi_reduction <add>, %39, %cst_27 [2] : vector<16x16x8xf32> to vector<16x16xf32>
    %cst_28 = arith.constant -1.000000e+30 : f32
    %41 = vector.broadcast %cst_28 : f32 to vector<16x16xf32>
    %42 = arith.select %25, %40, %41 : vector<16x16xi1>, vector<16x16xf32>
    %cst_29 = arith.constant dense<0xFF800000> : vector<16xf32>
    %43 = vector.multi_reduction <maximumf>, %42, %cst_29 [1] : vector<16x16xf32> to vector<16xf32>
    %44 = vector.shape_cast %43 : vector<16xf32> to vector<16x1xf32>
    %45 = vector.broadcast %44 : vector<16x1xf32> to vector<16x16xf32>
    %46 = arith.subf %42, %45 : vector<16x16xf32>
    %47 = math.exp %46 : vector<16x16xf32>
    %cst_30 = arith.constant dense<0.000000e+00> : vector<16xf32>
    %48 = vector.multi_reduction <add>, %47, %cst_30 [1] : vector<16x16xf32> to vector<16xf32>
    %49 = vector.shape_cast %48 : vector<16xf32> to vector<16x1xf32>
    %50 = tpu.reciprocal %49 {approx = true} : vector<16x1xf32> -> vector<16x1xf32>
    %51 = vector.broadcast %50 : vector<16x1xf32> to vector<16x16xf32>
    %52 = arith.mulf %47, %51 : vector<16x16xf32>
    %53 = vector.extract_strided_slice %16 {offsets = [0, 8], sizes = [16, 8], strides = [1, 1]} : vector<16x112xf32> to vector<16x8xf32>
    %54 = vector.extract_strided_slice %21 {offsets = [0, 8], sizes = [16, 8], strides = [1, 1]} : vector<16x112xf32> to vector<16x8xf32>
    %55 = vector.extract_strided_slice %22 {offsets = [1, 0], sizes = [1, 8], strides = [1, 1]} : vector<16x8xf32> to vector<1x8xf32>
    %56 = vector.shape_cast %54 : vector<16x8xf32> to vector<16x1x8xf32>
    %57 = vector.shape_cast %53 : vector<16x8xf32> to vector<1x16x8xf32>
    %58 = vector.broadcast %56 : vector<16x1x8xf32> to vector<16x16x8xf32>
    %59 = vector.broadcast %57 : vector<1x16x8xf32> to vector<16x16x8xf32>
    %60 = arith.addf %58, %59 : vector<16x16x8xf32>
    %cst_31 = arith.constant 2.000000e-01 : f32
    %61 = vector.broadcast %cst_31 : f32 to vector<16x16x8xf32>
    %62 = arith.mulf %61, %60 : vector<16x16x8xf32>
    %63 = arith.maximumf %60, %62 : vector<16x16x8xf32>
    %64 = vector.shape_cast %55 : vector<1x8xf32> to vector<1x1x8xf32>
    %65 = vector.broadcast %64 : vector<1x1x8xf32> to vector<16x16x8xf32>
    %66 = arith.mulf %63, %65 : vector<16x16x8xf32>
    %cst_32 = arith.constant dense<0.000000e+00> : vector<16x16xf32>
    %67 = vector.multi_reduction <add>, %66, %cst_32 [2] : vector<16x16x8xf32> to vector<16x16xf32>
    %cst_33 = arith.constant -1.000000e+30 : f32
    %68 = vector.broadcast %cst_33 : f32 to vector<16x16xf32>
    %69 = arith.select %25, %67, %68 : vector<16x16xi1>, vector<16x16xf32>
    %cst_34 = arith.constant dense<0xFF800000> : vector<16xf32>
    %70 = vector.multi_reduction <maximumf>, %69, %cst_34 [1] : vector<16x16xf32> to vector<16xf32>
    %71 = vector.shape_cast %70 : vector<16xf32> to vector<16x1xf32>
    %72 = vector.broadcast %71 : vector<16x1xf32> to vector<16x16xf32>
    %73 = arith.subf %69, %72 : vector<16x16xf32>
    %74 = math.exp %73 : vector<16x16xf32>
    %cst_35 = arith.constant dense<0.000000e+00> : vector<16xf32>
    %75 = vector.multi_reduction <add>, %74, %cst_35 [1] : vector<16x16xf32> to vector<16xf32>
    %76 = vector.shape_cast %75 : vector<16xf32> to vector<16x1xf32>
    %77 = tpu.reciprocal %76 {approx = true} : vector<16x1xf32> -> vector<16x1xf32>
    %78 = vector.broadcast %77 : vector<16x1xf32> to vector<16x16xf32>
    %79 = arith.mulf %74, %78 : vector<16x16xf32>
    %80 = vector.extract_strided_slice %16 {offsets = [0, 16], sizes = [16, 8], strides = [1, 1]} : vector<16x112xf32> to vector<16x8xf32>
    %81 = vector.extract_strided_slice %21 {offsets = [0, 16], sizes = [16, 8], strides = [1, 1]} : vector<16x112xf32> to vector<16x8xf32>
    %82 = vector.extract_strided_slice %22 {offsets = [2, 0], sizes = [1, 8], strides = [1, 1]} : vector<16x8xf32> to vector<1x8xf32>
    %83 = vector.shape_cast %81 : vector<16x8xf32> to vector<16x1x8xf32>
    %84 = vector.shape_cast %80 : vector<16x8xf32> to vector<1x16x8xf32>
    %85 = vector.broadcast %83 : vector<16x1x8xf32> to vector<16x16x8xf32>
    %86 = vector.broadcast %84 : vector<1x16x8xf32> to vector<16x16x8xf32>
    %87 = arith.addf %85, %86 : vector<16x16x8xf32>
    %cst_36 = arith.constant 2.000000e-01 : f32
    %88 = vector.broadcast %cst_36 : f32 to vector<16x16x8xf32>
    %89 = arith.mulf %88, %87 : vector<16x16x8xf32>
    %90 = arith.maximumf %87, %89 : vector<16x16x8xf32>
    %91 = vector.shape_cast %82 : vector<1x8xf32> to vector<1x1x8xf32>
    %92 = vector.broadcast %91 : vector<1x1x8xf32> to vector<16x16x8xf32>
    %93 = arith.mulf %90, %92 : vector<16x16x8xf32>
    %cst_37 = arith.constant dense<0.000000e+00> : vector<16x16xf32>
    %94 = vector.multi_reduction <add>, %93, %cst_37 [2] : vector<16x16x8xf32> to vector<16x16xf32>
    %cst_38 = arith.constant -1.000000e+30 : f32
    %95 = vector.broadcast %cst_38 : f32 to vector<16x16xf32>
    %96 = arith.select %25, %94, %95 : vector<16x16xi1>, vector<16x16xf32>
    %cst_39 = arith.constant dense<0xFF800000> : vector<16xf32>
    %97 = vector.multi_reduction <maximumf>, %96, %cst_39 [1] : vector<16x16xf32> to vector<16xf32>
    %98 = vector.shape_cast %97 : vector<16xf32> to vector<16x1xf32>
    %99 = vector.broadcast %98 : vector<16x1xf32> to vector<16x16xf32>
    %100 = arith.subf %96, %99 : vector<16x16xf32>
    %101 = math.exp %100 : vector<16x16xf32>
    %cst_40 = arith.constant dense<0.000000e+00> : vector<16xf32>
    %102 = vector.multi_reduction <add>, %101, %cst_40 [1] : vector<16x16xf32> to vector<16xf32>
    %103 = vector.shape_cast %102 : vector<16xf32> to vector<16x1xf32>
    %104 = tpu.reciprocal %103 {approx = true} : vector<16x1xf32> -> vector<16x1xf32>
    %105 = vector.broadcast %104 : vector<16x1xf32> to vector<16x16xf32>
    %106 = arith.mulf %101, %105 : vector<16x16xf32>
    %107 = vector.extract_strided_slice %16 {offsets = [0, 24], sizes = [16, 8], strides = [1, 1]} : vector<16x112xf32> to vector<16x8xf32>
    %108 = vector.extract_strided_slice %21 {offsets = [0, 24], sizes = [16, 8], strides = [1, 1]} : vector<16x112xf32> to vector<16x8xf32>
    %109 = vector.extract_strided_slice %22 {offsets = [3, 0], sizes = [1, 8], strides = [1, 1]} : vector<16x8xf32> to vector<1x8xf32>
    %110 = vector.shape_cast %108 : vector<16x8xf32> to vector<16x1x8xf32>
    %111 = vector.shape_cast %107 : vector<16x8xf32> to vector<1x16x8xf32>
    %112 = vector.broadcast %110 : vector<16x1x8xf32> to vector<16x16x8xf32>
    %113 = vector.broadcast %111 : vector<1x16x8xf32> to vector<16x16x8xf32>
    %114 = arith.addf %112, %113 : vector<16x16x8xf32>
    %cst_41 = arith.constant 2.000000e-01 : f32
    %115 = vector.broadcast %cst_41 : f32 to vector<16x16x8xf32>
    %116 = arith.mulf %115, %114 : vector<16x16x8xf32>
    %117 = arith.maximumf %114, %116 : vector<16x16x8xf32>
    %118 = vector.shape_cast %109 : vector<1x8xf32> to vector<1x1x8xf32>
    %119 = vector.broadcast %118 : vector<1x1x8xf32> to vector<16x16x8xf32>
    %120 = arith.mulf %117, %119 : vector<16x16x8xf32>
    %cst_42 = arith.constant dense<0.000000e+00> : vector<16x16xf32>
    %121 = vector.multi_reduction <add>, %120, %cst_42 [2] : vector<16x16x8xf32> to vector<16x16xf32>
    %cst_43 = arith.constant -1.000000e+30 : f32
    %122 = vector.broadcast %cst_43 : f32 to vector<16x16xf32>
    %123 = arith.select %25, %121, %122 : vector<16x16xi1>, vector<16x16xf32>
    %cst_44 = arith.constant dense<0xFF800000> : vector<16xf32>
    %124 = vector.multi_reduction <maximumf>, %123, %cst_44 [1] : vector<16x16xf32> to vector<16xf32>
    %125 = vector.shape_cast %124 : vector<16xf32> to vector<16x1xf32>
    %126 = vector.broadcast %125 : vector<16x1xf32> to vector<16x16xf32>
    %127 = arith.subf %123, %126 : vector<16x16xf32>
    %128 = math.exp %127 : vector<16x16xf32>
    %cst_45 = arith.constant dense<0.000000e+00> : vector<16xf32>
    %129 = vector.multi_reduction <add>, %128, %cst_45 [1] : vector<16x16xf32> to vector<16xf32>
    %130 = vector.shape_cast %129 : vector<16xf32> to vector<16x1xf32>
    %131 = tpu.reciprocal %130 {approx = true} : vector<16x1xf32> -> vector<16x1xf32>
    %132 = vector.broadcast %131 : vector<16x1xf32> to vector<16x16xf32>
    %133 = arith.mulf %128, %132 : vector<16x16xf32>
    %134 = tpu.concatenate %52, %79, %106, %133 in 1 : vector<16x16xf32>, vector<16x16xf32>, vector<16x16xf32>, vector<16x16xf32> -> vector<16x64xf32>
    %135 = tpu.concatenate %26, %53, %80, %107 in 0 : vector<16x8xf32>, vector<16x8xf32>, vector<16x8xf32>, vector<16x8xf32> -> vector<64x8xf32>
    %cst_46 = arith.constant dense<0.000000e+00> : vector<16x8xf32>
    %136 = tpu.matmul %134, %135, %cst_46 {dimension_numbers = #tpu.dot_dimension_numbers<[1], [0], [0], [1], [0, 0, 1, 1], [], []>} : vector<16x64xf32>, vector<64x8xf32>, vector<16x8xf32> -> vector<16x8xf32>
    %137 = vector.extract_strided_slice %16 {offsets = [0, 32], sizes = [16, 6], strides = [1, 1]} : vector<16x112xf32> to vector<16x6xf32>
    %138 = vector.extract_strided_slice %21 {offsets = [0, 32], sizes = [16, 6], strides = [1, 1]} : vector<16x112xf32> to vector<16x6xf32>
    %139 = vector.extract_strided_slice %22 {offsets = [4, 0], sizes = [1, 6], strides = [1, 1]} : vector<16x8xf32> to vector<1x6xf32>
    %140 = vector.shape_cast %138 : vector<16x6xf32> to vector<16x1x6xf32>
    %141 = vector.shape_cast %137 : vector<16x6xf32> to vector<1x16x6xf32>
    %142 = vector.broadcast %140 : vector<16x1x6xf32> to vector<16x16x6xf32>
    %143 = vector.broadcast %141 : vector<1x16x6xf32> to vector<16x16x6xf32>
    %144 = arith.addf %142, %143 : vector<16x16x6xf32>
    %cst_47 = arith.constant 2.000000e-01 : f32
    %145 = vector.broadcast %cst_47 : f32 to vector<16x16x6xf32>
    %146 = arith.mulf %145, %144 : vector<16x16x6xf32>
    %147 = arith.maximumf %144, %146 : vector<16x16x6xf32>
    %148 = vector.shape_cast %139 : vector<1x6xf32> to vector<1x1x6xf32>
    %149 = vector.broadcast %148 : vector<1x1x6xf32> to vector<16x16x6xf32>
    %150 = arith.mulf %147, %149 : vector<16x16x6xf32>
    %cst_48 = arith.constant dense<0.000000e+00> : vector<16x16xf32>
    %151 = vector.multi_reduction <add>, %150, %cst_48 [2] : vector<16x16x6xf32> to vector<16x16xf32>
    %cst_49 = arith.constant -1.000000e+30 : f32
    %152 = vector.broadcast %cst_49 : f32 to vector<16x16xf32>
    %153 = arith.select %25, %151, %152 : vector<16x16xi1>, vector<16x16xf32>
    %cst_50 = arith.constant dense<0xFF800000> : vector<16xf32>
    %154 = vector.multi_reduction <maximumf>, %153, %cst_50 [1] : vector<16x16xf32> to vector<16xf32>
    %155 = vector.shape_cast %154 : vector<16xf32> to vector<16x1xf32>
    %156 = vector.broadcast %155 : vector<16x1xf32> to vector<16x16xf32>
    %157 = arith.subf %153, %156 : vector<16x16xf32>
    %158 = math.exp %157 : vector<16x16xf32>
    %cst_51 = arith.constant dense<0.000000e+00> : vector<16xf32>
    %159 = vector.multi_reduction <add>, %158, %cst_51 [1] : vector<16x16xf32> to vector<16xf32>
    %160 = vector.shape_cast %159 : vector<16xf32> to vector<16x1xf32>
    %161 = tpu.reciprocal %160 {approx = true} : vector<16x1xf32> -> vector<16x1xf32>
    %162 = vector.broadcast %161 : vector<16x1xf32> to vector<16x16xf32>
    %163 = arith.mulf %158, %162 : vector<16x16xf32>
    %164 = vector.extract_strided_slice %16 {offsets = [0, 38], sizes = [16, 6], strides = [1, 1]} : vector<16x112xf32> to vector<16x6xf32>
    %165 = vector.extract_strided_slice %21 {offsets = [0, 38], sizes = [16, 6], strides = [1, 1]} : vector<16x112xf32> to vector<16x6xf32>
    %166 = vector.extract_strided_slice %22 {offsets = [5, 0], sizes = [1, 6], strides = [1, 1]} : vector<16x8xf32> to vector<1x6xf32>
    %167 = vector.shape_cast %165 : vector<16x6xf32> to vector<16x1x6xf32>
    %168 = vector.shape_cast %164 : vector<16x6xf32> to vector<1x16x6xf32>
    %169 = vector.broadcast %167 : vector<16x1x6xf32> to vector<16x16x6xf32>
    %170 = vector.broadcast %168 : vector<1x16x6xf32> to vector<16x16x6xf32>
    %171 = arith.addf %169, %170 : vector<16x16x6xf32>
    %cst_52 = arith.constant 2.000000e-01 : f32
    %172 = vector.broadcast %cst_52 : f32 to vector<16x16x6xf32>
    %173 = arith.mulf %172, %171 : vector<16x16x6xf32>
    %174 = arith.maximumf %171, %173 : vector<16x16x6xf32>
    %175 = vector.shape_cast %166 : vector<1x6xf32> to vector<1x1x6xf32>
    %176 = vector.broadcast %175 : vector<1x1x6xf32> to vector<16x16x6xf32>
    %177 = arith.mulf %174, %176 : vector<16x16x6xf32>
    %cst_53 = arith.constant dense<0.000000e+00> : vector<16x16xf32>
    %178 = vector.multi_reduction <add>, %177, %cst_53 [2] : vector<16x16x6xf32> to vector<16x16xf32>
    %cst_54 = arith.constant -1.000000e+30 : f32
    %179 = vector.broadcast %cst_54 : f32 to vector<16x16xf32>
    %180 = arith.select %25, %178, %179 : vector<16x16xi1>, vector<16x16xf32>
    %cst_55 = arith.constant dense<0xFF800000> : vector<16xf32>
    %181 = vector.multi_reduction <maximumf>, %180, %cst_55 [1] : vector<16x16xf32> to vector<16xf32>
    %182 = vector.shape_cast %181 : vector<16xf32> to vector<16x1xf32>
    %183 = vector.broadcast %182 : vector<16x1xf32> to vector<16x16xf32>
    %184 = arith.subf %180, %183 : vector<16x16xf32>
    %185 = math.exp %184 : vector<16x16xf32>
    %cst_56 = arith.constant dense<0.000000e+00> : vector<16xf32>
    %186 = vector.multi_reduction <add>, %185, %cst_56 [1] : vector<16x16xf32> to vector<16xf32>
    %187 = vector.shape_cast %186 : vector<16xf32> to vector<16x1xf32>
    %188 = tpu.reciprocal %187 {approx = true} : vector<16x1xf32> -> vector<16x1xf32>
    %189 = vector.broadcast %188 : vector<16x1xf32> to vector<16x16xf32>
    %190 = arith.mulf %185, %189 : vector<16x16xf32>
    %191 = vector.extract_strided_slice %16 {offsets = [0, 44], sizes = [16, 6], strides = [1, 1]} : vector<16x112xf32> to vector<16x6xf32>
    %192 = vector.extract_strided_slice %21 {offsets = [0, 44], sizes = [16, 6], strides = [1, 1]} : vector<16x112xf32> to vector<16x6xf32>
    %193 = vector.extract_strided_slice %22 {offsets = [6, 0], sizes = [1, 6], strides = [1, 1]} : vector<16x8xf32> to vector<1x6xf32>
    %194 = vector.shape_cast %192 : vector<16x6xf32> to vector<16x1x6xf32>
    %195 = vector.shape_cast %191 : vector<16x6xf32> to vector<1x16x6xf32>
    %196 = vector.broadcast %194 : vector<16x1x6xf32> to vector<16x16x6xf32>
    %197 = vector.broadcast %195 : vector<1x16x6xf32> to vector<16x16x6xf32>
    %198 = arith.addf %196, %197 : vector<16x16x6xf32>
    %cst_57 = arith.constant 2.000000e-01 : f32
    %199 = vector.broadcast %cst_57 : f32 to vector<16x16x6xf32>
    %200 = arith.mulf %199, %198 : vector<16x16x6xf32>
    %201 = arith.maximumf %198, %200 : vector<16x16x6xf32>
    %202 = vector.shape_cast %193 : vector<1x6xf32> to vector<1x1x6xf32>
    %203 = vector.broadcast %202 : vector<1x1x6xf32> to vector<16x16x6xf32>
    %204 = arith.mulf %201, %203 : vector<16x16x6xf32>
    %cst_58 = arith.constant dense<0.000000e+00> : vector<16x16xf32>
    %205 = vector.multi_reduction <add>, %204, %cst_58 [2] : vector<16x16x6xf32> to vector<16x16xf32>
    %cst_59 = arith.constant -1.000000e+30 : f32
    %206 = vector.broadcast %cst_59 : f32 to vector<16x16xf32>
    %207 = arith.select %25, %205, %206 : vector<16x16xi1>, vector<16x16xf32>
    %cst_60 = arith.constant dense<0xFF800000> : vector<16xf32>
    %208 = vector.multi_reduction <maximumf>, %207, %cst_60 [1] : vector<16x16xf32> to vector<16xf32>
    %209 = vector.shape_cast %208 : vector<16xf32> to vector<16x1xf32>
    %210 = vector.broadcast %209 : vector<16x1xf32> to vector<16x16xf32>
    %211 = arith.subf %207, %210 : vector<16x16xf32>
    %212 = math.exp %211 : vector<16x16xf32>
    %cst_61 = arith.constant dense<0.000000e+00> : vector<16xf32>
    %213 = vector.multi_reduction <add>, %212, %cst_61 [1] : vector<16x16xf32> to vector<16xf32>
    %214 = vector.shape_cast %213 : vector<16xf32> to vector<16x1xf32>
    %215 = tpu.reciprocal %214 {approx = true} : vector<16x1xf32> -> vector<16x1xf32>
    %216 = vector.broadcast %215 : vector<16x1xf32> to vector<16x16xf32>
    %217 = arith.mulf %212, %216 : vector<16x16xf32>
    %218 = vector.extract_strided_slice %16 {offsets = [0, 50], sizes = [16, 6], strides = [1, 1]} : vector<16x112xf32> to vector<16x6xf32>
    %219 = vector.extract_strided_slice %21 {offsets = [0, 50], sizes = [16, 6], strides = [1, 1]} : vector<16x112xf32> to vector<16x6xf32>
    %220 = vector.extract_strided_slice %22 {offsets = [7, 0], sizes = [1, 6], strides = [1, 1]} : vector<16x8xf32> to vector<1x6xf32>
    %221 = vector.shape_cast %219 : vector<16x6xf32> to vector<16x1x6xf32>
    %222 = vector.shape_cast %218 : vector<16x6xf32> to vector<1x16x6xf32>
    %223 = vector.broadcast %221 : vector<16x1x6xf32> to vector<16x16x6xf32>
    %224 = vector.broadcast %222 : vector<1x16x6xf32> to vector<16x16x6xf32>
    %225 = arith.addf %223, %224 : vector<16x16x6xf32>
    %cst_62 = arith.constant 2.000000e-01 : f32
    %226 = vector.broadcast %cst_62 : f32 to vector<16x16x6xf32>
    %227 = arith.mulf %226, %225 : vector<16x16x6xf32>
    %228 = arith.maximumf %225, %227 : vector<16x16x6xf32>
    %229 = vector.shape_cast %220 : vector<1x6xf32> to vector<1x1x6xf32>
    %230 = vector.broadcast %229 : vector<1x1x6xf32> to vector<16x16x6xf32>
    %231 = arith.mulf %228, %230 : vector<16x16x6xf32>
    %cst_63 = arith.constant dense<0.000000e+00> : vector<16x16xf32>
    %232 = vector.multi_reduction <add>, %231, %cst_63 [2] : vector<16x16x6xf32> to vector<16x16xf32>
    %cst_64 = arith.constant -1.000000e+30 : f32
    %233 = vector.broadcast %cst_64 : f32 to vector<16x16xf32>
    %234 = arith.select %25, %232, %233 : vector<16x16xi1>, vector<16x16xf32>
    %cst_65 = arith.constant dense<0xFF800000> : vector<16xf32>
    %235 = vector.multi_reduction <maximumf>, %234, %cst_65 [1] : vector<16x16xf32> to vector<16xf32>
    %236 = vector.shape_cast %235 : vector<16xf32> to vector<16x1xf32>
    %237 = vector.broadcast %236 : vector<16x1xf32> to vector<16x16xf32>
    %238 = arith.subf %234, %237 : vector<16x16xf32>
    %239 = math.exp %238 : vector<16x16xf32>
    %cst_66 = arith.constant dense<0.000000e+00> : vector<16xf32>
    %240 = vector.multi_reduction <add>, %239, %cst_66 [1] : vector<16x16xf32> to vector<16xf32>
    %241 = vector.shape_cast %240 : vector<16xf32> to vector<16x1xf32>
    %242 = tpu.reciprocal %241 {approx = true} : vector<16x1xf32> -> vector<16x1xf32>
    %243 = vector.broadcast %242 : vector<16x1xf32> to vector<16x16xf32>
    %244 = arith.mulf %239, %243 : vector<16x16xf32>
    %245 = tpu.concatenate %163, %190, %217, %244 in 1 : vector<16x16xf32>, vector<16x16xf32>, vector<16x16xf32>, vector<16x16xf32> -> vector<16x64xf32>
    %246 = tpu.concatenate %137, %164, %191, %218 in 0 : vector<16x6xf32>, vector<16x6xf32>, vector<16x6xf32>, vector<16x6xf32> -> vector<64x6xf32>
    %cst_67 = arith.constant dense<0.000000e+00> : vector<16x6xf32>
    %247 = tpu.matmul %245, %246, %cst_67 {dimension_numbers = #tpu.dot_dimension_numbers<[1], [0], [0], [1], [0, 0, 1, 1], [], []>} : vector<16x64xf32>, vector<64x6xf32>, vector<16x6xf32> -> vector<16x6xf32>
    %248 = vector.extract_strided_slice %16 {offsets = [0, 56], sizes = [16, 8], strides = [1, 1]} : vector<16x112xf32> to vector<16x8xf32>
    %249 = vector.extract_strided_slice %21 {offsets = [0, 56], sizes = [16, 8], strides = [1, 1]} : vector<16x112xf32> to vector<16x8xf32>
    %250 = vector.extract_strided_slice %22 {offsets = [8, 0], sizes = [1, 8], strides = [1, 1]} : vector<16x8xf32> to vector<1x8xf32>
    %251 = vector.shape_cast %249 : vector<16x8xf32> to vector<16x1x8xf32>
    %252 = vector.shape_cast %248 : vector<16x8xf32> to vector<1x16x8xf32>
    %253 = vector.broadcast %251 : vector<16x1x8xf32> to vector<16x16x8xf32>
    %254 = vector.broadcast %252 : vector<1x16x8xf32> to vector<16x16x8xf32>
    %255 = arith.addf %253, %254 : vector<16x16x8xf32>
    %cst_68 = arith.constant 2.000000e-01 : f32
    %256 = vector.broadcast %cst_68 : f32 to vector<16x16x8xf32>
    %257 = arith.mulf %256, %255 : vector<16x16x8xf32>
    %258 = arith.maximumf %255, %257 : vector<16x16x8xf32>
    %259 = vector.shape_cast %250 : vector<1x8xf32> to vector<1x1x8xf32>
    %260 = vector.broadcast %259 : vector<1x1x8xf32> to vector<16x16x8xf32>
    %261 = arith.mulf %258, %260 : vector<16x16x8xf32>
    %cst_69 = arith.constant dense<0.000000e+00> : vector<16x16xf32>
    %262 = vector.multi_reduction <add>, %261, %cst_69 [2] : vector<16x16x8xf32> to vector<16x16xf32>
    %cst_70 = arith.constant -1.000000e+30 : f32
    %263 = vector.broadcast %cst_70 : f32 to vector<16x16xf32>
    %264 = arith.select %25, %262, %263 : vector<16x16xi1>, vector<16x16xf32>
    %cst_71 = arith.constant dense<0xFF800000> : vector<16xf32>
    %265 = vector.multi_reduction <maximumf>, %264, %cst_71 [1] : vector<16x16xf32> to vector<16xf32>
    %266 = vector.shape_cast %265 : vector<16xf32> to vector<16x1xf32>
    %267 = vector.broadcast %266 : vector<16x1xf32> to vector<16x16xf32>
    %268 = arith.subf %264, %267 : vector<16x16xf32>
    %269 = math.exp %268 : vector<16x16xf32>
    %cst_72 = arith.constant dense<0.000000e+00> : vector<16xf32>
    %270 = vector.multi_reduction <add>, %269, %cst_72 [1] : vector<16x16xf32> to vector<16xf32>
    %271 = vector.shape_cast %270 : vector<16xf32> to vector<16x1xf32>
    %272 = tpu.reciprocal %271 {approx = true} : vector<16x1xf32> -> vector<16x1xf32>
    %273 = vector.broadcast %272 : vector<16x1xf32> to vector<16x16xf32>
    %274 = arith.mulf %269, %273 : vector<16x16xf32>
    %275 = vector.extract_strided_slice %16 {offsets = [0, 64], sizes = [16, 8], strides = [1, 1]} : vector<16x112xf32> to vector<16x8xf32>
    %276 = vector.extract_strided_slice %21 {offsets = [0, 64], sizes = [16, 8], strides = [1, 1]} : vector<16x112xf32> to vector<16x8xf32>
    %277 = vector.extract_strided_slice %22 {offsets = [9, 0], sizes = [1, 8], strides = [1, 1]} : vector<16x8xf32> to vector<1x8xf32>
    %278 = vector.shape_cast %276 : vector<16x8xf32> to vector<16x1x8xf32>
    %279 = vector.shape_cast %275 : vector<16x8xf32> to vector<1x16x8xf32>
    %280 = vector.broadcast %278 : vector<16x1x8xf32> to vector<16x16x8xf32>
    %281 = vector.broadcast %279 : vector<1x16x8xf32> to vector<16x16x8xf32>
    %282 = arith.addf %280, %281 : vector<16x16x8xf32>
    %cst_73 = arith.constant 2.000000e-01 : f32
    %283 = vector.broadcast %cst_73 : f32 to vector<16x16x8xf32>
    %284 = arith.mulf %283, %282 : vector<16x16x8xf32>
    %285 = arith.maximumf %282, %284 : vector<16x16x8xf32>
    %286 = vector.shape_cast %277 : vector<1x8xf32> to vector<1x1x8xf32>
    %287 = vector.broadcast %286 : vector<1x1x8xf32> to vector<16x16x8xf32>
    %288 = arith.mulf %285, %287 : vector<16x16x8xf32>
    %cst_74 = arith.constant dense<0.000000e+00> : vector<16x16xf32>
    %289 = vector.multi_reduction <add>, %288, %cst_74 [2] : vector<16x16x8xf32> to vector<16x16xf32>
    %cst_75 = arith.constant -1.000000e+30 : f32
    %290 = vector.broadcast %cst_75 : f32 to vector<16x16xf32>
    %291 = arith.select %25, %289, %290 : vector<16x16xi1>, vector<16x16xf32>
    %cst_76 = arith.constant dense<0xFF800000> : vector<16xf32>
    %292 = vector.multi_reduction <maximumf>, %291, %cst_76 [1] : vector<16x16xf32> to vector<16xf32>
    %293 = vector.shape_cast %292 : vector<16xf32> to vector<16x1xf32>
    %294 = vector.broadcast %293 : vector<16x1xf32> to vector<16x16xf32>
    %295 = arith.subf %291, %294 : vector<16x16xf32>
    %296 = math.exp %295 : vector<16x16xf32>
    %cst_77 = arith.constant dense<0.000000e+00> : vector<16xf32>
    %297 = vector.multi_reduction <add>, %296, %cst_77 [1] : vector<16x16xf32> to vector<16xf32>
    %298 = vector.shape_cast %297 : vector<16xf32> to vector<16x1xf32>
    %299 = tpu.reciprocal %298 {approx = true} : vector<16x1xf32> -> vector<16x1xf32>
    %300 = vector.broadcast %299 : vector<16x1xf32> to vector<16x16xf32>
    %301 = arith.mulf %296, %300 : vector<16x16xf32>
    %302 = vector.extract_strided_slice %16 {offsets = [0, 72], sizes = [16, 8], strides = [1, 1]} : vector<16x112xf32> to vector<16x8xf32>
    %303 = vector.extract_strided_slice %21 {offsets = [0, 72], sizes = [16, 8], strides = [1, 1]} : vector<16x112xf32> to vector<16x8xf32>
    %304 = vector.extract_strided_slice %22 {offsets = [10, 0], sizes = [1, 8], strides = [1, 1]} : vector<16x8xf32> to vector<1x8xf32>
    %305 = vector.shape_cast %303 : vector<16x8xf32> to vector<16x1x8xf32>
    %306 = vector.shape_cast %302 : vector<16x8xf32> to vector<1x16x8xf32>
    %307 = vector.broadcast %305 : vector<16x1x8xf32> to vector<16x16x8xf32>
    %308 = vector.broadcast %306 : vector<1x16x8xf32> to vector<16x16x8xf32>
    %309 = arith.addf %307, %308 : vector<16x16x8xf32>
    %cst_78 = arith.constant 2.000000e-01 : f32
    %310 = vector.broadcast %cst_78 : f32 to vector<16x16x8xf32>
    %311 = arith.mulf %310, %309 : vector<16x16x8xf32>
    %312 = arith.maximumf %309, %311 : vector<16x16x8xf32>
    %313 = vector.shape_cast %304 : vector<1x8xf32> to vector<1x1x8xf32>
    %314 = vector.broadcast %313 : vector<1x1x8xf32> to vector<16x16x8xf32>
    %315 = arith.mulf %312, %314 : vector<16x16x8xf32>
    %cst_79 = arith.constant dense<0.000000e+00> : vector<16x16xf32>
    %316 = vector.multi_reduction <add>, %315, %cst_79 [2] : vector<16x16x8xf32> to vector<16x16xf32>
    %cst_80 = arith.constant -1.000000e+30 : f32
    %317 = vector.broadcast %cst_80 : f32 to vector<16x16xf32>
    %318 = arith.select %25, %316, %317 : vector<16x16xi1>, vector<16x16xf32>
    %cst_81 = arith.constant dense<0xFF800000> : vector<16xf32>
    %319 = vector.multi_reduction <maximumf>, %318, %cst_81 [1] : vector<16x16xf32> to vector<16xf32>
    %320 = vector.shape_cast %319 : vector<16xf32> to vector<16x1xf32>
    %321 = vector.broadcast %320 : vector<16x1xf32> to vector<16x16xf32>
    %322 = arith.subf %318, %321 : vector<16x16xf32>
    %323 = math.exp %322 : vector<16x16xf32>
    %cst_82 = arith.constant dense<0.000000e+00> : vector<16xf32>
    %324 = vector.multi_reduction <add>, %323, %cst_82 [1] : vector<16x16xf32> to vector<16xf32>
    %325 = vector.shape_cast %324 : vector<16xf32> to vector<16x1xf32>
    %326 = tpu.reciprocal %325 {approx = true} : vector<16x1xf32> -> vector<16x1xf32>
    %327 = vector.broadcast %326 : vector<16x1xf32> to vector<16x16xf32>
    %328 = arith.mulf %323, %327 : vector<16x16xf32>
    %329 = vector.extract_strided_slice %16 {offsets = [0, 80], sizes = [16, 8], strides = [1, 1]} : vector<16x112xf32> to vector<16x8xf32>
    %330 = vector.extract_strided_slice %21 {offsets = [0, 80], sizes = [16, 8], strides = [1, 1]} : vector<16x112xf32> to vector<16x8xf32>
    %331 = vector.extract_strided_slice %22 {offsets = [11, 0], sizes = [1, 8], strides = [1, 1]} : vector<16x8xf32> to vector<1x8xf32>
    %332 = vector.shape_cast %330 : vector<16x8xf32> to vector<16x1x8xf32>
    %333 = vector.shape_cast %329 : vector<16x8xf32> to vector<1x16x8xf32>
    %334 = vector.broadcast %332 : vector<16x1x8xf32> to vector<16x16x8xf32>
    %335 = vector.broadcast %333 : vector<1x16x8xf32> to vector<16x16x8xf32>
    %336 = arith.addf %334, %335 : vector<16x16x8xf32>
    %cst_83 = arith.constant 2.000000e-01 : f32
    %337 = vector.broadcast %cst_83 : f32 to vector<16x16x8xf32>
    %338 = arith.mulf %337, %336 : vector<16x16x8xf32>
    %339 = arith.maximumf %336, %338 : vector<16x16x8xf32>
    %340 = vector.shape_cast %331 : vector<1x8xf32> to vector<1x1x8xf32>
    %341 = vector.broadcast %340 : vector<1x1x8xf32> to vector<16x16x8xf32>
    %342 = arith.mulf %339, %341 : vector<16x16x8xf32>
    %cst_84 = arith.constant dense<0.000000e+00> : vector<16x16xf32>
    %343 = vector.multi_reduction <add>, %342, %cst_84 [2] : vector<16x16x8xf32> to vector<16x16xf32>
    %cst_85 = arith.constant -1.000000e+30 : f32
    %344 = vector.broadcast %cst_85 : f32 to vector<16x16xf32>
    %345 = arith.select %25, %343, %344 : vector<16x16xi1>, vector<16x16xf32>
    %cst_86 = arith.constant dense<0xFF800000> : vector<16xf32>
    %346 = vector.multi_reduction <maximumf>, %345, %cst_86 [1] : vector<16x16xf32> to vector<16xf32>
    %347 = vector.shape_cast %346 : vector<16xf32> to vector<16x1xf32>
    %348 = vector.broadcast %347 : vector<16x1xf32> to vector<16x16xf32>
    %349 = arith.subf %345, %348 : vector<16x16xf32>
    %350 = math.exp %349 : vector<16x16xf32>
    %cst_87 = arith.constant dense<0.000000e+00> : vector<16xf32>
    %351 = vector.multi_reduction <add>, %350, %cst_87 [1] : vector<16x16xf32> to vector<16xf32>
    %352 = vector.shape_cast %351 : vector<16xf32> to vector<16x1xf32>
    %353 = tpu.reciprocal %352 {approx = true} : vector<16x1xf32> -> vector<16x1xf32>
    %354 = vector.broadcast %353 : vector<16x1xf32> to vector<16x16xf32>
    %355 = arith.mulf %350, %354 : vector<16x16xf32>
    %356 = tpu.concatenate %274, %301, %328, %355 in 1 : vector<16x16xf32>, vector<16x16xf32>, vector<16x16xf32>, vector<16x16xf32> -> vector<16x64xf32>
    %357 = tpu.concatenate %248, %275, %302, %329 in 0 : vector<16x8xf32>, vector<16x8xf32>, vector<16x8xf32>, vector<16x8xf32> -> vector<64x8xf32>
    %cst_88 = arith.constant dense<0.000000e+00> : vector<16x8xf32>
    %358 = tpu.matmul %356, %357, %cst_88 {dimension_numbers = #tpu.dot_dimension_numbers<[1], [0], [0], [1], [0, 0, 1, 1], [], []>} : vector<16x64xf32>, vector<64x8xf32>, vector<16x8xf32> -> vector<16x8xf32>
    %359 = vector.extract_strided_slice %16 {offsets = [0, 88], sizes = [16, 6], strides = [1, 1]} : vector<16x112xf32> to vector<16x6xf32>
    %360 = vector.extract_strided_slice %21 {offsets = [0, 88], sizes = [16, 6], strides = [1, 1]} : vector<16x112xf32> to vector<16x6xf32>
    %361 = vector.extract_strided_slice %22 {offsets = [12, 0], sizes = [1, 6], strides = [1, 1]} : vector<16x8xf32> to vector<1x6xf32>
    %362 = vector.shape_cast %360 : vector<16x6xf32> to vector<16x1x6xf32>
    %363 = vector.shape_cast %359 : vector<16x6xf32> to vector<1x16x6xf32>
    %364 = vector.broadcast %362 : vector<16x1x6xf32> to vector<16x16x6xf32>
    %365 = vector.broadcast %363 : vector<1x16x6xf32> to vector<16x16x6xf32>
    %366 = arith.addf %364, %365 : vector<16x16x6xf32>
    %cst_89 = arith.constant 2.000000e-01 : f32
    %367 = vector.broadcast %cst_89 : f32 to vector<16x16x6xf32>
    %368 = arith.mulf %367, %366 : vector<16x16x6xf32>
    %369 = arith.maximumf %366, %368 : vector<16x16x6xf32>
    %370 = vector.shape_cast %361 : vector<1x6xf32> to vector<1x1x6xf32>
    %371 = vector.broadcast %370 : vector<1x1x6xf32> to vector<16x16x6xf32>
    %372 = arith.mulf %369, %371 : vector<16x16x6xf32>
    %cst_90 = arith.constant dense<0.000000e+00> : vector<16x16xf32>
    %373 = vector.multi_reduction <add>, %372, %cst_90 [2] : vector<16x16x6xf32> to vector<16x16xf32>
    %cst_91 = arith.constant -1.000000e+30 : f32
    %374 = vector.broadcast %cst_91 : f32 to vector<16x16xf32>
    %375 = arith.select %25, %373, %374 : vector<16x16xi1>, vector<16x16xf32>
    %cst_92 = arith.constant dense<0xFF800000> : vector<16xf32>
    %376 = vector.multi_reduction <maximumf>, %375, %cst_92 [1] : vector<16x16xf32> to vector<16xf32>
    %377 = vector.shape_cast %376 : vector<16xf32> to vector<16x1xf32>
    %378 = vector.broadcast %377 : vector<16x1xf32> to vector<16x16xf32>
    %379 = arith.subf %375, %378 : vector<16x16xf32>
    %380 = math.exp %379 : vector<16x16xf32>
    %cst_93 = arith.constant dense<0.000000e+00> : vector<16xf32>
    %381 = vector.multi_reduction <add>, %380, %cst_93 [1] : vector<16x16xf32> to vector<16xf32>
    %382 = vector.shape_cast %381 : vector<16xf32> to vector<16x1xf32>
    %383 = tpu.reciprocal %382 {approx = true} : vector<16x1xf32> -> vector<16x1xf32>
    %384 = vector.broadcast %383 : vector<16x1xf32> to vector<16x16xf32>
    %385 = arith.mulf %380, %384 : vector<16x16xf32>
    %386 = vector.extract_strided_slice %16 {offsets = [0, 94], sizes = [16, 6], strides = [1, 1]} : vector<16x112xf32> to vector<16x6xf32>
    %387 = vector.extract_strided_slice %21 {offsets = [0, 94], sizes = [16, 6], strides = [1, 1]} : vector<16x112xf32> to vector<16x6xf32>
    %388 = vector.extract_strided_slice %22 {offsets = [13, 0], sizes = [1, 6], strides = [1, 1]} : vector<16x8xf32> to vector<1x6xf32>
    %389 = vector.shape_cast %387 : vector<16x6xf32> to vector<16x1x6xf32>
    %390 = vector.shape_cast %386 : vector<16x6xf32> to vector<1x16x6xf32>
    %391 = vector.broadcast %389 : vector<16x1x6xf32> to vector<16x16x6xf32>
    %392 = vector.broadcast %390 : vector<1x16x6xf32> to vector<16x16x6xf32>
    %393 = arith.addf %391, %392 : vector<16x16x6xf32>
    %cst_94 = arith.constant 2.000000e-01 : f32
    %394 = vector.broadcast %cst_94 : f32 to vector<16x16x6xf32>
    %395 = arith.mulf %394, %393 : vector<16x16x6xf32>
    %396 = arith.maximumf %393, %395 : vector<16x16x6xf32>
    %397 = vector.shape_cast %388 : vector<1x6xf32> to vector<1x1x6xf32>
    %398 = vector.broadcast %397 : vector<1x1x6xf32> to vector<16x16x6xf32>
    %399 = arith.mulf %396, %398 : vector<16x16x6xf32>
    %cst_95 = arith.constant dense<0.000000e+00> : vector<16x16xf32>
    %400 = vector.multi_reduction <add>, %399, %cst_95 [2] : vector<16x16x6xf32> to vector<16x16xf32>
    %cst_96 = arith.constant -1.000000e+30 : f32
    %401 = vector.broadcast %cst_96 : f32 to vector<16x16xf32>
    %402 = arith.select %25, %400, %401 : vector<16x16xi1>, vector<16x16xf32>
    %cst_97 = arith.constant dense<0xFF800000> : vector<16xf32>
    %403 = vector.multi_reduction <maximumf>, %402, %cst_97 [1] : vector<16x16xf32> to vector<16xf32>
    %404 = vector.shape_cast %403 : vector<16xf32> to vector<16x1xf32>
    %405 = vector.broadcast %404 : vector<16x1xf32> to vector<16x16xf32>
    %406 = arith.subf %402, %405 : vector<16x16xf32>
    %407 = math.exp %406 : vector<16x16xf32>
    %cst_98 = arith.constant dense<0.000000e+00> : vector<16xf32>
    %408 = vector.multi_reduction <add>, %407, %cst_98 [1] : vector<16x16xf32> to vector<16xf32>
    %409 = vector.shape_cast %408 : vector<16xf32> to vector<16x1xf32>
    %410 = tpu.reciprocal %409 {approx = true} : vector<16x1xf32> -> vector<16x1xf32>
    %411 = vector.broadcast %410 : vector<16x1xf32> to vector<16x16xf32>
    %412 = arith.mulf %407, %411 : vector<16x16xf32>
    %413 = vector.extract_strided_slice %16 {offsets = [0, 100], sizes = [16, 6], strides = [1, 1]} : vector<16x112xf32> to vector<16x6xf32>
    %414 = vector.extract_strided_slice %21 {offsets = [0, 100], sizes = [16, 6], strides = [1, 1]} : vector<16x112xf32> to vector<16x6xf32>
    %415 = vector.extract_strided_slice %22 {offsets = [14, 0], sizes = [1, 6], strides = [1, 1]} : vector<16x8xf32> to vector<1x6xf32>
    %416 = vector.shape_cast %414 : vector<16x6xf32> to vector<16x1x6xf32>
    %417 = vector.shape_cast %413 : vector<16x6xf32> to vector<1x16x6xf32>
    %418 = vector.broadcast %416 : vector<16x1x6xf32> to vector<16x16x6xf32>
    %419 = vector.broadcast %417 : vector<1x16x6xf32> to vector<16x16x6xf32>
    %420 = arith.addf %418, %419 : vector<16x16x6xf32>
    %cst_99 = arith.constant 2.000000e-01 : f32
    %421 = vector.broadcast %cst_99 : f32 to vector<16x16x6xf32>
    %422 = arith.mulf %421, %420 : vector<16x16x6xf32>
    %423 = arith.maximumf %420, %422 : vector<16x16x6xf32>
    %424 = vector.shape_cast %415 : vector<1x6xf32> to vector<1x1x6xf32>
    %425 = vector.broadcast %424 : vector<1x1x6xf32> to vector<16x16x6xf32>
    %426 = arith.mulf %423, %425 : vector<16x16x6xf32>
    %cst_100 = arith.constant dense<0.000000e+00> : vector<16x16xf32>
    %427 = vector.multi_reduction <add>, %426, %cst_100 [2] : vector<16x16x6xf32> to vector<16x16xf32>
    %cst_101 = arith.constant -1.000000e+30 : f32
    %428 = vector.broadcast %cst_101 : f32 to vector<16x16xf32>
    %429 = arith.select %25, %427, %428 : vector<16x16xi1>, vector<16x16xf32>
    %cst_102 = arith.constant dense<0xFF800000> : vector<16xf32>
    %430 = vector.multi_reduction <maximumf>, %429, %cst_102 [1] : vector<16x16xf32> to vector<16xf32>
    %431 = vector.shape_cast %430 : vector<16xf32> to vector<16x1xf32>
    %432 = vector.broadcast %431 : vector<16x1xf32> to vector<16x16xf32>
    %433 = arith.subf %429, %432 : vector<16x16xf32>
    %434 = math.exp %433 : vector<16x16xf32>
    %cst_103 = arith.constant dense<0.000000e+00> : vector<16xf32>
    %435 = vector.multi_reduction <add>, %434, %cst_103 [1] : vector<16x16xf32> to vector<16xf32>
    %436 = vector.shape_cast %435 : vector<16xf32> to vector<16x1xf32>
    %437 = tpu.reciprocal %436 {approx = true} : vector<16x1xf32> -> vector<16x1xf32>
    %438 = vector.broadcast %437 : vector<16x1xf32> to vector<16x16xf32>
    %439 = arith.mulf %434, %438 : vector<16x16xf32>
    %440 = vector.extract_strided_slice %16 {offsets = [0, 106], sizes = [16, 6], strides = [1, 1]} : vector<16x112xf32> to vector<16x6xf32>
    %441 = vector.extract_strided_slice %21 {offsets = [0, 106], sizes = [16, 6], strides = [1, 1]} : vector<16x112xf32> to vector<16x6xf32>
    %442 = vector.extract_strided_slice %22 {offsets = [15, 0], sizes = [1, 6], strides = [1, 1]} : vector<16x8xf32> to vector<1x6xf32>
    %443 = vector.shape_cast %441 : vector<16x6xf32> to vector<16x1x6xf32>
    %444 = vector.shape_cast %440 : vector<16x6xf32> to vector<1x16x6xf32>
    %445 = vector.broadcast %443 : vector<16x1x6xf32> to vector<16x16x6xf32>
    %446 = vector.broadcast %444 : vector<1x16x6xf32> to vector<16x16x6xf32>
    %447 = arith.addf %445, %446 : vector<16x16x6xf32>
    %cst_104 = arith.constant 2.000000e-01 : f32
    %448 = vector.broadcast %cst_104 : f32 to vector<16x16x6xf32>
    %449 = arith.mulf %448, %447 : vector<16x16x6xf32>
    %450 = arith.maximumf %447, %449 : vector<16x16x6xf32>
    %451 = vector.shape_cast %442 : vector<1x6xf32> to vector<1x1x6xf32>
    %452 = vector.broadcast %451 : vector<1x1x6xf32> to vector<16x16x6xf32>
    %453 = arith.mulf %450, %452 : vector<16x16x6xf32>
    %cst_105 = arith.constant dense<0.000000e+00> : vector<16x16xf32>
    %454 = vector.multi_reduction <add>, %453, %cst_105 [2] : vector<16x16x6xf32> to vector<16x16xf32>
    %cst_106 = arith.constant -1.000000e+30 : f32
    %455 = vector.broadcast %cst_106 : f32 to vector<16x16xf32>
    %456 = arith.select %25, %454, %455 : vector<16x16xi1>, vector<16x16xf32>
    %cst_107 = arith.constant dense<0xFF800000> : vector<16xf32>
    %457 = vector.multi_reduction <maximumf>, %456, %cst_107 [1] : vector<16x16xf32> to vector<16xf32>
    %458 = vector.shape_cast %457 : vector<16xf32> to vector<16x1xf32>
    %459 = vector.broadcast %458 : vector<16x1xf32> to vector<16x16xf32>
    %460 = arith.subf %456, %459 : vector<16x16xf32>
    %461 = math.exp %460 : vector<16x16xf32>
    %cst_108 = arith.constant dense<0.000000e+00> : vector<16xf32>
    %462 = vector.multi_reduction <add>, %461, %cst_108 [1] : vector<16x16xf32> to vector<16xf32>
    %463 = vector.shape_cast %462 : vector<16xf32> to vector<16x1xf32>
    %464 = tpu.reciprocal %463 {approx = true} : vector<16x1xf32> -> vector<16x1xf32>
    %465 = vector.broadcast %464 : vector<16x1xf32> to vector<16x16xf32>
    %466 = arith.mulf %461, %465 : vector<16x16xf32>
    %467 = tpu.concatenate %385, %412, %439, %466 in 1 : vector<16x16xf32>, vector<16x16xf32>, vector<16x16xf32>, vector<16x16xf32> -> vector<16x64xf32>
    %468 = tpu.concatenate %359, %386, %413, %440 in 0 : vector<16x6xf32>, vector<16x6xf32>, vector<16x6xf32>, vector<16x6xf32> -> vector<64x6xf32>
    %cst_109 = arith.constant dense<0.000000e+00> : vector<16x6xf32>
    %469 = tpu.matmul %467, %468, %cst_109 {dimension_numbers = #tpu.dot_dimension_numbers<[1], [0], [0], [1], [0, 0, 1, 1], [], []>} : vector<16x64xf32>, vector<64x6xf32>, vector<16x6xf32> -> vector<16x6xf32>
    %cst_110 = arith.constant 0.000000e+00 : f32
    %470 = vector.broadcast %cst_110 : f32 to vector<16x100xf32>
    %471 = tpu.concatenate %136, %247, %358, %469, %470 in 1 : vector<16x8xf32>, vector<16x6xf32>, vector<16x8xf32>, vector<16x6xf32>, vector<16x100xf32> -> vector<16x128xf32>
    %cst_111 = arith.constant 2.500000e-01 : f32
    %472 = vector.broadcast %cst_111 : f32 to vector<16x128xf32>
    %473 = arith.mulf %471, %472 : vector<16x128xf32>
    %c0_112 = arith.constant 0 : index
    %c0_113 = arith.constant 0 : index
    %474 = vector.load %arg11[%c0_112, %c0_113] : memref<1x128xf32, #tpu.memory_space<vmem>>, vector<1x128xf32>
    %475 = vector.broadcast %474 : vector<1x128xf32> to vector<16x128xf32>
    %476 = arith.addf %473, %475 : vector<16x128xf32>
    %c0_114 = arith.constant 0 : index
    %c0_115 = arith.constant 0 : index
    %477 = vector.load %arg12[%c0_114, %c0_115] : memref<16x128xf32, #tpu.memory_space<vmem>>, vector<16x128xf32>
    tpu.vector_store %arg12[%c0_114, %c0_115], %476 {strides = array<i32>} : memref<16x128xf32, #tpu.memory_space<vmem>>, vector<16x128xf32>,
    return
  }
}

</mosaic_0001>

<llo_original>
// kernel: tpu_custom_call.1
$region0: #{tpu_custom_call.1}
  #allocation0 [shape = 'u32[]', space=smem, size = 0x4, offset = 0x4, fixed_abs, tag = 'smem constant byte address 0x4 - core index']
  #allocation1 [shape = 'u32[144,128]{1,0:T(1,128)}', space=vmem, size = 0x12000, scoped, tag = 'internal scratch']
  %s0 = inlined_call_operand.hbm [shape: f32[16,20], index: 0, kind: input, shape index: {}]
  %s1 = inlined_call_operand.hbm [shape: f32[16,12], index: 1, kind: input, shape index: {}]
  %s2 = inlined_call_operand.hbm [shape: f32[20,32], index: 2, kind: input, shape index: {}]
  %s3 = inlined_call_operand.hbm [shape: f32[12,32], index: 3, kind: input, shape index: {}]
  %s4 = inlined_call_operand.hbm [shape: f32[1,32], index: 4, kind: input, shape index: {}]
  %s5 = inlined_call_operand.vmem [shape: f32[32,112], index: 5, kind: input, shape index: {}]
  %s6 = inlined_call_operand.hbm [shape: f32[1,112], index: 6, kind: input, shape index: {}]
  %s7 = inlined_call_operand.hbm [shape: f32[32,112], index: 7, kind: input, shape index: {}]
  %s8 = inlined_call_operand.hbm [shape: f32[1,112], index: 8, kind: input, shape index: {}]
  %s9 = inlined_call_operand.vmem [shape: f32[16,8], index: 9, kind: input, shape index: {}]
  %s10 = inlined_call_operand.hbm [shape: f32[16,16], index: 10, kind: input, shape index: {}]
  %s11 = inlined_call_operand.vmem [shape: f32[1,128], index: 11, kind: input, shape index: {}]
  %s12 = inlined_call_operand.hbm [shape: f32[16,128], index: 12, kind: output, shape index: {}]
  %s13 = sld [smem:[#allocation0]]
  $region94: #{tpu_custom_call.1} parent=0
    _
  %s15 = ssub.s32 1, %s13
  %s16 = scalar_select 0, %s15, %s13
  $region1: #{tpu_custom_call.1} parent=0
    #allocation2 [shape = 'u8[8192]{0}', space=vmem, size = 0x2000, scoped, tag = 'input window, operand 0, single buffered']
    #allocation3 [shape = 's32[1]{0}', space=sflag, size = 0x4, scoped, tag = 'scoped memory for tpu_custom_call.1']
    #allocation4 [shape = 's32[1]{0}', space=sflag, size = 0x4, scoped, tag = 'scoped memory for tpu_custom_call.1']
    #allocation5 [shape = 'u8[8192]{0}', space=vmem, size = 0x2000, scoped, tag = 'input window, operand 1, single buffered']
    #allocation6 [shape = 's32[1]{0}', space=sflag, size = 0x4, scoped, tag = 'scoped memory for tpu_custom_call.1']
    #allocation7 [shape = 'u8[12288]{0}', space=vmem, size = 0x3000, scoped, tag = 'input window, operand 2, single buffered']
    #allocation8 [shape = 'u8[8192]{0}', space=vmem, size = 0x2000, scoped, tag = 'input window, operand 3, single buffered']
    #allocation9 [shape = 's32[1]{0}', space=sflag, size = 0x4, scoped, tag = 'scoped memory for tpu_custom_call.1']
    #allocation10 [shape = 'u8[512]{0}', space=vmem, size = 0x400, scoped, tag = 'input window, operand 4, single buffered']
    #allocation11 [shape = 'u8[512]{0}', space=vmem, size = 0x400, scoped, tag = 'input window, operand 6, single buffered']
    #allocation12 [shape = 's32[1]{0}', space=sflag, size = 0x4, scoped, tag = 'scoped memory for tpu_custom_call.1']
    #allocation13 [shape = 'u8[16384]{0}', space=vmem, size = 0x4000, scoped, tag = 'input window, operand 7, single buffered']
    #allocation14 [shape = 'u8[512]{0}', space=vmem, size = 0x400, scoped, tag = 'input window, operand 8, single buffered']
    #allocation15 [shape = 's32[1]{0}', space=sflag, size = 0x4, scoped, tag = 'scoped memory for tpu_custom_call.1']
    #allocation16 [shape = 'u8[8192]{0}', space=vmem, size = 0x2000, scoped, tag = 'input window, operand 10, single buffered']
    #allocation17 [shape = 'u8[8192]{0}', space=vmem, size = 0x2000, scoped, tag = 'output window, operand 0, single buffered']
    %17 = vsyncpa [#allocation3], 0
    %18 = vsyncpa [#allocation6], 0
    %19 = vsyncpa [#allocation9], 0
    %20 = vsyncpa [#allocation12], 0
    %21 = vsyncpa [#allocation15], 0
    %22 = vsyncpa [#allocation4], 0
    // Predicated region
    $region2: #{tpu_custom_call.1} parent=1 // pred_check
      _
    $region3: #{tpu_custom_call.1} parent=1 // pred_check_branch
      %24 = sbr.rel (0) target = $region5
    $region4: #{tpu_custom_call.1} parent=1 // pred_region
      %s26 = ssub.s32 256, 256
      %27 = vsyncadd [#allocation3], %s26
      %s28 = sshll.u32 [#allocation2], 4
      %s29 = int_to_ptr.vmem [resolvable:$true] %s28
      %34 = dma.hbm_to_vmem [thread:$0]  %s0, 256, %s29, [#allocation3], 128, 128, 8
    $region5: #{tpu_custom_call.1} parent=1 // pred_fallthru
      _
    // Predicated region
    $region6: #{tpu_custom_call.1} parent=1 // pred_check
      _
    $region7: #{tpu_custom_call.1} parent=1 // pred_check_branch
      %36 = sbr.rel (0) target = $region9
    $region8: #{tpu_custom_call.1} parent=1 // pred_region
      %s38 = ssub.s32 256, 256
      %39 = vsyncadd [#allocation6], %s38
      %s40 = sshll.u32 [#allocation5], 4
      %s41 = int_to_ptr.vmem [resolvable:$true] %s40
      %46 = dma.hbm_to_vmem [thread:$0]  %s1, 256, %s41, [#allocation6], 128, 128, 8
    $region9: #{tpu_custom_call.1} parent=1 // pred_fallthru
      _
    // Predicated region
    $region10: #{tpu_custom_call.1} parent=1 // pred_check
      _
    $region11: #{tpu_custom_call.1} parent=1 // pred_check_branch
      %48 = sbr.rel (0) target = $region13
    $region12: #{tpu_custom_call.1} parent=1 // pred_region
      %s50 = ssub.s32 384, 384
      %51 = vsyncadd [#allocation6], %s50
      %s52 = sshll.u32 [#allocation7], 4
      %s53 = int_to_ptr.vmem [resolvable:$true] %s52
      %58 = dma.hbm_to_vmem [thread:$0]  %s2, 384, %s53, [#allocation6], 128, 128, 8
    $region13: #{tpu_custom_call.1} parent=1 // pred_fallthru
      _
    // Predicated region
    $region14: #{tpu_custom_call.1} parent=1 // pred_check
      _
    $region15: #{tpu_custom_call.1} parent=1 // pred_check_branch
      %60 = sbr.rel (0) target = $region17
    $region16: #{tpu_custom_call.1} parent=1 // pred_region
      %s62 = ssub.s32 256, 256
      %63 = vsyncadd [#allocation9], %s62
      %s64 = sshll.u32 [#allocation8], 4
      %s65 = int_to_ptr.vmem [resolvable:$true] %s64
      %70 = dma.hbm_to_vmem [thread:$0]  %s3, 256, %s65, [#allocation9], 128, 128, 8
    $region17: #{tpu_custom_call.1} parent=1 // pred_fallthru
      _
    // Predicated region
    $region18: #{tpu_custom_call.1} parent=1 // pred_check
      _
    $region19: #{tpu_custom_call.1} parent=1 // pred_check_branch
      %72 = sbr.rel (0) target = $region21
    $region20: #{tpu_custom_call.1} parent=1 // pred_region
      %s74 = ssub.s32 16, 16
      %75 = vsyncadd [#allocation9], %s74
      %s77 = sshll.u32 [#allocation10], 4
      %s78 = int_to_ptr.vmem [resolvable:$true] %s77
      %80 = dma.hbm_to_vmem [thread:$0]  %s4, 16, %s78, [#allocation9]
    $region21: #{tpu_custom_call.1} parent=1 // pred_fallthru
      _
    // Predicated region
    $region22: #{tpu_custom_call.1} parent=1 // pred_check
      _
    $region23: #{tpu_custom_call.1} parent=1 // pred_check_branch
      %82 = sbr.rel (0) target = $region25
    $region24: #{tpu_custom_call.1} parent=1 // pred_region
      _
    $region25: #{tpu_custom_call.1} parent=1 // pred_fallthru
      _
    // Predicated region
    $region26: #{tpu_custom_call.1} parent=1 // pred_check
      _
    $region27: #{tpu_custom_call.1} parent=1 // pred_check_branch
      %84 = sbr.rel (0) target = $region29
    $region28: #{tpu_custom_call.1} parent=1 // pred_region
      %s86 = ssub.s32 16, 16
      %87 = vsyncadd [#allocation12], %s86
      %s89 = sshll.u32 [#allocation11], 4
      %s90 = int_to_ptr.vmem [resolvable:$true] %s89
      %92 = dma.hbm_to_vmem [thread:$0]  %s6, 16, %s90, [#allocation12]
    $region29: #{tpu_custom_call.1} parent=1 // pred_fallthru
      _
    // Predicated region
    $region30: #{tpu_custom_call.1} parent=1 // pred_check
      _
    $region31: #{tpu_custom_call.1} parent=1 // pred_check_branch
      %94 = sbr.rel (0) target = $region33
    $region32: #{tpu_custom_call.1} parent=1 // pred_region
      %s96 = ssub.s32 512, 512
      %97 = vsyncadd [#allocation12], %s96
      %s98 = sshll.u32 [#allocation13], 4
      %s99 = int_to_ptr.vmem [resolvable:$true] %s98
      %104 = dma.hbm_to_vmem [thread:$0]  %s7, 512, %s99, [#allocation12], 128, 128, 8
    $region33: #{tpu_custom_call.1} parent=1 // pred_fallthru
      _
    // Predicated region
    $region34: #{tpu_custom_call.1} parent=1 // pred_check
      _
    $region35: #{tpu_custom_call.1} parent=1 // pred_check_branch
      %106 = sbr.rel (0) target = $region37
    $region36: #{tpu_custom_call.1} parent=1 // pred_region
      %s108 = ssub.s32 16, 16
      %109 = vsyncadd [#allocation15], %s108
      %s111 = sshll.u32 [#allocation14], 4
      %s112 = int_to_ptr.vmem [resolvable:$true] %s111
      %114 = dma.hbm_to_vmem [thread:$0]  %s8, 16, %s112, [#allocation15]
    $region37: #{tpu_custom_call.1} parent=1 // pred_fallthru
      _
    // Predicated region
    $region38: #{tpu_custom_call.1} parent=1 // pred_check
      _
    $region39: #{tpu_custom_call.1} parent=1 // pred_check_branch
      %116 = sbr.rel (0) target = $region41
    $region40: #{tpu_custom_call.1} parent=1 // pred_region
      _
    $region41: #{tpu_custom_call.1} parent=1 // pred_fallthru
      _
    // Predicated region
    $region42: #{tpu_custom_call.1} parent=1 // pred_check
      _
    $region43: #{tpu_custom_call.1} parent=1 // pred_check_branch
      %118 = sbr.rel (0) target = $region45
    $region44: #{tpu_custom_call.1} parent=1 // pred_region
      %s120 = ssub.s32 256, 256
      %121 = vsyncadd [#allocation15], %s120
      %s122 = sshll.u32 [#allocation16], 4
      %s123 = int_to_ptr.vmem [resolvable:$true] %s122
      %128 = dma.hbm_to_vmem [thread:$0]  %s10, 256, %s123, [#allocation15], 128, 128, 8
    $region45: #{tpu_custom_call.1} parent=1 // pred_fallthru
      _
    // Predicated region
    $region46: #{tpu_custom_call.1} parent=1 // pred_check
      _
    $region47: #{tpu_custom_call.1} parent=1 // pred_check_branch
      %130 = sbr.rel (0) target = $region49
    $region48: #{tpu_custom_call.1} parent=1 // pred_region
      _
    $region49: #{tpu_custom_call.1} parent=1 // pred_fallthru
      _
    // Predicated region
    $region50: #{tpu_custom_call.1} parent=1 // pred_check
      _
    $region51: #{tpu_custom_call.1} parent=1 // pred_check_branch
      %132 = sbr.rel (0) target = $region53
    $region52: #{tpu_custom_call.1} parent=1 // pred_region
      %133 = dma.done [#allocation3], 256
    $region53: #{tpu_custom_call.1} parent=1 // pred_fallthru
      _
    // Predicated region
    $region54: #{tpu_custom_call.1} parent=1 // pred_check
      _
    $region55: #{tpu_custom_call.1} parent=1 // pred_check_branch
      %135 = sbr.rel (0) target = $region57
    $region56: #{tpu_custom_call.1} parent=1 // pred_region
      %136 = dma.done [#allocation6], 256
    $region57: #{tpu_custom_call.1} parent=1 // pred_fallthru
      _
    // Predicated region
    $region58: #{tpu_custom_call.1} parent=1 // pred_check
      _
    $region59: #{tpu_custom_call.1} parent=1 // pred_check_branch
      %138 = sbr.rel (0) target = $region61
    $region60: #{tpu_custom_call.1} parent=1 // pred_region
      %139 = dma.done [#allocation6], 384
    $region61: #{tpu_custom_call.1} parent=1 // pred_fallthru
      _
    // Predicated region
    $region62: #{tpu_custom_call.1} parent=1 // pred_check
      _
    $region63: #{tpu_custom_call.1} parent=1 // pred_check_branch
      %141 = sbr.rel (0) target = $region65
    $region64: #{tpu_custom_call.1} parent=1 // pred_region
      %142 = dma.done [#allocation9], 256
    $region65: #{tpu_custom_call.1} parent=1 // pred_fallthru
      _
    // Predicated region
    $region66: #{tpu_custom_call.1} parent=1 // pred_check
      _
    $region67: #{tpu_custom_call.1} parent=1 // pred_check_branch
      %144 = sbr.rel (0) target = $region69
    $region68: #{tpu_custom_call.1} parent=1 // pred_region
      %145 = dma.done [#allocation9], 16
    $region69: #{tpu_custom_call.1} parent=1 // pred_fallthru
      _
    // Predicated region
    $region70: #{tpu_custom_call.1} parent=1 // pred_check
      _
    $region71: #{tpu_custom_call.1} parent=1 // pred_check_branch
      %147 = sbr.rel (0) target = $region73
    $region72: #{tpu_custom_call.1} parent=1 // pred_region
      %148 = dma.done [#allocation12], 16
    $region73: #{tpu_custom_call.1} parent=1 // pred_fallthru
      _
    // Predicated region
    $region74: #{tpu_custom_call.1} parent=1 // pred_check
      _
    $region75: #{tpu_custom_call.1} parent=1 // pred_check_branch
      %150 = sbr.rel (0) target = $region77
    $region76: #{tpu_custom_call.1} parent=1 // pred_region
      %151 = dma.done [#allocation12], 512
    $region77: #{tpu_custom_call.1} parent=1 // pred_fallthru
      _
    // Predicated region
    $region78: #{tpu_custom_call.1} parent=1 // pred_check
      _
    $region79: #{tpu_custom_call.1} parent=1 // pred_check_branch
      %153 = sbr.rel (0) target = $region81
    $region80: #{tpu_custom_call.1} parent=1 // pred_region
      %154 = dma.done [#allocation15], 16
    $region81: #{tpu_custom_call.1} parent=1 // pred_fallthru
      _
    // Predicated region
    $region82: #{tpu_custom_call.1} parent=1 // pred_check
      _
    $region83: #{tpu_custom_call.1} parent=1 // pred_check_branch
      %156 = sbr.rel (0) target = $region85
    $region84: #{tpu_custom_call.1} parent=1 // pred_region
      %157 = dma.done [#allocation15], 256
    $region85: #{tpu_custom_call.1} parent=1 // pred_fallthru
      _
    %v158 = vld [vmem:[#allocation2] sm:$0xff]
    %v159 = vld [vmem:[#allocation2 + $0x8] sm:$0xff]
    %v160 = vld [vmem:[#allocation7] sm:$0xff]
    %v161 = vld [vmem:[#allocation7 + $0x8] sm:$0xff]
    %v162 = vld [vmem:[#allocation7 + $0x10] sm:$0xf]
    %v163 = vld [vmem:[#allocation5] sm:$0xff]
    %v164 = vld [vmem:[#allocation5 + $0x8] sm:$0xff]
    %v165 = vld [vmem:[#allocation8] sm:$0xff]
    %v166 = vld [vmem:[#allocation8 + $0x8] sm:$0xf]
    %vm167 = vcmask 97280
    %v169 = vsel %vm167, %v163, 0
    %v172 = vsel %vm167, %v164, 0
    %vm174 = vcmask 1043456
    %v176 = vsel %vm174, %v166, 0
    %178 = vmatprep.subr.mxu0 0.0
    %179 = vmatpush1.msra.mxu0 0.0
    %180 = vmatprep.subr.mxu0 0.0
    %181 = vmatpush1.msra.mxu0 0.0
    %182 = vmatprep.subr.mxu0 0.0
    %183 = vmatpush1.msra.mxu0 0.0
    %184 = vmatprep.subr.mxu0 0.0
    %185 = vmatpush1.msra.mxu0 0.0
    %186 = vmatprep.subr.mxu0 0.0
    %187 = vmatpush1.msra.mxu0 0.0
    %188 = vmatprep.subr.mxu0 0.0
    %189 = vmatpush1.msra.mxu0 0.0
    %190 = vmatprep.subr.mxu0 0.0
    %191 = vmatpush1.msra.mxu0 0.0
    %192 = vmatprep.subr.mxu0 0.0
    %193 = vmatpush1.msra.mxu0 0.0
    %194 = vmatprep.subr.mxu0 0.0
    %195 = vmatpush1.msra.mxu0 0.0
    %196 = vmatprep.subr.mxu0 0.0
    %197 = vmatpush1.msra.mxu0 0.0
    %198 = vmatprep.subr.mxu0 0.0
    %199 = vmatpush1.msra.mxu0 0.0
    %200 = vmatprep.subr.mxu0 0.0
    %201 = vmatpush1.msra.mxu0 0.0
    %202 = vmatprep.subr.mxu0 0.0
    %203 = vmatpush1.msra.mxu0 0.0
    %204 = vmatprep.subr.mxu0 0.0
    %205 = vmatpush1.msra.mxu0 0.0
    %206 = vmatprep.subr.mxu0 0.0
    %207 = vmatpush1.msra.mxu0 %v176
    %208 = vmatprep.subr.mxu0 0.0
    %209 = vmatpush1.msra.mxu0 %v165
    %210 = vmatprep.subr.mxu0 0.0
    %211 = vmatpush2.msra.mxu0 0.0
    %212 = vmatprep.subr.mxu0 0.0
    %213 = vmatpush2.msra.mxu0 0.0
    %214 = vmatprep.subr.mxu0 0.0
    %215 = vmatpush2.msra.mxu0 0.0
    %216 = vmatprep.subr.mxu0 0.0
    %217 = vmatpush2.msra.mxu0 0.0
    %218 = vmatprep.subr.mxu0 0.0
    %219 = vmatpush2.msra.mxu0 0.0
    %220 = vmatprep.subr.mxu0 0.0
    %221 = vmatpush2.msra.mxu0 0.0
    %222 = vmatprep.subr.mxu0 0.0
    %223 = vmatpush2.msra.mxu0 0.0
    %224 = vmatprep.subr.mxu0 0.0
    %225 = vmatpush2.msra.mxu0 0.0
    %226 = vmatprep.subr.mxu0 0.0
    %227 = vmatpush2.msra.mxu0 0.0
    %228 = vmatprep.subr.mxu0 0.0
    %229 = vmatpush2.msra.mxu0 0.0
    %230 = vmatprep.subr.mxu0 0.0
    %231 = vmatpush2.msra.mxu0 0.0
    %232 = vmatprep.subr.mxu0 0.0
    %233 = vmatpush2.msra.mxu0 0.0
    %234 = vmatprep.subr.mxu0 0.0
    %235 = vmatpush2.msra.mxu0 0.0
    %236 = vmatprep.subr.mxu0 0.0
    %237 = vmatpush2.msra.mxu0 0.0
    %238 = vmatprep.subr.mxu0 0.0
    %239 = vmatpush2.msra.mxu0 0.0
    %240 = vmatprep.subr.mxu0 0.0
    %241 = vmatpush2.msra.mxu0 0.0
    %242 = vmatprep.mubr.f32.mxu0 0.0
    %243 = vmatmul.mubr.f32.gmra.mxu0 %v169
    %v244 = vpop.f32.mrf.mxu0
    %v245 = vadd.f32 0.0, %v244
    %v246 = vpop.f32.mrf.mxu0
    %247 = vmatprep.mubr.f32.mxu0 0.0
    %248 = vmatmul.mubr.f32.gmra.mxu0 %v172
    %v249 = vpop.f32.mrf.mxu0
    %v250 = vadd.f32 0.0, %v249
    %v251 = vpop.f32.mrf.mxu0
    %252 = vdwg.mxu0
    %vm253 = vcmask 162816
    %v255 = vsel %vm253, %v158, 0
    %v258 = vsel %vm253, %v159, 0
    %v261 = vsel %vm174, %v162, 0
    %263 = vmatprep.subr.mxu0 0.0
    %264 = vmatpush1.msra.mxu0 0.0
    %265 = vmatprep.subr.mxu0 0.0
    %266 = vmatpush1.msra.mxu0 0.0
    %267 = vmatprep.subr.mxu0 0.0
    %268 = vmatpush1.msra.mxu0 0.0
    %269 = vmatprep.subr.mxu0 0.0
    %270 = vmatpush1.msra.mxu0 0.0
    %271 = vmatprep.subr.mxu0 0.0
    %272 = vmatpush1.msra.mxu0 0.0
    %273 = vmatprep.subr.mxu0 0.0
    %274 = vmatpush1.msra.mxu0 0.0
    %275 = vmatprep.subr.mxu0 0.0
    %276 = vmatpush1.msra.mxu0 0.0
    %277 = vmatprep.subr.mxu0 0.0
    %278 = vmatpush1.msra.mxu0 0.0
    %279 = vmatprep.subr.mxu0 0.0
    %280 = vmatpush1.msra.mxu0 0.0
    %281 = vmatprep.subr.mxu0 0.0
    %282 = vmatpush1.msra.mxu0 0.0
    %283 = vmatprep.subr.mxu0 0.0
    %284 = vmatpush1.msra.mxu0 0.0
    %285 = vmatprep.subr.mxu0 0.0
    %286 = vmatpush1.msra.mxu0 0.0
    %287 = vmatprep.subr.mxu0 0.0
    %288 = vmatpush1.msra.mxu0 0.0
    %289 = vmatprep.subr.mxu0 0.0
    %290 = vmatpush1.msra.mxu0 %v261
    %291 = vmatprep.subr.mxu0 0.0
    %292 = vmatpush1.msra.mxu0 %v161
    %293 = vmatprep.subr.mxu0 0.0
    %294 = vmatpush1.msra.mxu0 %v160
    %295 = vmatprep.subr.mxu0 0.0
    %296 = vmatpush2.msra.mxu0 0.0
    %297 = vmatprep.subr.mxu0 0.0
    %298 = vmatpush2.msra.mxu0 0.0
    %299 = vmatprep.subr.mxu0 0.0
    %300 = vmatpush2.msra.mxu0 0.0
    %301 = vmatprep.subr.mxu0 0.0
    %302 = vmatpush2.msra.mxu0 0.0
    %303 = vmatprep.subr.mxu0 0.0
    %304 = vmatpush2.msra.mxu0 0.0
    %305 = vmatprep.subr.mxu0 0.0
    %306 = vmatpush2.msra.mxu0 0.0
    %307 = vmatprep.subr.mxu0 0.0
    %308 = vmatpush2.msra.mxu0 0.0
    %309 = vmatprep.subr.mxu0 0.0
    %310 = vmatpush2.msra.mxu0 0.0
    %311 = vmatprep.subr.mxu0 0.0
    %312 = vmatpush2.msra.mxu0 0.0
    %313 = vmatprep.subr.mxu0 0.0
    %314 = vmatpush2.msra.mxu0 0.0
    %315 = vmatprep.subr.mxu0 0.0
    %316 = vmatpush2.msra.mxu0 0.0
    %317 = vmatprep.subr.mxu0 0.0
    %318 = vmatpush2.msra.mxu0 0.0
    %319 = vmatprep.subr.mxu0 0.0
    %320 = vmatpush2.msra.mxu0 0.0
    %321 = vmatprep.subr.mxu0 0.0
    %322 = vmatpush2.msra.mxu0 0.0
    %323 = vmatprep.subr.mxu0 0.0
    %324 = vmatpush2.msra.mxu0 0.0
    %325 = vmatprep.subr.mxu0 0.0
    %326 = vmatpush2.msra.mxu0 0.0
    %327 = vmatprep.mubr.f32.mxu0 0.0
    %328 = vmatmul.mubr.f32.gmra.mxu0 %v255
    %v329 = vpop.f32.mrf.mxu0
    %v330 = vadd.f32 %v245, %v329
    %v331 = vpop.f32.mrf.mxu0
    %332 = vmatprep.mubr.f32.mxu0 0.0
    %333 = vmatmul.mubr.f32.gmra.mxu0 %v258
    %v334 = vpop.f32.mrf.mxu0
    %v335 = vadd.f32 %v250, %v334
    %v336 = vpop.f32.mrf.mxu0
    %337 = vdwg.mxu0
    %v338 = vld [vmem:[#allocation10] sm:$0x1]
    %v340 = vlaneseq
    %v341 = vshrl.u32 %v340, 7
    %v342 = vsub.s32 0, %v341
    %v343 = vrot.slane %v338, %v342
    %v345 = vadd.f32 %v330, %v343
    %v346 = vadd.f32 %v335, %v343
    %v347 = vmax.f32 %v345, 0.0
    %v348 = vmax.f32 %v346, 0.0
    %v349 = vld [vmem:[%s5] sm:$0xff]
    %v350 = vld [vmem:[%s5 + $0x8] sm:$0xff]
    %v351 = vld [vmem:[%s5 + $0x10] sm:$0xff]
    %v352 = vld [vmem:[%s5 + $0x18] sm:$0xff]
    %v353 = vld [vmem:[#allocation11] sm:$0x1]
    %v355 = vlaneseq
    %v356 = vshrl.u32 %v355, 7
    %v357 = vsub.s32 0, %v356
    %v358 = vrot.slane %v353, %v357
    %vm360 = vcmask 261120
    %v362 = vsel %vm360, %v347, 0
    %v365 = vsel %vm360, %v348, 0
    %367 = vmatprep.subr.mxu0 0.0
    %368 = vmatpush1.msra.mxu0 0.0
    %369 = vmatprep.subr.mxu0 0.0
    %370 = vmatpush1.msra.mxu0 0.0
    %371 = vmatprep.subr.mxu0 0.0
    %372 = vmatpush1.msra.mxu0 0.0
    %373 = vmatprep.subr.mxu0 0.0
    %374 = vmatpush1.msra.mxu0 0.0
    %375 = vmatprep.subr.mxu0 0.0
    %376 = vmatpush1.msra.mxu0 0.0
    %377 = vmatprep.subr.mxu0 0.0
    %378 = vmatpush1.msra.mxu0 0.0
    %379 = vmatprep.subr.mxu0 0.0
    %380 = vmatpush1.msra.mxu0 0.0
    %381 = vmatprep.subr.mxu0 0.0
    %382 = vmatpush1.msra.mxu0 0.0
    %383 = vmatprep.subr.mxu0 0.0
    %384 = vmatpush1.msra.mxu0 0.0
    %385 = vmatprep.subr.mxu0 0.0
    %386 = vmatpush1.msra.mxu0 0.0
    %387 = vmatprep.subr.mxu0 0.0
    %388 = vmatpush1.msra.mxu0 0.0
    %389 = vmatprep.subr.mxu0 0.0
    %390 = vmatpush1.msra.mxu0 0.0
    %391 = vmatprep.subr.mxu0 0.0
    %392 = vmatpush1.msra.mxu0 %v352
    %393 = vmatprep.subr.mxu0 0.0
    %394 = vmatpush1.msra.mxu0 %v351
    %395 = vmatprep.subr.mxu0 0.0
    %396 = vmatpush1.msra.mxu0 %v350
    %397 = vmatprep.subr.mxu0 0.0
    %398 = vmatpush1.msra.mxu0 %v349
    %399 = vmatprep.subr.mxu0 0.0
    %400 = vmatpush2.msra.mxu0 0.0
    %401 = vmatprep.subr.mxu0 0.0
    %402 = vmatpush2.msra.mxu0 0.0
    %403 = vmatprep.subr.mxu0 0.0
    %404 = vmatpush2.msra.mxu0 0.0
    %405 = vmatprep.subr.mxu0 0.0
    %406 = vmatpush2.msra.mxu0 0.0
    %407 = vmatprep.subr.mxu0 0.0
    %408 = vmatpush2.msra.mxu0 0.0
    %409 = vmatprep.subr.mxu0 0.0
    %410 = vmatpush2.msra.mxu0 0.0
    %411 = vmatprep.subr.mxu0 0.0
    %412 = vmatpush2.msra.mxu0 0.0
    %413 = vmatprep.subr.mxu0 0.0
    %414 = vmatpush2.msra.mxu0 0.0
    %415 = vmatprep.subr.mxu0 0.0
    %416 = vmatpush2.msra.mxu0 0.0
    %417 = vmatprep.subr.mxu0 0.0
    %418 = vmatpush2.msra.mxu0 0.0
    %419 = vmatprep.subr.mxu0 0.0
    %420 = vmatpush2.msra.mxu0 0.0
    %421 = vmatprep.subr.mxu0 0.0
    %422 = vmatpush2.msra.mxu0 0.0
    %423 = vmatprep.subr.mxu0 0.0
    %424 = vmatpush2.msra.mxu0 0.0
    %425 = vmatprep.subr.mxu0 0.0
    %426 = vmatpush2.msra.mxu0 0.0
    %427 = vmatprep.subr.mxu0 0.0
    %428 = vmatpush2.msra.mxu0 0.0
    %429 = vmatprep.subr.mxu0 0.0
    %430 = vmatpush2.msra.mxu0 0.0
    %431 = vmatprep.mubr.f32.mxu0 0.0
    %432 = vmatmul.mubr.f32.gmra.mxu0 %v362
    %v433 = vpop.f32.mrf.mxu0
    %v434 = vadd.f32 %v358, %v433
    %v435 = vpop.f32.mrf.mxu0
    %436 = vmatprep.mubr.f32.mxu0 0.0
    %437 = vmatmul.mubr.f32.gmra.mxu0 %v365
    %v438 = vpop.f32.mrf.mxu0
    %v439 = vadd.f32 %v358, %v438
    %v440 = vpop.f32.mrf.mxu0
    %441 = vdwg.mxu0
    %v442 = vld [vmem:[#allocation13] sm:$0xff]
    %v443 = vld [vmem:[#allocation13 + $0x8] sm:$0xff]
    %v444 = vld [vmem:[#allocation13 + $0x10] sm:$0xff]
    %v445 = vld [vmem:[#allocation13 + $0x18] sm:$0xff]
    %v446 = vld [vmem:[#allocation14] sm:$0x1]
    %v448 = vlaneseq
    %v449 = vshrl.u32 %v448, 7
    %v450 = vsub.s32 0, %v449
    %v451 = vrot.slane %v446, %v450
    %453 = vmatprep.subr.mxu0 0.0
    %454 = vmatpush1.msra.mxu0 0.0
    %455 = vmatprep.subr.mxu0 0.0
    %456 = vmatpush1.msra.mxu0 0.0
    %457 = vmatprep.subr.mxu0 0.0
    %458 = vmatpush1.msra.mxu0 0.0
    %459 = vmatprep.subr.mxu0 0.0
    %460 = vmatpush1.msra.mxu0 0.0
    %461 = vmatprep.subr.mxu0 0.0
    %462 = vmatpush1.msra.mxu0 0.0
    %463 = vmatprep.subr.mxu0 0.0
    %464 = vmatpush1.msra.mxu0 0.0
    %465 = vmatprep.subr.mxu0 0.0
    %466 = vmatpush1.msra.mxu0 0.0
    %467 = vmatprep.subr.mxu0 0.0
    %468 = vmatpush1.msra.mxu0 0.0
    %469 = vmatprep.subr.mxu0 0.0
    %470 = vmatpush1.msra.mxu0 0.0
    %471 = vmatprep.subr.mxu0 0.0
    %472 = vmatpush1.msra.mxu0 0.0
    %473 = vmatprep.subr.mxu0 0.0
    %474 = vmatpush1.msra.mxu0 0.0
    %475 = vmatprep.subr.mxu0 0.0
    %476 = vmatpush1.msra.mxu0 0.0
    %477 = vmatprep.subr.mxu0 0.0
    %478 = vmatpush1.msra.mxu0 %v445
    %479 = vmatprep.subr.mxu0 0.0
    %480 = vmatpush1.msra.mxu0 %v444
    %481 = vmatprep.subr.mxu0 0.0
    %482 = vmatpush1.msra.mxu0 %v443
    %483 = vmatprep.subr.mxu0 0.0
    %484 = vmatpush1.msra.mxu0 %v442
    %485 = vmatprep.subr.mxu0 0.0
    %486 = vmatpush2.msra.mxu0 0.0
    %487 = vmatprep.subr.mxu0 0.0
    %488 = vmatpush2.msra.mxu0 0.0
    %489 = vmatprep.subr.mxu0 0.0
    %490 = vmatpush2.msra.mxu0 0.0
    %491 = vmatprep.subr.mxu0 0.0
    %492 = vmatpush2.msra.mxu0 0.0
    %493 = vmatprep.subr.mxu0 0.0
    %494 = vmatpush2.msra.mxu0 0.0
    %495 = vmatprep.subr.mxu0 0.0
    %496 = vmatpush2.msra.mxu0 0.0
    %497 = vmatprep.subr.mxu0 0.0
    %498 = vmatpush2.msra.mxu0 0.0
    %499 = vmatprep.subr.mxu0 0.0
    %500 = vmatpush2.msra.mxu0 0.0
    %501 = vmatprep.subr.mxu0 0.0
    %502 = vmatpush2.msra.mxu0 0.0
    %503 = vmatprep.subr.mxu0 0.0
    %504 = vmatpush2.msra.mxu0 0.0
    %505 = vmatprep.subr.mxu0 0.0
    %506 = vmatpush2.msra.mxu0 0.0
    %507 = vmatprep.subr.mxu0 0.0
    %508 = vmatpush2.msra.mxu0 0.0
    %509 = vmatprep.subr.mxu0 0.0
    %510 = vmatpush2.msra.mxu0 0.0
    %511 = vmatprep.subr.mxu0 0.0
    %512 = vmatpush2.msra.mxu0 0.0
    %513 = vmatprep.subr.mxu0 0.0
    %514 = vmatpush2.msra.mxu0 0.0
    %515 = vmatprep.subr.mxu0 0.0
    %516 = vmatpush2.msra.mxu0 0.0
    %517 = vmatprep.mubr.f32.mxu0 0.0
    %518 = vmatmul.mubr.f32.gmra.mxu0 %v362
    %v519 = vpop.f32.mrf.mxu0
    %v520 = vadd.f32 %v451, %v519
    %v521 = vpop.f32.mrf.mxu0
    %522 = vmatprep.mubr.f32.mxu0 0.0
    %523 = vmatmul.mubr.f32.gmra.mxu0 %v365
    %v524 = vpop.f32.mrf.mxu0
    %v525 = vadd.f32 %v451, %v524
    %v526 = vpop.f32.mrf.mxu0
    %527 = vdwg.mxu0
    %v528 = vld [vmem:[%s9] sm:$0xff]
    %v529 = vld [vmem:[%s9 + $0x8] sm:$0xff]
    %v530 = vld [vmem:[#allocation16] sm:$0xff]
    %v531 = vld [vmem:[#allocation16 + $0x8] sm:$0xff]
    %vm532 = vcmp.gt.f32.partialorder %v530, 0.0
    %vm533 = vcmp.gt.f32.partialorder %v531, 0.0
    %v536 = vcombine.high %v520, %v520
    %v538 = vunpack.c.l.s4 1966171168
    %v539 = vunpack.c.0.s8 %v538
    %v540 = vlaneseq
    %v541 = vshrl.u32 %v540, 7
    %v542 = vsub.s32 %v539, %v541
    %v543 = vrot.slane %v520, %v542
    %v545 = vunpack.c.l.s4 1966171168
    %v546 = vunpack.c.0.s8 %v545
    %v547 = vlaneseq
    %v548 = vshrl.u32 %v547, 7
    %v549 = vsub.s32 %v546, %v548
    %v550 = vrot.slane %v536, %v549
    %v551 = vcombine.high %v543, %v543
    %v552 = vcombine.high %v550, %v550
    %v554 = vunpack.c.l.s4 1966171168
    %v555 = vunpack.c.0.s8 %v554
    %v556 = vlaneseq
    %v557 = vshrl.u32 %v556, 7
    %v558 = vsub.s32 %v555, %v557
    %v559 = vrot.slane %v543, %v558
    %v561 = vunpack.c.l.s4 1966171168
    %v562 = vunpack.c.0.s8 %v561
    %v563 = vlaneseq
    %v564 = vshrl.u32 %v563, 7
    %v565 = vsub.s32 %v562, %v564
    %v566 = vrot.slane %v550, %v565
    %v568 = vunpack.c.l.s4 1966171168
    %v569 = vunpack.c.0.s8 %v568
    %v570 = vlaneseq
    %v571 = vshrl.u32 %v570, 7
    %v572 = vsub.s32 %v569, %v571
    %v573 = vrot.slane %v551, %v572
    %v575 = vunpack.c.l.s4 1966171168
    %v576 = vunpack.c.0.s8 %v575
    %v577 = vlaneseq
    %v578 = vshrl.u32 %v577, 7
    %v579 = vsub.s32 %v576, %v578
    %v580 = vrot.slane %v552, %v579
    %v581 = vcombine.high %v559, %v559
    %v582 = vcombine.high %v566, %v566
    %v583 = vcombine.high %v573, %v573
    %v584 = vcombine.high %v580, %v580
    %v585 = vcombine.high %v525, %v525
    %v587 = vunpack.c.l.s4 1966171168
    %v588 = vunpack.c.0.s8 %v587
    %v589 = vlaneseq
    %v590 = vshrl.u32 %v589, 7
    %v591 = vsub.s32 %v588, %v590
    %v592 = vrot.slane %v525, %v591
    %v594 = vunpack.c.l.s4 1966171168
    %v595 = vunpack.c.0.s8 %v594
    %v596 = vlaneseq
    %v597 = vshrl.u32 %v596, 7
    %v598 = vsub.s32 %v595, %v597
    %v599 = vrot.slane %v585, %v598
    %v600 = vcombine.high %v592, %v592
    %v601 = vcombine.high %v599, %v599
    %v603 = vunpack.c.l.s4 1966171168
    %v604 = vunpack.c.0.s8 %v603
    %v605 = vlaneseq
    %v606 = vshrl.u32 %v605, 7
    %v607 = vsub.s32 %v604, %v606
    %v608 = vrot.slane %v592, %v607
    %v610 = vunpack.c.l.s4 1966171168
    %v611 = vunpack.c.0.s8 %v610
    %v612 = vlaneseq
    %v613 = vshrl.u32 %v612, 7
    %v614 = vsub.s32 %v611, %v613
    %v615 = vrot.slane %v599, %v614
    %v617 = vunpack.c.l.s4 1966171168
    %v618 = vunpack.c.0.s8 %v617
    %v619 = vlaneseq
    %v620 = vshrl.u32 %v619, 7
    %v621 = vsub.s32 %v618, %v620
    %v622 = vrot.slane %v600, %v621
    %v624 = vunpack.c.l.s4 1966171168
    %v625 = vunpack.c.0.s8 %v624
    %v626 = vlaneseq
    %v627 = vshrl.u32 %v626, 7
    %v628 = vsub.s32 %v625, %v627
    %v629 = vrot.slane %v601, %v628
    %v630 = vcombine.high %v608, %v608
    %v631 = vcombine.high %v615, %v615
    %v632 = vcombine.high %v622, %v622
    %v633 = vcombine.high %v629, %v629
    %v634 = vlaneseq
    %v635 = vshrl.u32 %v634, 7
    %v636 = vsub.s32 0, %v635
    %v637 = vrot.slane %v559, %v636
    %v638 = vlaneseq
    %v639 = vshrl.u32 %v638, 7
    %v640 = vsub.s32 0, %v639
    %v641 = vrot.slane %v573, %v640
    %v642 = vlaneseq
    %v643 = vshrl.u32 %v642, 7
    %v644 = vsub.s32 0, %v643
    %v645 = vrot.slane %v581, %v644
    %v646 = vlaneseq
    %v647 = vshrl.u32 %v646, 7
    %v648 = vsub.s32 0, %v647
    %v649 = vrot.slane %v583, %v648
    %v650 = vlaneseq
    %v651 = vshrl.u32 %v650, 7
    %v652 = vsub.s32 0, %v651
    %v653 = vrot.slane %v566, %v652
    %v654 = vlaneseq
    %v655 = vshrl.u32 %v654, 7
    %v656 = vsub.s32 0, %v655
    %v657 = vrot.slane %v580, %v656
    %v658 = vlaneseq
    %v659 = vshrl.u32 %v658, 7
    %v660 = vsub.s32 0, %v659
    %v661 = vrot.slane %v582, %v660
    %v662 = vlaneseq
    %v663 = vshrl.u32 %v662, 7
    %v664 = vsub.s32 0, %v663
    %v665 = vrot.slane %v584, %v664
    %v666 = vlaneseq
    %v667 = vshrl.u32 %v666, 7
    %v668 = vsub.s32 0, %v667
    %v669 = vrot.slane %v608, %v668
    %v670 = vlaneseq
    %v671 = vshrl.u32 %v670, 7
    %v672 = vsub.s32 0, %v671
    %v673 = vrot.slane %v622, %v672
    %v674 = vlaneseq
    %v675 = vshrl.u32 %v674, 7
    %v676 = vsub.s32 0, %v675
    %v677 = vrot.slane %v630, %v676
    %v678 = vlaneseq
    %v679 = vshrl.u32 %v678, 7
    %v680 = vsub.s32 0, %v679
    %v681 = vrot.slane %v632, %v680
    %v682 = vlaneseq
    %v683 = vshrl.u32 %v682, 7
    %v684 = vsub.s32 0, %v683
    %v685 = vrot.slane %v615, %v684
    %v686 = vlaneseq
    %v687 = vshrl.u32 %v686, 7
    %v688 = vsub.s32 0, %v687
    %v689 = vrot.slane %v629, %v688
    %v690 = vlaneseq
    %v691 = vshrl.u32 %v690, 7
    %v692 = vsub.s32 0, %v691
    %v693 = vrot.slane %v631, %v692
    %v694 = vlaneseq
    %v695 = vshrl.u32 %v694, 7
    %v696 = vsub.s32 0, %v695
    %v697 = vrot.slane %v633, %v696
    %v714 = vadd.f32 %v637, %v434
    %v715 = vadd.f32 %v637, %v439
    %v716 = vadd.f32 %v641, %v434
    %v717 = vadd.f32 %v641, %v439
    %v718 = vadd.f32 %v645, %v434
    %v719 = vadd.f32 %v645, %v439
    %v720 = vadd.f32 %v649, %v434
    %v721 = vadd.f32 %v649, %v439
    %v722 = vadd.f32 %v653, %v434
    %v723 = vadd.f32 %v653, %v439
    %v724 = vadd.f32 %v657, %v434
    %v725 = vadd.f32 %v657, %v439
    %v726 = vadd.f32 %v661, %v434
    %v727 = vadd.f32 %v661, %v439
    %v728 = vadd.f32 %v665, %v434
    %v729 = vadd.f32 %v665, %v439
    %v730 = vadd.f32 %v669, %v434
    %v731 = vadd.f32 %v669, %v439
    %v732 = vadd.f32 %v673, %v434
    %v733 = vadd.f32 %v673, %v439
    %v734 = vadd.f32 %v677, %v434
    %v735 = vadd.f32 %v677, %v439
    %v736 = vadd.f32 %v681, %v434
    %v737 = vadd.f32 %v681, %v439
    %v738 = vadd.f32 %v685, %v434
    %v739 = vadd.f32 %v685, %v439
    %v740 = vadd.f32 %v689, %v434
    %v741 = vadd.f32 %v689, %v439
    %v742 = vadd.f32 %v693, %v434
    %v743 = vadd.f32 %v693, %v439
    %v744 = vadd.f32 %v697, %v434
    %v745 = vadd.f32 %v697, %v439
    %v746 = vmul.f32 %v714, 0.2
    %v747 = vmul.f32 %v715, 0.2
    %v748 = vmul.f32 %v716, 0.2
    %v749 = vmul.f32 %v717, 0.2
    %v750 = vmul.f32 %v718, 0.2
    %v751 = vmul.f32 %v719, 0.2
    %v752 = vmul.f32 %v720, 0.2
    %v753 = vmul.f32 %v721, 0.2
    %v754 = vmul.f32 %v722, 0.2
    %v755 = vmul.f32 %v723, 0.2
    %v756 = vmul.f32 %v724, 0.2
    %v757 = vmul.f32 %v725, 0.2
    %v758 = vmul.f32 %v726, 0.2
    %v759 = vmul.f32 %v727, 0.2
    %v760 = vmul.f32 %v728, 0.2
    %v761 = vmul.f32 %v729, 0.2
    %v762 = vmul.f32 %v730, 0.2
    %v763 = vmul.f32 %v731, 0.2
    %v764 = vmul.f32 %v732, 0.2
    %v765 = vmul.f32 %v733, 0.2
    %v766 = vmul.f32 %v734, 0.2
    %v767 = vmul.f32 %v735, 0.2
    %v768 = vmul.f32 %v736, 0.2
    %v769 = vmul.f32 %v737, 0.2
    %v770 = vmul.f32 %v738, 0.2
    %v771 = vmul.f32 %v739, 0.2
    %v772 = vmul.f32 %v740, 0.2
    %v773 = vmul.f32 %v741, 0.2
    %v774 = vmul.f32 %v742, 0.2
    %v775 = vmul.f32 %v743, 0.2
    %v776 = vmul.f32 %v744, 0.2
    %v777 = vmul.f32 %v745, 0.2
    %v778 = vmax.f32 %v714, %v746
    %v779 = vmax.f32 %v715, %v747
    %v780 = vmax.f32 %v716, %v748
    %v781 = vmax.f32 %v717, %v749
    %v782 = vmax.f32 %v718, %v750
    %v783 = vmax.f32 %v719, %v751
    %v784 = vmax.f32 %v720, %v752
    %v785 = vmax.f32 %v721, %v753
    %v786 = vmax.f32 %v722, %v754
    %v787 = vmax.f32 %v723, %v755
    %v788 = vmax.f32 %v724, %v756
    %v789 = vmax.f32 %v725, %v757
    %v790 = vmax.f32 %v726, %v758
    %v791 = vmax.f32 %v727, %v759
    %v792 = vmax.f32 %v728, %v760
    %v793 = vmax.f32 %v729, %v761
    %v794 = vmax.f32 %v730, %v762
    %v795 = vmax.f32 %v731, %v763
    %v796 = vmax.f32 %v732, %v764
    %v797 = vmax.f32 %v733, %v765
    %v798 = vmax.f32 %v734, %v766
    %v799 = vmax.f32 %v735, %v767
    %v800 = vmax.f32 %v736, %v768
    %v801 = vmax.f32 %v737, %v769
    %v802 = vmax.f32 %v738, %v770
    %v803 = vmax.f32 %v739, %v771
    %v804 = vmax.f32 %v740, %v772
    %v805 = vmax.f32 %v741, %v773
    %v806 = vmax.f32 %v742, %v774
    %v807 = vmax.f32 %v743, %v775
    %v808 = vmax.f32 %v744, %v776
    %v809 = vmax.f32 %v745, %v777
    %v810 = vlaneseq
    %v811 = vshrl.u32 %v810, 7
    %v812 = vsub.s32 0, %v811
    %v813 = vrot.slane %v528, %v812
    %v814 = vmul.f32 %v778, %v813
    %v815 = vmul.f32 %v779, %v813
    %v816 = vmul.f32 %v780, %v813
    %v817 = vmul.f32 %v781, %v813
    %v818 = vmul.f32 %v782, %v813
    %v819 = vmul.f32 %v783, %v813
    %v820 = vmul.f32 %v784, %v813
    %v821 = vmul.f32 %v785, %v813
    %v822 = vmul.f32 %v786, %v813
    %v823 = vmul.f32 %v787, %v813
    %v824 = vmul.f32 %v788, %v813
    %v825 = vmul.f32 %v789, %v813
    %v826 = vmul.f32 %v790, %v813
    %v827 = vmul.f32 %v791, %v813
    %v828 = vmul.f32 %v792, %v813
    %v829 = vmul.f32 %v793, %v813
    %v830 = vmul.f32 %v794, %v813
    %v831 = vmul.f32 %v795, %v813
    %v832 = vmul.f32 %v796, %v813
    %v833 = vmul.f32 %v797, %v813
    %v834 = vmul.f32 %v798, %v813
    %v835 = vmul.f32 %v799, %v813
    %v836 = vmul.f32 %v800, %v813
    %v837 = vmul.f32 %v801, %v813
    %v838 = vmul.f32 %v802, %v813
    %v839 = vmul.f32 %v803, %v813
    %v840 = vmul.f32 %v804, %v813
    %v841 = vmul.f32 %v805, %v813
    %v842 = vmul.f32 %v806, %v813
    %v843 = vmul.f32 %v807, %v813
    %v844 = vmul.f32 %v808, %v813
    %v845 = vmul.f32 %v809, %v813
    %vm846 = vcmask 64512
    %v847 = vsel %vm846, %v814, 0.0
    %848 = vadd.xlane.f32.xlu0 %v847
    %v849 = vpop.xlane.xlu0 %848
    %v850 = vsel %vm846, %v815, 0.0
    %851 = vadd.xlane.f32.xlu0 %v850
    %v852 = vpop.xlane.xlu0 %851
    %v853 = vsel %vm846, %v816, 0.0
    %854 = vadd.xlane.f32.xlu0 %v853
    %v855 = vpop.xlane.xlu0 %854
    %v856 = vsel %vm846, %v817, 0.0
    %857 = vadd.xlane.f32.xlu0 %v856
    %v858 = vpop.xlane.xlu0 %857
    %v859 = vsel %vm846, %v818, 0.0
    %860 = vadd.xlane.f32.xlu0 %v859
    %v861 = vpop.xlane.xlu0 %860
    %v862 = vsel %vm846, %v819, 0.0
    %863 = vadd.xlane.f32.xlu0 %v862
    %v864 = vpop.xlane.xlu0 %863
    %v865 = vsel %vm846, %v820, 0.0
    %866 = vadd.xlane.f32.xlu0 %v865
    %v867 = vpop.xlane.xlu0 %866
    %v868 = vsel %vm846, %v821, 0.0
    %869 = vadd.xlane.f32.xlu0 %v868
    %v870 = vpop.xlane.xlu0 %869
    %v871 = vsel %vm846, %v822, 0.0
    %872 = vadd.xlane.f32.xlu0 %v871
    %v873 = vpop.xlane.xlu0 %872
    %v874 = vsel %vm846, %v823, 0.0
    %875 = vadd.xlane.f32.xlu0 %v874
    %v876 = vpop.xlane.xlu0 %875
    %v877 = vsel %vm846, %v824, 0.0
    %878 = vadd.xlane.f32.xlu0 %v877
    %v879 = vpop.xlane.xlu0 %878
    %v880 = vsel %vm846, %v825, 0.0
    %881 = vadd.xlane.f32.xlu0 %v880
    %v882 = vpop.xlane.xlu0 %881
    %v883 = vsel %vm846, %v826, 0.0
    %884 = vadd.xlane.f32.xlu0 %v883
    %v885 = vpop.xlane.xlu0 %884
    %v886 = vsel %vm846, %v827, 0.0
    %887 = vadd.xlane.f32.xlu0 %v886
    %v888 = vpop.xlane.xlu0 %887
    %v889 = vsel %vm846, %v828, 0.0
    %890 = vadd.xlane.f32.xlu0 %v889
    %v891 = vpop.xlane.xlu0 %890
    %v892 = vsel %vm846, %v829, 0.0
    %893 = vadd.xlane.f32.xlu0 %v892
    %v894 = vpop.xlane.xlu0 %893
    %v895 = vsel %vm846, %v830, 0.0
    %896 = vadd.xlane.f32.xlu0 %v895
    %v897 = vpop.xlane.xlu0 %896
    %v898 = vsel %vm846, %v831, 0.0
    %899 = vadd.xlane.f32.xlu0 %v898
    %v900 = vpop.xlane.xlu0 %899
    %v901 = vsel %vm846, %v832, 0.0
    %902 = vadd.xlane.f32.xlu0 %v901
    %v903 = vpop.xlane.xlu0 %902
    %v904 = vsel %vm846, %v833, 0.0
    %905 = vadd.xlane.f32.xlu0 %v904
    %v906 = vpop.xlane.xlu0 %905
    %v907 = vsel %vm846, %v834, 0.0
    %908 = vadd.xlane.f32.xlu0 %v907
    %v909 = vpop.xlane.xlu0 %908
    %v910 = vsel %vm846, %v835, 0.0
    %911 = vadd.xlane.f32.xlu0 %v910
    %v912 = vpop.xlane.xlu0 %911
    %v913 = vsel %vm846, %v836, 0.0
    %914 = vadd.xlane.f32.xlu0 %v913
    %v915 = vpop.xlane.xlu0 %914
    %v916 = vsel %vm846, %v837, 0.0
    %917 = vadd.xlane.f32.xlu0 %v916
    %v918 = vpop.xlane.xlu0 %917
    %v919 = vsel %vm846, %v838, 0.0
    %920 = vadd.xlane.f32.xlu0 %v919
    %v921 = vpop.xlane.xlu0 %920
    %v922 = vsel %vm846, %v839, 0.0
    %923 = vadd.xlane.f32.xlu0 %v922
    %v924 = vpop.xlane.xlu0 %923
    %v925 = vsel %vm846, %v840, 0.0
    %926 = vadd.xlane.f32.xlu0 %v925
    %v927 = vpop.xlane.xlu0 %926
    %v928 = vsel %vm846, %v841, 0.0
    %929 = vadd.xlane.f32.xlu0 %v928
    %v930 = vpop.xlane.xlu0 %929
    %v931 = vsel %vm846, %v842, 0.0
    %932 = vadd.xlane.f32.xlu0 %v931
    %v933 = vpop.xlane.xlu0 %932
    %v934 = vsel %vm846, %v843, 0.0
    %935 = vadd.xlane.f32.xlu0 %v934
    %v936 = vpop.xlane.xlu0 %935
    %v937 = vsel %vm846, %v844, 0.0
    %938 = vadd.xlane.f32.xlu0 %v937
    %v939 = vpop.xlane.xlu0 %938
    %v940 = vsel %vm846, %v845, 0.0
    %941 = vadd.xlane.f32.xlu0 %v940
    %v942 = vpop.xlane.xlu0 %941
    %v975 = vlaneseq
    %v976 = vand.u32 %v975, 127
    %v977 = vlaneseq
    %v978 = vshrl.u32 %v977, 7
    %v979 = vsub.s32 %v976, %v978
    %v980 = vrot.slane %v849, %v979
    %v981 = vadd.s32 %v976, 4294967288
    %v982 = vlaneseq
    %v983 = vshrl.u32 %v982, 7
    %v984 = vsub.s32 %v981, %v983
    %v985 = vrot.slane %v852, %v984
    %vm986 = vcmask 130112
    %v987 = vsel %vm986, %v985, %v980
    %v988 = vlaneseq
    %v989 = vshrl.u32 %v988, 7
    %v990 = vsub.s32 %v976, %v989
    %v991 = vrot.slane %v855, %v990
    %v992 = vlaneseq
    %v993 = vshrl.u32 %v992, 7
    %v994 = vsub.s32 %v981, %v993
    %v995 = vrot.slane %v858, %v994
    %v996 = vsel %vm986, %v995, %v991
    %v997 = vlaneseq
    %v998 = vshrl.u32 %v997, 7
    %v999 = vsub.s32 %v976, %v998
    %v1000 = vrot.slane %v861, %v999
    %v1001 = vlaneseq
    %v1002 = vshrl.u32 %v1001, 7
    %v1003 = vsub.s32 %v981, %v1002
    %v1004 = vrot.slane %v864, %v1003
    %v1005 = vsel %vm986, %v1004, %v1000
    %v1006 = vlaneseq
    %v1007 = vshrl.u32 %v1006, 7
    %v1008 = vsub.s32 %v976, %v1007
    %v1009 = vrot.slane %v867, %v1008
    %v1010 = vlaneseq
    %v1011 = vshrl.u32 %v1010, 7
    %v1012 = vsub.s32 %v981, %v1011
    %v1013 = vrot.slane %v870, %v1012
    %v1014 = vsel %vm986, %v1013, %v1009
    %v1015 = vlaneseq
    %v1016 = vshrl.u32 %v1015, 7
    %v1017 = vsub.s32 %v976, %v1016
    %v1018 = vrot.slane %v873, %v1017
    %v1019 = vlaneseq
    %v1020 = vshrl.u32 %v1019, 7
    %v1021 = vsub.s32 %v981, %v1020
    %v1022 = vrot.slane %v876, %v1021
    %v1023 = vsel %vm986, %v1022, %v1018
    %v1024 = vlaneseq
    %v1025 = vshrl.u32 %v1024, 7
    %v1026 = vsub.s32 %v976, %v1025
    %v1027 = vrot.slane %v879, %v1026
    %v1028 = vlaneseq
    %v1029 = vshrl.u32 %v1028, 7
    %v1030 = vsub.s32 %v981, %v1029
    %v1031 = vrot.slane %v882, %v1030
    %v1032 = vsel %vm986, %v1031, %v1027
    %v1033 = vlaneseq
    %v1034 = vshrl.u32 %v1033, 7
    %v1035 = vsub.s32 %v976, %v1034
    %v1036 = vrot.slane %v885, %v1035
    %v1037 = vlaneseq
    %v1038 = vshrl.u32 %v1037, 7
    %v1039 = vsub.s32 %v981, %v1038
    %v1040 = vrot.slane %v888, %v1039
    %v1041 = vsel %vm986, %v1040, %v1036
    %v1042 = vlaneseq
    %v1043 = vshrl.u32 %v1042, 7
    %v1044 = vsub.s32 %v976, %v1043
    %v1045 = vrot.slane %v891, %v1044
    %v1046 = vlaneseq
    %v1047 = vshrl.u32 %v1046, 7
    %v1048 = vsub.s32 %v981, %v1047
    %v1049 = vrot.slane %v894, %v1048
    %v1050 = vsel %vm986, %v1049, %v1045
    %v1051 = vlaneseq
    %v1052 = vshrl.u32 %v1051, 7
    %v1053 = vsub.s32 %v976, %v1052
    %v1054 = vrot.slane %v897, %v1053
    %v1055 = vlaneseq
    %v1056 = vshrl.u32 %v1055, 7
    %v1057 = vsub.s32 %v981, %v1056
    %v1058 = vrot.slane %v900, %v1057
    %v1059 = vsel %vm986, %v1058, %v1054
    %v1060 = vlaneseq
    %v1061 = vshrl.u32 %v1060, 7
    %v1062 = vsub.s32 %v976, %v1061
    %v1063 = vrot.slane %v903, %v1062
    %v1064 = vlaneseq
    %v1065 = vshrl.u32 %v1064, 7
    %v1066 = vsub.s32 %v981, %v1065
    %v1067 = vrot.slane %v906, %v1066
    %v1068 = vsel %vm986, %v1067, %v1063
    %v1069 = vlaneseq
    %v1070 = vshrl.u32 %v1069, 7
    %v1071 = vsub.s32 %v976, %v1070
    %v1072 = vrot.slane %v909, %v1071
    %v1073 = vlaneseq
    %v1074 = vshrl.u32 %v1073, 7
    %v1075 = vsub.s32 %v981, %v1074
    %v1076 = vrot.slane %v912, %v1075
    %v1077 = vsel %vm986, %v1076, %v1072
    %v1078 = vlaneseq
    %v1079 = vshrl.u32 %v1078, 7
    %v1080 = vsub.s32 %v976, %v1079
    %v1081 = vrot.slane %v915, %v1080
    %v1082 = vlaneseq
    %v1083 = vshrl.u32 %v1082, 7
    %v1084 = vsub.s32 %v981, %v1083
    %v1085 = vrot.slane %v918, %v1084
    %v1086 = vsel %vm986, %v1085, %v1081
    %v1087 = vlaneseq
    %v1088 = vshrl.u32 %v1087, 7
    %v1089 = vsub.s32 %v976, %v1088
    %v1090 = vrot.slane %v921, %v1089
    %v1091 = vlaneseq
    %v1092 = vshrl.u32 %v1091, 7
    %v1093 = vsub.s32 %v981, %v1092
    %v1094 = vrot.slane %v924, %v1093
    %v1095 = vsel %vm986, %v1094, %v1090
    %v1096 = vlaneseq
    %v1097 = vshrl.u32 %v1096, 7
    %v1098 = vsub.s32 %v976, %v1097
    %v1099 = vrot.slane %v927, %v1098
    %v1100 = vlaneseq
    %v1101 = vshrl.u32 %v1100, 7
    %v1102 = vsub.s32 %v981, %v1101
    %v1103 = vrot.slane %v930, %v1102
    %v1104 = vsel %vm986, %v1103, %v1099
    %v1105 = vlaneseq
    %v1106 = vshrl.u32 %v1105, 7
    %v1107 = vsub.s32 %v976, %v1106
    %v1108 = vrot.slane %v933, %v1107
    %v1109 = vlaneseq
    %v1110 = vshrl.u32 %v1109, 7
    %v1111 = vsub.s32 %v981, %v1110
    %v1112 = vrot.slane %v936, %v1111
    %v1113 = vsel %vm986, %v1112, %v1108
    %v1114 = vlaneseq
    %v1115 = vshrl.u32 %v1114, 7
    %v1116 = vsub.s32 %v976, %v1115
    %v1117 = vrot.slane %v939, %v1116
    %v1118 = vlaneseq
    %v1119 = vshrl.u32 %v1118, 7
    %v1120 = vsub.s32 %v981, %v1119
    %v1121 = vrot.slane %v942, %v1120
    %v1122 = vsel %vm986, %v1121, %v1117
    %vm1123 = vcmask 1041409
    %v1124 = vsel %vm1123, %v996, %v987
    %vm1125 = vcmask 1042434
    %v1126 = vsel %vm1125, %v1005, %v1124
    %vm1127 = vcmask 1043459
    %v1128 = vsel %vm1127, %v1014, %v1126
    %vm1129 = vcmask 1044484
    %v1130 = vsel %vm1129, %v1023, %v1128
    %vm1131 = vcmask 1045509
    %v1132 = vsel %vm1131, %v1032, %v1130
    %vm1133 = vcmask 1046534
    %v1134 = vsel %vm1133, %v1041, %v1132
    %vm1135 = vcmask 1047559
    %v1136 = vsel %vm1135, %v1050, %v1134
    %v1137 = vsel %vm1123, %v1068, %v1059
    %v1138 = vsel %vm1125, %v1077, %v1137
    %v1139 = vsel %vm1127, %v1086, %v1138
    %v1140 = vsel %vm1129, %v1095, %v1139
    %v1141 = vsel %vm1131, %v1104, %v1140
    %v1142 = vsel %vm1133, %v1113, %v1141
    %v1143 = vsel %vm1135, %v1122, %v1142
    %v1146 = vsel %vm532, %v1136, -1e+30
    %v1147 = vsel %vm533, %v1143, -1e+30
    %vm1148 = vcmask 130048
    %v1149 = vsel %vm1148, %v1146, -inf
    %1150 = vmax.xlane.f32.xlu0 %v1149
    %v1151 = vpop.xlane.xlu0 %1150
    %v1152 = vsel %vm1148, %v1147, -inf
    %1153 = vmax.xlane.f32.xlu0 %v1152
    %v1154 = vpop.xlane.xlu0 %1153
    %v1155 = vsub.f32 %v1146, %v1151
    %v1156 = vsub.f32 %v1147, %v1154
    %v1157 = vmul.f32 %v1155, 1.442695
    %v1158 = vpow.pop %v1157
    %v1159 = vmul.f32 %v1156, 1.442695
    %v1160 = vpow.pop %v1159
    %v1161 = vsel %vm1148, %v1158, 0.0
    %1162 = vadd.xlane.f32.xlu0 %v1161
    %v1163 = vpop.xlane.xlu0 %1162
    %v1164 = vsel %vm1148, %v1160, 0.0
    %1165 = vadd.xlane.f32.xlu0 %v1164
    %v1166 = vpop.xlane.xlu0 %1165
    %v1167 = vrcp.pop %v1163
    %v1168 = vrcp.pop %v1166
    %v1169 = vmul.f32 %v1158, %v1167
    %v1170 = vmul.f32 %v1160, %v1168
    %v1171 = vlaneseq
    %v1172 = vshrl.u32 %v1171, 7
    %v1173 = vsub.s32 1, %v1172
    %v1174 = vrot.slane %v528, %v1173
    %1176 = vrot.lane.b32.xlu0 %v1174, 8
    %v1177 = vpop.permute.xlu0 %1176
    %v1179 = vmul.f32 %v778, %v1177
    %v1180 = vmul.f32 %v779, %v1177
    %v1181 = vmul.f32 %v780, %v1177
    %v1182 = vmul.f32 %v781, %v1177
    %v1183 = vmul.f32 %v782, %v1177
    %v1184 = vmul.f32 %v783, %v1177
    %v1185 = vmul.f32 %v784, %v1177
    %v1186 = vmul.f32 %v785, %v1177
    %v1187 = vmul.f32 %v786, %v1177
    %v1188 = vmul.f32 %v787, %v1177
    %v1189 = vmul.f32 %v788, %v1177
    %v1190 = vmul.f32 %v789, %v1177
    %v1191 = vmul.f32 %v790, %v1177
    %v1192 = vmul.f32 %v791, %v1177
    %v1193 = vmul.f32 %v792, %v1177
    %v1194 = vmul.f32 %v793, %v1177
    %v1195 = vmul.f32 %v794, %v1177
    %v1196 = vmul.f32 %v795, %v1177
    %v1197 = vmul.f32 %v796, %v1177
    %v1198 = vmul.f32 %v797, %v1177
    %v1199 = vmul.f32 %v798, %v1177
    %v1200 = vmul.f32 %v799, %v1177
    %v1201 = vmul.f32 %v800, %v1177
    %v1202 = vmul.f32 %v801, %v1177
    %v1203 = vmul.f32 %v802, %v1177
    %v1204 = vmul.f32 %v803, %v1177
    %v1205 = vmul.f32 %v804, %v1177
    %v1206 = vmul.f32 %v805, %v1177
    %v1207 = vmul.f32 %v806, %v1177
    %v1208 = vmul.f32 %v807, %v1177
    %v1209 = vmul.f32 %v808, %v1177
    %v1210 = vmul.f32 %v809, %v1177
    %1243 = vrot.lane.b32.xlu0 %v1179, 120
    %v1244 = vpop.permute.xlu0 %1243
    %1245 = vrot.lane.b32.xlu0 %v1180, 120
    %v1246 = vpop.permute.xlu0 %1245
    %1247 = vrot.lane.b32.xlu0 %v1181, 120
    %v1248 = vpop.permute.xlu0 %1247
    %1249 = vrot.lane.b32.xlu0 %v1182, 120
    %v1250 = vpop.permute.xlu0 %1249
    %1251 = vrot.lane.b32.xlu0 %v1183, 120
    %v1252 = vpop.permute.xlu0 %1251
    %1253 = vrot.lane.b32.xlu0 %v1184, 120
    %v1254 = vpop.permute.xlu0 %1253
    %1255 = vrot.lane.b32.xlu0 %v1185, 120
    %v1256 = vpop.permute.xlu0 %1255
    %1257 = vrot.lane.b32.xlu0 %v1186, 120
    %v1258 = vpop.permute.xlu0 %1257
    %1259 = vrot.lane.b32.xlu0 %v1187, 120
    %v1260 = vpop.permute.xlu0 %1259
    %1261 = vrot.lane.b32.xlu0 %v1188, 120
    %v1262 = vpop.permute.xlu0 %1261
    %1263 = vrot.lane.b32.xlu0 %v1189, 120
    %v1264 = vpop.permute.xlu0 %1263
    %1265 = vrot.lane.b32.xlu0 %v1190, 120
    %v1266 = vpop.permute.xlu0 %1265
    %1267 = vrot.lane.b32.xlu0 %v1191, 120
    %v1268 = vpop.permute.xlu0 %1267
    %1269 = vrot.lane.b32.xlu0 %v1192, 120
    %v1270 = vpop.permute.xlu0 %1269
    %1271 = vrot.lane.b32.xlu0 %v1193, 120
    %v1272 = vpop.permute.xlu0 %1271
    %1273 = vrot.lane.b32.xlu0 %v1194, 120
    %v1274 = vpop.permute.xlu0 %1273
    %1275 = vrot.lane.b32.xlu0 %v1195, 120
    %v1276 = vpop.permute.xlu0 %1275
    %1277 = vrot.lane.b32.xlu0 %v1196, 120
    %v1278 = vpop.permute.xlu0 %1277
    %1279 = vrot.lane.b32.xlu0 %v1197, 120
    %v1280 = vpop.permute.xlu0 %1279
    %1281 = vrot.lane.b32.xlu0 %v1198, 120
    %v1282 = vpop.permute.xlu0 %1281
    %1283 = vrot.lane.b32.xlu0 %v1199, 120
    %v1284 = vpop.permute.xlu0 %1283
    %1285 = vrot.lane.b32.xlu0 %v1200, 120
    %v1286 = vpop.permute.xlu0 %1285
    %1287 = vrot.lane.b32.xlu0 %v1201, 120
    %v1288 = vpop.permute.xlu0 %1287
    %1289 = vrot.lane.b32.xlu0 %v1202, 120
    %v1290 = vpop.permute.xlu0 %1289
    %1291 = vrot.lane.b32.xlu0 %v1203, 120
    %v1292 = vpop.permute.xlu0 %1291
    %1293 = vrot.lane.b32.xlu0 %v1204, 120
    %v1294 = vpop.permute.xlu0 %1293
    %1295 = vrot.lane.b32.xlu0 %v1205, 120
    %v1296 = vpop.permute.xlu0 %1295
    %1297 = vrot.lane.b32.xlu0 %v1206, 120
    %v1298 = vpop.permute.xlu0 %1297
    %1299 = vrot.lane.b32.xlu0 %v1207, 120
    %v1300 = vpop.permute.xlu0 %1299
    %1301 = vrot.lane.b32.xlu0 %v1208, 120
    %v1302 = vpop.permute.xlu0 %1301
    %1303 = vrot.lane.b32.xlu0 %v1209, 120
    %v1304 = vpop.permute.xlu0 %1303
    %1305 = vrot.lane.b32.xlu0 %v1210, 120
    %v1306 = vpop.permute.xlu0 %1305
    %v1339 = vsel %vm846, %v1244, 0.0
    %1340 = vadd.xlane.f32.xlu0 %v1339
    %v1341 = vpop.xlane.xlu0 %1340
    %v1342 = vsel %vm846, %v1246, 0.0
    %1343 = vadd.xlane.f32.xlu0 %v1342
    %v1344 = vpop.xlane.xlu0 %1343
    %v1345 = vsel %vm846, %v1248, 0.0
    %1346 = vadd.xlane.f32.xlu0 %v1345
    %v1347 = vpop.xlane.xlu0 %1346
    %v1348 = vsel %vm846, %v1250, 0.0
    %1349 = vadd.xlane.f32.xlu0 %v1348
    %v1350 = vpop.xlane.xlu0 %1349
    %v1351 = vsel %vm846, %v1252, 0.0
    %1352 = vadd.xlane.f32.xlu0 %v1351
    %v1353 = vpop.xlane.xlu0 %1352
    %v1354 = vsel %vm846, %v1254, 0.0
    %1355 = vadd.xlane.f32.xlu0 %v1354
    %v1356 = vpop.xlane.xlu0 %1355
    %v1357 = vsel %vm846, %v1256, 0.0
    %1358 = vadd.xlane.f32.xlu0 %v1357
    %v1359 = vpop.xlane.xlu0 %1358
    %v1360 = vsel %vm846, %v1258, 0.0
    %1361 = vadd.xlane.f32.xlu0 %v1360
    %v1362 = vpop.xlane.xlu0 %1361
    %v1363 = vsel %vm846, %v1260, 0.0
    %1364 = vadd.xlane.f32.xlu0 %v1363
    %v1365 = vpop.xlane.xlu0 %1364
    %v1366 = vsel %vm846, %v1262, 0.0
    %1367 = vadd.xlane.f32.xlu0 %v1366
    %v1368 = vpop.xlane.xlu0 %1367
    %v1369 = vsel %vm846, %v1264, 0.0
    %1370 = vadd.xlane.f32.xlu0 %v1369
    %v1371 = vpop.xlane.xlu0 %1370
    %v1372 = vsel %vm846, %v1266, 0.0
    %1373 = vadd.xlane.f32.xlu0 %v1372
    %v1374 = vpop.xlane.xlu0 %1373
    %v1375 = vsel %vm846, %v1268, 0.0
    %1376 = vadd.xlane.f32.xlu0 %v1375
    %v1377 = vpop.xlane.xlu0 %1376
    %v1378 = vsel %vm846, %v1270, 0.0
    %1379 = vadd.xlane.f32.xlu0 %v1378
    %v1380 = vpop.xlane.xlu0 %1379
    %v1381 = vsel %vm846, %v1272, 0.0
    %1382 = vadd.xlane.f32.xlu0 %v1381
    %v1383 = vpop.xlane.xlu0 %1382
    %v1384 = vsel %vm846, %v1274, 0.0
    %1385 = vadd.xlane.f32.xlu0 %v1384
    %v1386 = vpop.xlane.xlu0 %1385
    %v1387 = vsel %vm846, %v1276, 0.0
    %1388 = vadd.xlane.f32.xlu0 %v1387
    %v1389 = vpop.xlane.xlu0 %1388
    %v1390 = vsel %vm846, %v1278, 0.0
    %1391 = vadd.xlane.f32.xlu0 %v1390
    %v1392 = vpop.xlane.xlu0 %1391
    %v1393 = vsel %vm846, %v1280, 0.0
    %1394 = vadd.xlane.f32.xlu0 %v1393
    %v1395 = vpop.xlane.xlu0 %1394
    %v1396 = vsel %vm846, %v1282, 0.0
    %1397 = vadd.xlane.f32.xlu0 %v1396
    %v1398 = vpop.xlane.xlu0 %1397
    %v1399 = vsel %vm846, %v1284, 0.0
    %1400 = vadd.xlane.f32.xlu0 %v1399
    %v1401 = vpop.xlane.xlu0 %1400
    %v1402 = vsel %vm846, %v1286, 0.0
    %1403 = vadd.xlane.f32.xlu0 %v1402
    %v1404 = vpop.xlane.xlu0 %1403
    %v1405 = vsel %vm846, %v1288, 0.0
    %1406 = vadd.xlane.f32.xlu0 %v1405
    %v1407 = vpop.xlane.xlu0 %1406
    %v1408 = vsel %vm846, %v1290, 0.0
    %1409 = vadd.xlane.f32.xlu0 %v1408
    %v1410 = vpop.xlane.xlu0 %1409
    %v1411 = vsel %vm846, %v1292, 0.0
    %1412 = vadd.xlane.f32.xlu0 %v1411
    %v1413 = vpop.xlane.xlu0 %1412
    %v1414 = vsel %vm846, %v1294, 0.0
    %1415 = vadd.xlane.f32.xlu0 %v1414
    %v1416 = vpop.xlane.xlu0 %1415
    %v1417 = vsel %vm846, %v1296, 0.0
    %1418 = vadd.xlane.f32.xlu0 %v1417
    %v1419 = vpop.xlane.xlu0 %1418
    %v1420 = vsel %vm846, %v1298, 0.0
    %1421 = vadd.xlane.f32.xlu0 %v1420
    %v1422 = vpop.xlane.xlu0 %1421
    %v1423 = vsel %vm846, %v1300, 0.0
    %1424 = vadd.xlane.f32.xlu0 %v1423
    %v1425 = vpop.xlane.xlu0 %1424
    %v1426 = vsel %vm846, %v1302, 0.0
    %1427 = vadd.xlane.f32.xlu0 %v1426
    %v1428 = vpop.xlane.xlu0 %1427
    %v1429 = vsel %vm846, %v1304, 0.0
    %1430 = vadd.xlane.f32.xlu0 %v1429
    %v1431 = vpop.xlane.xlu0 %1430
    %v1432 = vsel %vm846, %v1306, 0.0
    %1433 = vadd.xlane.f32.xlu0 %v1432
    %v1434 = vpop.xlane.xlu0 %1433
    %v1467 = vlaneseq
    %v1468 = vshrl.u32 %v1467, 7
    %v1469 = vsub.s32 %v976, %v1468
    %v1470 = vrot.slane %v1341, %v1469
    %v1471 = vlaneseq
    %v1472 = vshrl.u32 %v1471, 7
    %v1473 = vsub.s32 %v981, %v1472
    %v1474 = vrot.slane %v1344, %v1473
    %v1475 = vsel %vm986, %v1474, %v1470
    %v1476 = vlaneseq
    %v1477 = vshrl.u32 %v1476, 7
    %v1478 = vsub.s32 %v976, %v1477
    %v1479 = vrot.slane %v1347, %v1478
    %v1480 = vlaneseq
    %v1481 = vshrl.u32 %v1480, 7
    %v1482 = vsub.s32 %v981, %v1481
    %v1483 = vrot.slane %v1350, %v1482
    %v1484 = vsel %vm986, %v1483, %v1479
    %v1485 = vlaneseq
    %v1486 = vshrl.u32 %v1485, 7
    %v1487 = vsub.s32 %v976, %v1486
    %v1488 = vrot.slane %v1353, %v1487
    %v1489 = vlaneseq
    %v1490 = vshrl.u32 %v1489, 7
    %v1491 = vsub.s32 %v981, %v1490
    %v1492 = vrot.slane %v1356, %v1491
    %v1493 = vsel %vm986, %v1492, %v1488
    %v1494 = vlaneseq
    %v1495 = vshrl.u32 %v1494, 7
    %v1496 = vsub.s32 %v976, %v1495
    %v1497 = vrot.slane %v1359, %v1496
    %v1498 = vlaneseq
    %v1499 = vshrl.u32 %v1498, 7
    %v1500 = vsub.s32 %v981, %v1499
    %v1501 = vrot.slane %v1362, %v1500
    %v1502 = vsel %vm986, %v1501, %v1497
    %v1503 = vlaneseq
    %v1504 = vshrl.u32 %v1503, 7
    %v1505 = vsub.s32 %v976, %v1504
    %v1506 = vrot.slane %v1365, %v1505
    %v1507 = vlaneseq
    %v1508 = vshrl.u32 %v1507, 7
    %v1509 = vsub.s32 %v981, %v1508
    %v1510 = vrot.slane %v1368, %v1509
    %v1511 = vsel %vm986, %v1510, %v1506
    %v1512 = vlaneseq
    %v1513 = vshrl.u32 %v1512, 7
    %v1514 = vsub.s32 %v976, %v1513
    %v1515 = vrot.slane %v1371, %v1514
    %v1516 = vlaneseq
    %v1517 = vshrl.u32 %v1516, 7
    %v1518 = vsub.s32 %v981, %v1517
    %v1519 = vrot.slane %v1374, %v1518
    %v1520 = vsel %vm986, %v1519, %v1515
    %v1521 = vlaneseq
    %v1522 = vshrl.u32 %v1521, 7
    %v1523 = vsub.s32 %v976, %v1522
    %v1524 = vrot.slane %v1377, %v1523
    %v1525 = vlaneseq
    %v1526 = vshrl.u32 %v1525, 7
    %v1527 = vsub.s32 %v981, %v1526
    %v1528 = vrot.slane %v1380, %v1527
    %v1529 = vsel %vm986, %v1528, %v1524
    %v1530 = vlaneseq
    %v1531 = vshrl.u32 %v1530, 7
    %v1532 = vsub.s32 %v976, %v1531
    %v1533 = vrot.slane %v1383, %v1532
    %v1534 = vlaneseq
    %v1535 = vshrl.u32 %v1534, 7
    %v1536 = vsub.s32 %v981, %v1535
    %v1537 = vrot.slane %v1386, %v1536
    %v1538 = vsel %vm986, %v1537, %v1533
    %v1539 = vlaneseq
    %v1540 = vshrl.u32 %v1539, 7
    %v1541 = vsub.s32 %v976, %v1540
    %v1542 = vrot.slane %v1389, %v1541
    %v1543 = vlaneseq
    %v1544 = vshrl.u32 %v1543, 7
    %v1545 = vsub.s32 %v981, %v1544
    %v1546 = vrot.slane %v1392, %v1545
    %v1547 = vsel %vm986, %v1546, %v1542
    %v1548 = vlaneseq
    %v1549 = vshrl.u32 %v1548, 7
    %v1550 = vsub.s32 %v976, %v1549
    %v1551 = vrot.slane %v1395, %v1550
    %v1552 = vlaneseq
    %v1553 = vshrl.u32 %v1552, 7
    %v1554 = vsub.s32 %v981, %v1553
    %v1555 = vrot.slane %v1398, %v1554
    %v1556 = vsel %vm986, %v1555, %v1551
    %v1557 = vlaneseq
    %v1558 = vshrl.u32 %v1557, 7
    %v1559 = vsub.s32 %v976, %v1558
    %v1560 = vrot.slane %v1401, %v1559
    %v1561 = vlaneseq
    %v1562 = vshrl.u32 %v1561, 7
    %v1563 = vsub.s32 %v981, %v1562
    %v1564 = vrot.slane %v1404, %v1563
    %v1565 = vsel %vm986, %v1564, %v1560
    %v1566 = vlaneseq
    %v1567 = vshrl.u32 %v1566, 7
    %v1568 = vsub.s32 %v976, %v1567
    %v1569 = vrot.slane %v1407, %v1568
    %v1570 = vlaneseq
    %v1571 = vshrl.u32 %v1570, 7
    %v1572 = vsub.s32 %v981, %v1571
    %v1573 = vrot.slane %v1410, %v1572
    %v1574 = vsel %vm986, %v1573, %v1569
    %v1575 = vlaneseq
    %v1576 = vshrl.u32 %v1575, 7
    %v1577 = vsub.s32 %v976, %v1576
    %v1578 = vrot.slane %v1413, %v1577
    %v1579 = vlaneseq
    %v1580 = vshrl.u32 %v1579, 7
    %v1581 = vsub.s32 %v981, %v1580
    %v1582 = vrot.slane %v1416, %v1581
    %v1583 = vsel %vm986, %v1582, %v1578
    %v1584 = vlaneseq
    %v1585 = vshrl.u32 %v1584, 7
    %v1586 = vsub.s32 %v976, %v1585
    %v1587 = vrot.slane %v1419, %v1586
    %v1588 = vlaneseq
    %v1589 = vshrl.u32 %v1588, 7
    %v1590 = vsub.s32 %v981, %v1589
    %v1591 = vrot.slane %v1422, %v1590
    %v1592 = vsel %vm986, %v1591, %v1587
    %v1593 = vlaneseq
    %v1594 = vshrl.u32 %v1593, 7
    %v1595 = vsub.s32 %v976, %v1594
    %v1596 = vrot.slane %v1425, %v1595
    %v1597 = vlaneseq
    %v1598 = vshrl.u32 %v1597, 7
    %v1599 = vsub.s32 %v981, %v1598
    %v1600 = vrot.slane %v1428, %v1599
    %v1601 = vsel %vm986, %v1600, %v1596
    %v1602 = vlaneseq
    %v1603 = vshrl.u32 %v1602, 7
    %v1604 = vsub.s32 %v976, %v1603
    %v1605 = vrot.slane %v1431, %v1604
    %v1606 = vlaneseq
    %v1607 = vshrl.u32 %v1606, 7
    %v1608 = vsub.s32 %v981, %v1607
    %v1609 = vrot.slane %v1434, %v1608
    %v1610 = vsel %vm986, %v1609, %v1605
    %v1611 = vsel %vm1123, %v1484, %v1475
    %v1612 = vsel %vm1125, %v1493, %v1611
    %v1613 = vsel %vm1127, %v1502, %v1612
    %v1614 = vsel %vm1129, %v1511, %v1613
    %v1615 = vsel %vm1131, %v1520, %v1614
    %v1616 = vsel %vm1133, %v1529, %v1615
    %v1617 = vsel %vm1135, %v1538, %v1616
    %v1618 = vsel %vm1123, %v1556, %v1547
    %v1619 = vsel %vm1125, %v1565, %v1618
    %v1620 = vsel %vm1127, %v1574, %v1619
    %v1621 = vsel %vm1129, %v1583, %v1620
    %v1622 = vsel %vm1131, %v1592, %v1621
    %v1623 = vsel %vm1133, %v1601, %v1622
    %v1624 = vsel %vm1135, %v1610, %v1623
    %v1627 = vsel %vm532, %v1617, -1e+30
    %v1628 = vsel %vm533, %v1624, -1e+30
    %v1629 = vsel %vm1148, %v1627, -inf
    %1630 = vmax.xlane.f32.xlu0 %v1629
    %v1631 = vpop.xlane.xlu0 %1630
    %v1632 = vsel %vm1148, %v1628, -inf
    %1633 = vmax.xlane.f32.xlu0 %v1632
    %v1634 = vpop.xlane.xlu0 %1633
    %v1635 = vsub.f32 %v1627, %v1631
    %v1636 = vsub.f32 %v1628, %v1634
    %v1637 = vmul.f32 %v1635, 1.442695
    %v1638 = vpow.pop %v1637
    %v1639 = vmul.f32 %v1636, 1.442695
    %v1640 = vpow.pop %v1639
    %v1641 = vsel %vm1148, %v1638, 0.0
    %1642 = vadd.xlane.f32.xlu0 %v1641
    %v1643 = vpop.xlane.xlu0 %1642
    %v1644 = vsel %vm1148, %v1640, 0.0
    %1645 = vadd.xlane.f32.xlu0 %v1644
    %v1646 = vpop.xlane.xlu0 %1645
    %v1647 = vrcp.pop %v1643
    %v1648 = vrcp.pop %v1646
    %v1649 = vmul.f32 %v1638, %v1647
    %v1650 = vmul.f32 %v1640, %v1648
    %v1651 = vlaneseq
    %v1652 = vshrl.u32 %v1651, 7
    %v1653 = vsub.s32 2, %v1652
    %v1654 = vrot.slane %v528, %v1653
    %1656 = vrot.lane.b32.xlu0 %v1654, 16
    %v1657 = vpop.permute.xlu0 %1656
    %v1659 = vmul.f32 %v778, %v1657
    %v1660 = vmul.f32 %v779, %v1657
    %v1661 = vmul.f32 %v780, %v1657
    %v1662 = vmul.f32 %v781, %v1657
    %v1663 = vmul.f32 %v782, %v1657
    %v1664 = vmul.f32 %v783, %v1657
    %v1665 = vmul.f32 %v784, %v1657
    %v1666 = vmul.f32 %v785, %v1657
    %v1667 = vmul.f32 %v786, %v1657
    %v1668 = vmul.f32 %v787, %v1657
    %v1669 = vmul.f32 %v788, %v1657
    %v1670 = vmul.f32 %v789, %v1657
    %v1671 = vmul.f32 %v790, %v1657
    %v1672 = vmul.f32 %v791, %v1657
    %v1673 = vmul.f32 %v792, %v1657
    %v1674 = vmul.f32 %v793, %v1657
    %v1675 = vmul.f32 %v794, %v1657
    %v1676 = vmul.f32 %v795, %v1657
    %v1677 = vmul.f32 %v796, %v1657
    %v1678 = vmul.f32 %v797, %v1657
    %v1679 = vmul.f32 %v798, %v1657
    %v1680 = vmul.f32 %v799, %v1657
    %v1681 = vmul.f32 %v800, %v1657
    %v1682 = vmul.f32 %v801, %v1657
    %v1683 = vmul.f32 %v802, %v1657
    %v1684 = vmul.f32 %v803, %v1657
    %v1685 = vmul.f32 %v804, %v1657
    %v1686 = vmul.f32 %v805, %v1657
    %v1687 = vmul.f32 %v806, %v1657
    %v1688 = vmul.f32 %v807, %v1657
    %v1689 = vmul.f32 %v808, %v1657
    %v1690 = vmul.f32 %v809, %v1657
    %1723 = vrot.lane.b32.xlu0 %v1659, 112
    %v1724 = vpop.permute.xlu0 %1723
    %1725 = vrot.lane.b32.xlu0 %v1660, 112
    %v1726 = vpop.permute.xlu0 %1725
    %1727 = vrot.lane.b32.xlu0 %v1661, 112
    %v1728 = vpop.permute.xlu0 %1727
    %1729 = vrot.lane.b32.xlu0 %v1662, 112
    %v1730 = vpop.permute.xlu0 %1729
    %1731 = vrot.lane.b32.xlu0 %v1663, 112
    %v1732 = vpop.permute.xlu0 %1731
    %1733 = vrot.lane.b32.xlu0 %v1664, 112
    %v1734 = vpop.permute.xlu0 %1733
    %1735 = vrot.lane.b32.xlu0 %v1665, 112
    %v1736 = vpop.permute.xlu0 %1735
    %1737 = vrot.lane.b32.xlu0 %v1666, 112
    %v1738 = vpop.permute.xlu0 %1737
    %1739 = vrot.lane.b32.xlu0 %v1667, 112
    %v1740 = vpop.permute.xlu0 %1739
    %1741 = vrot.lane.b32.xlu0 %v1668, 112
    %v1742 = vpop.permute.xlu0 %1741
    %1743 = vrot.lane.b32.xlu0 %v1669, 112
    %v1744 = vpop.permute.xlu0 %1743
    %1745 = vrot.lane.b32.xlu0 %v1670, 112
    %v1746 = vpop.permute.xlu0 %1745
    %1747 = vrot.lane.b32.xlu0 %v1671, 112
    %v1748 = vpop.permute.xlu0 %1747
    %1749 = vrot.lane.b32.xlu0 %v1672, 112
    %v1750 = vpop.permute.xlu0 %1749
    %1751 = vrot.lane.b32.xlu0 %v1673, 112
    %v1752 = vpop.permute.xlu0 %1751
    %1753 = vrot.lane.b32.xlu0 %v1674, 112
    %v1754 = vpop.permute.xlu0 %1753
    %1755 = vrot.lane.b32.xlu0 %v1675, 112
    %v1756 = vpop.permute.xlu0 %1755
    %1757 = vrot.lane.b32.xlu0 %v1676, 112
    %v1758 = vpop.permute.xlu0 %1757
    %1759 = vrot.lane.b32.xlu0 %v1677, 112
    %v1760 = vpop.permute.xlu0 %1759
    %1761 = vrot.lane.b32.xlu0 %v1678, 112
    %v1762 = vpop.permute.xlu0 %1761
    %1763 = vrot.lane.b32.xlu0 %v1679, 112
    %v1764 = vpop.permute.xlu0 %1763
    %1765 = vrot.lane.b32.xlu0 %v1680, 112
    %v1766 = vpop.permute.xlu0 %1765
    %1767 = vrot.lane.b32.xlu0 %v1681, 112
    %v1768 = vpop.permute.xlu0 %1767
    %1769 = vrot.lane.b32.xlu0 %v1682, 112
    %v1770 = vpop.permute.xlu0 %1769
    %1771 = vrot.lane.b32.xlu0 %v1683, 112
    %v1772 = vpop.permute.xlu0 %1771
    %1773 = vrot.lane.b32.xlu0 %v1684, 112
    %v1774 = vpop.permute.xlu0 %1773
    %1775 = vrot.lane.b32.xlu0 %v1685, 112
    %v1776 = vpop.permute.xlu0 %1775
    %1777 = vrot.lane.b32.xlu0 %v1686, 112
    %v1778 = vpop.permute.xlu0 %1777
    %1779 = vrot.lane.b32.xlu0 %v1687, 112
    %v1780 = vpop.permute.xlu0 %1779
    %1781 = vrot.lane.b32.xlu0 %v1688, 112
    %v1782 = vpop.permute.xlu0 %1781
    %1783 = vrot.lane.b32.xlu0 %v1689, 112
    %v1784 = vpop.permute.xlu0 %1783
    %1785 = vrot.lane.b32.xlu0 %v1690, 112
    %v1786 = vpop.permute.xlu0 %1785
    %v1819 = vsel %vm846, %v1724, 0.0
    %1820 = vadd.xlane.f32.xlu0 %v1819
    %v1821 = vpop.xlane.xlu0 %1820
    %v1822 = vsel %vm846, %v1726, 0.0
    %1823 = vadd.xlane.f32.xlu0 %v1822
    %v1824 = vpop.xlane.xlu0 %1823
    %v1825 = vsel %vm846, %v1728, 0.0
    %1826 = vadd.xlane.f32.xlu0 %v1825
    %v1827 = vpop.xlane.xlu0 %1826
    %v1828 = vsel %vm846, %v1730, 0.0
    %1829 = vadd.xlane.f32.xlu0 %v1828
    %v1830 = vpop.xlane.xlu0 %1829
    %v1831 = vsel %vm846, %v1732, 0.0
    %1832 = vadd.xlane.f32.xlu0 %v1831
    %v1833 = vpop.xlane.xlu0 %1832
    %v1834 = vsel %vm846, %v1734, 0.0
    %1835 = vadd.xlane.f32.xlu0 %v1834
    %v1836 = vpop.xlane.xlu0 %1835
    %v1837 = vsel %vm846, %v1736, 0.0
    %1838 = vadd.xlane.f32.xlu0 %v1837
    %v1839 = vpop.xlane.xlu0 %1838
    %v1840 = vsel %vm846, %v1738, 0.0
    %1841 = vadd.xlane.f32.xlu0 %v1840
    %v1842 = vpop.xlane.xlu0 %1841
    %v1843 = vsel %vm846, %v1740, 0.0
    %1844 = vadd.xlane.f32.xlu0 %v1843
    %v1845 = vpop.xlane.xlu0 %1844
    %v1846 = vsel %vm846, %v1742, 0.0
    %1847 = vadd.xlane.f32.xlu0 %v1846
    %v1848 = vpop.xlane.xlu0 %1847
    %v1849 = vsel %vm846, %v1744, 0.0
    %1850 = vadd.xlane.f32.xlu0 %v1849
    %v1851 = vpop.xlane.xlu0 %1850
    %v1852 = vsel %vm846, %v1746, 0.0
    %1853 = vadd.xlane.f32.xlu0 %v1852
    %v1854 = vpop.xlane.xlu0 %1853
    %v1855 = vsel %vm846, %v1748, 0.0
    %1856 = vadd.xlane.f32.xlu0 %v1855
    %v1857 = vpop.xlane.xlu0 %1856
    %v1858 = vsel %vm846, %v1750, 0.0
    %1859 = vadd.xlane.f32.xlu0 %v1858
    %v1860 = vpop.xlane.xlu0 %1859
    %v1861 = vsel %vm846, %v1752, 0.0
    %1862 = vadd.xlane.f32.xlu0 %v1861
    %v1863 = vpop.xlane.xlu0 %1862
    %v1864 = vsel %vm846, %v1754, 0.0
    %1865 = vadd.xlane.f32.xlu0 %v1864
    %v1866 = vpop.xlane.xlu0 %1865
    %v1867 = vsel %vm846, %v1756, 0.0
    %1868 = vadd.xlane.f32.xlu0 %v1867
    %v1869 = vpop.xlane.xlu0 %1868
    %v1870 = vsel %vm846, %v1758, 0.0
    %1871 = vadd.xlane.f32.xlu0 %v1870
    %v1872 = vpop.xlane.xlu0 %1871
    %v1873 = vsel %vm846, %v1760, 0.0
    %1874 = vadd.xlane.f32.xlu0 %v1873
    %v1875 = vpop.xlane.xlu0 %1874
    %v1876 = vsel %vm846, %v1762, 0.0
    %1877 = vadd.xlane.f32.xlu0 %v1876
    %v1878 = vpop.xlane.xlu0 %1877
    %v1879 = vsel %vm846, %v1764, 0.0
    %1880 = vadd.xlane.f32.xlu0 %v1879
    %v1881 = vpop.xlane.xlu0 %1880
    %v1882 = vsel %vm846, %v1766, 0.0
    %1883 = vadd.xlane.f32.xlu0 %v1882
    %v1884 = vpop.xlane.xlu0 %1883
    %v1885 = vsel %vm846, %v1768, 0.0
    %1886 = vadd.xlane.f32.xlu0 %v1885
    %v1887 = vpop.xlane.xlu0 %1886
    %v1888 = vsel %vm846, %v1770, 0.0
    %1889 = vadd.xlane.f32.xlu0 %v1888
    %v1890 = vpop.xlane.xlu0 %1889
    %v1891 = vsel %vm846, %v1772, 0.0
    %1892 = vadd.xlane.f32.xlu0 %v1891
    %v1893 = vpop.xlane.xlu0 %1892
    %v1894 = vsel %vm846, %v1774, 0.0
    %1895 = vadd.xlane.f32.xlu0 %v1894
    %v1896 = vpop.xlane.xlu0 %1895
    %v1897 = vsel %vm846, %v1776, 0.0
    %1898 = vadd.xlane.f32.xlu0 %v1897
    %v1899 = vpop.xlane.xlu0 %1898
    %v1900 = vsel %vm846, %v1778, 0.0
    %1901 = vadd.xlane.f32.xlu0 %v1900
    %v1902 = vpop.xlane.xlu0 %1901
    %v1903 = vsel %vm846, %v1780, 0.0
    %1904 = vadd.xlane.f32.xlu0 %v1903
    %v1905 = vpop.xlane.xlu0 %1904
    %v1906 = vsel %vm846, %v1782, 0.0
    %1907 = vadd.xlane.f32.xlu0 %v1906
    %v1908 = vpop.xlane.xlu0 %1907
    %v1909 = vsel %vm846, %v1784, 0.0
    %1910 = vadd.xlane.f32.xlu0 %v1909
    %v1911 = vpop.xlane.xlu0 %1910
    %v1912 = vsel %vm846, %v1786, 0.0
    %1913 = vadd.xlane.f32.xlu0 %v1912
    %v1914 = vpop.xlane.xlu0 %1913
    %v1947 = vlaneseq
    %v1948 = vshrl.u32 %v1947, 7
    %v1949 = vsub.s32 %v976, %v1948
    %v1950 = vrot.slane %v1821, %v1949
    %v1951 = vlaneseq
    %v1952 = vshrl.u32 %v1951, 7
    %v1953 = vsub.s32 %v981, %v1952
    %v1954 = vrot.slane %v1824, %v1953
    %v1955 = vsel %vm986, %v1954, %v1950
    %v1956 = vlaneseq
    %v1957 = vshrl.u32 %v1956, 7
    %v1958 = vsub.s32 %v976, %v1957
    %v1959 = vrot.slane %v1827, %v1958
    %v1960 = vlaneseq
    %v1961 = vshrl.u32 %v1960, 7
    %v1962 = vsub.s32 %v981, %v1961
    %v1963 = vrot.slane %v1830, %v1962
    %v1964 = vsel %vm986, %v1963, %v1959
    %v1965 = vlaneseq
    %v1966 = vshrl.u32 %v1965, 7
    %v1967 = vsub.s32 %v976, %v1966
    %v1968 = vrot.slane %v1833, %v1967
    %v1969 = vlaneseq
    %v1970 = vshrl.u32 %v1969, 7
    %v1971 = vsub.s32 %v981, %v1970
    %v1972 = vrot.slane %v1836, %v1971
    %v1973 = vsel %vm986, %v1972, %v1968
    %v1974 = vlaneseq
    %v1975 = vshrl.u32 %v1974, 7
    %v1976 = vsub.s32 %v976, %v1975
    %v1977 = vrot.slane %v1839, %v1976
    %v1978 = vlaneseq
    %v1979 = vshrl.u32 %v1978, 7
    %v1980 = vsub.s32 %v981, %v1979
    %v1981 = vrot.slane %v1842, %v1980
    %v1982 = vsel %vm986, %v1981, %v1977
    %v1983 = vlaneseq
    %v1984 = vshrl.u32 %v1983, 7
    %v1985 = vsub.s32 %v976, %v1984
    %v1986 = vrot.slane %v1845, %v1985
    %v1987 = vlaneseq
    %v1988 = vshrl.u32 %v1987, 7
    %v1989 = vsub.s32 %v981, %v1988
    %v1990 = vrot.slane %v1848, %v1989
    %v1991 = vsel %vm986, %v1990, %v1986
    %v1992 = vlaneseq
    %v1993 = vshrl.u32 %v1992, 7
    %v1994 = vsub.s32 %v976, %v1993
    %v1995 = vrot.slane %v1851, %v1994
    %v1996 = vlaneseq
    %v1997 = vshrl.u32 %v1996, 7
    %v1998 = vsub.s32 %v981, %v1997
    %v1999 = vrot.slane %v1854, %v1998
    %v2000 = vsel %vm986, %v1999, %v1995
    %v2001 = vlaneseq
    %v2002 = vshrl.u32 %v2001, 7
    %v2003 = vsub.s32 %v976, %v2002
    %v2004 = vrot.slane %v1857, %v2003
    %v2005 = vlaneseq
    %v2006 = vshrl.u32 %v2005, 7
    %v2007 = vsub.s32 %v981, %v2006
    %v2008 = vrot.slane %v1860, %v2007
    %v2009 = vsel %vm986, %v2008, %v2004
    %v2010 = vlaneseq
    %v2011 = vshrl.u32 %v2010, 7
    %v2012 = vsub.s32 %v976, %v2011
    %v2013 = vrot.slane %v1863, %v2012
    %v2014 = vlaneseq
    %v2015 = vshrl.u32 %v2014, 7
    %v2016 = vsub.s32 %v981, %v2015
    %v2017 = vrot.slane %v1866, %v2016
    %v2018 = vsel %vm986, %v2017, %v2013
    %v2019 = vlaneseq
    %v2020 = vshrl.u32 %v2019, 7
    %v2021 = vsub.s32 %v976, %v2020
    %v2022 = vrot.slane %v1869, %v2021
    %v2023 = vlaneseq
    %v2024 = vshrl.u32 %v2023, 7
    %v2025 = vsub.s32 %v981, %v2024
    %v2026 = vrot.slane %v1872, %v2025
    %v2027 = vsel %vm986, %v2026, %v2022
    %v2028 = vlaneseq
    %v2029 = vshrl.u32 %v2028, 7
    %v2030 = vsub.s32 %v976, %v2029
    %v2031 = vrot.slane %v1875, %v2030
    %v2032 = vlaneseq
    %v2033 = vshrl.u32 %v2032, 7
    %v2034 = vsub.s32 %v981, %v2033
    %v2035 = vrot.slane %v1878, %v2034
    %v2036 = vsel %vm986, %v2035, %v2031
    %v2037 = vlaneseq
    %v2038 = vshrl.u32 %v2037, 7
    %v2039 = vsub.s32 %v976, %v2038
    %v2040 = vrot.slane %v1881, %v2039
    %v2041 = vlaneseq
    %v2042 = vshrl.u32 %v2041, 7
    %v2043 = vsub.s32 %v981, %v2042
    %v2044 = vrot.slane %v1884, %v2043
    %v2045 = vsel %vm986, %v2044, %v2040
    %v2046 = vlaneseq
    %v2047 = vshrl.u32 %v2046, 7
    %v2048 = vsub.s32 %v976, %v2047
    %v2049 = vrot.slane %v1887, %v2048
    %v2050 = vlaneseq
    %v2051 = vshrl.u32 %v2050, 7
    %v2052 = vsub.s32 %v981, %v2051
    %v2053 = vrot.slane %v1890, %v2052
    %v2054 = vsel %vm986, %v2053, %v2049
    %v2055 = vlaneseq
    %v2056 = vshrl.u32 %v2055, 7
    %v2057 = vsub.s32 %v976, %v2056
    %v2058 = vrot.slane %v1893, %v2057
    %v2059 = vlaneseq
    %v2060 = vshrl.u32 %v2059, 7
    %v2061 = vsub.s32 %v981, %v2060
    %v2062 = vrot.slane %v1896, %v2061
    %v2063 = vsel %vm986, %v2062, %v2058
    %v2064 = vlaneseq
    %v2065 = vshrl.u32 %v2064, 7
    %v2066 = vsub.s32 %v976, %v2065
    %v2067 = vrot.slane %v1899, %v2066
    %v2068 = vlaneseq
    %v2069 = vshrl.u32 %v2068, 7
    %v2070 = vsub.s32 %v981, %v2069
    %v2071 = vrot.slane %v1902, %v2070
    %v2072 = vsel %vm986, %v2071, %v2067
    %v2073 = vlaneseq
    %v2074 = vshrl.u32 %v2073, 7
    %v2075 = vsub.s32 %v976, %v2074
    %v2076 = vrot.slane %v1905, %v2075
    %v2077 = vlaneseq
    %v2078 = vshrl.u32 %v2077, 7
    %v2079 = vsub.s32 %v981, %v2078
    %v2080 = vrot.slane %v1908, %v2079
    %v2081 = vsel %vm986, %v2080, %v2076
    %v2082 = vlaneseq
    %v2083 = vshrl.u32 %v2082, 7
    %v2084 = vsub.s32 %v976, %v2083
    %v2085 = vrot.slane %v1911, %v2084
    %v2086 = vlaneseq
    %v2087 = vshrl.u32 %v2086, 7
    %v2088 = vsub.s32 %v981, %v2087
    %v2089 = vrot.slane %v1914, %v2088
    %v2090 = vsel %vm986, %v2089, %v2085
    %v2091 = vsel %vm1123, %v1964, %v1955
    %v2092 = vsel %vm1125, %v1973, %v2091
    %v2093 = vsel %vm1127, %v1982, %v2092
    %v2094 = vsel %vm1129, %v1991, %v2093
    %v2095 = vsel %vm1131, %v2000, %v2094
    %v2096 = vsel %vm1133, %v2009, %v2095
    %v2097 = vsel %vm1135, %v2018, %v2096
    %v2098 = vsel %vm1123, %v2036, %v2027
    %v2099 = vsel %vm1125, %v2045, %v2098
    %v2100 = vsel %vm1127, %v2054, %v2099
    %v2101 = vsel %vm1129, %v2063, %v2100
    %v2102 = vsel %vm1131, %v2072, %v2101
    %v2103 = vsel %vm1133, %v2081, %v2102
    %v2104 = vsel %vm1135, %v2090, %v2103
    %v2107 = vsel %vm532, %v2097, -1e+30
    %v2108 = vsel %vm533, %v2104, -1e+30
    %v2109 = vsel %vm1148, %v2107, -inf
    %2110 = vmax.xlane.f32.xlu0 %v2109
    %v2111 = vpop.xlane.xlu0 %2110
    %v2112 = vsel %vm1148, %v2108, -inf
    %2113 = vmax.xlane.f32.xlu0 %v2112
    %v2114 = vpop.xlane.xlu0 %2113
    %v2115 = vsub.f32 %v2107, %v2111
    %v2116 = vsub.f32 %v2108, %v2114
    %v2117 = vmul.f32 %v2115, 1.442695
    %v2118 = vpow.pop %v2117
    %v2119 = vmul.f32 %v2116, 1.442695
    %v2120 = vpow.pop %v2119
    %v2121 = vsel %vm1148, %v2118, 0.0
    %2122 = vadd.xlane.f32.xlu0 %v2121
    %v2123 = vpop.xlane.xlu0 %2122
    %v2124 = vsel %vm1148, %v2120, 0.0
    %2125 = vadd.xlane.f32.xlu0 %v2124
    %v2126 = vpop.xlane.xlu0 %2125
    %v2127 = vrcp.pop %v2123
    %v2128 = vrcp.pop %v2126
    %v2129 = vmul.f32 %v2118, %v2127
    %v2130 = vmul.f32 %v2120, %v2128
    %v2131 = vlaneseq
    %v2132 = vshrl.u32 %v2131, 7
    %v2133 = vsub.s32 3, %v2132
    %v2134 = vrot.slane %v528, %v2133
    %2136 = vrot.lane.b32.xlu0 %v2134, 24
    %v2137 = vpop.permute.xlu0 %2136
    %v2139 = vmul.f32 %v778, %v2137
    %v2140 = vmul.f32 %v779, %v2137
    %v2141 = vmul.f32 %v780, %v2137
    %v2142 = vmul.f32 %v781, %v2137
    %v2143 = vmul.f32 %v782, %v2137
    %v2144 = vmul.f32 %v783, %v2137
    %v2145 = vmul.f32 %v784, %v2137
    %v2146 = vmul.f32 %v785, %v2137
    %v2147 = vmul.f32 %v786, %v2137
    %v2148 = vmul.f32 %v787, %v2137
    %v2149 = vmul.f32 %v788, %v2137
    %v2150 = vmul.f32 %v789, %v2137
    %v2151 = vmul.f32 %v790, %v2137
    %v2152 = vmul.f32 %v791, %v2137
    %v2153 = vmul.f32 %v792, %v2137
    %v2154 = vmul.f32 %v793, %v2137
    %v2155 = vmul.f32 %v794, %v2137
    %v2156 = vmul.f32 %v795, %v2137
    %v2157 = vmul.f32 %v796, %v2137
    %v2158 = vmul.f32 %v797, %v2137
    %v2159 = vmul.f32 %v798, %v2137
    %v2160 = vmul.f32 %v799, %v2137
    %v2161 = vmul.f32 %v800, %v2137
    %v2162 = vmul.f32 %v801, %v2137
    %v2163 = vmul.f32 %v802, %v2137
    %v2164 = vmul.f32 %v803, %v2137
    %v2165 = vmul.f32 %v804, %v2137
    %v2166 = vmul.f32 %v805, %v2137
    %v2167 = vmul.f32 %v806, %v2137
    %v2168 = vmul.f32 %v807, %v2137
    %v2169 = vmul.f32 %v808, %v2137
    %v2170 = vmul.f32 %v809, %v2137
    %2203 = vrot.lane.b32.xlu0 %v2139, 104
    %v2204 = vpop.permute.xlu0 %2203
    %2205 = vrot.lane.b32.xlu0 %v2140, 104
    %v2206 = vpop.permute.xlu0 %2205
    %2207 = vrot.lane.b32.xlu0 %v2141, 104
    %v2208 = vpop.permute.xlu0 %2207
    %2209 = vrot.lane.b32.xlu0 %v2142, 104
    %v2210 = vpop.permute.xlu0 %2209
    %2211 = vrot.lane.b32.xlu0 %v2143, 104
    %v2212 = vpop.permute.xlu0 %2211
    %2213 = vrot.lane.b32.xlu0 %v2144, 104
    %v2214 = vpop.permute.xlu0 %2213
    %2215 = vrot.lane.b32.xlu0 %v2145, 104
    %v2216 = vpop.permute.xlu0 %2215
    %2217 = vrot.lane.b32.xlu0 %v2146, 104
    %v2218 = vpop.permute.xlu0 %2217
    %2219 = vrot.lane.b32.xlu0 %v2147, 104
    %v2220 = vpop.permute.xlu0 %2219
    %2221 = vrot.lane.b32.xlu0 %v2148, 104
    %v2222 = vpop.permute.xlu0 %2221
    %2223 = vrot.lane.b32.xlu0 %v2149, 104
    %v2224 = vpop.permute.xlu0 %2223
    %2225 = vrot.lane.b32.xlu0 %v2150, 104
    %v2226 = vpop.permute.xlu0 %2225
    %2227 = vrot.lane.b32.xlu0 %v2151, 104
    %v2228 = vpop.permute.xlu0 %2227
    %2229 = vrot.lane.b32.xlu0 %v2152, 104
    %v2230 = vpop.permute.xlu0 %2229
    %2231 = vrot.lane.b32.xlu0 %v2153, 104
    %v2232 = vpop.permute.xlu0 %2231
    %2233 = vrot.lane.b32.xlu0 %v2154, 104
    %v2234 = vpop.permute.xlu0 %2233
    %2235 = vrot.lane.b32.xlu0 %v2155, 104
    %v2236 = vpop.permute.xlu0 %2235
    %2237 = vrot.lane.b32.xlu0 %v2156, 104
    %v2238 = vpop.permute.xlu0 %2237
    %2239 = vrot.lane.b32.xlu0 %v2157, 104
    %v2240 = vpop.permute.xlu0 %2239
    %2241 = vrot.lane.b32.xlu0 %v2158, 104
    %v2242 = vpop.permute.xlu0 %2241
    %2243 = vrot.lane.b32.xlu0 %v2159, 104
    %v2244 = vpop.permute.xlu0 %2243
    %2245 = vrot.lane.b32.xlu0 %v2160, 104
    %v2246 = vpop.permute.xlu0 %2245
    %2247 = vrot.lane.b32.xlu0 %v2161, 104
    %v2248 = vpop.permute.xlu0 %2247
    %2249 = vrot.lane.b32.xlu0 %v2162, 104
    %v2250 = vpop.permute.xlu0 %2249
    %2251 = vrot.lane.b32.xlu0 %v2163, 104
    %v2252 = vpop.permute.xlu0 %2251
    %2253 = vrot.lane.b32.xlu0 %v2164, 104
    %v2254 = vpop.permute.xlu0 %2253
    %2255 = vrot.lane.b32.xlu0 %v2165, 104
    %v2256 = vpop.permute.xlu0 %2255
    %2257 = vrot.lane.b32.xlu0 %v2166, 104
    %v2258 = vpop.permute.xlu0 %2257
    %2259 = vrot.lane.b32.xlu0 %v2167, 104
    %v2260 = vpop.permute.xlu0 %2259
    %2261 = vrot.lane.b32.xlu0 %v2168, 104
    %v2262 = vpop.permute.xlu0 %2261
    %2263 = vrot.lane.b32.xlu0 %v2169, 104
    %v2264 = vpop.permute.xlu0 %2263
    %2265 = vrot.lane.b32.xlu0 %v2170, 104
    %v2266 = vpop.permute.xlu0 %2265
    %v2299 = vsel %vm846, %v2204, 0.0
    %2300 = vadd.xlane.f32.xlu0 %v2299
    %v2301 = vpop.xlane.xlu0 %2300
    %v2302 = vsel %vm846, %v2206, 0.0
    %2303 = vadd.xlane.f32.xlu0 %v2302
    %v2304 = vpop.xlane.xlu0 %2303
    %v2305 = vsel %vm846, %v2208, 0.0
    %2306 = vadd.xlane.f32.xlu0 %v2305
    %v2307 = vpop.xlane.xlu0 %2306
    %v2308 = vsel %vm846, %v2210, 0.0
    %2309 = vadd.xlane.f32.xlu0 %v2308
    %v2310 = vpop.xlane.xlu0 %2309
    %v2311 = vsel %vm846, %v2212, 0.0
    %2312 = vadd.xlane.f32.xlu0 %v2311
    %v2313 = vpop.xlane.xlu0 %2312
    %v2314 = vsel %vm846, %v2214, 0.0
    %2315 = vadd.xlane.f32.xlu0 %v2314
    %v2316 = vpop.xlane.xlu0 %2315
    %v2317 = vsel %vm846, %v2216, 0.0
    %2318 = vadd.xlane.f32.xlu0 %v2317
    %v2319 = vpop.xlane.xlu0 %2318
    %v2320 = vsel %vm846, %v2218, 0.0
    %2321 = vadd.xlane.f32.xlu0 %v2320
    %v2322 = vpop.xlane.xlu0 %2321
    %v2323 = vsel %vm846, %v2220, 0.0
    %2324 = vadd.xlane.f32.xlu0 %v2323
    %v2325 = vpop.xlane.xlu0 %2324
    %v2326 = vsel %vm846, %v2222, 0.0
    %2327 = vadd.xlane.f32.xlu0 %v2326
    %v2328 = vpop.xlane.xlu0 %2327
    %v2329 = vsel %vm846, %v2224, 0.0
    %2330 = vadd.xlane.f32.xlu0 %v2329
    %v2331 = vpop.xlane.xlu0 %2330
    %v2332 = vsel %vm846, %v2226, 0.0
    %2333 = vadd.xlane.f32.xlu0 %v2332
    %v2334 = vpop.xlane.xlu0 %2333
    %v2335 = vsel %vm846, %v2228, 0.0
    %2336 = vadd.xlane.f32.xlu0 %v2335
    %v2337 = vpop.xlane.xlu0 %2336
    %v2338 = vsel %vm846, %v2230, 0.0
    %2339 = vadd.xlane.f32.xlu0 %v2338
    %v2340 = vpop.xlane.xlu0 %2339
    %v2341 = vsel %vm846, %v2232, 0.0
    %2342 = vadd.xlane.f32.xlu0 %v2341
    %v2343 = vpop.xlane.xlu0 %2342
    %v2344 = vsel %vm846, %v2234, 0.0
    %2345 = vadd.xlane.f32.xlu0 %v2344
    %v2346 = vpop.xlane.xlu0 %2345
    %v2347 = vsel %vm846, %v2236, 0.0
    %2348 = vadd.xlane.f32.xlu0 %v2347
    %v2349 = vpop.xlane.xlu0 %2348
    %v2350 = vsel %vm846, %v2238, 0.0
    %2351 = vadd.xlane.f32.xlu0 %v2350
    %v2352 = vpop.xlane.xlu0 %2351
    %v2353 = vsel %vm846, %v2240, 0.0
    %2354 = vadd.xlane.f32.xlu0 %v2353
    %v2355 = vpop.xlane.xlu0 %2354
    %v2356 = vsel %vm846, %v2242, 0.0
    %2357 = vadd.xlane.f32.xlu0 %v2356
    %v2358 = vpop.xlane.xlu0 %2357
    %v2359 = vsel %vm846, %v2244, 0.0
    %2360 = vadd.xlane.f32.xlu0 %v2359
    %v2361 = vpop.xlane.xlu0 %2360
    %v2362 = vsel %vm846, %v2246, 0.0
    %2363 = vadd.xlane.f32.xlu0 %v2362
    %v2364 = vpop.xlane.xlu0 %2363
    %v2365 = vsel %vm846, %v2248, 0.0
    %2366 = vadd.xlane.f32.xlu0 %v2365
    %v2367 = vpop.xlane.xlu0 %2366
    %v2368 = vsel %vm846, %v2250, 0.0
    %2369 = vadd.xlane.f32.xlu0 %v2368
    %v2370 = vpop.xlane.xlu0 %2369
    %v2371 = vsel %vm846, %v2252, 0.0
    %2372 = vadd.xlane.f32.xlu0 %v2371
    %v2373 = vpop.xlane.xlu0 %2372
    %v2374 = vsel %vm846, %v2254, 0.0
    %2375 = vadd.xlane.f32.xlu0 %v2374
    %v2376 = vpop.xlane.xlu0 %2375
    %v2377 = vsel %vm846, %v2256, 0.0
    %2378 = vadd.xlane.f32.xlu0 %v2377
    %v2379 = vpop.xlane.xlu0 %2378
    %v2380 = vsel %vm846, %v2258, 0.0
    %2381 = vadd.xlane.f32.xlu0 %v2380
    %v2382 = vpop.xlane.xlu0 %2381
    %v2383 = vsel %vm846, %v2260, 0.0
    %2384 = vadd.xlane.f32.xlu0 %v2383
    %v2385 = vpop.xlane.xlu0 %2384
    %v2386 = vsel %vm846, %v2262, 0.0
    %2387 = vadd.xlane.f32.xlu0 %v2386
    %v2388 = vpop.xlane.xlu0 %2387
    %v2389 = vsel %vm846, %v2264, 0.0
    %2390 = vadd.xlane.f32.xlu0 %v2389
    %v2391 = vpop.xlane.xlu0 %2390
    %v2392 = vsel %vm846, %v2266, 0.0
    %2393 = vadd.xlane.f32.xlu0 %v2392
    %v2394 = vpop.xlane.xlu0 %2393
    %v2427 = vlaneseq
    %v2428 = vshrl.u32 %v2427, 7
    %v2429 = vsub.s32 %v976, %v2428
    %v2430 = vrot.slane %v2301, %v2429
    %v2431 = vlaneseq
    %v2432 = vshrl.u32 %v2431, 7
    %v2433 = vsub.s32 %v981, %v2432
    %v2434 = vrot.slane %v2304, %v2433
    %v2435 = vsel %vm986, %v2434, %v2430
    %v2436 = vlaneseq
    %v2437 = vshrl.u32 %v2436, 7
    %v2438 = vsub.s32 %v976, %v2437
    %v2439 = vrot.slane %v2307, %v2438
    %v2440 = vlaneseq
    %v2441 = vshrl.u32 %v2440, 7
    %v2442 = vsub.s32 %v981, %v2441
    %v2443 = vrot.slane %v2310, %v2442
    %v2444 = vsel %vm986, %v2443, %v2439
    %v2445 = vlaneseq
    %v2446 = vshrl.u32 %v2445, 7
    %v2447 = vsub.s32 %v976, %v2446
    %v2448 = vrot.slane %v2313, %v2447
    %v2449 = vlaneseq
    %v2450 = vshrl.u32 %v2449, 7
    %v2451 = vsub.s32 %v981, %v2450
    %v2452 = vrot.slane %v2316, %v2451
    %v2453 = vsel %vm986, %v2452, %v2448
    %v2454 = vlaneseq
    %v2455 = vshrl.u32 %v2454, 7
    %v2456 = vsub.s32 %v976, %v2455
    %v2457 = vrot.slane %v2319, %v2456
    %v2458 = vlaneseq
    %v2459 = vshrl.u32 %v2458, 7
    %v2460 = vsub.s32 %v981, %v2459
    %v2461 = vrot.slane %v2322, %v2460
    %v2462 = vsel %vm986, %v2461, %v2457
    %v2463 = vlaneseq
    %v2464 = vshrl.u32 %v2463, 7
    %v2465 = vsub.s32 %v976, %v2464
    %v2466 = vrot.slane %v2325, %v2465
    %v2467 = vlaneseq
    %v2468 = vshrl.u32 %v2467, 7
    %v2469 = vsub.s32 %v981, %v2468
    %v2470 = vrot.slane %v2328, %v2469
    %v2471 = vsel %vm986, %v2470, %v2466
    %v2472 = vlaneseq
    %v2473 = vshrl.u32 %v2472, 7
    %v2474 = vsub.s32 %v976, %v2473
    %v2475 = vrot.slane %v2331, %v2474
    %v2476 = vlaneseq
    %v2477 = vshrl.u32 %v2476, 7
    %v2478 = vsub.s32 %v981, %v2477
    %v2479 = vrot.slane %v2334, %v2478
    %v2480 = vsel %vm986, %v2479, %v2475
    %v2481 = vlaneseq
    %v2482 = vshrl.u32 %v2481, 7
    %v2483 = vsub.s32 %v976, %v2482
    %v2484 = vrot.slane %v2337, %v2483
    %v2485 = vlaneseq
    %v2486 = vshrl.u32 %v2485, 7
    %v2487 = vsub.s32 %v981, %v2486
    %v2488 = vrot.slane %v2340, %v2487
    %v2489 = vsel %vm986, %v2488, %v2484
    %v2490 = vlaneseq
    %v2491 = vshrl.u32 %v2490, 7
    %v2492 = vsub.s32 %v976, %v2491
    %v2493 = vrot.slane %v2343, %v2492
    %v2494 = vlaneseq
    %v2495 = vshrl.u32 %v2494, 7
    %v2496 = vsub.s32 %v981, %v2495
    %v2497 = vrot.slane %v2346, %v2496
    %v2498 = vsel %vm986, %v2497, %v2493
    %v2499 = vlaneseq
    %v2500 = vshrl.u32 %v2499, 7
    %v2501 = vsub.s32 %v976, %v2500
    %v2502 = vrot.slane %v2349, %v2501
    %v2503 = vlaneseq
    %v2504 = vshrl.u32 %v2503, 7
    %v2505 = vsub.s32 %v981, %v2504
    %v2506 = vrot.slane %v2352, %v2505
    %v2507 = vsel %vm986, %v2506, %v2502
    %v2508 = vlaneseq
    %v2509 = vshrl.u32 %v2508, 7
    %v2510 = vsub.s32 %v976, %v2509
    %v2511 = vrot.slane %v2355, %v2510
    %v2512 = vlaneseq
    %v2513 = vshrl.u32 %v2512, 7
    %v2514 = vsub.s32 %v981, %v2513
    %v2515 = vrot.slane %v2358, %v2514
    %v2516 = vsel %vm986, %v2515, %v2511
    %v2517 = vlaneseq
    %v2518 = vshrl.u32 %v2517, 7
    %v2519 = vsub.s32 %v976, %v2518
    %v2520 = vrot.slane %v2361, %v2519
    %v2521 = vlaneseq
    %v2522 = vshrl.u32 %v2521, 7
    %v2523 = vsub.s32 %v981, %v2522
    %v2524 = vrot.slane %v2364, %v2523
    %v2525 = vsel %vm986, %v2524, %v2520
    %v2526 = vlaneseq
    %v2527 = vshrl.u32 %v2526, 7
    %v2528 = vsub.s32 %v976, %v2527
    %v2529 = vrot.slane %v2367, %v2528
    %v2530 = vlaneseq
    %v2531 = vshrl.u32 %v2530, 7
    %v2532 = vsub.s32 %v981, %v2531
    %v2533 = vrot.slane %v2370, %v2532
    %v2534 = vsel %vm986, %v2533, %v2529
    %v2535 = vlaneseq
    %v2536 = vshrl.u32 %v2535, 7
    %v2537 = vsub.s32 %v976, %v2536
    %v2538 = vrot.slane %v2373, %v2537
    %v2539 = vlaneseq
    %v2540 = vshrl.u32 %v2539, 7
    %v2541 = vsub.s32 %v981, %v2540
    %v2542 = vrot.slane %v2376, %v2541
    %v2543 = vsel %vm986, %v2542, %v2538
    %v2544 = vlaneseq
    %v2545 = vshrl.u32 %v2544, 7
    %v2546 = vsub.s32 %v976, %v2545
    %v2547 = vrot.slane %v2379, %v2546
    %v2548 = vlaneseq
    %v2549 = vshrl.u32 %v2548, 7
    %v2550 = vsub.s32 %v981, %v2549
    %v2551 = vrot.slane %v2382, %v2550
    %v2552 = vsel %vm986, %v2551, %v2547
    %v2553 = vlaneseq
    %v2554 = vshrl.u32 %v2553, 7
    %v2555 = vsub.s32 %v976, %v2554
    %v2556 = vrot.slane %v2385, %v2555
    %v2557 = vlaneseq
    %v2558 = vshrl.u32 %v2557, 7
    %v2559 = vsub.s32 %v981, %v2558
    %v2560 = vrot.slane %v2388, %v2559
    %v2561 = vsel %vm986, %v2560, %v2556
    %v2562 = vlaneseq
    %v2563 = vshrl.u32 %v2562, 7
    %v2564 = vsub.s32 %v976, %v2563
    %v2565 = vrot.slane %v2391, %v2564
    %v2566 = vlaneseq
    %v2567 = vshrl.u32 %v2566, 7
    %v2568 = vsub.s32 %v981, %v2567
    %v2569 = vrot.slane %v2394, %v2568
    %v2570 = vsel %vm986, %v2569, %v2565
    %v2571 = vsel %vm1123, %v2444, %v2435
    %v2572 = vsel %vm1125, %v2453, %v2571
    %v2573 = vsel %vm1127, %v2462, %v2572
    %v2574 = vsel %vm1129, %v2471, %v2573
    %v2575 = vsel %vm1131, %v2480, %v2574
    %v2576 = vsel %vm1133, %v2489, %v2575
    %v2577 = vsel %vm1135, %v2498, %v2576
    %v2578 = vsel %vm1123, %v2516, %v2507
    %v2579 = vsel %vm1125, %v2525, %v2578
    %v2580 = vsel %vm1127, %v2534, %v2579
    %v2581 = vsel %vm1129, %v2543, %v2580
    %v2582 = vsel %vm1131, %v2552, %v2581
    %v2583 = vsel %vm1133, %v2561, %v2582
    %v2584 = vsel %vm1135, %v2570, %v2583
    %v2587 = vsel %vm532, %v2577, -1e+30
    %v2588 = vsel %vm533, %v2584, -1e+30
    %v2589 = vsel %vm1148, %v2587, -inf
    %2590 = vmax.xlane.f32.xlu0 %v2589
    %v2591 = vpop.xlane.xlu0 %2590
    %v2592 = vsel %vm1148, %v2588, -inf
    %2593 = vmax.xlane.f32.xlu0 %v2592
    %v2594 = vpop.xlane.xlu0 %2593
    %v2595 = vsub.f32 %v2587, %v2591
    %v2596 = vsub.f32 %v2588, %v2594
    %v2597 = vmul.f32 %v2595, 1.442695
    %v2598 = vpow.pop %v2597
    %v2599 = vmul.f32 %v2596, 1.442695
    %v2600 = vpow.pop %v2599
    %v2601 = vsel %vm1148, %v2598, 0.0
    %2602 = vadd.xlane.f32.xlu0 %v2601
    %v2603 = vpop.xlane.xlu0 %2602
    %v2604 = vsel %vm1148, %v2600, 0.0
    %2605 = vadd.xlane.f32.xlu0 %v2604
    %v2606 = vpop.xlane.xlu0 %2605
    %v2607 = vrcp.pop %v2603
    %v2608 = vrcp.pop %v2606
    %v2609 = vmul.f32 %v2598, %v2607
    %v2610 = vmul.f32 %v2600, %v2608
    %2613 = vrot.lane.b32.xlu0 %v1649, 16
    %v2614 = vpop.permute.xlu0 %2613
    %2615 = vrot.lane.b32.xlu0 %v1650, 16
    %v2616 = vpop.permute.xlu0 %2615
    %2621 = vrot.lane.b32.xlu0 %v2129, 32
    %v2622 = vpop.permute.xlu0 %2621
    %2623 = vrot.lane.b32.xlu0 %v2130, 32
    %v2624 = vpop.permute.xlu0 %2623
    %2629 = vrot.lane.b32.xlu0 %v2609, 48
    %v2630 = vpop.permute.xlu0 %2629
    %2631 = vrot.lane.b32.xlu0 %v2610, 48
    %v2632 = vpop.permute.xlu0 %2631
    %v2635 = vsel %vm1148, %v1169, %v2614
    %v2636 = vsel %vm1148, %v1170, %v2616
    %v2637 = vsel %vm360, %v2635, %v2622
    %v2638 = vsel %vm360, %v2636, %v2624
    %vm2639 = vcmask 392192
    %v2640 = vsel %vm2639, %v2637, %v2630
    %v2641 = vsel %vm2639, %v2638, %v2632
    %2644 = vrot.lane.b32.xlu0 %v434, 120
    %v2645 = vpop.permute.xlu0 %2644
    %2646 = vrot.lane.b32.xlu0 %v439, 120
    %v2647 = vpop.permute.xlu0 %2646
    %2650 = vrot.lane.b32.xlu0 %v434, 112
    %v2651 = vpop.permute.xlu0 %2650
    %2652 = vrot.lane.b32.xlu0 %v439, 112
    %v2653 = vpop.permute.xlu0 %2652
    %2656 = vrot.lane.b32.xlu0 %v434, 104
    %v2657 = vpop.permute.xlu0 %2656
    %2658 = vrot.lane.b32.xlu0 %v439, 104
    %v2659 = vpop.permute.xlu0 %2658
    %vm2662 = vcmask 523264
    %v2664 = vsel %vm2662, %v2640, 0
    %v2667 = vsel %vm2662, %v2641, 0
    %2669 = vmatprep.subr.mxu0 0.0
    %2670 = vmatpush1.msra.mxu0 0.0
    %2671 = vmatprep.subr.mxu0 0.0
    %2672 = vmatpush1.msra.mxu0 0.0
    %2673 = vmatprep.subr.mxu0 0.0
    %2674 = vmatpush1.msra.mxu0 0.0
    %2675 = vmatprep.subr.mxu0 0.0
    %2676 = vmatpush1.msra.mxu0 0.0
    %2677 = vmatprep.subr.mxu0 0.0
    %2678 = vmatpush1.msra.mxu0 0.0
    %2679 = vmatprep.subr.mxu0 0.0
    %2680 = vmatpush1.msra.mxu0 0.0
    %2681 = vmatprep.subr.mxu0 0.0
    %2682 = vmatpush1.msra.mxu0 0.0
    %2683 = vmatprep.subr.mxu0 0.0
    %2684 = vmatpush1.msra.mxu0 0.0
    %2685 = vmatprep.subr.mxu0 0.0
    %2686 = vmatpush1.msra.mxu0 %v2659
    %2687 = vmatprep.subr.mxu0 0.0
    %2688 = vmatpush1.msra.mxu0 %v2657
    %2689 = vmatprep.subr.mxu0 0.0
    %2690 = vmatpush1.msra.mxu0 %v2653
    %2691 = vmatprep.subr.mxu0 0.0
    %2692 = vmatpush1.msra.mxu0 %v2651
    %2693 = vmatprep.subr.mxu0 0.0
    %2694 = vmatpush1.msra.mxu0 %v2647
    %2695 = vmatprep.subr.mxu0 0.0
    %2696 = vmatpush1.msra.mxu0 %v2645
    %2697 = vmatprep.subr.mxu0 0.0
    %2698 = vmatpush1.msra.mxu0 %v439
    %2699 = vmatprep.subr.mxu0 0.0
    %2700 = vmatpush1.msra.mxu0 %v434
    %2701 = vmatprep.subr.mxu0 0.0
    %2702 = vmatpush2.msra.mxu0 0.0
    %2703 = vmatprep.subr.mxu0 0.0
    %2704 = vmatpush2.msra.mxu0 0.0
    %2705 = vmatprep.subr.mxu0 0.0
    %2706 = vmatpush2.msra.mxu0 0.0
    %2707 = vmatprep.subr.mxu0 0.0
    %2708 = vmatpush2.msra.mxu0 0.0
    %2709 = vmatprep.subr.mxu0 0.0
    %2710 = vmatpush2.msra.mxu0 0.0
    %2711 = vmatprep.subr.mxu0 0.0
    %2712 = vmatpush2.msra.mxu0 0.0
    %2713 = vmatprep.subr.mxu0 0.0
    %2714 = vmatpush2.msra.mxu0 0.0
    %2715 = vmatprep.subr.mxu0 0.0
    %2716 = vmatpush2.msra.mxu0 0.0
    %2717 = vmatprep.subr.mxu0 0.0
    %2718 = vmatpush2.msra.mxu0 0.0
    %2719 = vmatprep.subr.mxu0 0.0
    %2720 = vmatpush2.msra.mxu0 0.0
    %2721 = vmatprep.subr.mxu0 0.0
    %2722 = vmatpush2.msra.mxu0 0.0
    %2723 = vmatprep.subr.mxu0 0.0
    %2724 = vmatpush2.msra.mxu0 0.0
    %2725 = vmatprep.subr.mxu0 0.0
    %2726 = vmatpush2.msra.mxu0 0.0
    %2727 = vmatprep.subr.mxu0 0.0
    %2728 = vmatpush2.msra.mxu0 0.0
    %2729 = vmatprep.subr.mxu0 0.0
    %2730 = vmatpush2.msra.mxu0 0.0
    %2731 = vmatprep.subr.mxu0 0.0
    %2732 = vmatpush2.msra.mxu0 0.0
    %2733 = vmatprep.mubr.f32.mxu0 0.0
    %2734 = vmatmul.mubr.f32.gmra.mxu0 %v2664
    %v2735 = vpop.f32.mrf.mxu0
    %v2736 = vadd.f32 0.0, %v2735
    %v2737 = vpop.f32.mrf.mxu0
    %2738 = vmatprep.mubr.f32.mxu0 0.0
    %2739 = vmatmul.mubr.f32.gmra.mxu0 %v2667
    %v2740 = vpop.f32.mrf.mxu0
    %v2741 = vadd.f32 0.0, %v2740
    %v2742 = vpop.f32.mrf.mxu0
    %2743 = vdwg.mxu0
    %v2744 = vlaneseq
    %v2745 = vshrl.u32 %v2744, 7
    %v2746 = vsub.s32 4, %v2745
    %v2747 = vrot.slane %v528, %v2746
    %2749 = vrot.lane.b32.xlu0 %v2747, 32
    %v2750 = vpop.permute.xlu0 %2749
    %v2752 = vmul.f32 %v778, %v2750
    %v2753 = vmul.f32 %v779, %v2750
    %v2754 = vmul.f32 %v780, %v2750
    %v2755 = vmul.f32 %v781, %v2750
    %v2756 = vmul.f32 %v782, %v2750
    %v2757 = vmul.f32 %v783, %v2750
    %v2758 = vmul.f32 %v784, %v2750
    %v2759 = vmul.f32 %v785, %v2750
    %v2760 = vmul.f32 %v786, %v2750
    %v2761 = vmul.f32 %v787, %v2750
    %v2762 = vmul.f32 %v788, %v2750
    %v2763 = vmul.f32 %v789, %v2750
    %v2764 = vmul.f32 %v790, %v2750
    %v2765 = vmul.f32 %v791, %v2750
    %v2766 = vmul.f32 %v792, %v2750
    %v2767 = vmul.f32 %v793, %v2750
    %v2768 = vmul.f32 %v794, %v2750
    %v2769 = vmul.f32 %v795, %v2750
    %v2770 = vmul.f32 %v796, %v2750
    %v2771 = vmul.f32 %v797, %v2750
    %v2772 = vmul.f32 %v798, %v2750
    %v2773 = vmul.f32 %v799, %v2750
    %v2774 = vmul.f32 %v800, %v2750
    %v2775 = vmul.f32 %v801, %v2750
    %v2776 = vmul.f32 %v802, %v2750
    %v2777 = vmul.f32 %v803, %v2750
    %v2778 = vmul.f32 %v804, %v2750
    %v2779 = vmul.f32 %v805, %v2750
    %v2780 = vmul.f32 %v806, %v2750
    %v2781 = vmul.f32 %v807, %v2750
    %v2782 = vmul.f32 %v808, %v2750
    %v2783 = vmul.f32 %v809, %v2750
    %2816 = vrot.lane.b32.xlu0 %v2752, 96
    %v2817 = vpop.permute.xlu0 %2816
    %2818 = vrot.lane.b32.xlu0 %v2753, 96
    %v2819 = vpop.permute.xlu0 %2818
    %2820 = vrot.lane.b32.xlu0 %v2754, 96
    %v2821 = vpop.permute.xlu0 %2820
    %2822 = vrot.lane.b32.xlu0 %v2755, 96
    %v2823 = vpop.permute.xlu0 %2822
    %2824 = vrot.lane.b32.xlu0 %v2756, 96
    %v2825 = vpop.permute.xlu0 %2824
    %2826 = vrot.lane.b32.xlu0 %v2757, 96
    %v2827 = vpop.permute.xlu0 %2826
    %2828 = vrot.lane.b32.xlu0 %v2758, 96
    %v2829 = vpop.permute.xlu0 %2828
    %2830 = vrot.lane.b32.xlu0 %v2759, 96
    %v2831 = vpop.permute.xlu0 %2830
    %2832 = vrot.lane.b32.xlu0 %v2760, 96
    %v2833 = vpop.permute.xlu0 %2832
    %2834 = vrot.lane.b32.xlu0 %v2761, 96
    %v2835 = vpop.permute.xlu0 %2834
    %2836 = vrot.lane.b32.xlu0 %v2762, 96
    %v2837 = vpop.permute.xlu0 %2836
    %2838 = vrot.lane.b32.xlu0 %v2763, 96
    %v2839 = vpop.permute.xlu0 %2838
    %2840 = vrot.lane.b32.xlu0 %v2764, 96
    %v2841 = vpop.permute.xlu0 %2840
    %2842 = vrot.lane.b32.xlu0 %v2765, 96
    %v2843 = vpop.permute.xlu0 %2842
    %2844 = vrot.lane.b32.xlu0 %v2766, 96
    %v2845 = vpop.permute.xlu0 %2844
    %2846 = vrot.lane.b32.xlu0 %v2767, 96
    %v2847 = vpop.permute.xlu0 %2846
    %2848 = vrot.lane.b32.xlu0 %v2768, 96
    %v2849 = vpop.permute.xlu0 %2848
    %2850 = vrot.lane.b32.xlu0 %v2769, 96
    %v2851 = vpop.permute.xlu0 %2850
    %2852 = vrot.lane.b32.xlu0 %v2770, 96
    %v2853 = vpop.permute.xlu0 %2852
    %2854 = vrot.lane.b32.xlu0 %v2771, 96
    %v2855 = vpop.permute.xlu0 %2854
    %2856 = vrot.lane.b32.xlu0 %v2772, 96
    %v2857 = vpop.permute.xlu0 %2856
    %2858 = vrot.lane.b32.xlu0 %v2773, 96
    %v2859 = vpop.permute.xlu0 %2858
    %2860 = vrot.lane.b32.xlu0 %v2774, 96
    %v2861 = vpop.permute.xlu0 %2860
    %2862 = vrot.lane.b32.xlu0 %v2775, 96
    %v2863 = vpop.permute.xlu0 %2862
    %2864 = vrot.lane.b32.xlu0 %v2776, 96
    %v2865 = vpop.permute.xlu0 %2864
    %2866 = vrot.lane.b32.xlu0 %v2777, 96
    %v2867 = vpop.permute.xlu0 %2866
    %2868 = vrot.lane.b32.xlu0 %v2778, 96
    %v2869 = vpop.permute.xlu0 %2868
    %2870 = vrot.lane.b32.xlu0 %v2779, 96
    %v2871 = vpop.permute.xlu0 %2870
    %2872 = vrot.lane.b32.xlu0 %v2780, 96
    %v2873 = vpop.permute.xlu0 %2872
    %2874 = vrot.lane.b32.xlu0 %v2781, 96
    %v2875 = vpop.permute.xlu0 %2874
    %2876 = vrot.lane.b32.xlu0 %v2782, 96
    %v2877 = vpop.permute.xlu0 %2876
    %2878 = vrot.lane.b32.xlu0 %v2783, 96
    %v2879 = vpop.permute.xlu0 %2878
    %vm2912 = vcmask 48128
    %v2913 = vsel %vm2912, %v2817, 0.0
    %2914 = vadd.xlane.f32.xlu0 %v2913
    %v2915 = vpop.xlane.xlu0 %2914
    %v2916 = vsel %vm2912, %v2819, 0.0
    %2917 = vadd.xlane.f32.xlu0 %v2916
    %v2918 = vpop.xlane.xlu0 %2917
    %v2919 = vsel %vm2912, %v2821, 0.0
    %2920 = vadd.xlane.f32.xlu0 %v2919
    %v2921 = vpop.xlane.xlu0 %2920
    %v2922 = vsel %vm2912, %v2823, 0.0
    %2923 = vadd.xlane.f32.xlu0 %v2922
    %v2924 = vpop.xlane.xlu0 %2923
    %v2925 = vsel %vm2912, %v2825, 0.0
    %2926 = vadd.xlane.f32.xlu0 %v2925
    %v2927 = vpop.xlane.xlu0 %2926
    %v2928 = vsel %vm2912, %v2827, 0.0
    %2929 = vadd.xlane.f32.xlu0 %v2928
    %v2930 = vpop.xlane.xlu0 %2929
    %v2931 = vsel %vm2912, %v2829, 0.0
    %2932 = vadd.xlane.f32.xlu0 %v2931
    %v2933 = vpop.xlane.xlu0 %2932
    %v2934 = vsel %vm2912, %v2831, 0.0
    %2935 = vadd.xlane.f32.xlu0 %v2934
    %v2936 = vpop.xlane.xlu0 %2935
    %v2937 = vsel %vm2912, %v2833, 0.0
    %2938 = vadd.xlane.f32.xlu0 %v2937
    %v2939 = vpop.xlane.xlu0 %2938
    %v2940 = vsel %vm2912, %v2835, 0.0
    %2941 = vadd.xlane.f32.xlu0 %v2940
    %v2942 = vpop.xlane.xlu0 %2941
    %v2943 = vsel %vm2912, %v2837, 0.0
    %2944 = vadd.xlane.f32.xlu0 %v2943
    %v2945 = vpop.xlane.xlu0 %2944
    %v2946 = vsel %vm2912, %v2839, 0.0
    %2947 = vadd.xlane.f32.xlu0 %v2946
    %v2948 = vpop.xlane.xlu0 %2947
    %v2949 = vsel %vm2912, %v2841, 0.0
    %2950 = vadd.xlane.f32.xlu0 %v2949
    %v2951 = vpop.xlane.xlu0 %2950
    %v2952 = vsel %vm2912, %v2843, 0.0
    %2953 = vadd.xlane.f32.xlu0 %v2952
    %v2954 = vpop.xlane.xlu0 %2953
    %v2955 = vsel %vm2912, %v2845, 0.0
    %2956 = vadd.xlane.f32.xlu0 %v2955
    %v2957 = vpop.xlane.xlu0 %2956
    %v2958 = vsel %vm2912, %v2847, 0.0
    %2959 = vadd.xlane.f32.xlu0 %v2958
    %v2960 = vpop.xlane.xlu0 %2959
    %v2961 = vsel %vm2912, %v2849, 0.0
    %2962 = vadd.xlane.f32.xlu0 %v2961
    %v2963 = vpop.xlane.xlu0 %2962
    %v2964 = vsel %vm2912, %v2851, 0.0
    %2965 = vadd.xlane.f32.xlu0 %v2964
    %v2966 = vpop.xlane.xlu0 %2965
    %v2967 = vsel %vm2912, %v2853, 0.0
    %2968 = vadd.xlane.f32.xlu0 %v2967
    %v2969 = vpop.xlane.xlu0 %2968
    %v2970 = vsel %vm2912, %v2855, 0.0
    %2971 = vadd.xlane.f32.xlu0 %v2970
    %v2972 = vpop.xlane.xlu0 %2971
    %v2973 = vsel %vm2912, %v2857, 0.0
    %2974 = vadd.xlane.f32.xlu0 %v2973
    %v2975 = vpop.xlane.xlu0 %2974
    %v2976 = vsel %vm2912, %v2859, 0.0
    %2977 = vadd.xlane.f32.xlu0 %v2976
    %v2978 = vpop.xlane.xlu0 %2977
    %v2979 = vsel %vm2912, %v2861, 0.0
    %2980 = vadd.xlane.f32.xlu0 %v2979
    %v2981 = vpop.xlane.xlu0 %2980
    %v2982 = vsel %vm2912, %v2863, 0.0
    %2983 = vadd.xlane.f32.xlu0 %v2982
    %v2984 = vpop.xlane.xlu0 %2983
    %v2985 = vsel %vm2912, %v2865, 0.0
    %2986 = vadd.xlane.f32.xlu0 %v2985
    %v2987 = vpop.xlane.xlu0 %2986
    %v2988 = vsel %vm2912, %v2867, 0.0
    %2989 = vadd.xlane.f32.xlu0 %v2988
    %v2990 = vpop.xlane.xlu0 %2989
    %v2991 = vsel %vm2912, %v2869, 0.0
    %2992 = vadd.xlane.f32.xlu0 %v2991
    %v2993 = vpop.xlane.xlu0 %2992
    %v2994 = vsel %vm2912, %v2871, 0.0
    %2995 = vadd.xlane.f32.xlu0 %v2994
    %v2996 = vpop.xlane.xlu0 %2995
    %v2997 = vsel %vm2912, %v2873, 0.0
    %2998 = vadd.xlane.f32.xlu0 %v2997
    %v2999 = vpop.xlane.xlu0 %2998
    %v3000 = vsel %vm2912, %v2875, 0.0
    %3001 = vadd.xlane.f32.xlu0 %v3000
    %v3002 = vpop.xlane.xlu0 %3001
    %v3003 = vsel %vm2912, %v2877, 0.0
    %3004 = vadd.xlane.f32.xlu0 %v3003
    %v3005 = vpop.xlane.xlu0 %3004
    %v3006 = vsel %vm2912, %v2879, 0.0
    %3007 = vadd.xlane.f32.xlu0 %v3006
    %v3008 = vpop.xlane.xlu0 %3007
    %v3041 = vlaneseq
    %v3042 = vshrl.u32 %v3041, 7
    %v3043 = vsub.s32 %v976, %v3042
    %v3044 = vrot.slane %v2915, %v3043
    %v3045 = vlaneseq
    %v3046 = vshrl.u32 %v3045, 7
    %v3047 = vsub.s32 %v981, %v3046
    %v3048 = vrot.slane %v2918, %v3047
    %v3049 = vsel %vm986, %v3048, %v3044
    %v3050 = vlaneseq
    %v3051 = vshrl.u32 %v3050, 7
    %v3052 = vsub.s32 %v976, %v3051
    %v3053 = vrot.slane %v2921, %v3052
    %v3054 = vlaneseq
    %v3055 = vshrl.u32 %v3054, 7
    %v3056 = vsub.s32 %v981, %v3055
    %v3057 = vrot.slane %v2924, %v3056
    %v3058 = vsel %vm986, %v3057, %v3053
    %v3059 = vlaneseq
    %v3060 = vshrl.u32 %v3059, 7
    %v3061 = vsub.s32 %v976, %v3060
    %v3062 = vrot.slane %v2927, %v3061
    %v3063 = vlaneseq
    %v3064 = vshrl.u32 %v3063, 7
    %v3065 = vsub.s32 %v981, %v3064
    %v3066 = vrot.slane %v2930, %v3065
    %v3067 = vsel %vm986, %v3066, %v3062
    %v3068 = vlaneseq
    %v3069 = vshrl.u32 %v3068, 7
    %v3070 = vsub.s32 %v976, %v3069
    %v3071 = vrot.slane %v2933, %v3070
    %v3072 = vlaneseq
    %v3073 = vshrl.u32 %v3072, 7
    %v3074 = vsub.s32 %v981, %v3073
    %v3075 = vrot.slane %v2936, %v3074
    %v3076 = vsel %vm986, %v3075, %v3071
    %v3077 = vlaneseq
    %v3078 = vshrl.u32 %v3077, 7
    %v3079 = vsub.s32 %v976, %v3078
    %v3080 = vrot.slane %v2939, %v3079
    %v3081 = vlaneseq
    %v3082 = vshrl.u32 %v3081, 7
    %v3083 = vsub.s32 %v981, %v3082
    %v3084 = vrot.slane %v2942, %v3083
    %v3085 = vsel %vm986, %v3084, %v3080
    %v3086 = vlaneseq
    %v3087 = vshrl.u32 %v3086, 7
    %v3088 = vsub.s32 %v976, %v3087
    %v3089 = vrot.slane %v2945, %v3088
    %v3090 = vlaneseq
    %v3091 = vshrl.u32 %v3090, 7
    %v3092 = vsub.s32 %v981, %v3091
    %v3093 = vrot.slane %v2948, %v3092
    %v3094 = vsel %vm986, %v3093, %v3089
    %v3095 = vlaneseq
    %v3096 = vshrl.u32 %v3095, 7
    %v3097 = vsub.s32 %v976, %v3096
    %v3098 = vrot.slane %v2951, %v3097
    %v3099 = vlaneseq
    %v3100 = vshrl.u32 %v3099, 7
    %v3101 = vsub.s32 %v981, %v3100
    %v3102 = vrot.slane %v2954, %v3101
    %v3103 = vsel %vm986, %v3102, %v3098
    %v3104 = vlaneseq
    %v3105 = vshrl.u32 %v3104, 7
    %v3106 = vsub.s32 %v976, %v3105
    %v3107 = vrot.slane %v2957, %v3106
    %v3108 = vlaneseq
    %v3109 = vshrl.u32 %v3108, 7
    %v3110 = vsub.s32 %v981, %v3109
    %v3111 = vrot.slane %v2960, %v3110
    %v3112 = vsel %vm986, %v3111, %v3107
    %v3113 = vlaneseq
    %v3114 = vshrl.u32 %v3113, 7
    %v3115 = vsub.s32 %v976, %v3114
    %v3116 = vrot.slane %v2963, %v3115
    %v3117 = vlaneseq
    %v3118 = vshrl.u32 %v3117, 7
    %v3119 = vsub.s32 %v981, %v3118
    %v3120 = vrot.slane %v2966, %v3119
    %v3121 = vsel %vm986, %v3120, %v3116
    %v3122 = vlaneseq
    %v3123 = vshrl.u32 %v3122, 7
    %v3124 = vsub.s32 %v976, %v3123
    %v3125 = vrot.slane %v2969, %v3124
    %v3126 = vlaneseq
    %v3127 = vshrl.u32 %v3126, 7
    %v3128 = vsub.s32 %v981, %v3127
    %v3129 = vrot.slane %v2972, %v3128
    %v3130 = vsel %vm986, %v3129, %v3125
    %v3131 = vlaneseq
    %v3132 = vshrl.u32 %v3131, 7
    %v3133 = vsub.s32 %v976, %v3132
    %v3134 = vrot.slane %v2975, %v3133
    %v3135 = vlaneseq
    %v3136 = vshrl.u32 %v3135, 7
    %v3137 = vsub.s32 %v981, %v3136
    %v3138 = vrot.slane %v2978, %v3137
    %v3139 = vsel %vm986, %v3138, %v3134
    %v3140 = vlaneseq
    %v3141 = vshrl.u32 %v3140, 7
    %v3142 = vsub.s32 %v976, %v3141
    %v3143 = vrot.slane %v2981, %v3142
    %v3144 = vlaneseq
    %v3145 = vshrl.u32 %v3144, 7
    %v3146 = vsub.s32 %v981, %v3145
    %v3147 = vrot.slane %v2984, %v3146
    %v3148 = vsel %vm986, %v3147, %v3143
    %v3149 = vlaneseq
    %v3150 = vshrl.u32 %v3149, 7
    %v3151 = vsub.s32 %v976, %v3150
    %v3152 = vrot.slane %v2987, %v3151
    %v3153 = vlaneseq
    %v3154 = vshrl.u32 %v3153, 7
    %v3155 = vsub.s32 %v981, %v3154
    %v3156 = vrot.slane %v2990, %v3155
    %v3157 = vsel %vm986, %v3156, %v3152
    %v3158 = vlaneseq
    %v3159 = vshrl.u32 %v3158, 7
    %v3160 = vsub.s32 %v976, %v3159
    %v3161 = vrot.slane %v2993, %v3160
    %v3162 = vlaneseq
    %v3163 = vshrl.u32 %v3162, 7
    %v3164 = vsub.s32 %v981, %v3163
    %v3165 = vrot.slane %v2996, %v3164
    %v3166 = vsel %vm986, %v3165, %v3161
    %v3167 = vlaneseq
    %v3168 = vshrl.u32 %v3167, 7
    %v3169 = vsub.s32 %v976, %v3168
    %v3170 = vrot.slane %v2999, %v3169
    %v3171 = vlaneseq
    %v3172 = vshrl.u32 %v3171, 7
    %v3173 = vsub.s32 %v981, %v3172
    %v3174 = vrot.slane %v3002, %v3173
    %v3175 = vsel %vm986, %v3174, %v3170
    %v3176 = vlaneseq
    %v3177 = vshrl.u32 %v3176, 7
    %v3178 = vsub.s32 %v976, %v3177
    %v3179 = vrot.slane %v3005, %v3178
    %v3180 = vlaneseq
    %v3181 = vshrl.u32 %v3180, 7
    %v3182 = vsub.s32 %v981, %v3181
    %v3183 = vrot.slane %v3008, %v3182
    %v3184 = vsel %vm986, %v3183, %v3179
    %v3185 = vsel %vm1123, %v3058, %v3049
    %v3186 = vsel %vm1125, %v3067, %v3185
    %v3187 = vsel %vm1127, %v3076, %v3186
    %v3188 = vsel %vm1129, %v3085, %v3187
    %v3189 = vsel %vm1131, %v3094, %v3188
    %v3190 = vsel %vm1133, %v3103, %v3189
    %v3191 = vsel %vm1135, %v3112, %v3190
    %v3192 = vsel %vm1123, %v3130, %v3121
    %v3193 = vsel %vm1125, %v3139, %v3192
    %v3194 = vsel %vm1127, %v3148, %v3193
    %v3195 = vsel %vm1129, %v3157, %v3194
    %v3196 = vsel %vm1131, %v3166, %v3195
    %v3197 = vsel %vm1133, %v3175, %v3196
    %v3198 = vsel %vm1135, %v3184, %v3197
    %v3201 = vsel %vm532, %v3191, -1e+30
    %v3202 = vsel %vm533, %v3198, -1e+30
    %v3203 = vsel %vm1148, %v3201, -inf
    %3204 = vmax.xlane.f32.xlu0 %v3203
    %v3205 = vpop.xlane.xlu0 %3204
    %v3206 = vsel %vm1148, %v3202, -inf
    %3207 = vmax.xlane.f32.xlu0 %v3206
    %v3208 = vpop.xlane.xlu0 %3207
    %v3209 = vsub.f32 %v3201, %v3205
    %v3210 = vsub.f32 %v3202, %v3208
    %v3211 = vmul.f32 %v3209, 1.442695
    %v3212 = vpow.pop %v3211
    %v3213 = vmul.f32 %v3210, 1.442695
    %v3214 = vpow.pop %v3213
    %v3215 = vsel %vm1148, %v3212, 0.0
    %3216 = vadd.xlane.f32.xlu0 %v3215
    %v3217 = vpop.xlane.xlu0 %3216
    %v3218 = vsel %vm1148, %v3214, 0.0
    %3219 = vadd.xlane.f32.xlu0 %v3218
    %v3220 = vpop.xlane.xlu0 %3219
    %v3221 = vrcp.pop %v3217
    %v3222 = vrcp.pop %v3220
    %v3223 = vmul.f32 %v3212, %v3221
    %v3224 = vmul.f32 %v3214, %v3222
    %v3225 = vlaneseq
    %v3226 = vshrl.u32 %v3225, 7
    %v3227 = vsub.s32 5, %v3226
    %v3228 = vrot.slane %v528, %v3227
    %3230 = vrot.lane.b32.xlu0 %v3228, 38
    %v3231 = vpop.permute.xlu0 %3230
    %v3233 = vmul.f32 %v778, %v3231
    %v3234 = vmul.f32 %v779, %v3231
    %v3235 = vmul.f32 %v780, %v3231
    %v3236 = vmul.f32 %v781, %v3231
    %v3237 = vmul.f32 %v782, %v3231
    %v3238 = vmul.f32 %v783, %v3231
    %v3239 = vmul.f32 %v784, %v3231
    %v3240 = vmul.f32 %v785, %v3231
    %v3241 = vmul.f32 %v786, %v3231
    %v3242 = vmul.f32 %v787, %v3231
    %v3243 = vmul.f32 %v788, %v3231
    %v3244 = vmul.f32 %v789, %v3231
    %v3245 = vmul.f32 %v790, %v3231
    %v3246 = vmul.f32 %v791, %v3231
    %v3247 = vmul.f32 %v792, %v3231
    %v3248 = vmul.f32 %v793, %v3231
    %v3249 = vmul.f32 %v794, %v3231
    %v3250 = vmul.f32 %v795, %v3231
    %v3251 = vmul.f32 %v796, %v3231
    %v3252 = vmul.f32 %v797, %v3231
    %v3253 = vmul.f32 %v798, %v3231
    %v3254 = vmul.f32 %v799, %v3231
    %v3255 = vmul.f32 %v800, %v3231
    %v3256 = vmul.f32 %v801, %v3231
    %v3257 = vmul.f32 %v802, %v3231
    %v3258 = vmul.f32 %v803, %v3231
    %v3259 = vmul.f32 %v804, %v3231
    %v3260 = vmul.f32 %v805, %v3231
    %v3261 = vmul.f32 %v806, %v3231
    %v3262 = vmul.f32 %v807, %v3231
    %v3263 = vmul.f32 %v808, %v3231
    %v3264 = vmul.f32 %v809, %v3231
    %3297 = vrot.lane.b32.xlu0 %v3233, 90
    %v3298 = vpop.permute.xlu0 %3297
    %3299 = vrot.lane.b32.xlu0 %v3234, 90
    %v3300 = vpop.permute.xlu0 %3299
    %3301 = vrot.lane.b32.xlu0 %v3235, 90
    %v3302 = vpop.permute.xlu0 %3301
    %3303 = vrot.lane.b32.xlu0 %v3236, 90
    %v3304 = vpop.permute.xlu0 %3303
    %3305 = vrot.lane.b32.xlu0 %v3237, 90
    %v3306 = vpop.permute.xlu0 %3305
    %3307 = vrot.lane.b32.xlu0 %v3238, 90
    %v3308 = vpop.permute.xlu0 %3307
    %3309 = vrot.lane.b32.xlu0 %v3239, 90
    %v3310 = vpop.permute.xlu0 %3309
    %3311 = vrot.lane.b32.xlu0 %v3240, 90
    %v3312 = vpop.permute.xlu0 %3311
    %3313 = vrot.lane.b32.xlu0 %v3241, 90
    %v3314 = vpop.permute.xlu0 %3313
    %3315 = vrot.lane.b32.xlu0 %v3242, 90
    %v3316 = vpop.permute.xlu0 %3315
    %3317 = vrot.lane.b32.xlu0 %v3243, 90
    %v3318 = vpop.permute.xlu0 %3317
    %3319 = vrot.lane.b32.xlu0 %v3244, 90
    %v3320 = vpop.permute.xlu0 %3319
    %3321 = vrot.lane.b32.xlu0 %v3245, 90
    %v3322 = vpop.permute.xlu0 %3321
    %3323 = vrot.lane.b32.xlu0 %v3246, 90
    %v3324 = vpop.permute.xlu0 %3323
    %3325 = vrot.lane.b32.xlu0 %v3247, 90
    %v3326 = vpop.permute.xlu0 %3325
    %3327 = vrot.lane.b32.xlu0 %v3248, 90
    %v3328 = vpop.permute.xlu0 %3327
    %3329 = vrot.lane.b32.xlu0 %v3249, 90
    %v3330 = vpop.permute.xlu0 %3329
    %3331 = vrot.lane.b32.xlu0 %v3250, 90
    %v3332 = vpop.permute.xlu0 %3331
    %3333 = vrot.lane.b32.xlu0 %v3251, 90
    %v3334 = vpop.permute.xlu0 %3333
    %3335 = vrot.lane.b32.xlu0 %v3252, 90
    %v3336 = vpop.permute.xlu0 %3335
    %3337 = vrot.lane.b32.xlu0 %v3253, 90
    %v3338 = vpop.permute.xlu0 %3337
    %3339 = vrot.lane.b32.xlu0 %v3254, 90
    %v3340 = vpop.permute.xlu0 %3339
    %3341 = vrot.lane.b32.xlu0 %v3255, 90
    %v3342 = vpop.permute.xlu0 %3341
    %3343 = vrot.lane.b32.xlu0 %v3256, 90
    %v3344 = vpop.permute.xlu0 %3343
    %3345 = vrot.lane.b32.xlu0 %v3257, 90
    %v3346 = vpop.permute.xlu0 %3345
    %3347 = vrot.lane.b32.xlu0 %v3258, 90
    %v3348 = vpop.permute.xlu0 %3347
    %3349 = vrot.lane.b32.xlu0 %v3259, 90
    %v3350 = vpop.permute.xlu0 %3349
    %3351 = vrot.lane.b32.xlu0 %v3260, 90
    %v3352 = vpop.permute.xlu0 %3351
    %3353 = vrot.lane.b32.xlu0 %v3261, 90
    %v3354 = vpop.permute.xlu0 %3353
    %3355 = vrot.lane.b32.xlu0 %v3262, 90
    %v3356 = vpop.permute.xlu0 %3355
    %3357 = vrot.lane.b32.xlu0 %v3263, 90
    %v3358 = vpop.permute.xlu0 %3357
    %3359 = vrot.lane.b32.xlu0 %v3264, 90
    %v3360 = vpop.permute.xlu0 %3359
    %v3393 = vsel %vm2912, %v3298, 0.0
    %3394 = vadd.xlane.f32.xlu0 %v3393
    %v3395 = vpop.xlane.xlu0 %3394
    %v3396 = vsel %vm2912, %v3300, 0.0
    %3397 = vadd.xlane.f32.xlu0 %v3396
    %v3398 = vpop.xlane.xlu0 %3397
    %v3399 = vsel %vm2912, %v3302, 0.0
    %3400 = vadd.xlane.f32.xlu0 %v3399
    %v3401 = vpop.xlane.xlu0 %3400
    %v3402 = vsel %vm2912, %v3304, 0.0
    %3403 = vadd.xlane.f32.xlu0 %v3402
    %v3404 = vpop.xlane.xlu0 %3403
    %v3405 = vsel %vm2912, %v3306, 0.0
    %3406 = vadd.xlane.f32.xlu0 %v3405
    %v3407 = vpop.xlane.xlu0 %3406
    %v3408 = vsel %vm2912, %v3308, 0.0
    %3409 = vadd.xlane.f32.xlu0 %v3408
    %v3410 = vpop.xlane.xlu0 %3409
    %v3411 = vsel %vm2912, %v3310, 0.0
    %3412 = vadd.xlane.f32.xlu0 %v3411
    %v3413 = vpop.xlane.xlu0 %3412
    %v3414 = vsel %vm2912, %v3312, 0.0
    %3415 = vadd.xlane.f32.xlu0 %v3414
    %v3416 = vpop.xlane.xlu0 %3415
    %v3417 = vsel %vm2912, %v3314, 0.0
    %3418 = vadd.xlane.f32.xlu0 %v3417
    %v3419 = vpop.xlane.xlu0 %3418
    %v3420 = vsel %vm2912, %v3316, 0.0
    %3421 = vadd.xlane.f32.xlu0 %v3420
    %v3422 = vpop.xlane.xlu0 %3421
    %v3423 = vsel %vm2912, %v3318, 0.0
    %3424 = vadd.xlane.f32.xlu0 %v3423
    %v3425 = vpop.xlane.xlu0 %3424
    %v3426 = vsel %vm2912, %v3320, 0.0
    %3427 = vadd.xlane.f32.xlu0 %v3426
    %v3428 = vpop.xlane.xlu0 %3427
    %v3429 = vsel %vm2912, %v3322, 0.0
    %3430 = vadd.xlane.f32.xlu0 %v3429
    %v3431 = vpop.xlane.xlu0 %3430
    %v3432 = vsel %vm2912, %v3324, 0.0
    %3433 = vadd.xlane.f32.xlu0 %v3432
    %v3434 = vpop.xlane.xlu0 %3433
    %v3435 = vsel %vm2912, %v3326, 0.0
    %3436 = vadd.xlane.f32.xlu0 %v3435
    %v3437 = vpop.xlane.xlu0 %3436
    %v3438 = vsel %vm2912, %v3328, 0.0
    %3439 = vadd.xlane.f32.xlu0 %v3438
    %v3440 = vpop.xlane.xlu0 %3439
    %v3441 = vsel %vm2912, %v3330, 0.0
    %3442 = vadd.xlane.f32.xlu0 %v3441
    %v3443 = vpop.xlane.xlu0 %3442
    %v3444 = vsel %vm2912, %v3332, 0.0
    %3445 = vadd.xlane.f32.xlu0 %v3444
    %v3446 = vpop.xlane.xlu0 %3445
    %v3447 = vsel %vm2912, %v3334, 0.0
    %3448 = vadd.xlane.f32.xlu0 %v3447
    %v3449 = vpop.xlane.xlu0 %3448
    %v3450 = vsel %vm2912, %v3336, 0.0
    %3451 = vadd.xlane.f32.xlu0 %v3450
    %v3452 = vpop.xlane.xlu0 %3451
    %v3453 = vsel %vm2912, %v3338, 0.0
    %3454 = vadd.xlane.f32.xlu0 %v3453
    %v3455 = vpop.xlane.xlu0 %3454
    %v3456 = vsel %vm2912, %v3340, 0.0
    %3457 = vadd.xlane.f32.xlu0 %v3456
    %v3458 = vpop.xlane.xlu0 %3457
    %v3459 = vsel %vm2912, %v3342, 0.0
    %3460 = vadd.xlane.f32.xlu0 %v3459
    %v3461 = vpop.xlane.xlu0 %3460
    %v3462 = vsel %vm2912, %v3344, 0.0
    %3463 = vadd.xlane.f32.xlu0 %v3462
    %v3464 = vpop.xlane.xlu0 %3463
    %v3465 = vsel %vm2912, %v3346, 0.0
    %3466 = vadd.xlane.f32.xlu0 %v3465
    %v3467 = vpop.xlane.xlu0 %3466
    %v3468 = vsel %vm2912, %v3348, 0.0
    %3469 = vadd.xlane.f32.xlu0 %v3468
    %v3470 = vpop.xlane.xlu0 %3469
    %v3471 = vsel %vm2912, %v3350, 0.0
    %3472 = vadd.xlane.f32.xlu0 %v3471
    %v3473 = vpop.xlane.xlu0 %3472
    %v3474 = vsel %vm2912, %v3352, 0.0
    %3475 = vadd.xlane.f32.xlu0 %v3474
    %v3476 = vpop.xlane.xlu0 %3475
    %v3477 = vsel %vm2912, %v3354, 0.0
    %3478 = vadd.xlane.f32.xlu0 %v3477
    %v3479 = vpop.xlane.xlu0 %3478
    %v3480 = vsel %vm2912, %v3356, 0.0
    %3481 = vadd.xlane.f32.xlu0 %v3480
    %v3482 = vpop.xlane.xlu0 %3481
    %v3483 = vsel %vm2912, %v3358, 0.0
    %3484 = vadd.xlane.f32.xlu0 %v3483
    %v3485 = vpop.xlane.xlu0 %3484
    %v3486 = vsel %vm2912, %v3360, 0.0
    %3487 = vadd.xlane.f32.xlu0 %v3486
    %v3488 = vpop.xlane.xlu0 %3487
    %v3521 = vlaneseq
    %v3522 = vshrl.u32 %v3521, 7
    %v3523 = vsub.s32 %v976, %v3522
    %v3524 = vrot.slane %v3395, %v3523
    %v3525 = vlaneseq
    %v3526 = vshrl.u32 %v3525, 7
    %v3527 = vsub.s32 %v981, %v3526
    %v3528 = vrot.slane %v3398, %v3527
    %v3529 = vsel %vm986, %v3528, %v3524
    %v3530 = vlaneseq
    %v3531 = vshrl.u32 %v3530, 7
    %v3532 = vsub.s32 %v976, %v3531
    %v3533 = vrot.slane %v3401, %v3532
    %v3534 = vlaneseq
    %v3535 = vshrl.u32 %v3534, 7
    %v3536 = vsub.s32 %v981, %v3535
    %v3537 = vrot.slane %v3404, %v3536
    %v3538 = vsel %vm986, %v3537, %v3533
    %v3539 = vlaneseq
    %v3540 = vshrl.u32 %v3539, 7
    %v3541 = vsub.s32 %v976, %v3540
    %v3542 = vrot.slane %v3407, %v3541
    %v3543 = vlaneseq
    %v3544 = vshrl.u32 %v3543, 7
    %v3545 = vsub.s32 %v981, %v3544
    %v3546 = vrot.slane %v3410, %v3545
    %v3547 = vsel %vm986, %v3546, %v3542
    %v3548 = vlaneseq
    %v3549 = vshrl.u32 %v3548, 7
    %v3550 = vsub.s32 %v976, %v3549
    %v3551 = vrot.slane %v3413, %v3550
    %v3552 = vlaneseq
    %v3553 = vshrl.u32 %v3552, 7
    %v3554 = vsub.s32 %v981, %v3553
    %v3555 = vrot.slane %v3416, %v3554
    %v3556 = vsel %vm986, %v3555, %v3551
    %v3557 = vlaneseq
    %v3558 = vshrl.u32 %v3557, 7
    %v3559 = vsub.s32 %v976, %v3558
    %v3560 = vrot.slane %v3419, %v3559
    %v3561 = vlaneseq
    %v3562 = vshrl.u32 %v3561, 7
    %v3563 = vsub.s32 %v981, %v3562
    %v3564 = vrot.slane %v3422, %v3563
    %v3565 = vsel %vm986, %v3564, %v3560
    %v3566 = vlaneseq
    %v3567 = vshrl.u32 %v3566, 7
    %v3568 = vsub.s32 %v976, %v3567
    %v3569 = vrot.slane %v3425, %v3568
    %v3570 = vlaneseq
    %v3571 = vshrl.u32 %v3570, 7
    %v3572 = vsub.s32 %v981, %v3571
    %v3573 = vrot.slane %v3428, %v3572
    %v3574 = vsel %vm986, %v3573, %v3569
    %v3575 = vlaneseq
    %v3576 = vshrl.u32 %v3575, 7
    %v3577 = vsub.s32 %v976, %v3576
    %v3578 = vrot.slane %v3431, %v3577
    %v3579 = vlaneseq
    %v3580 = vshrl.u32 %v3579, 7
    %v3581 = vsub.s32 %v981, %v3580
    %v3582 = vrot.slane %v3434, %v3581
    %v3583 = vsel %vm986, %v3582, %v3578
    %v3584 = vlaneseq
    %v3585 = vshrl.u32 %v3584, 7
    %v3586 = vsub.s32 %v976, %v3585
    %v3587 = vrot.slane %v3437, %v3586
    %v3588 = vlaneseq
    %v3589 = vshrl.u32 %v3588, 7
    %v3590 = vsub.s32 %v981, %v3589
    %v3591 = vrot.slane %v3440, %v3590
    %v3592 = vsel %vm986, %v3591, %v3587
    %v3593 = vlaneseq
    %v3594 = vshrl.u32 %v3593, 7
    %v3595 = vsub.s32 %v976, %v3594
    %v3596 = vrot.slane %v3443, %v3595
    %v3597 = vlaneseq
    %v3598 = vshrl.u32 %v3597, 7
    %v3599 = vsub.s32 %v981, %v3598
    %v3600 = vrot.slane %v3446, %v3599
    %v3601 = vsel %vm986, %v3600, %v3596
    %v3602 = vlaneseq
    %v3603 = vshrl.u32 %v3602, 7
    %v3604 = vsub.s32 %v976, %v3603
    %v3605 = vrot.slane %v3449, %v3604
    %v3606 = vlaneseq
    %v3607 = vshrl.u32 %v3606, 7
    %v3608 = vsub.s32 %v981, %v3607
    %v3609 = vrot.slane %v3452, %v3608
    %v3610 = vsel %vm986, %v3609, %v3605
    %v3611 = vlaneseq
    %v3612 = vshrl.u32 %v3611, 7
    %v3613 = vsub.s32 %v976, %v3612
    %v3614 = vrot.slane %v3455, %v3613
    %v3615 = vlaneseq
    %v3616 = vshrl.u32 %v3615, 7
    %v3617 = vsub.s32 %v981, %v3616
    %v3618 = vrot.slane %v3458, %v3617
    %v3619 = vsel %vm986, %v3618, %v3614
    %v3620 = vlaneseq
    %v3621 = vshrl.u32 %v3620, 7
    %v3622 = vsub.s32 %v976, %v3621
    %v3623 = vrot.slane %v3461, %v3622
    %v3624 = vlaneseq
    %v3625 = vshrl.u32 %v3624, 7
    %v3626 = vsub.s32 %v981, %v3625
    %v3627 = vrot.slane %v3464, %v3626
    %v3628 = vsel %vm986, %v3627, %v3623
    %v3629 = vlaneseq
    %v3630 = vshrl.u32 %v3629, 7
    %v3631 = vsub.s32 %v976, %v3630
    %v3632 = vrot.slane %v3467, %v3631
    %v3633 = vlaneseq
    %v3634 = vshrl.u32 %v3633, 7
    %v3635 = vsub.s32 %v981, %v3634
    %v3636 = vrot.slane %v3470, %v3635
    %v3637 = vsel %vm986, %v3636, %v3632
    %v3638 = vlaneseq
    %v3639 = vshrl.u32 %v3638, 7
    %v3640 = vsub.s32 %v976, %v3639
    %v3641 = vrot.slane %v3473, %v3640
    %v3642 = vlaneseq
    %v3643 = vshrl.u32 %v3642, 7
    %v3644 = vsub.s32 %v981, %v3643
    %v3645 = vrot.slane %v3476, %v3644
    %v3646 = vsel %vm986, %v3645, %v3641
    %v3647 = vlaneseq
    %v3648 = vshrl.u32 %v3647, 7
    %v3649 = vsub.s32 %v976, %v3648
    %v3650 = vrot.slane %v3479, %v3649
    %v3651 = vlaneseq
    %v3652 = vshrl.u32 %v3651, 7
    %v3653 = vsub.s32 %v981, %v3652
    %v3654 = vrot.slane %v3482, %v3653
    %v3655 = vsel %vm986, %v3654, %v3650
    %v3656 = vlaneseq
    %v3657 = vshrl.u32 %v3656, 7
    %v3658 = vsub.s32 %v976, %v3657
    %v3659 = vrot.slane %v3485, %v3658
    %v3660 = vlaneseq
    %v3661 = vshrl.u32 %v3660, 7
    %v3662 = vsub.s32 %v981, %v3661
    %v3663 = vrot.slane %v3488, %v3662
    %v3664 = vsel %vm986, %v3663, %v3659
    %v3665 = vsel %vm1123, %v3538, %v3529
    %v3666 = vsel %vm1125, %v3547, %v3665
    %v3667 = vsel %vm1127, %v3556, %v3666
    %v3668 = vsel %vm1129, %v3565, %v3667
    %v3669 = vsel %vm1131, %v3574, %v3668
    %v3670 = vsel %vm1133, %v3583, %v3669
    %v3671 = vsel %vm1135, %v3592, %v3670
    %v3672 = vsel %vm1123, %v3610, %v3601
    %v3673 = vsel %vm1125, %v3619, %v3672
    %v3674 = vsel %vm1127, %v3628, %v3673
    %v3675 = vsel %vm1129, %v3637, %v3674
    %v3676 = vsel %vm1131, %v3646, %v3675
    %v3677 = vsel %vm1133, %v3655, %v3676
    %v3678 = vsel %vm1135, %v3664, %v3677
    %v3681 = vsel %vm532, %v3671, -1e+30
    %v3682 = vsel %vm533, %v3678, -1e+30
    %v3683 = vsel %vm1148, %v3681, -inf
    %3684 = vmax.xlane.f32.xlu0 %v3683
    %v3685 = vpop.xlane.xlu0 %3684
    %v3686 = vsel %vm1148, %v3682, -inf
    %3687 = vmax.xlane.f32.xlu0 %v3686
    %v3688 = vpop.xlane.xlu0 %3687
    %v3689 = vsub.f32 %v3681, %v3685
    %v3690 = vsub.f32 %v3682, %v3688
    %v3691 = vmul.f32 %v3689, 1.442695
    %v3692 = vpow.pop %v3691
    %v3693 = vmul.f32 %v3690, 1.442695
    %v3694 = vpow.pop %v3693
    %v3695 = vsel %vm1148, %v3692, 0.0
    %3696 = vadd.xlane.f32.xlu0 %v3695
    %v3697 = vpop.xlane.xlu0 %3696
    %v3698 = vsel %vm1148, %v3694, 0.0
    %3699 = vadd.xlane.f32.xlu0 %v3698
    %v3700 = vpop.xlane.xlu0 %3699
    %v3701 = vrcp.pop %v3697
    %v3702 = vrcp.pop %v3700
    %v3703 = vmul.f32 %v3692, %v3701
    %v3704 = vmul.f32 %v3694, %v3702
    %v3705 = vlaneseq
    %v3706 = vshrl.u32 %v3705, 7
    %v3707 = vsub.s32 6, %v3706
    %v3708 = vrot.slane %v528, %v3707
    %3710 = vrot.lane.b32.xlu0 %v3708, 44
    %v3711 = vpop.permute.xlu0 %3710
    %v3713 = vmul.f32 %v778, %v3711
    %v3714 = vmul.f32 %v779, %v3711
    %v3715 = vmul.f32 %v780, %v3711
    %v3716 = vmul.f32 %v781, %v3711
    %v3717 = vmul.f32 %v782, %v3711
    %v3718 = vmul.f32 %v783, %v3711
    %v3719 = vmul.f32 %v784, %v3711
    %v3720 = vmul.f32 %v785, %v3711
    %v3721 = vmul.f32 %v786, %v3711
    %v3722 = vmul.f32 %v787, %v3711
    %v3723 = vmul.f32 %v788, %v3711
    %v3724 = vmul.f32 %v789, %v3711
    %v3725 = vmul.f32 %v790, %v3711
    %v3726 = vmul.f32 %v791, %v3711
    %v3727 = vmul.f32 %v792, %v3711
    %v3728 = vmul.f32 %v793, %v3711
    %v3729 = vmul.f32 %v794, %v3711
    %v3730 = vmul.f32 %v795, %v3711
    %v3731 = vmul.f32 %v796, %v3711
    %v3732 = vmul.f32 %v797, %v3711
    %v3733 = vmul.f32 %v798, %v3711
    %v3734 = vmul.f32 %v799, %v3711
    %v3735 = vmul.f32 %v800, %v3711
    %v3736 = vmul.f32 %v801, %v3711
    %v3737 = vmul.f32 %v802, %v3711
    %v3738 = vmul.f32 %v803, %v3711
    %v3739 = vmul.f32 %v804, %v3711
    %v3740 = vmul.f32 %v805, %v3711
    %v3741 = vmul.f32 %v806, %v3711
    %v3742 = vmul.f32 %v807, %v3711
    %v3743 = vmul.f32 %v808, %v3711
    %v3744 = vmul.f32 %v809, %v3711
    %3777 = vrot.lane.b32.xlu0 %v3713, 84
    %v3778 = vpop.permute.xlu0 %3777
    %3779 = vrot.lane.b32.xlu0 %v3714, 84
    %v3780 = vpop.permute.xlu0 %3779
    %3781 = vrot.lane.b32.xlu0 %v3715, 84
    %v3782 = vpop.permute.xlu0 %3781
    %3783 = vrot.lane.b32.xlu0 %v3716, 84
    %v3784 = vpop.permute.xlu0 %3783
    %3785 = vrot.lane.b32.xlu0 %v3717, 84
    %v3786 = vpop.permute.xlu0 %3785
    %3787 = vrot.lane.b32.xlu0 %v3718, 84
    %v3788 = vpop.permute.xlu0 %3787
    %3789 = vrot.lane.b32.xlu0 %v3719, 84
    %v3790 = vpop.permute.xlu0 %3789
    %3791 = vrot.lane.b32.xlu0 %v3720, 84
    %v3792 = vpop.permute.xlu0 %3791
    %3793 = vrot.lane.b32.xlu0 %v3721, 84
    %v3794 = vpop.permute.xlu0 %3793
    %3795 = vrot.lane.b32.xlu0 %v3722, 84
    %v3796 = vpop.permute.xlu0 %3795
    %3797 = vrot.lane.b32.xlu0 %v3723, 84
    %v3798 = vpop.permute.xlu0 %3797
    %3799 = vrot.lane.b32.xlu0 %v3724, 84
    %v3800 = vpop.permute.xlu0 %3799
    %3801 = vrot.lane.b32.xlu0 %v3725, 84
    %v3802 = vpop.permute.xlu0 %3801
    %3803 = vrot.lane.b32.xlu0 %v3726, 84
    %v3804 = vpop.permute.xlu0 %3803
    %3805 = vrot.lane.b32.xlu0 %v3727, 84
    %v3806 = vpop.permute.xlu0 %3805
    %3807 = vrot.lane.b32.xlu0 %v3728, 84
    %v3808 = vpop.permute.xlu0 %3807
    %3809 = vrot.lane.b32.xlu0 %v3729, 84
    %v3810 = vpop.permute.xlu0 %3809
    %3811 = vrot.lane.b32.xlu0 %v3730, 84
    %v3812 = vpop.permute.xlu0 %3811
    %3813 = vrot.lane.b32.xlu0 %v3731, 84
    %v3814 = vpop.permute.xlu0 %3813
    %3815 = vrot.lane.b32.xlu0 %v3732, 84
    %v3816 = vpop.permute.xlu0 %3815
    %3817 = vrot.lane.b32.xlu0 %v3733, 84
    %v3818 = vpop.permute.xlu0 %3817
    %3819 = vrot.lane.b32.xlu0 %v3734, 84
    %v3820 = vpop.permute.xlu0 %3819
    %3821 = vrot.lane.b32.xlu0 %v3735, 84
    %v3822 = vpop.permute.xlu0 %3821
    %3823 = vrot.lane.b32.xlu0 %v3736, 84
    %v3824 = vpop.permute.xlu0 %3823
    %3825 = vrot.lane.b32.xlu0 %v3737, 84
    %v3826 = vpop.permute.xlu0 %3825
    %3827 = vrot.lane.b32.xlu0 %v3738, 84
    %v3828 = vpop.permute.xlu0 %3827
    %3829 = vrot.lane.b32.xlu0 %v3739, 84
    %v3830 = vpop.permute.xlu0 %3829
    %3831 = vrot.lane.b32.xlu0 %v3740, 84
    %v3832 = vpop.permute.xlu0 %3831
    %3833 = vrot.lane.b32.xlu0 %v3741, 84
    %v3834 = vpop.permute.xlu0 %3833
    %3835 = vrot.lane.b32.xlu0 %v3742, 84
    %v3836 = vpop.permute.xlu0 %3835
    %3837 = vrot.lane.b32.xlu0 %v3743, 84
    %v3838 = vpop.permute.xlu0 %3837
    %3839 = vrot.lane.b32.xlu0 %v3744, 84
    %v3840 = vpop.permute.xlu0 %3839
    %v3873 = vsel %vm2912, %v3778, 0.0
    %3874 = vadd.xlane.f32.xlu0 %v3873
    %v3875 = vpop.xlane.xlu0 %3874
    %v3876 = vsel %vm2912, %v3780, 0.0
    %3877 = vadd.xlane.f32.xlu0 %v3876
    %v3878 = vpop.xlane.xlu0 %3877
    %v3879 = vsel %vm2912, %v3782, 0.0
    %3880 = vadd.xlane.f32.xlu0 %v3879
    %v3881 = vpop.xlane.xlu0 %3880
    %v3882 = vsel %vm2912, %v3784, 0.0
    %3883 = vadd.xlane.f32.xlu0 %v3882
    %v3884 = vpop.xlane.xlu0 %3883
    %v3885 = vsel %vm2912, %v3786, 0.0
    %3886 = vadd.xlane.f32.xlu0 %v3885
    %v3887 = vpop.xlane.xlu0 %3886
    %v3888 = vsel %vm2912, %v3788, 0.0
    %3889 = vadd.xlane.f32.xlu0 %v3888
    %v3890 = vpop.xlane.xlu0 %3889
    %v3891 = vsel %vm2912, %v3790, 0.0
    %3892 = vadd.xlane.f32.xlu0 %v3891
    %v3893 = vpop.xlane.xlu0 %3892
    %v3894 = vsel %vm2912, %v3792, 0.0
    %3895 = vadd.xlane.f32.xlu0 %v3894
    %v3896 = vpop.xlane.xlu0 %3895
    %v3897 = vsel %vm2912, %v3794, 0.0
    %3898 = vadd.xlane.f32.xlu0 %v3897
    %v3899 = vpop.xlane.xlu0 %3898
    %v3900 = vsel %vm2912, %v3796, 0.0
    %3901 = vadd.xlane.f32.xlu0 %v3900
    %v3902 = vpop.xlane.xlu0 %3901
    %v3903 = vsel %vm2912, %v3798, 0.0
    %3904 = vadd.xlane.f32.xlu0 %v3903
    %v3905 = vpop.xlane.xlu0 %3904
    %v3906 = vsel %vm2912, %v3800, 0.0
    %3907 = vadd.xlane.f32.xlu0 %v3906
    %v3908 = vpop.xlane.xlu0 %3907
    %v3909 = vsel %vm2912, %v3802, 0.0
    %3910 = vadd.xlane.f32.xlu0 %v3909
    %v3911 = vpop.xlane.xlu0 %3910
    %v3912 = vsel %vm2912, %v3804, 0.0
    %3913 = vadd.xlane.f32.xlu0 %v3912
    %v3914 = vpop.xlane.xlu0 %3913
    %v3915 = vsel %vm2912, %v3806, 0.0
    %3916 = vadd.xlane.f32.xlu0 %v3915
    %v3917 = vpop.xlane.xlu0 %3916
    %v3918 = vsel %vm2912, %v3808, 0.0
    %3919 = vadd.xlane.f32.xlu0 %v3918
    %v3920 = vpop.xlane.xlu0 %3919
    %v3921 = vsel %vm2912, %v3810, 0.0
    %3922 = vadd.xlane.f32.xlu0 %v3921
    %v3923 = vpop.xlane.xlu0 %3922
    %v3924 = vsel %vm2912, %v3812, 0.0
    %3925 = vadd.xlane.f32.xlu0 %v3924
    %v3926 = vpop.xlane.xlu0 %3925
    %v3927 = vsel %vm2912, %v3814, 0.0
    %3928 = vadd.xlane.f32.xlu0 %v3927
    %v3929 = vpop.xlane.xlu0 %3928
    %v3930 = vsel %vm2912, %v3816, 0.0
    %3931 = vadd.xlane.f32.xlu0 %v3930
    %v3932 = vpop.xlane.xlu0 %3931
    %v3933 = vsel %vm2912, %v3818, 0.0
    %3934 = vadd.xlane.f32.xlu0 %v3933
    %v3935 = vpop.xlane.xlu0 %3934
    %v3936 = vsel %vm2912, %v3820, 0.0
    %3937 = vadd.xlane.f32.xlu0 %v3936
    %v3938 = vpop.xlane.xlu0 %3937
    %v3939 = vsel %vm2912, %v3822, 0.0
    %3940 = vadd.xlane.f32.xlu0 %v3939
    %v3941 = vpop.xlane.xlu0 %3940
    %v3942 = vsel %vm2912, %v3824, 0.0
    %3943 = vadd.xlane.f32.xlu0 %v3942
    %v3944 = vpop.xlane.xlu0 %3943
    %v3945 = vsel %vm2912, %v3826, 0.0
    %3946 = vadd.xlane.f32.xlu0 %v3945
    %v3947 = vpop.xlane.xlu0 %3946
    %v3948 = vsel %vm2912, %v3828, 0.0
    %3949 = vadd.xlane.f32.xlu0 %v3948
    %v3950 = vpop.xlane.xlu0 %3949
    %v3951 = vsel %vm2912, %v3830, 0.0
    %3952 = vadd.xlane.f32.xlu0 %v3951
    %v3953 = vpop.xlane.xlu0 %3952
    %v3954 = vsel %vm2912, %v3832, 0.0
    %3955 = vadd.xlane.f32.xlu0 %v3954
    %v3956 = vpop.xlane.xlu0 %3955
    %v3957 = vsel %vm2912, %v3834, 0.0
    %3958 = vadd.xlane.f32.xlu0 %v3957
    %v3959 = vpop.xlane.xlu0 %3958
    %v3960 = vsel %vm2912, %v3836, 0.0
    %3961 = vadd.xlane.f32.xlu0 %v3960
    %v3962 = vpop.xlane.xlu0 %3961
    %v3963 = vsel %vm2912, %v3838, 0.0
    %3964 = vadd.xlane.f32.xlu0 %v3963
    %v3965 = vpop.xlane.xlu0 %3964
    %v3966 = vsel %vm2912, %v3840, 0.0
    %3967 = vadd.xlane.f32.xlu0 %v3966
    %v3968 = vpop.xlane.xlu0 %3967
    %v4001 = vlaneseq
    %v4002 = vshrl.u32 %v4001, 7
    %v4003 = vsub.s32 %v976, %v4002
    %v4004 = vrot.slane %v3875, %v4003
    %v4005 = vlaneseq
    %v4006 = vshrl.u32 %v4005, 7
    %v4007 = vsub.s32 %v981, %v4006
    %v4008 = vrot.slane %v3878, %v4007
    %v4009 = vsel %vm986, %v4008, %v4004
    %v4010 = vlaneseq
    %v4011 = vshrl.u32 %v4010, 7
    %v4012 = vsub.s32 %v976, %v4011
    %v4013 = vrot.slane %v3881, %v4012
    %v4014 = vlaneseq
    %v4015 = vshrl.u32 %v4014, 7
    %v4016 = vsub.s32 %v981, %v4015
    %v4017 = vrot.slane %v3884, %v4016
    %v4018 = vsel %vm986, %v4017, %v4013
    %v4019 = vlaneseq
    %v4020 = vshrl.u32 %v4019, 7
    %v4021 = vsub.s32 %v976, %v4020
    %v4022 = vrot.slane %v3887, %v4021
    %v4023 = vlaneseq
    %v4024 = vshrl.u32 %v4023, 7
    %v4025 = vsub.s32 %v981, %v4024
    %v4026 = vrot.slane %v3890, %v4025
    %v4027 = vsel %vm986, %v4026, %v4022
    %v4028 = vlaneseq
    %v4029 = vshrl.u32 %v4028, 7
    %v4030 = vsub.s32 %v976, %v4029
    %v4031 = vrot.slane %v3893, %v4030
    %v4032 = vlaneseq
    %v4033 = vshrl.u32 %v4032, 7
    %v4034 = vsub.s32 %v981, %v4033
    %v4035 = vrot.slane %v3896, %v4034
    %v4036 = vsel %vm986, %v4035, %v4031
    %v4037 = vlaneseq
    %v4038 = vshrl.u32 %v4037, 7
    %v4039 = vsub.s32 %v976, %v4038
    %v4040 = vrot.slane %v3899, %v4039
    %v4041 = vlaneseq
    %v4042 = vshrl.u32 %v4041, 7
    %v4043 = vsub.s32 %v981, %v4042
    %v4044 = vrot.slane %v3902, %v4043
    %v4045 = vsel %vm986, %v4044, %v4040
    %v4046 = vlaneseq
    %v4047 = vshrl.u32 %v4046, 7
    %v4048 = vsub.s32 %v976, %v4047
    %v4049 = vrot.slane %v3905, %v4048
    %v4050 = vlaneseq
    %v4051 = vshrl.u32 %v4050, 7
    %v4052 = vsub.s32 %v981, %v4051
    %v4053 = vrot.slane %v3908, %v4052
    %v4054 = vsel %vm986, %v4053, %v4049
    %v4055 = vlaneseq
    %v4056 = vshrl.u32 %v4055, 7
    %v4057 = vsub.s32 %v976, %v4056
    %v4058 = vrot.slane %v3911, %v4057
    %v4059 = vlaneseq
    %v4060 = vshrl.u32 %v4059, 7
    %v4061 = vsub.s32 %v981, %v4060
    %v4062 = vrot.slane %v3914, %v4061
    %v4063 = vsel %vm986, %v4062, %v4058
    %v4064 = vlaneseq
    %v4065 = vshrl.u32 %v4064, 7
    %v4066 = vsub.s32 %v976, %v4065
    %v4067 = vrot.slane %v3917, %v4066
    %v4068 = vlaneseq
    %v4069 = vshrl.u32 %v4068, 7
    %v4070 = vsub.s32 %v981, %v4069
    %v4071 = vrot.slane %v3920, %v4070
    %v4072 = vsel %vm986, %v4071, %v4067
    %v4073 = vlaneseq
    %v4074 = vshrl.u32 %v4073, 7
    %v4075 = vsub.s32 %v976, %v4074
    %v4076 = vrot.slane %v3923, %v4075
    %v4077 = vlaneseq
    %v4078 = vshrl.u32 %v4077, 7
    %v4079 = vsub.s32 %v981, %v4078
    %v4080 = vrot.slane %v3926, %v4079
    %v4081 = vsel %vm986, %v4080, %v4076
    %v4082 = vlaneseq
    %v4083 = vshrl.u32 %v4082, 7
    %v4084 = vsub.s32 %v976, %v4083
    %v4085 = vrot.slane %v3929, %v4084
    %v4086 = vlaneseq
    %v4087 = vshrl.u32 %v4086, 7
    %v4088 = vsub.s32 %v981, %v4087
    %v4089 = vrot.slane %v3932, %v4088
    %v4090 = vsel %vm986, %v4089, %v4085
    %v4091 = vlaneseq
    %v4092 = vshrl.u32 %v4091, 7
    %v4093 = vsub.s32 %v976, %v4092
    %v4094 = vrot.slane %v3935, %v4093
    %v4095 = vlaneseq
    %v4096 = vshrl.u32 %v4095, 7
    %v4097 = vsub.s32 %v981, %v4096
    %v4098 = vrot.slane %v3938, %v4097
    %v4099 = vsel %vm986, %v4098, %v4094
    %v4100 = vlaneseq
    %v4101 = vshrl.u32 %v4100, 7
    %v4102 = vsub.s32 %v976, %v4101
    %v4103 = vrot.slane %v3941, %v4102
    %v4104 = vlaneseq
    %v4105 = vshrl.u32 %v4104, 7
    %v4106 = vsub.s32 %v981, %v4105
    %v4107 = vrot.slane %v3944, %v4106
    %v4108 = vsel %vm986, %v4107, %v4103
    %v4109 = vlaneseq
    %v4110 = vshrl.u32 %v4109, 7
    %v4111 = vsub.s32 %v976, %v4110
    %v4112 = vrot.slane %v3947, %v4111
    %v4113 = vlaneseq
    %v4114 = vshrl.u32 %v4113, 7
    %v4115 = vsub.s32 %v981, %v4114
    %v4116 = vrot.slane %v3950, %v4115
    %v4117 = vsel %vm986, %v4116, %v4112
    %v4118 = vlaneseq
    %v4119 = vshrl.u32 %v4118, 7
    %v4120 = vsub.s32 %v976, %v4119
    %v4121 = vrot.slane %v3953, %v4120
    %v4122 = vlaneseq
    %v4123 = vshrl.u32 %v4122, 7
    %v4124 = vsub.s32 %v981, %v4123
    %v4125 = vrot.slane %v3956, %v4124
    %v4126 = vsel %vm986, %v4125, %v4121
    %v4127 = vlaneseq
    %v4128 = vshrl.u32 %v4127, 7
    %v4129 = vsub.s32 %v976, %v4128
    %v4130 = vrot.slane %v3959, %v4129
    %v4131 = vlaneseq
    %v4132 = vshrl.u32 %v4131, 7
    %v4133 = vsub.s32 %v981, %v4132
    %v4134 = vrot.slane %v3962, %v4133
    %v4135 = vsel %vm986, %v4134, %v4130
    %v4136 = vlaneseq
    %v4137 = vshrl.u32 %v4136, 7
    %v4138 = vsub.s32 %v976, %v4137
    %v4139 = vrot.slane %v3965, %v4138
    %v4140 = vlaneseq
    %v4141 = vshrl.u32 %v4140, 7
    %v4142 = vsub.s32 %v981, %v4141
    %v4143 = vrot.slane %v3968, %v4142
    %v4144 = vsel %vm986, %v4143, %v4139
    %v4145 = vsel %vm1123, %v4018, %v4009
    %v4146 = vsel %vm1125, %v4027, %v4145
    %v4147 = vsel %vm1127, %v4036, %v4146
    %v4148 = vsel %vm1129, %v4045, %v4147
    %v4149 = vsel %vm1131, %v4054, %v4148
    %v4150 = vsel %vm1133, %v4063, %v4149
    %v4151 = vsel %vm1135, %v4072, %v4150
    %v4152 = vsel %vm1123, %v4090, %v4081
    %v4153 = vsel %vm1125, %v4099, %v4152
    %v4154 = vsel %vm1127, %v4108, %v4153
    %v4155 = vsel %vm1129, %v4117, %v4154
    %v4156 = vsel %vm1131, %v4126, %v4155
    %v4157 = vsel %vm1133, %v4135, %v4156
    %v4158 = vsel %vm1135, %v4144, %v4157
    %v4161 = vsel %vm532, %v4151, -1e+30
    %v4162 = vsel %vm533, %v4158, -1e+30
    %v4163 = vsel %vm1148, %v4161, -inf
    %4164 = vmax.xlane.f32.xlu0 %v4163
    %v4165 = vpop.xlane.xlu0 %4164
    %v4166 = vsel %vm1148, %v4162, -inf
    %4167 = vmax.xlane.f32.xlu0 %v4166
    %v4168 = vpop.xlane.xlu0 %4167
    %v4169 = vsub.f32 %v4161, %v4165
    %v4170 = vsub.f32 %v4162, %v4168
    %v4171 = vmul.f32 %v4169, 1.442695
    %v4172 = vpow.pop %v4171
    %v4173 = vmul.f32 %v4170, 1.442695
    %v4174 = vpow.pop %v4173
    %v4175 = vsel %vm1148, %v4172, 0.0
    %4176 = vadd.xlane.f32.xlu0 %v4175
    %v4177 = vpop.xlane.xlu0 %4176
    %v4178 = vsel %vm1148, %v4174, 0.0
    %4179 = vadd.xlane.f32.xlu0 %v4178
    %v4180 = vpop.xlane.xlu0 %4179
    %v4181 = vrcp.pop %v4177
    %v4182 = vrcp.pop %v4180
    %v4183 = vmul.f32 %v4172, %v4181
    %v4184 = vmul.f32 %v4174, %v4182
    %v4185 = vlaneseq
    %v4186 = vshrl.u32 %v4185, 7
    %v4187 = vsub.s32 7, %v4186
    %v4188 = vrot.slane %v528, %v4187
    %4190 = vrot.lane.b32.xlu0 %v4188, 50
    %v4191 = vpop.permute.xlu0 %4190
    %v4193 = vmul.f32 %v778, %v4191
    %v4194 = vmul.f32 %v779, %v4191
    %v4195 = vmul.f32 %v780, %v4191
    %v4196 = vmul.f32 %v781, %v4191
    %v4197 = vmul.f32 %v782, %v4191
    %v4198 = vmul.f32 %v783, %v4191
    %v4199 = vmul.f32 %v784, %v4191
    %v4200 = vmul.f32 %v785, %v4191
    %v4201 = vmul.f32 %v786, %v4191
    %v4202 = vmul.f32 %v787, %v4191
    %v4203 = vmul.f32 %v788, %v4191
    %v4204 = vmul.f32 %v789, %v4191
    %v4205 = vmul.f32 %v790, %v4191
    %v4206 = vmul.f32 %v791, %v4191
    %v4207 = vmul.f32 %v792, %v4191
    %v4208 = vmul.f32 %v793, %v4191
    %v4209 = vmul.f32 %v794, %v4191
    %v4210 = vmul.f32 %v795, %v4191
    %v4211 = vmul.f32 %v796, %v4191
    %v4212 = vmul.f32 %v797, %v4191
    %v4213 = vmul.f32 %v798, %v4191
    %v4214 = vmul.f32 %v799, %v4191
    %v4215 = vmul.f32 %v800, %v4191
    %v4216 = vmul.f32 %v801, %v4191
    %v4217 = vmul.f32 %v802, %v4191
    %v4218 = vmul.f32 %v803, %v4191
    %v4219 = vmul.f32 %v804, %v4191
    %v4220 = vmul.f32 %v805, %v4191
    %v4221 = vmul.f32 %v806, %v4191
    %v4222 = vmul.f32 %v807, %v4191
    %v4223 = vmul.f32 %v808, %v4191
    %v4224 = vmul.f32 %v809, %v4191
    %4257 = vrot.lane.b32.xlu0 %v4193, 78
    %v4258 = vpop.permute.xlu0 %4257
    %4259 = vrot.lane.b32.xlu0 %v4194, 78
    %v4260 = vpop.permute.xlu0 %4259
    %4261 = vrot.lane.b32.xlu0 %v4195, 78
    %v4262 = vpop.permute.xlu0 %4261
    %4263 = vrot.lane.b32.xlu0 %v4196, 78
    %v4264 = vpop.permute.xlu0 %4263
    %4265 = vrot.lane.b32.xlu0 %v4197, 78
    %v4266 = vpop.permute.xlu0 %4265
    %4267 = vrot.lane.b32.xlu0 %v4198, 78
    %v4268 = vpop.permute.xlu0 %4267
    %4269 = vrot.lane.b32.xlu0 %v4199, 78
    %v4270 = vpop.permute.xlu0 %4269
    %4271 = vrot.lane.b32.xlu0 %v4200, 78
    %v4272 = vpop.permute.xlu0 %4271
    %4273 = vrot.lane.b32.xlu0 %v4201, 78
    %v4274 = vpop.permute.xlu0 %4273
    %4275 = vrot.lane.b32.xlu0 %v4202, 78
    %v4276 = vpop.permute.xlu0 %4275
    %4277 = vrot.lane.b32.xlu0 %v4203, 78
    %v4278 = vpop.permute.xlu0 %4277
    %4279 = vrot.lane.b32.xlu0 %v4204, 78
    %v4280 = vpop.permute.xlu0 %4279
    %4281 = vrot.lane.b32.xlu0 %v4205, 78
    %v4282 = vpop.permute.xlu0 %4281
    %4283 = vrot.lane.b32.xlu0 %v4206, 78
    %v4284 = vpop.permute.xlu0 %4283
    %4285 = vrot.lane.b32.xlu0 %v4207, 78
    %v4286 = vpop.permute.xlu0 %4285
    %4287 = vrot.lane.b32.xlu0 %v4208, 78
    %v4288 = vpop.permute.xlu0 %4287
    %4289 = vrot.lane.b32.xlu0 %v4209, 78
    %v4290 = vpop.permute.xlu0 %4289
    %4291 = vrot.lane.b32.xlu0 %v4210, 78
    %v4292 = vpop.permute.xlu0 %4291
    %4293 = vrot.lane.b32.xlu0 %v4211, 78
    %v4294 = vpop.permute.xlu0 %4293
    %4295 = vrot.lane.b32.xlu0 %v4212, 78
    %v4296 = vpop.permute.xlu0 %4295
    %4297 = vrot.lane.b32.xlu0 %v4213, 78
    %v4298 = vpop.permute.xlu0 %4297
    %4299 = vrot.lane.b32.xlu0 %v4214, 78
    %v4300 = vpop.permute.xlu0 %4299
    %4301 = vrot.lane.b32.xlu0 %v4215, 78
    %v4302 = vpop.permute.xlu0 %4301
    %4303 = vrot.lane.b32.xlu0 %v4216, 78
    %v4304 = vpop.permute.xlu0 %4303
    %4305 = vrot.lane.b32.xlu0 %v4217, 78
    %v4306 = vpop.permute.xlu0 %4305
    %4307 = vrot.lane.b32.xlu0 %v4218, 78
    %v4308 = vpop.permute.xlu0 %4307
    %4309 = vrot.lane.b32.xlu0 %v4219, 78
    %v4310 = vpop.permute.xlu0 %4309
    %4311 = vrot.lane.b32.xlu0 %v4220, 78
    %v4312 = vpop.permute.xlu0 %4311
    %4313 = vrot.lane.b32.xlu0 %v4221, 78
    %v4314 = vpop.permute.xlu0 %4313
    %4315 = vrot.lane.b32.xlu0 %v4222, 78
    %v4316 = vpop.permute.xlu0 %4315
    %4317 = vrot.lane.b32.xlu0 %v4223, 78
    %v4318 = vpop.permute.xlu0 %4317
    %4319 = vrot.lane.b32.xlu0 %v4224, 78
    %v4320 = vpop.permute.xlu0 %4319
    %v4353 = vsel %vm2912, %v4258, 0.0
    %4354 = vadd.xlane.f32.xlu0 %v4353
    %v4355 = vpop.xlane.xlu0 %4354
    %v4356 = vsel %vm2912, %v4260, 0.0
    %4357 = vadd.xlane.f32.xlu0 %v4356
    %v4358 = vpop.xlane.xlu0 %4357
    %v4359 = vsel %vm2912, %v4262, 0.0
    %4360 = vadd.xlane.f32.xlu0 %v4359
    %v4361 = vpop.xlane.xlu0 %4360
    %v4362 = vsel %vm2912, %v4264, 0.0
    %4363 = vadd.xlane.f32.xlu0 %v4362
    %v4364 = vpop.xlane.xlu0 %4363
    %v4365 = vsel %vm2912, %v4266, 0.0
    %4366 = vadd.xlane.f32.xlu0 %v4365
    %v4367 = vpop.xlane.xlu0 %4366
    %v4368 = vsel %vm2912, %v4268, 0.0
    %4369 = vadd.xlane.f32.xlu0 %v4368
    %v4370 = vpop.xlane.xlu0 %4369
    %v4371 = vsel %vm2912, %v4270, 0.0
    %4372 = vadd.xlane.f32.xlu0 %v4371
    %v4373 = vpop.xlane.xlu0 %4372
    %v4374 = vsel %vm2912, %v4272, 0.0
    %4375 = vadd.xlane.f32.xlu0 %v4374
    %v4376 = vpop.xlane.xlu0 %4375
    %v4377 = vsel %vm2912, %v4274, 0.0
    %4378 = vadd.xlane.f32.xlu0 %v4377
    %v4379 = vpop.xlane.xlu0 %4378
    %v4380 = vsel %vm2912, %v4276, 0.0
    %4381 = vadd.xlane.f32.xlu0 %v4380
    %v4382 = vpop.xlane.xlu0 %4381
    %v4383 = vsel %vm2912, %v4278, 0.0
    %4384 = vadd.xlane.f32.xlu0 %v4383
    %v4385 = vpop.xlane.xlu0 %4384
    %v4386 = vsel %vm2912, %v4280, 0.0
    %4387 = vadd.xlane.f32.xlu0 %v4386
    %v4388 = vpop.xlane.xlu0 %4387
    %v4389 = vsel %vm2912, %v4282, 0.0
    %4390 = vadd.xlane.f32.xlu0 %v4389
    %v4391 = vpop.xlane.xlu0 %4390
    %v4392 = vsel %vm2912, %v4284, 0.0
    %4393 = vadd.xlane.f32.xlu0 %v4392
    %v4394 = vpop.xlane.xlu0 %4393
    %v4395 = vsel %vm2912, %v4286, 0.0
    %4396 = vadd.xlane.f32.xlu0 %v4395
    %v4397 = vpop.xlane.xlu0 %4396
    %v4398 = vsel %vm2912, %v4288, 0.0
    %4399 = vadd.xlane.f32.xlu0 %v4398
    %v4400 = vpop.xlane.xlu0 %4399
    %v4401 = vsel %vm2912, %v4290, 0.0
    %4402 = vadd.xlane.f32.xlu0 %v4401
    %v4403 = vpop.xlane.xlu0 %4402
    %v4404 = vsel %vm2912, %v4292, 0.0
    %4405 = vadd.xlane.f32.xlu0 %v4404
    %v4406 = vpop.xlane.xlu0 %4405
    %v4407 = vsel %vm2912, %v4294, 0.0
    %4408 = vadd.xlane.f32.xlu0 %v4407
    %v4409 = vpop.xlane.xlu0 %4408
    %v4410 = vsel %vm2912, %v4296, 0.0
    %4411 = vadd.xlane.f32.xlu0 %v4410
    %v4412 = vpop.xlane.xlu0 %4411
    %v4413 = vsel %vm2912, %v4298, 0.0
    %4414 = vadd.xlane.f32.xlu0 %v4413
    %v4415 = vpop.xlane.xlu0 %4414
    %v4416 = vsel %vm2912, %v4300, 0.0
    %4417 = vadd.xlane.f32.xlu0 %v4416
    %v4418 = vpop.xlane.xlu0 %4417
    %v4419 = vsel %vm2912, %v4302, 0.0
    %4420 = vadd.xlane.f32.xlu0 %v4419
    %v4421 = vpop.xlane.xlu0 %4420
    %v4422 = vsel %vm2912, %v4304, 0.0
    %4423 = vadd.xlane.f32.xlu0 %v4422
    %v4424 = vpop.xlane.xlu0 %4423
    %v4425 = vsel %vm2912, %v4306, 0.0
    %4426 = vadd.xlane.f32.xlu0 %v4425
    %v4427 = vpop.xlane.xlu0 %4426
    %v4428 = vsel %vm2912, %v4308, 0.0
    %4429 = vadd.xlane.f32.xlu0 %v4428
    %v4430 = vpop.xlane.xlu0 %4429
    %v4431 = vsel %vm2912, %v4310, 0.0
    %4432 = vadd.xlane.f32.xlu0 %v4431
    %v4433 = vpop.xlane.xlu0 %4432
    %v4434 = vsel %vm2912, %v4312, 0.0
    %4435 = vadd.xlane.f32.xlu0 %v4434
    %v4436 = vpop.xlane.xlu0 %4435
    %v4437 = vsel %vm2912, %v4314, 0.0
    %4438 = vadd.xlane.f32.xlu0 %v4437
    %v4439 = vpop.xlane.xlu0 %4438
    %v4440 = vsel %vm2912, %v4316, 0.0
    %4441 = vadd.xlane.f32.xlu0 %v4440
    %v4442 = vpop.xlane.xlu0 %4441
    %v4443 = vsel %vm2912, %v4318, 0.0
    %4444 = vadd.xlane.f32.xlu0 %v4443
    %v4445 = vpop.xlane.xlu0 %4444
    %v4446 = vsel %vm2912, %v4320, 0.0
    %4447 = vadd.xlane.f32.xlu0 %v4446
    %v4448 = vpop.xlane.xlu0 %4447
    %v4481 = vlaneseq
    %v4482 = vshrl.u32 %v4481, 7
    %v4483 = vsub.s32 %v976, %v4482
    %v4484 = vrot.slane %v4355, %v4483
    %v4485 = vlaneseq
    %v4486 = vshrl.u32 %v4485, 7
    %v4487 = vsub.s32 %v981, %v4486
    %v4488 = vrot.slane %v4358, %v4487
    %v4489 = vsel %vm986, %v4488, %v4484
    %v4490 = vlaneseq
    %v4491 = vshrl.u32 %v4490, 7
    %v4492 = vsub.s32 %v976, %v4491
    %v4493 = vrot.slane %v4361, %v4492
    %v4494 = vlaneseq
    %v4495 = vshrl.u32 %v4494, 7
    %v4496 = vsub.s32 %v981, %v4495
    %v4497 = vrot.slane %v4364, %v4496
    %v4498 = vsel %vm986, %v4497, %v4493
    %v4499 = vlaneseq
    %v4500 = vshrl.u32 %v4499, 7
    %v4501 = vsub.s32 %v976, %v4500
    %v4502 = vrot.slane %v4367, %v4501
    %v4503 = vlaneseq
    %v4504 = vshrl.u32 %v4503, 7
    %v4505 = vsub.s32 %v981, %v4504
    %v4506 = vrot.slane %v4370, %v4505
    %v4507 = vsel %vm986, %v4506, %v4502
    %v4508 = vlaneseq
    %v4509 = vshrl.u32 %v4508, 7
    %v4510 = vsub.s32 %v976, %v4509
    %v4511 = vrot.slane %v4373, %v4510
    %v4512 = vlaneseq
    %v4513 = vshrl.u32 %v4512, 7
    %v4514 = vsub.s32 %v981, %v4513
    %v4515 = vrot.slane %v4376, %v4514
    %v4516 = vsel %vm986, %v4515, %v4511
    %v4517 = vlaneseq
    %v4518 = vshrl.u32 %v4517, 7
    %v4519 = vsub.s32 %v976, %v4518
    %v4520 = vrot.slane %v4379, %v4519
    %v4521 = vlaneseq
    %v4522 = vshrl.u32 %v4521, 7
    %v4523 = vsub.s32 %v981, %v4522
    %v4524 = vrot.slane %v4382, %v4523
    %v4525 = vsel %vm986, %v4524, %v4520
    %v4526 = vlaneseq
    %v4527 = vshrl.u32 %v4526, 7
    %v4528 = vsub.s32 %v976, %v4527
    %v4529 = vrot.slane %v4385, %v4528
    %v4530 = vlaneseq
    %v4531 = vshrl.u32 %v4530, 7
    %v4532 = vsub.s32 %v981, %v4531
    %v4533 = vrot.slane %v4388, %v4532
    %v4534 = vsel %vm986, %v4533, %v4529
    %v4535 = vlaneseq
    %v4536 = vshrl.u32 %v4535, 7
    %v4537 = vsub.s32 %v976, %v4536
    %v4538 = vrot.slane %v4391, %v4537
    %v4539 = vlaneseq
    %v4540 = vshrl.u32 %v4539, 7
    %v4541 = vsub.s32 %v981, %v4540
    %v4542 = vrot.slane %v4394, %v4541
    %v4543 = vsel %vm986, %v4542, %v4538
    %v4544 = vlaneseq
    %v4545 = vshrl.u32 %v4544, 7
    %v4546 = vsub.s32 %v976, %v4545
    %v4547 = vrot.slane %v4397, %v4546
    %v4548 = vlaneseq
    %v4549 = vshrl.u32 %v4548, 7
    %v4550 = vsub.s32 %v981, %v4549
    %v4551 = vrot.slane %v4400, %v4550
    %v4552 = vsel %vm986, %v4551, %v4547
    %v4553 = vlaneseq
    %v4554 = vshrl.u32 %v4553, 7
    %v4555 = vsub.s32 %v976, %v4554
    %v4556 = vrot.slane %v4403, %v4555
    %v4557 = vlaneseq
    %v4558 = vshrl.u32 %v4557, 7
    %v4559 = vsub.s32 %v981, %v4558
    %v4560 = vrot.slane %v4406, %v4559
    %v4561 = vsel %vm986, %v4560, %v4556
    %v4562 = vlaneseq
    %v4563 = vshrl.u32 %v4562, 7
    %v4564 = vsub.s32 %v976, %v4563
    %v4565 = vrot.slane %v4409, %v4564
    %v4566 = vlaneseq
    %v4567 = vshrl.u32 %v4566, 7
    %v4568 = vsub.s32 %v981, %v4567
    %v4569 = vrot.slane %v4412, %v4568
    %v4570 = vsel %vm986, %v4569, %v4565
    %v4571 = vlaneseq
    %v4572 = vshrl.u32 %v4571, 7
    %v4573 = vsub.s32 %v976, %v4572
    %v4574 = vrot.slane %v4415, %v4573
    %v4575 = vlaneseq
    %v4576 = vshrl.u32 %v4575, 7
    %v4577 = vsub.s32 %v981, %v4576
    %v4578 = vrot.slane %v4418, %v4577
    %v4579 = vsel %vm986, %v4578, %v4574
    %v4580 = vlaneseq
    %v4581 = vshrl.u32 %v4580, 7
    %v4582 = vsub.s32 %v976, %v4581
    %v4583 = vrot.slane %v4421, %v4582
    %v4584 = vlaneseq
    %v4585 = vshrl.u32 %v4584, 7
    %v4586 = vsub.s32 %v981, %v4585
    %v4587 = vrot.slane %v4424, %v4586
    %v4588 = vsel %vm986, %v4587, %v4583
    %v4589 = vlaneseq
    %v4590 = vshrl.u32 %v4589, 7
    %v4591 = vsub.s32 %v976, %v4590
    %v4592 = vrot.slane %v4427, %v4591
    %v4593 = vlaneseq
    %v4594 = vshrl.u32 %v4593, 7
    %v4595 = vsub.s32 %v981, %v4594
    %v4596 = vrot.slane %v4430, %v4595
    %v4597 = vsel %vm986, %v4596, %v4592
    %v4598 = vlaneseq
    %v4599 = vshrl.u32 %v4598, 7
    %v4600 = vsub.s32 %v976, %v4599
    %v4601 = vrot.slane %v4433, %v4600
    %v4602 = vlaneseq
    %v4603 = vshrl.u32 %v4602, 7
    %v4604 = vsub.s32 %v981, %v4603
    %v4605 = vrot.slane %v4436, %v4604
    %v4606 = vsel %vm986, %v4605, %v4601
    %v4607 = vlaneseq
    %v4608 = vshrl.u32 %v4607, 7
    %v4609 = vsub.s32 %v976, %v4608
    %v4610 = vrot.slane %v4439, %v4609
    %v4611 = vlaneseq
    %v4612 = vshrl.u32 %v4611, 7
    %v4613 = vsub.s32 %v981, %v4612
    %v4614 = vrot.slane %v4442, %v4613
    %v4615 = vsel %vm986, %v4614, %v4610
    %v4616 = vlaneseq
    %v4617 = vshrl.u32 %v4616, 7
    %v4618 = vsub.s32 %v976, %v4617
    %v4619 = vrot.slane %v4445, %v4618
    %v4620 = vlaneseq
    %v4621 = vshrl.u32 %v4620, 7
    %v4622 = vsub.s32 %v981, %v4621
    %v4623 = vrot.slane %v4448, %v4622
    %v4624 = vsel %vm986, %v4623, %v4619
    %v4625 = vsel %vm1123, %v4498, %v4489
    %v4626 = vsel %vm1125, %v4507, %v4625
    %v4627 = vsel %vm1127, %v4516, %v4626
    %v4628 = vsel %vm1129, %v4525, %v4627
    %v4629 = vsel %vm1131, %v4534, %v4628
    %v4630 = vsel %vm1133, %v4543, %v4629
    %v4631 = vsel %vm1135, %v4552, %v4630
    %v4632 = vsel %vm1123, %v4570, %v4561
    %v4633 = vsel %vm1125, %v4579, %v4632
    %v4634 = vsel %vm1127, %v4588, %v4633
    %v4635 = vsel %vm1129, %v4597, %v4634
    %v4636 = vsel %vm1131, %v4606, %v4635
    %v4637 = vsel %vm1133, %v4615, %v4636
    %v4638 = vsel %vm1135, %v4624, %v4637
    %v4641 = vsel %vm532, %v4631, -1e+30
    %v4642 = vsel %vm533, %v4638, -1e+30
    %v4643 = vsel %vm1148, %v4641, -inf
    %4644 = vmax.xlane.f32.xlu0 %v4643
    %v4645 = vpop.xlane.xlu0 %4644
    %v4646 = vsel %vm1148, %v4642, -inf
    %4647 = vmax.xlane.f32.xlu0 %v4646
    %v4648 = vpop.xlane.xlu0 %4647
    %v4649 = vsub.f32 %v4641, %v4645
    %v4650 = vsub.f32 %v4642, %v4648
    %v4651 = vmul.f32 %v4649, 1.442695
    %v4652 = vpow.pop %v4651
    %v4653 = vmul.f32 %v4650, 1.442695
    %v4654 = vpow.pop %v4653
    %v4655 = vsel %vm1148, %v4652, 0.0
    %4656 = vadd.xlane.f32.xlu0 %v4655
    %v4657 = vpop.xlane.xlu0 %4656
    %v4658 = vsel %vm1148, %v4654, 0.0
    %4659 = vadd.xlane.f32.xlu0 %v4658
    %v4660 = vpop.xlane.xlu0 %4659
    %v4661 = vrcp.pop %v4657
    %v4662 = vrcp.pop %v4660
    %v4663 = vmul.f32 %v4652, %v4661
    %v4664 = vmul.f32 %v4654, %v4662
    %4667 = vrot.lane.b32.xlu0 %v3703, 16
    %v4668 = vpop.permute.xlu0 %4667
    %4669 = vrot.lane.b32.xlu0 %v3704, 16
    %v4670 = vpop.permute.xlu0 %4669
    %4675 = vrot.lane.b32.xlu0 %v4183, 32
    %v4676 = vpop.permute.xlu0 %4675
    %4677 = vrot.lane.b32.xlu0 %v4184, 32
    %v4678 = vpop.permute.xlu0 %4677
    %4683 = vrot.lane.b32.xlu0 %v4663, 48
    %v4684 = vpop.permute.xlu0 %4683
    %4685 = vrot.lane.b32.xlu0 %v4664, 48
    %v4686 = vpop.permute.xlu0 %4685
    %v4689 = vsel %vm1148, %v3223, %v4668
    %v4690 = vsel %vm1148, %v3224, %v4670
    %v4691 = vsel %vm360, %v4689, %v4676
    %v4692 = vsel %vm360, %v4690, %v4678
    %v4693 = vsel %vm2639, %v4691, %v4684
    %v4694 = vsel %vm2639, %v4692, %v4686
    %4695 = vrot.lane.b32.xlu0 %v434, 122
    %v4696 = vpop.permute.xlu0 %4695
    %4697 = vrot.lane.b32.xlu0 %v439, 122
    %v4698 = vpop.permute.xlu0 %4697
    %4699 = vrot.lane.b32.xlu0 %v434, 116
    %v4700 = vpop.permute.xlu0 %4699
    %4701 = vrot.lane.b32.xlu0 %v439, 116
    %v4702 = vpop.permute.xlu0 %4701
    %4703 = vrot.lane.b32.xlu0 %v434, 110
    %v4704 = vpop.permute.xlu0 %4703
    %4705 = vrot.lane.b32.xlu0 %v439, 110
    %v4706 = vpop.permute.xlu0 %4705
    %4707 = vrot.lane.b32.xlu0 %v434, 96
    %v4708 = vpop.permute.xlu0 %4707
    %4709 = vrot.lane.b32.xlu0 %v439, 96
    %v4710 = vpop.permute.xlu0 %4709
    %4711 = vrot.lane.b32.xlu0 %v4696, 96
    %v4712 = vpop.permute.xlu0 %4711
    %4713 = vrot.lane.b32.xlu0 %v4698, 96
    %v4714 = vpop.permute.xlu0 %4713
    %4715 = vrot.lane.b32.xlu0 %v4700, 96
    %v4716 = vpop.permute.xlu0 %4715
    %4717 = vrot.lane.b32.xlu0 %v4702, 96
    %v4718 = vpop.permute.xlu0 %4717
    %4719 = vrot.lane.b32.xlu0 %v4704, 96
    %v4720 = vpop.permute.xlu0 %4719
    %4721 = vrot.lane.b32.xlu0 %v4706, 96
    %v4722 = vpop.permute.xlu0 %4721
    %v4732 = vsel %vm2662, %v4693, 0
    %v4735 = vsel %vm2662, %v4694, 0
    %4737 = vmatprep.subr.mxu0 0.0
    %4738 = vmatpush1.msra.mxu0 0.0
    %4739 = vmatprep.subr.mxu0 0.0
    %4740 = vmatpush1.msra.mxu0 0.0
    %4741 = vmatprep.subr.mxu0 0.0
    %4742 = vmatpush1.msra.mxu0 0.0
    %4743 = vmatprep.subr.mxu0 0.0
    %4744 = vmatpush1.msra.mxu0 0.0
    %4745 = vmatprep.subr.mxu0 0.0
    %4746 = vmatpush1.msra.mxu0 0.0
    %4747 = vmatprep.subr.mxu0 0.0
    %4748 = vmatpush1.msra.mxu0 0.0
    %4749 = vmatprep.subr.mxu0 0.0
    %4750 = vmatpush1.msra.mxu0 0.0
    %4751 = vmatprep.subr.mxu0 0.0
    %4752 = vmatpush1.msra.mxu0 0.0
    %4753 = vmatprep.subr.mxu0 0.0
    %4754 = vmatpush1.msra.mxu0 %v4722
    %4755 = vmatprep.subr.mxu0 0.0
    %4756 = vmatpush1.msra.mxu0 %v4720
    %4757 = vmatprep.subr.mxu0 0.0
    %4758 = vmatpush1.msra.mxu0 %v4718
    %4759 = vmatprep.subr.mxu0 0.0
    %4760 = vmatpush1.msra.mxu0 %v4716
    %4761 = vmatprep.subr.mxu0 0.0
    %4762 = vmatpush1.msra.mxu0 %v4714
    %4763 = vmatprep.subr.mxu0 0.0
    %4764 = vmatpush1.msra.mxu0 %v4712
    %4765 = vmatprep.subr.mxu0 0.0
    %4766 = vmatpush1.msra.mxu0 %v4710
    %4767 = vmatprep.subr.mxu0 0.0
    %4768 = vmatpush1.msra.mxu0 %v4708
    %4769 = vmatprep.subr.mxu0 0.0
    %4770 = vmatpush2.msra.mxu0 0.0
    %4771 = vmatprep.subr.mxu0 0.0
    %4772 = vmatpush2.msra.mxu0 0.0
    %4773 = vmatprep.subr.mxu0 0.0
    %4774 = vmatpush2.msra.mxu0 0.0
    %4775 = vmatprep.subr.mxu0 0.0
    %4776 = vmatpush2.msra.mxu0 0.0
    %4777 = vmatprep.subr.mxu0 0.0
    %4778 = vmatpush2.msra.mxu0 0.0
    %4779 = vmatprep.subr.mxu0 0.0
    %4780 = vmatpush2.msra.mxu0 0.0
    %4781 = vmatprep.subr.mxu0 0.0
    %4782 = vmatpush2.msra.mxu0 0.0
    %4783 = vmatprep.subr.mxu0 0.0
    %4784 = vmatpush2.msra.mxu0 0.0
    %4785 = vmatprep.subr.mxu0 0.0
    %4786 = vmatpush2.msra.mxu0 0.0
    %4787 = vmatprep.subr.mxu0 0.0
    %4788 = vmatpush2.msra.mxu0 0.0
    %4789 = vmatprep.subr.mxu0 0.0
    %4790 = vmatpush2.msra.mxu0 0.0
    %4791 = vmatprep.subr.mxu0 0.0
    %4792 = vmatpush2.msra.mxu0 0.0
    %4793 = vmatprep.subr.mxu0 0.0
    %4794 = vmatpush2.msra.mxu0 0.0
    %4795 = vmatprep.subr.mxu0 0.0
    %4796 = vmatpush2.msra.mxu0 0.0
    %4797 = vmatprep.subr.mxu0 0.0
    %4798 = vmatpush2.msra.mxu0 0.0
    %4799 = vmatprep.subr.mxu0 0.0
    %4800 = vmatpush2.msra.mxu0 0.0
    %4801 = vmatprep.mubr.f32.mxu0 0.0
    %4802 = vmatmul.mubr.f32.gmra.mxu0 %v4732
    %v4803 = vpop.f32.mrf.mxu0
    %v4804 = vadd.f32 0.0, %v4803
    %v4805 = vpop.f32.mrf.mxu0
    %4806 = vmatprep.mubr.f32.mxu0 0.0
    %4807 = vmatmul.mubr.f32.gmra.mxu0 %v4735
    %v4808 = vpop.f32.mrf.mxu0
    %v4809 = vadd.f32 0.0, %v4808
    %v4810 = vpop.f32.mrf.mxu0
    %4811 = vdwg.mxu0
    %v4812 = vlaneseq
    %v4813 = vshrl.u32 %v4812, 7
    %v4814 = vsub.s32 0, %v4813
    %v4815 = vrot.slane %v529, %v4814
    %4817 = vrot.lane.b32.xlu0 %v4815, 56
    %v4818 = vpop.permute.xlu0 %4817
    %v4820 = vmul.f32 %v778, %v4818
    %v4821 = vmul.f32 %v779, %v4818
    %v4822 = vmul.f32 %v780, %v4818
    %v4823 = vmul.f32 %v781, %v4818
    %v4824 = vmul.f32 %v782, %v4818
    %v4825 = vmul.f32 %v783, %v4818
    %v4826 = vmul.f32 %v784, %v4818
    %v4827 = vmul.f32 %v785, %v4818
    %v4828 = vmul.f32 %v786, %v4818
    %v4829 = vmul.f32 %v787, %v4818
    %v4830 = vmul.f32 %v788, %v4818
    %v4831 = vmul.f32 %v789, %v4818
    %v4832 = vmul.f32 %v790, %v4818
    %v4833 = vmul.f32 %v791, %v4818
    %v4834 = vmul.f32 %v792, %v4818
    %v4835 = vmul.f32 %v793, %v4818
    %v4836 = vmul.f32 %v794, %v4818
    %v4837 = vmul.f32 %v795, %v4818
    %v4838 = vmul.f32 %v796, %v4818
    %v4839 = vmul.f32 %v797, %v4818
    %v4840 = vmul.f32 %v798, %v4818
    %v4841 = vmul.f32 %v799, %v4818
    %v4842 = vmul.f32 %v800, %v4818
    %v4843 = vmul.f32 %v801, %v4818
    %v4844 = vmul.f32 %v802, %v4818
    %v4845 = vmul.f32 %v803, %v4818
    %v4846 = vmul.f32 %v804, %v4818
    %v4847 = vmul.f32 %v805, %v4818
    %v4848 = vmul.f32 %v806, %v4818
    %v4849 = vmul.f32 %v807, %v4818
    %v4850 = vmul.f32 %v808, %v4818
    %v4851 = vmul.f32 %v809, %v4818
    %4884 = vrot.lane.b32.xlu0 %v4820, 72
    %v4885 = vpop.permute.xlu0 %4884
    %4886 = vrot.lane.b32.xlu0 %v4821, 72
    %v4887 = vpop.permute.xlu0 %4886
    %4888 = vrot.lane.b32.xlu0 %v4822, 72
    %v4889 = vpop.permute.xlu0 %4888
    %4890 = vrot.lane.b32.xlu0 %v4823, 72
    %v4891 = vpop.permute.xlu0 %4890
    %4892 = vrot.lane.b32.xlu0 %v4824, 72
    %v4893 = vpop.permute.xlu0 %4892
    %4894 = vrot.lane.b32.xlu0 %v4825, 72
    %v4895 = vpop.permute.xlu0 %4894
    %4896 = vrot.lane.b32.xlu0 %v4826, 72
    %v4897 = vpop.permute.xlu0 %4896
    %4898 = vrot.lane.b32.xlu0 %v4827, 72
    %v4899 = vpop.permute.xlu0 %4898
    %4900 = vrot.lane.b32.xlu0 %v4828, 72
    %v4901 = vpop.permute.xlu0 %4900
    %4902 = vrot.lane.b32.xlu0 %v4829, 72
    %v4903 = vpop.permute.xlu0 %4902
    %4904 = vrot.lane.b32.xlu0 %v4830, 72
    %v4905 = vpop.permute.xlu0 %4904
    %4906 = vrot.lane.b32.xlu0 %v4831, 72
    %v4907 = vpop.permute.xlu0 %4906
    %4908 = vrot.lane.b32.xlu0 %v4832, 72
    %v4909 = vpop.permute.xlu0 %4908
    %4910 = vrot.lane.b32.xlu0 %v4833, 72
    %v4911 = vpop.permute.xlu0 %4910
    %4912 = vrot.lane.b32.xlu0 %v4834, 72
    %v4913 = vpop.permute.xlu0 %4912
    %4914 = vrot.lane.b32.xlu0 %v4835, 72
    %v4915 = vpop.permute.xlu0 %4914
    %4916 = vrot.lane.b32.xlu0 %v4836, 72
    %v4917 = vpop.permute.xlu0 %4916
    %4918 = vrot.lane.b32.xlu0 %v4837, 72
    %v4919 = vpop.permute.xlu0 %4918
    %4920 = vrot.lane.b32.xlu0 %v4838, 72
    %v4921 = vpop.permute.xlu0 %4920
    %4922 = vrot.lane.b32.xlu0 %v4839, 72
    %v4923 = vpop.permute.xlu0 %4922
    %4924 = vrot.lane.b32.xlu0 %v4840, 72
    %v4925 = vpop.permute.xlu0 %4924
    %4926 = vrot.lane.b32.xlu0 %v4841, 72
    %v4927 = vpop.permute.xlu0 %4926
    %4928 = vrot.lane.b32.xlu0 %v4842, 72
    %v4929 = vpop.permute.xlu0 %4928
    %4930 = vrot.lane.b32.xlu0 %v4843, 72
    %v4931 = vpop.permute.xlu0 %4930
    %4932 = vrot.lane.b32.xlu0 %v4844, 72
    %v4933 = vpop.permute.xlu0 %4932
    %4934 = vrot.lane.b32.xlu0 %v4845, 72
    %v4935 = vpop.permute.xlu0 %4934
    %4936 = vrot.lane.b32.xlu0 %v4846, 72
    %v4937 = vpop.permute.xlu0 %4936
    %4938 = vrot.lane.b32.xlu0 %v4847, 72
    %v4939 = vpop.permute.xlu0 %4938
    %4940 = vrot.lane.b32.xlu0 %v4848, 72
    %v4941 = vpop.permute.xlu0 %4940
    %4942 = vrot.lane.b32.xlu0 %v4849, 72
    %v4943 = vpop.permute.xlu0 %4942
    %4944 = vrot.lane.b32.xlu0 %v4850, 72
    %v4945 = vpop.permute.xlu0 %4944
    %4946 = vrot.lane.b32.xlu0 %v4851, 72
    %v4947 = vpop.permute.xlu0 %4946
    %v4980 = vsel %vm846, %v4885, 0.0
    %4981 = vadd.xlane.f32.xlu0 %v4980
    %v4982 = vpop.xlane.xlu0 %4981
    %v4983 = vsel %vm846, %v4887, 0.0
    %4984 = vadd.xlane.f32.xlu0 %v4983
    %v4985 = vpop.xlane.xlu0 %4984
    %v4986 = vsel %vm846, %v4889, 0.0
    %4987 = vadd.xlane.f32.xlu0 %v4986
    %v4988 = vpop.xlane.xlu0 %4987
    %v4989 = vsel %vm846, %v4891, 0.0
    %4990 = vadd.xlane.f32.xlu0 %v4989
    %v4991 = vpop.xlane.xlu0 %4990
    %v4992 = vsel %vm846, %v4893, 0.0
    %4993 = vadd.xlane.f32.xlu0 %v4992
    %v4994 = vpop.xlane.xlu0 %4993
    %v4995 = vsel %vm846, %v4895, 0.0
    %4996 = vadd.xlane.f32.xlu0 %v4995
    %v4997 = vpop.xlane.xlu0 %4996
    %v4998 = vsel %vm846, %v4897, 0.0
    %4999 = vadd.xlane.f32.xlu0 %v4998
    %v5000 = vpop.xlane.xlu0 %4999
    %v5001 = vsel %vm846, %v4899, 0.0
    %5002 = vadd.xlane.f32.xlu0 %v5001
    %v5003 = vpop.xlane.xlu0 %5002
    %v5004 = vsel %vm846, %v4901, 0.0
    %5005 = vadd.xlane.f32.xlu0 %v5004
    %v5006 = vpop.xlane.xlu0 %5005
    %v5007 = vsel %vm846, %v4903, 0.0
    %5008 = vadd.xlane.f32.xlu0 %v5007
    %v5009 = vpop.xlane.xlu0 %5008
    %v5010 = vsel %vm846, %v4905, 0.0
    %5011 = vadd.xlane.f32.xlu0 %v5010
    %v5012 = vpop.xlane.xlu0 %5011
    %v5013 = vsel %vm846, %v4907, 0.0
    %5014 = vadd.xlane.f32.xlu0 %v5013
    %v5015 = vpop.xlane.xlu0 %5014
    %v5016 = vsel %vm846, %v4909, 0.0
    %5017 = vadd.xlane.f32.xlu0 %v5016
    %v5018 = vpop.xlane.xlu0 %5017
    %v5019 = vsel %vm846, %v4911, 0.0
    %5020 = vadd.xlane.f32.xlu0 %v5019
    %v5021 = vpop.xlane.xlu0 %5020
    %v5022 = vsel %vm846, %v4913, 0.0
    %5023 = vadd.xlane.f32.xlu0 %v5022
    %v5024 = vpop.xlane.xlu0 %5023
    %v5025 = vsel %vm846, %v4915, 0.0
    %5026 = vadd.xlane.f32.xlu0 %v5025
    %v5027 = vpop.xlane.xlu0 %5026
    %v5028 = vsel %vm846, %v4917, 0.0
    %5029 = vadd.xlane.f32.xlu0 %v5028
    %v5030 = vpop.xlane.xlu0 %5029
    %v5031 = vsel %vm846, %v4919, 0.0
    %5032 = vadd.xlane.f32.xlu0 %v5031
    %v5033 = vpop.xlane.xlu0 %5032
    %v5034 = vsel %vm846, %v4921, 0.0
    %5035 = vadd.xlane.f32.xlu0 %v5034
    %v5036 = vpop.xlane.xlu0 %5035
    %v5037 = vsel %vm846, %v4923, 0.0
    %5038 = vadd.xlane.f32.xlu0 %v5037
    %v5039 = vpop.xlane.xlu0 %5038
    %v5040 = vsel %vm846, %v4925, 0.0
    %5041 = vadd.xlane.f32.xlu0 %v5040
    %v5042 = vpop.xlane.xlu0 %5041
    %v5043 = vsel %vm846, %v4927, 0.0
    %5044 = vadd.xlane.f32.xlu0 %v5043
    %v5045 = vpop.xlane.xlu0 %5044
    %v5046 = vsel %vm846, %v4929, 0.0
    %5047 = vadd.xlane.f32.xlu0 %v5046
    %v5048 = vpop.xlane.xlu0 %5047
    %v5049 = vsel %vm846, %v4931, 0.0
    %5050 = vadd.xlane.f32.xlu0 %v5049
    %v5051 = vpop.xlane.xlu0 %5050
    %v5052 = vsel %vm846, %v4933, 0.0
    %5053 = vadd.xlane.f32.xlu0 %v5052
    %v5054 = vpop.xlane.xlu0 %5053
    %v5055 = vsel %vm846, %v4935, 0.0
    %5056 = vadd.xlane.f32.xlu0 %v5055
    %v5057 = vpop.xlane.xlu0 %5056
    %v5058 = vsel %vm846, %v4937, 0.0
    %5059 = vadd.xlane.f32.xlu0 %v5058
    %v5060 = vpop.xlane.xlu0 %5059
    %v5061 = vsel %vm846, %v4939, 0.0
    %5062 = vadd.xlane.f32.xlu0 %v5061
    %v5063 = vpop.xlane.xlu0 %5062
    %v5064 = vsel %vm846, %v4941, 0.0
    %5065 = vadd.xlane.f32.xlu0 %v5064
    %v5066 = vpop.xlane.xlu0 %5065
    %v5067 = vsel %vm846, %v4943, 0.0
    %5068 = vadd.xlane.f32.xlu0 %v5067
    %v5069 = vpop.xlane.xlu0 %5068
    %v5070 = vsel %vm846, %v4945, 0.0
    %5071 = vadd.xlane.f32.xlu0 %v5070
    %v5072 = vpop.xlane.xlu0 %5071
    %v5073 = vsel %vm846, %v4947, 0.0
    %5074 = vadd.xlane.f32.xlu0 %v5073
    %v5075 = vpop.xlane.xlu0 %5074
    %v5108 = vlaneseq
    %v5109 = vshrl.u32 %v5108, 7
    %v5110 = vsub.s32 %v976, %v5109
    %v5111 = vrot.slane %v4982, %v5110
    %v5112 = vlaneseq
    %v5113 = vshrl.u32 %v5112, 7
    %v5114 = vsub.s32 %v981, %v5113
    %v5115 = vrot.slane %v4985, %v5114
    %v5116 = vsel %vm986, %v5115, %v5111
    %v5117 = vlaneseq
    %v5118 = vshrl.u32 %v5117, 7
    %v5119 = vsub.s32 %v976, %v5118
    %v5120 = vrot.slane %v4988, %v5119
    %v5121 = vlaneseq
    %v5122 = vshrl.u32 %v5121, 7
    %v5123 = vsub.s32 %v981, %v5122
    %v5124 = vrot.slane %v4991, %v5123
    %v5125 = vsel %vm986, %v5124, %v5120
    %v5126 = vlaneseq
    %v5127 = vshrl.u32 %v5126, 7
    %v5128 = vsub.s32 %v976, %v5127
    %v5129 = vrot.slane %v4994, %v5128
    %v5130 = vlaneseq
    %v5131 = vshrl.u32 %v5130, 7
    %v5132 = vsub.s32 %v981, %v5131
    %v5133 = vrot.slane %v4997, %v5132
    %v5134 = vsel %vm986, %v5133, %v5129
    %v5135 = vlaneseq
    %v5136 = vshrl.u32 %v5135, 7
    %v5137 = vsub.s32 %v976, %v5136
    %v5138 = vrot.slane %v5000, %v5137
    %v5139 = vlaneseq
    %v5140 = vshrl.u32 %v5139, 7
    %v5141 = vsub.s32 %v981, %v5140
    %v5142 = vrot.slane %v5003, %v5141
    %v5143 = vsel %vm986, %v5142, %v5138
    %v5144 = vlaneseq
    %v5145 = vshrl.u32 %v5144, 7
    %v5146 = vsub.s32 %v976, %v5145
    %v5147 = vrot.slane %v5006, %v5146
    %v5148 = vlaneseq
    %v5149 = vshrl.u32 %v5148, 7
    %v5150 = vsub.s32 %v981, %v5149
    %v5151 = vrot.slane %v5009, %v5150
    %v5152 = vsel %vm986, %v5151, %v5147
    %v5153 = vlaneseq
    %v5154 = vshrl.u32 %v5153, 7
    %v5155 = vsub.s32 %v976, %v5154
    %v5156 = vrot.slane %v5012, %v5155
    %v5157 = vlaneseq
    %v5158 = vshrl.u32 %v5157, 7
    %v5159 = vsub.s32 %v981, %v5158
    %v5160 = vrot.slane %v5015, %v5159
    %v5161 = vsel %vm986, %v5160, %v5156
    %v5162 = vlaneseq
    %v5163 = vshrl.u32 %v5162, 7
    %v5164 = vsub.s32 %v976, %v5163
    %v5165 = vrot.slane %v5018, %v5164
    %v5166 = vlaneseq
    %v5167 = vshrl.u32 %v5166, 7
    %v5168 = vsub.s32 %v981, %v5167
    %v5169 = vrot.slane %v5021, %v5168
    %v5170 = vsel %vm986, %v5169, %v5165
    %v5171 = vlaneseq
    %v5172 = vshrl.u32 %v5171, 7
    %v5173 = vsub.s32 %v976, %v5172
    %v5174 = vrot.slane %v5024, %v5173
    %v5175 = vlaneseq
    %v5176 = vshrl.u32 %v5175, 7
    %v5177 = vsub.s32 %v981, %v5176
    %v5178 = vrot.slane %v5027, %v5177
    %v5179 = vsel %vm986, %v5178, %v5174
    %v5180 = vlaneseq
    %v5181 = vshrl.u32 %v5180, 7
    %v5182 = vsub.s32 %v976, %v5181
    %v5183 = vrot.slane %v5030, %v5182
    %v5184 = vlaneseq
    %v5185 = vshrl.u32 %v5184, 7
    %v5186 = vsub.s32 %v981, %v5185
    %v5187 = vrot.slane %v5033, %v5186
    %v5188 = vsel %vm986, %v5187, %v5183
    %v5189 = vlaneseq
    %v5190 = vshrl.u32 %v5189, 7
    %v5191 = vsub.s32 %v976, %v5190
    %v5192 = vrot.slane %v5036, %v5191
    %v5193 = vlaneseq
    %v5194 = vshrl.u32 %v5193, 7
    %v5195 = vsub.s32 %v981, %v5194
    %v5196 = vrot.slane %v5039, %v5195
    %v5197 = vsel %vm986, %v5196, %v5192
    %v5198 = vlaneseq
    %v5199 = vshrl.u32 %v5198, 7
    %v5200 = vsub.s32 %v976, %v5199
    %v5201 = vrot.slane %v5042, %v5200
    %v5202 = vlaneseq
    %v5203 = vshrl.u32 %v5202, 7
    %v5204 = vsub.s32 %v981, %v5203
    %v5205 = vrot.slane %v5045, %v5204
    %v5206 = vsel %vm986, %v5205, %v5201
    %v5207 = vlaneseq
    %v5208 = vshrl.u32 %v5207, 7
    %v5209 = vsub.s32 %v976, %v5208
    %v5210 = vrot.slane %v5048, %v5209
    %v5211 = vlaneseq
    %v5212 = vshrl.u32 %v5211, 7
    %v5213 = vsub.s32 %v981, %v5212
    %v5214 = vrot.slane %v5051, %v5213
    %v5215 = vsel %vm986, %v5214, %v5210
    %v5216 = vlaneseq
    %v5217 = vshrl.u32 %v5216, 7
    %v5218 = vsub.s32 %v976, %v5217
    %v5219 = vrot.slane %v5054, %v5218
    %v5220 = vlaneseq
    %v5221 = vshrl.u32 %v5220, 7
    %v5222 = vsub.s32 %v981, %v5221
    %v5223 = vrot.slane %v5057, %v5222
    %v5224 = vsel %vm986, %v5223, %v5219
    %v5225 = vlaneseq
    %v5226 = vshrl.u32 %v5225, 7
    %v5227 = vsub.s32 %v976, %v5226
    %v5228 = vrot.slane %v5060, %v5227
    %v5229 = vlaneseq
    %v5230 = vshrl.u32 %v5229, 7
    %v5231 = vsub.s32 %v981, %v5230
    %v5232 = vrot.slane %v5063, %v5231
    %v5233 = vsel %vm986, %v5232, %v5228
    %v5234 = vlaneseq
    %v5235 = vshrl.u32 %v5234, 7
    %v5236 = vsub.s32 %v976, %v5235
    %v5237 = vrot.slane %v5066, %v5236
    %v5238 = vlaneseq
    %v5239 = vshrl.u32 %v5238, 7
    %v5240 = vsub.s32 %v981, %v5239
    %v5241 = vrot.slane %v5069, %v5240
    %v5242 = vsel %vm986, %v5241, %v5237
    %v5243 = vlaneseq
    %v5244 = vshrl.u32 %v5243, 7
    %v5245 = vsub.s32 %v976, %v5244
    %v5246 = vrot.slane %v5072, %v5245
    %v5247 = vlaneseq
    %v5248 = vshrl.u32 %v5247, 7
    %v5249 = vsub.s32 %v981, %v5248
    %v5250 = vrot.slane %v5075, %v5249
    %v5251 = vsel %vm986, %v5250, %v5246
    %v5252 = vsel %vm1123, %v5125, %v5116
    %v5253 = vsel %vm1125, %v5134, %v5252
    %v5254 = vsel %vm1127, %v5143, %v5253
    %v5255 = vsel %vm1129, %v5152, %v5254
    %v5256 = vsel %vm1131, %v5161, %v5255
    %v5257 = vsel %vm1133, %v5170, %v5256
    %v5258 = vsel %vm1135, %v5179, %v5257
    %v5259 = vsel %vm1123, %v5197, %v5188
    %v5260 = vsel %vm1125, %v5206, %v5259
    %v5261 = vsel %vm1127, %v5215, %v5260
    %v5262 = vsel %vm1129, %v5224, %v5261
    %v5263 = vsel %vm1131, %v5233, %v5262
    %v5264 = vsel %vm1133, %v5242, %v5263
    %v5265 = vsel %vm1135, %v5251, %v5264
    %v5268 = vsel %vm532, %v5258, -1e+30
    %v5269 = vsel %vm533, %v5265, -1e+30
    %v5270 = vsel %vm1148, %v5268, -inf
    %5271 = vmax.xlane.f32.xlu0 %v5270
    %v5272 = vpop.xlane.xlu0 %5271
    %v5273 = vsel %vm1148, %v5269, -inf
    %5274 = vmax.xlane.f32.xlu0 %v5273
    %v5275 = vpop.xlane.xlu0 %5274
    %v5276 = vsub.f32 %v5268, %v5272
    %v5277 = vsub.f32 %v5269, %v5275
    %v5278 = vmul.f32 %v5276, 1.442695
    %v5279 = vpow.pop %v5278
    %v5280 = vmul.f32 %v5277, 1.442695
    %v5281 = vpow.pop %v5280
    %v5282 = vsel %vm1148, %v5279, 0.0
    %5283 = vadd.xlane.f32.xlu0 %v5282
    %v5284 = vpop.xlane.xlu0 %5283
    %v5285 = vsel %vm1148, %v5281, 0.0
    %5286 = vadd.xlane.f32.xlu0 %v5285
    %v5287 = vpop.xlane.xlu0 %5286
    %v5288 = vrcp.pop %v5284
    %v5289 = vrcp.pop %v5287
    %v5290 = vmul.f32 %v5279, %v5288
    %v5291 = vmul.f32 %v5281, %v5289
    %v5292 = vlaneseq
    %v5293 = vshrl.u32 %v5292, 7
    %v5294 = vsub.s32 1, %v5293
    %v5295 = vrot.slane %v529, %v5294
    %5297 = vrot.lane.b32.xlu0 %v5295, 64
    %v5298 = vpop.permute.xlu0 %5297
    %v5300 = vmul.f32 %v778, %v5298
    %v5301 = vmul.f32 %v779, %v5298
    %v5302 = vmul.f32 %v780, %v5298
    %v5303 = vmul.f32 %v781, %v5298
    %v5304 = vmul.f32 %v782, %v5298
    %v5305 = vmul.f32 %v783, %v5298
    %v5306 = vmul.f32 %v784, %v5298
    %v5307 = vmul.f32 %v785, %v5298
    %v5308 = vmul.f32 %v786, %v5298
    %v5309 = vmul.f32 %v787, %v5298
    %v5310 = vmul.f32 %v788, %v5298
    %v5311 = vmul.f32 %v789, %v5298
    %v5312 = vmul.f32 %v790, %v5298
    %v5313 = vmul.f32 %v791, %v5298
    %v5314 = vmul.f32 %v792, %v5298
    %v5315 = vmul.f32 %v793, %v5298
    %v5316 = vmul.f32 %v794, %v5298
    %v5317 = vmul.f32 %v795, %v5298
    %v5318 = vmul.f32 %v796, %v5298
    %v5319 = vmul.f32 %v797, %v5298
    %v5320 = vmul.f32 %v798, %v5298
    %v5321 = vmul.f32 %v799, %v5298
    %v5322 = vmul.f32 %v800, %v5298
    %v5323 = vmul.f32 %v801, %v5298
    %v5324 = vmul.f32 %v802, %v5298
    %v5325 = vmul.f32 %v803, %v5298
    %v5326 = vmul.f32 %v804, %v5298
    %v5327 = vmul.f32 %v805, %v5298
    %v5328 = vmul.f32 %v806, %v5298
    %v5329 = vmul.f32 %v807, %v5298
    %v5330 = vmul.f32 %v808, %v5298
    %v5331 = vmul.f32 %v809, %v5298
    %5364 = vrot.lane.b32.xlu0 %v5300, 64
    %v5365 = vpop.permute.xlu0 %5364
    %5366 = vrot.lane.b32.xlu0 %v5301, 64
    %v5367 = vpop.permute.xlu0 %5366
    %5368 = vrot.lane.b32.xlu0 %v5302, 64
    %v5369 = vpop.permute.xlu0 %5368
    %5370 = vrot.lane.b32.xlu0 %v5303, 64
    %v5371 = vpop.permute.xlu0 %5370
    %5372 = vrot.lane.b32.xlu0 %v5304, 64
    %v5373 = vpop.permute.xlu0 %5372
    %5374 = vrot.lane.b32.xlu0 %v5305, 64
    %v5375 = vpop.permute.xlu0 %5374
    %5376 = vrot.lane.b32.xlu0 %v5306, 64
    %v5377 = vpop.permute.xlu0 %5376
    %5378 = vrot.lane.b32.xlu0 %v5307, 64
    %v5379 = vpop.permute.xlu0 %5378
    %5380 = vrot.lane.b32.xlu0 %v5308, 64
    %v5381 = vpop.permute.xlu0 %5380
    %5382 = vrot.lane.b32.xlu0 %v5309, 64
    %v5383 = vpop.permute.xlu0 %5382
    %5384 = vrot.lane.b32.xlu0 %v5310, 64
    %v5385 = vpop.permute.xlu0 %5384
    %5386 = vrot.lane.b32.xlu0 %v5311, 64
    %v5387 = vpop.permute.xlu0 %5386
    %5388 = vrot.lane.b32.xlu0 %v5312, 64
    %v5389 = vpop.permute.xlu0 %5388
    %5390 = vrot.lane.b32.xlu0 %v5313, 64
    %v5391 = vpop.permute.xlu0 %5390
    %5392 = vrot.lane.b32.xlu0 %v5314, 64
    %v5393 = vpop.permute.xlu0 %5392
    %5394 = vrot.lane.b32.xlu0 %v5315, 64
    %v5395 = vpop.permute.xlu0 %5394
    %5396 = vrot.lane.b32.xlu0 %v5316, 64
    %v5397 = vpop.permute.xlu0 %5396
    %5398 = vrot.lane.b32.xlu0 %v5317, 64
    %v5399 = vpop.permute.xlu0 %5398
    %5400 = vrot.lane.b32.xlu0 %v5318, 64
    %v5401 = vpop.permute.xlu0 %5400
    %5402 = vrot.lane.b32.xlu0 %v5319, 64
    %v5403 = vpop.permute.xlu0 %5402
    %5404 = vrot.lane.b32.xlu0 %v5320, 64
    %v5405 = vpop.permute.xlu0 %5404
    %5406 = vrot.lane.b32.xlu0 %v5321, 64
    %v5407 = vpop.permute.xlu0 %5406
    %5408 = vrot.lane.b32.xlu0 %v5322, 64
    %v5409 = vpop.permute.xlu0 %5408
    %5410 = vrot.lane.b32.xlu0 %v5323, 64
    %v5411 = vpop.permute.xlu0 %5410
    %5412 = vrot.lane.b32.xlu0 %v5324, 64
    %v5413 = vpop.permute.xlu0 %5412
    %5414 = vrot.lane.b32.xlu0 %v5325, 64
    %v5415 = vpop.permute.xlu0 %5414
    %5416 = vrot.lane.b32.xlu0 %v5326, 64
    %v5417 = vpop.permute.xlu0 %5416
    %5418 = vrot.lane.b32.xlu0 %v5327, 64
    %v5419 = vpop.permute.xlu0 %5418
    %5420 = vrot.lane.b32.xlu0 %v5328, 64
    %v5421 = vpop.permute.xlu0 %5420
    %5422 = vrot.lane.b32.xlu0 %v5329, 64
    %v5423 = vpop.permute.xlu0 %5422
    %5424 = vrot.lane.b32.xlu0 %v5330, 64
    %v5425 = vpop.permute.xlu0 %5424
    %5426 = vrot.lane.b32.xlu0 %v5331, 64
    %v5427 = vpop.permute.xlu0 %5426
    %v5460 = vsel %vm846, %v5365, 0.0
    %5461 = vadd.xlane.f32.xlu0 %v5460
    %v5462 = vpop.xlane.xlu0 %5461
    %v5463 = vsel %vm846, %v5367, 0.0
    %5464 = vadd.xlane.f32.xlu0 %v5463
    %v5465 = vpop.xlane.xlu0 %5464
    %v5466 = vsel %vm846, %v5369, 0.0
    %5467 = vadd.xlane.f32.xlu0 %v5466
    %v5468 = vpop.xlane.xlu0 %5467
    %v5469 = vsel %vm846, %v5371, 0.0
    %5470 = vadd.xlane.f32.xlu0 %v5469
    %v5471 = vpop.xlane.xlu0 %5470
    %v5472 = vsel %vm846, %v5373, 0.0
    %5473 = vadd.xlane.f32.xlu0 %v5472
    %v5474 = vpop.xlane.xlu0 %5473
    %v5475 = vsel %vm846, %v5375, 0.0
    %5476 = vadd.xlane.f32.xlu0 %v5475
    %v5477 = vpop.xlane.xlu0 %5476
    %v5478 = vsel %vm846, %v5377, 0.0
    %5479 = vadd.xlane.f32.xlu0 %v5478
    %v5480 = vpop.xlane.xlu0 %5479
    %v5481 = vsel %vm846, %v5379, 0.0
    %5482 = vadd.xlane.f32.xlu0 %v5481
    %v5483 = vpop.xlane.xlu0 %5482
    %v5484 = vsel %vm846, %v5381, 0.0
    %5485 = vadd.xlane.f32.xlu0 %v5484
    %v5486 = vpop.xlane.xlu0 %5485
    %v5487 = vsel %vm846, %v5383, 0.0
    %5488 = vadd.xlane.f32.xlu0 %v5487
    %v5489 = vpop.xlane.xlu0 %5488
    %v5490 = vsel %vm846, %v5385, 0.0
    %5491 = vadd.xlane.f32.xlu0 %v5490
    %v5492 = vpop.xlane.xlu0 %5491
    %v5493 = vsel %vm846, %v5387, 0.0
    %5494 = vadd.xlane.f32.xlu0 %v5493
    %v5495 = vpop.xlane.xlu0 %5494
    %v5496 = vsel %vm846, %v5389, 0.0
    %5497 = vadd.xlane.f32.xlu0 %v5496
    %v5498 = vpop.xlane.xlu0 %5497
    %v5499 = vsel %vm846, %v5391, 0.0
    %5500 = vadd.xlane.f32.xlu0 %v5499
    %v5501 = vpop.xlane.xlu0 %5500
    %v5502 = vsel %vm846, %v5393, 0.0
    %5503 = vadd.xlane.f32.xlu0 %v5502
    %v5504 = vpop.xlane.xlu0 %5503
    %v5505 = vsel %vm846, %v5395, 0.0
    %5506 = vadd.xlane.f32.xlu0 %v5505
    %v5507 = vpop.xlane.xlu0 %5506
    %v5508 = vsel %vm846, %v5397, 0.0
    %5509 = vadd.xlane.f32.xlu0 %v5508
    %v5510 = vpop.xlane.xlu0 %5509
    %v5511 = vsel %vm846, %v5399, 0.0
    %5512 = vadd.xlane.f32.xlu0 %v5511
    %v5513 = vpop.xlane.xlu0 %5512
    %v5514 = vsel %vm846, %v5401, 0.0
    %5515 = vadd.xlane.f32.xlu0 %v5514
    %v5516 = vpop.xlane.xlu0 %5515
    %v5517 = vsel %vm846, %v5403, 0.0
    %5518 = vadd.xlane.f32.xlu0 %v5517
    %v5519 = vpop.xlane.xlu0 %5518
    %v5520 = vsel %vm846, %v5405, 0.0
    %5521 = vadd.xlane.f32.xlu0 %v5520
    %v5522 = vpop.xlane.xlu0 %5521
    %v5523 = vsel %vm846, %v5407, 0.0
    %5524 = vadd.xlane.f32.xlu0 %v5523
    %v5525 = vpop.xlane.xlu0 %5524
    %v5526 = vsel %vm846, %v5409, 0.0
    %5527 = vadd.xlane.f32.xlu0 %v5526
    %v5528 = vpop.xlane.xlu0 %5527
    %v5529 = vsel %vm846, %v5411, 0.0
    %5530 = vadd.xlane.f32.xlu0 %v5529
    %v5531 = vpop.xlane.xlu0 %5530
    %v5532 = vsel %vm846, %v5413, 0.0
    %5533 = vadd.xlane.f32.xlu0 %v5532
    %v5534 = vpop.xlane.xlu0 %5533
    %v5535 = vsel %vm846, %v5415, 0.0
    %5536 = vadd.xlane.f32.xlu0 %v5535
    %v5537 = vpop.xlane.xlu0 %5536
    %v5538 = vsel %vm846, %v5417, 0.0
    %5539 = vadd.xlane.f32.xlu0 %v5538
    %v5540 = vpop.xlane.xlu0 %5539
    %v5541 = vsel %vm846, %v5419, 0.0
    %5542 = vadd.xlane.f32.xlu0 %v5541
    %v5543 = vpop.xlane.xlu0 %5542
    %v5544 = vsel %vm846, %v5421, 0.0
    %5545 = vadd.xlane.f32.xlu0 %v5544
    %v5546 = vpop.xlane.xlu0 %5545
    %v5547 = vsel %vm846, %v5423, 0.0
    %5548 = vadd.xlane.f32.xlu0 %v5547
    %v5549 = vpop.xlane.xlu0 %5548
    %v5550 = vsel %vm846, %v5425, 0.0
    %5551 = vadd.xlane.f32.xlu0 %v5550
    %v5552 = vpop.xlane.xlu0 %5551
    %v5553 = vsel %vm846, %v5427, 0.0
    %5554 = vadd.xlane.f32.xlu0 %v5553
    %v5555 = vpop.xlane.xlu0 %5554
    %v5588 = vlaneseq
    %v5589 = vshrl.u32 %v5588, 7
    %v5590 = vsub.s32 %v976, %v5589
    %v5591 = vrot.slane %v5462, %v5590
    %v5592 = vlaneseq
    %v5593 = vshrl.u32 %v5592, 7
    %v5594 = vsub.s32 %v981, %v5593
    %v5595 = vrot.slane %v5465, %v5594
    %v5596 = vsel %vm986, %v5595, %v5591
    %v5597 = vlaneseq
    %v5598 = vshrl.u32 %v5597, 7
    %v5599 = vsub.s32 %v976, %v5598
    %v5600 = vrot.slane %v5468, %v5599
    %v5601 = vlaneseq
    %v5602 = vshrl.u32 %v5601, 7
    %v5603 = vsub.s32 %v981, %v5602
    %v5604 = vrot.slane %v5471, %v5603
    %v5605 = vsel %vm986, %v5604, %v5600
    %v5606 = vlaneseq
    %v5607 = vshrl.u32 %v5606, 7
    %v5608 = vsub.s32 %v976, %v5607
    %v5609 = vrot.slane %v5474, %v5608
    %v5610 = vlaneseq
    %v5611 = vshrl.u32 %v5610, 7
    %v5612 = vsub.s32 %v981, %v5611
    %v5613 = vrot.slane %v5477, %v5612
    %v5614 = vsel %vm986, %v5613, %v5609
    %v5615 = vlaneseq
    %v5616 = vshrl.u32 %v5615, 7
    %v5617 = vsub.s32 %v976, %v5616
    %v5618 = vrot.slane %v5480, %v5617
    %v5619 = vlaneseq
    %v5620 = vshrl.u32 %v5619, 7
    %v5621 = vsub.s32 %v981, %v5620
    %v5622 = vrot.slane %v5483, %v5621
    %v5623 = vsel %vm986, %v5622, %v5618
    %v5624 = vlaneseq
    %v5625 = vshrl.u32 %v5624, 7
    %v5626 = vsub.s32 %v976, %v5625
    %v5627 = vrot.slane %v5486, %v5626
    %v5628 = vlaneseq
    %v5629 = vshrl.u32 %v5628, 7
    %v5630 = vsub.s32 %v981, %v5629
    %v5631 = vrot.slane %v5489, %v5630
    %v5632 = vsel %vm986, %v5631, %v5627
    %v5633 = vlaneseq
    %v5634 = vshrl.u32 %v5633, 7
    %v5635 = vsub.s32 %v976, %v5634
    %v5636 = vrot.slane %v5492, %v5635
    %v5637 = vlaneseq
    %v5638 = vshrl.u32 %v5637, 7
    %v5639 = vsub.s32 %v981, %v5638
    %v5640 = vrot.slane %v5495, %v5639
    %v5641 = vsel %vm986, %v5640, %v5636
    %v5642 = vlaneseq
    %v5643 = vshrl.u32 %v5642, 7
    %v5644 = vsub.s32 %v976, %v5643
    %v5645 = vrot.slane %v5498, %v5644
    %v5646 = vlaneseq
    %v5647 = vshrl.u32 %v5646, 7
    %v5648 = vsub.s32 %v981, %v5647
    %v5649 = vrot.slane %v5501, %v5648
    %v5650 = vsel %vm986, %v5649, %v5645
    %v5651 = vlaneseq
    %v5652 = vshrl.u32 %v5651, 7
    %v5653 = vsub.s32 %v976, %v5652
    %v5654 = vrot.slane %v5504, %v5653
    %v5655 = vlaneseq
    %v5656 = vshrl.u32 %v5655, 7
    %v5657 = vsub.s32 %v981, %v5656
    %v5658 = vrot.slane %v5507, %v5657
    %v5659 = vsel %vm986, %v5658, %v5654
    %v5660 = vlaneseq
    %v5661 = vshrl.u32 %v5660, 7
    %v5662 = vsub.s32 %v976, %v5661
    %v5663 = vrot.slane %v5510, %v5662
    %v5664 = vlaneseq
    %v5665 = vshrl.u32 %v5664, 7
    %v5666 = vsub.s32 %v981, %v5665
    %v5667 = vrot.slane %v5513, %v5666
    %v5668 = vsel %vm986, %v5667, %v5663
    %v5669 = vlaneseq
    %v5670 = vshrl.u32 %v5669, 7
    %v5671 = vsub.s32 %v976, %v5670
    %v5672 = vrot.slane %v5516, %v5671
    %v5673 = vlaneseq
    %v5674 = vshrl.u32 %v5673, 7
    %v5675 = vsub.s32 %v981, %v5674
    %v5676 = vrot.slane %v5519, %v5675
    %v5677 = vsel %vm986, %v5676, %v5672
    %v5678 = vlaneseq
    %v5679 = vshrl.u32 %v5678, 7
    %v5680 = vsub.s32 %v976, %v5679
    %v5681 = vrot.slane %v5522, %v5680
    %v5682 = vlaneseq
    %v5683 = vshrl.u32 %v5682, 7
    %v5684 = vsub.s32 %v981, %v5683
    %v5685 = vrot.slane %v5525, %v5684
    %v5686 = vsel %vm986, %v5685, %v5681
    %v5687 = vlaneseq
    %v5688 = vshrl.u32 %v5687, 7
    %v5689 = vsub.s32 %v976, %v5688
    %v5690 = vrot.slane %v5528, %v5689
    %v5691 = vlaneseq
    %v5692 = vshrl.u32 %v5691, 7
    %v5693 = vsub.s32 %v981, %v5692
    %v5694 = vrot.slane %v5531, %v5693
    %v5695 = vsel %vm986, %v5694, %v5690
    %v5696 = vlaneseq
    %v5697 = vshrl.u32 %v5696, 7
    %v5698 = vsub.s32 %v976, %v5697
    %v5699 = vrot.slane %v5534, %v5698
    %v5700 = vlaneseq
    %v5701 = vshrl.u32 %v5700, 7
    %v5702 = vsub.s32 %v981, %v5701
    %v5703 = vrot.slane %v5537, %v5702
    %v5704 = vsel %vm986, %v5703, %v5699
    %v5705 = vlaneseq
    %v5706 = vshrl.u32 %v5705, 7
    %v5707 = vsub.s32 %v976, %v5706
    %v5708 = vrot.slane %v5540, %v5707
    %v5709 = vlaneseq
    %v5710 = vshrl.u32 %v5709, 7
    %v5711 = vsub.s32 %v981, %v5710
    %v5712 = vrot.slane %v5543, %v5711
    %v5713 = vsel %vm986, %v5712, %v5708
    %v5714 = vlaneseq
    %v5715 = vshrl.u32 %v5714, 7
    %v5716 = vsub.s32 %v976, %v5715
    %v5717 = vrot.slane %v5546, %v5716
    %v5718 = vlaneseq
    %v5719 = vshrl.u32 %v5718, 7
    %v5720 = vsub.s32 %v981, %v5719
    %v5721 = vrot.slane %v5549, %v5720
    %v5722 = vsel %vm986, %v5721, %v5717
    %v5723 = vlaneseq
    %v5724 = vshrl.u32 %v5723, 7
    %v5725 = vsub.s32 %v976, %v5724
    %v5726 = vrot.slane %v5552, %v5725
    %v5727 = vlaneseq
    %v5728 = vshrl.u32 %v5727, 7
    %v5729 = vsub.s32 %v981, %v5728
    %v5730 = vrot.slane %v5555, %v5729
    %v5731 = vsel %vm986, %v5730, %v5726
    %v5732 = vsel %vm1123, %v5605, %v5596
    %v5733 = vsel %vm1125, %v5614, %v5732
    %v5734 = vsel %vm1127, %v5623, %v5733
    %v5735 = vsel %vm1129, %v5632, %v5734
    %v5736 = vsel %vm1131, %v5641, %v5735
    %v5737 = vsel %vm1133, %v5650, %v5736
    %v5738 = vsel %vm1135, %v5659, %v5737
    %v5739 = vsel %vm1123, %v5677, %v5668
    %v5740 = vsel %vm1125, %v5686, %v5739
    %v5741 = vsel %vm1127, %v5695, %v5740
    %v5742 = vsel %vm1129, %v5704, %v5741
    %v5743 = vsel %vm1131, %v5713, %v5742
    %v5744 = vsel %vm1133, %v5722, %v5743
    %v5745 = vsel %vm1135, %v5731, %v5744
    %v5748 = vsel %vm532, %v5738, -1e+30
    %v5749 = vsel %vm533, %v5745, -1e+30
    %v5750 = vsel %vm1148, %v5748, -inf
    %5751 = vmax.xlane.f32.xlu0 %v5750
    %v5752 = vpop.xlane.xlu0 %5751
    %v5753 = vsel %vm1148, %v5749, -inf
    %5754 = vmax.xlane.f32.xlu0 %v5753
    %v5755 = vpop.xlane.xlu0 %5754
    %v5756 = vsub.f32 %v5748, %v5752
    %v5757 = vsub.f32 %v5749, %v5755
    %v5758 = vmul.f32 %v5756, 1.442695
    %v5759 = vpow.pop %v5758
    %v5760 = vmul.f32 %v5757, 1.442695
    %v5761 = vpow.pop %v5760
    %v5762 = vsel %vm1148, %v5759, 0.0
    %5763 = vadd.xlane.f32.xlu0 %v5762
    %v5764 = vpop.xlane.xlu0 %5763
    %v5765 = vsel %vm1148, %v5761, 0.0
    %5766 = vadd.xlane.f32.xlu0 %v5765
    %v5767 = vpop.xlane.xlu0 %5766
    %v5768 = vrcp.pop %v5764
    %v5769 = vrcp.pop %v5767
    %v5770 = vmul.f32 %v5759, %v5768
    %v5771 = vmul.f32 %v5761, %v5769
    %v5772 = vlaneseq
    %v5773 = vshrl.u32 %v5772, 7
    %v5774 = vsub.s32 2, %v5773
    %v5775 = vrot.slane %v529, %v5774
    %5777 = vrot.lane.b32.xlu0 %v5775, 72
    %v5778 = vpop.permute.xlu0 %5777
    %v5780 = vmul.f32 %v778, %v5778
    %v5781 = vmul.f32 %v779, %v5778
    %v5782 = vmul.f32 %v780, %v5778
    %v5783 = vmul.f32 %v781, %v5778
    %v5784 = vmul.f32 %v782, %v5778
    %v5785 = vmul.f32 %v783, %v5778
    %v5786 = vmul.f32 %v784, %v5778
    %v5787 = vmul.f32 %v785, %v5778
    %v5788 = vmul.f32 %v786, %v5778
    %v5789 = vmul.f32 %v787, %v5778
    %v5790 = vmul.f32 %v788, %v5778
    %v5791 = vmul.f32 %v789, %v5778
    %v5792 = vmul.f32 %v790, %v5778
    %v5793 = vmul.f32 %v791, %v5778
    %v5794 = vmul.f32 %v792, %v5778
    %v5795 = vmul.f32 %v793, %v5778
    %v5796 = vmul.f32 %v794, %v5778
    %v5797 = vmul.f32 %v795, %v5778
    %v5798 = vmul.f32 %v796, %v5778
    %v5799 = vmul.f32 %v797, %v5778
    %v5800 = vmul.f32 %v798, %v5778
    %v5801 = vmul.f32 %v799, %v5778
    %v5802 = vmul.f32 %v800, %v5778
    %v5803 = vmul.f32 %v801, %v5778
    %v5804 = vmul.f32 %v802, %v5778
    %v5805 = vmul.f32 %v803, %v5778
    %v5806 = vmul.f32 %v804, %v5778
    %v5807 = vmul.f32 %v805, %v5778
    %v5808 = vmul.f32 %v806, %v5778
    %v5809 = vmul.f32 %v807, %v5778
    %v5810 = vmul.f32 %v808, %v5778
    %v5811 = vmul.f32 %v809, %v5778
    %5844 = vrot.lane.b32.xlu0 %v5780, 56
    %v5845 = vpop.permute.xlu0 %5844
    %5846 = vrot.lane.b32.xlu0 %v5781, 56
    %v5847 = vpop.permute.xlu0 %5846
    %5848 = vrot.lane.b32.xlu0 %v5782, 56
    %v5849 = vpop.permute.xlu0 %5848
    %5850 = vrot.lane.b32.xlu0 %v5783, 56
    %v5851 = vpop.permute.xlu0 %5850
    %5852 = vrot.lane.b32.xlu0 %v5784, 56
    %v5853 = vpop.permute.xlu0 %5852
    %5854 = vrot.lane.b32.xlu0 %v5785, 56
    %v5855 = vpop.permute.xlu0 %5854
    %5856 = vrot.lane.b32.xlu0 %v5786, 56
    %v5857 = vpop.permute.xlu0 %5856
    %5858 = vrot.lane.b32.xlu0 %v5787, 56
    %v5859 = vpop.permute.xlu0 %5858
    %5860 = vrot.lane.b32.xlu0 %v5788, 56
    %v5861 = vpop.permute.xlu0 %5860
    %5862 = vrot.lane.b32.xlu0 %v5789, 56
    %v5863 = vpop.permute.xlu0 %5862
    %5864 = vrot.lane.b32.xlu0 %v5790, 56
    %v5865 = vpop.permute.xlu0 %5864
    %5866 = vrot.lane.b32.xlu0 %v5791, 56
    %v5867 = vpop.permute.xlu0 %5866
    %5868 = vrot.lane.b32.xlu0 %v5792, 56
    %v5869 = vpop.permute.xlu0 %5868
    %5870 = vrot.lane.b32.xlu0 %v5793, 56
    %v5871 = vpop.permute.xlu0 %5870
    %5872 = vrot.lane.b32.xlu0 %v5794, 56
    %v5873 = vpop.permute.xlu0 %5872
    %5874 = vrot.lane.b32.xlu0 %v5795, 56
    %v5875 = vpop.permute.xlu0 %5874
    %5876 = vrot.lane.b32.xlu0 %v5796, 56
    %v5877 = vpop.permute.xlu0 %5876
    %5878 = vrot.lane.b32.xlu0 %v5797, 56
    %v5879 = vpop.permute.xlu0 %5878
    %5880 = vrot.lane.b32.xlu0 %v5798, 56
    %v5881 = vpop.permute.xlu0 %5880
    %5882 = vrot.lane.b32.xlu0 %v5799, 56
    %v5883 = vpop.permute.xlu0 %5882
    %5884 = vrot.lane.b32.xlu0 %v5800, 56
    %v5885 = vpop.permute.xlu0 %5884
    %5886 = vrot.lane.b32.xlu0 %v5801, 56
    %v5887 = vpop.permute.xlu0 %5886
    %5888 = vrot.lane.b32.xlu0 %v5802, 56
    %v5889 = vpop.permute.xlu0 %5888
    %5890 = vrot.lane.b32.xlu0 %v5803, 56
    %v5891 = vpop.permute.xlu0 %5890
    %5892 = vrot.lane.b32.xlu0 %v5804, 56
    %v5893 = vpop.permute.xlu0 %5892
    %5894 = vrot.lane.b32.xlu0 %v5805, 56
    %v5895 = vpop.permute.xlu0 %5894
    %5896 = vrot.lane.b32.xlu0 %v5806, 56
    %v5897 = vpop.permute.xlu0 %5896
    %5898 = vrot.lane.b32.xlu0 %v5807, 56
    %v5899 = vpop.permute.xlu0 %5898
    %5900 = vrot.lane.b32.xlu0 %v5808, 56
    %v5901 = vpop.permute.xlu0 %5900
    %5902 = vrot.lane.b32.xlu0 %v5809, 56
    %v5903 = vpop.permute.xlu0 %5902
    %5904 = vrot.lane.b32.xlu0 %v5810, 56
    %v5905 = vpop.permute.xlu0 %5904
    %5906 = vrot.lane.b32.xlu0 %v5811, 56
    %v5907 = vpop.permute.xlu0 %5906
    %v5940 = vsel %vm846, %v5845, 0.0
    %5941 = vadd.xlane.f32.xlu0 %v5940
    %v5942 = vpop.xlane.xlu0 %5941
    %v5943 = vsel %vm846, %v5847, 0.0
    %5944 = vadd.xlane.f32.xlu0 %v5943
    %v5945 = vpop.xlane.xlu0 %5944
    %v5946 = vsel %vm846, %v5849, 0.0
    %5947 = vadd.xlane.f32.xlu0 %v5946
    %v5948 = vpop.xlane.xlu0 %5947
    %v5949 = vsel %vm846, %v5851, 0.0
    %5950 = vadd.xlane.f32.xlu0 %v5949
    %v5951 = vpop.xlane.xlu0 %5950
    %v5952 = vsel %vm846, %v5853, 0.0
    %5953 = vadd.xlane.f32.xlu0 %v5952
    %v5954 = vpop.xlane.xlu0 %5953
    %v5955 = vsel %vm846, %v5855, 0.0
    %5956 = vadd.xlane.f32.xlu0 %v5955
    %v5957 = vpop.xlane.xlu0 %5956
    %v5958 = vsel %vm846, %v5857, 0.0
    %5959 = vadd.xlane.f32.xlu0 %v5958
    %v5960 = vpop.xlane.xlu0 %5959
    %v5961 = vsel %vm846, %v5859, 0.0
    %5962 = vadd.xlane.f32.xlu0 %v5961
    %v5963 = vpop.xlane.xlu0 %5962
    %v5964 = vsel %vm846, %v5861, 0.0
    %5965 = vadd.xlane.f32.xlu0 %v5964
    %v5966 = vpop.xlane.xlu0 %5965
    %v5967 = vsel %vm846, %v5863, 0.0
    %5968 = vadd.xlane.f32.xlu0 %v5967
    %v5969 = vpop.xlane.xlu0 %5968
    %v5970 = vsel %vm846, %v5865, 0.0
    %5971 = vadd.xlane.f32.xlu0 %v5970
    %v5972 = vpop.xlane.xlu0 %5971
    %v5973 = vsel %vm846, %v5867, 0.0
    %5974 = vadd.xlane.f32.xlu0 %v5973
    %v5975 = vpop.xlane.xlu0 %5974
    %v5976 = vsel %vm846, %v5869, 0.0
    %5977 = vadd.xlane.f32.xlu0 %v5976
    %v5978 = vpop.xlane.xlu0 %5977
    %v5979 = vsel %vm846, %v5871, 0.0
    %5980 = vadd.xlane.f32.xlu0 %v5979
    %v5981 = vpop.xlane.xlu0 %5980
    %v5982 = vsel %vm846, %v5873, 0.0
    %5983 = vadd.xlane.f32.xlu0 %v5982
    %v5984 = vpop.xlane.xlu0 %5983
    %v5985 = vsel %vm846, %v5875, 0.0
    %5986 = vadd.xlane.f32.xlu0 %v5985
    %v5987 = vpop.xlane.xlu0 %5986
    %v5988 = vsel %vm846, %v5877, 0.0
    %5989 = vadd.xlane.f32.xlu0 %v5988
    %v5990 = vpop.xlane.xlu0 %5989
    %v5991 = vsel %vm846, %v5879, 0.0
    %5992 = vadd.xlane.f32.xlu0 %v5991
    %v5993 = vpop.xlane.xlu0 %5992
    %v5994 = vsel %vm846, %v5881, 0.0
    %5995 = vadd.xlane.f32.xlu0 %v5994
    %v5996 = vpop.xlane.xlu0 %5995
    %v5997 = vsel %vm846, %v5883, 0.0
    %5998 = vadd.xlane.f32.xlu0 %v5997
    %v5999 = vpop.xlane.xlu0 %5998
    %v6000 = vsel %vm846, %v5885, 0.0
    %6001 = vadd.xlane.f32.xlu0 %v6000
    %v6002 = vpop.xlane.xlu0 %6001
    %v6003 = vsel %vm846, %v5887, 0.0
    %6004 = vadd.xlane.f32.xlu0 %v6003
    %v6005 = vpop.xlane.xlu0 %6004
    %v6006 = vsel %vm846, %v5889, 0.0
    %6007 = vadd.xlane.f32.xlu0 %v6006
    %v6008 = vpop.xlane.xlu0 %6007
    %v6009 = vsel %vm846, %v5891, 0.0
    %6010 = vadd.xlane.f32.xlu0 %v6009
    %v6011 = vpop.xlane.xlu0 %6010
    %v6012 = vsel %vm846, %v5893, 0.0
    %6013 = vadd.xlane.f32.xlu0 %v6012
    %v6014 = vpop.xlane.xlu0 %6013
    %v6015 = vsel %vm846, %v5895, 0.0
    %6016 = vadd.xlane.f32.xlu0 %v6015
    %v6017 = vpop.xlane.xlu0 %6016
    %v6018 = vsel %vm846, %v5897, 0.0
    %6019 = vadd.xlane.f32.xlu0 %v6018
    %v6020 = vpop.xlane.xlu0 %6019
    %v6021 = vsel %vm846, %v5899, 0.0
    %6022 = vadd.xlane.f32.xlu0 %v6021
    %v6023 = vpop.xlane.xlu0 %6022
    %v6024 = vsel %vm846, %v5901, 0.0
    %6025 = vadd.xlane.f32.xlu0 %v6024
    %v6026 = vpop.xlane.xlu0 %6025
    %v6027 = vsel %vm846, %v5903, 0.0
    %6028 = vadd.xlane.f32.xlu0 %v6027
    %v6029 = vpop.xlane.xlu0 %6028
    %v6030 = vsel %vm846, %v5905, 0.0
    %6031 = vadd.xlane.f32.xlu0 %v6030
    %v6032 = vpop.xlane.xlu0 %6031
    %v6033 = vsel %vm846, %v5907, 0.0
    %6034 = vadd.xlane.f32.xlu0 %v6033
    %v6035 = vpop.xlane.xlu0 %6034
    %v6068 = vlaneseq
    %v6069 = vshrl.u32 %v6068, 7
    %v6070 = vsub.s32 %v976, %v6069
    %v6071 = vrot.slane %v5942, %v6070
    %v6072 = vlaneseq
    %v6073 = vshrl.u32 %v6072, 7
    %v6074 = vsub.s32 %v981, %v6073
    %v6075 = vrot.slane %v5945, %v6074
    %v6076 = vsel %vm986, %v6075, %v6071
    %v6077 = vlaneseq
    %v6078 = vshrl.u32 %v6077, 7
    %v6079 = vsub.s32 %v976, %v6078
    %v6080 = vrot.slane %v5948, %v6079
    %v6081 = vlaneseq
    %v6082 = vshrl.u32 %v6081, 7
    %v6083 = vsub.s32 %v981, %v6082
    %v6084 = vrot.slane %v5951, %v6083
    %v6085 = vsel %vm986, %v6084, %v6080
    %v6086 = vlaneseq
    %v6087 = vshrl.u32 %v6086, 7
    %v6088 = vsub.s32 %v976, %v6087
    %v6089 = vrot.slane %v5954, %v6088
    %v6090 = vlaneseq
    %v6091 = vshrl.u32 %v6090, 7
    %v6092 = vsub.s32 %v981, %v6091
    %v6093 = vrot.slane %v5957, %v6092
    %v6094 = vsel %vm986, %v6093, %v6089
    %v6095 = vlaneseq
    %v6096 = vshrl.u32 %v6095, 7
    %v6097 = vsub.s32 %v976, %v6096
    %v6098 = vrot.slane %v5960, %v6097
    %v6099 = vlaneseq
    %v6100 = vshrl.u32 %v6099, 7
    %v6101 = vsub.s32 %v981, %v6100
    %v6102 = vrot.slane %v5963, %v6101
    %v6103 = vsel %vm986, %v6102, %v6098
    %v6104 = vlaneseq
    %v6105 = vshrl.u32 %v6104, 7
    %v6106 = vsub.s32 %v976, %v6105
    %v6107 = vrot.slane %v5966, %v6106
    %v6108 = vlaneseq
    %v6109 = vshrl.u32 %v6108, 7
    %v6110 = vsub.s32 %v981, %v6109
    %v6111 = vrot.slane %v5969, %v6110
    %v6112 = vsel %vm986, %v6111, %v6107
    %v6113 = vlaneseq
    %v6114 = vshrl.u32 %v6113, 7
    %v6115 = vsub.s32 %v976, %v6114
    %v6116 = vrot.slane %v5972, %v6115
    %v6117 = vlaneseq
    %v6118 = vshrl.u32 %v6117, 7
    %v6119 = vsub.s32 %v981, %v6118
    %v6120 = vrot.slane %v5975, %v6119
    %v6121 = vsel %vm986, %v6120, %v6116
    %v6122 = vlaneseq
    %v6123 = vshrl.u32 %v6122, 7
    %v6124 = vsub.s32 %v976, %v6123
    %v6125 = vrot.slane %v5978, %v6124
    %v6126 = vlaneseq
    %v6127 = vshrl.u32 %v6126, 7
    %v6128 = vsub.s32 %v981, %v6127
    %v6129 = vrot.slane %v5981, %v6128
    %v6130 = vsel %vm986, %v6129, %v6125
    %v6131 = vlaneseq
    %v6132 = vshrl.u32 %v6131, 7
    %v6133 = vsub.s32 %v976, %v6132
    %v6134 = vrot.slane %v5984, %v6133
    %v6135 = vlaneseq
    %v6136 = vshrl.u32 %v6135, 7
    %v6137 = vsub.s32 %v981, %v6136
    %v6138 = vrot.slane %v5987, %v6137
    %v6139 = vsel %vm986, %v6138, %v6134
    %v6140 = vlaneseq
    %v6141 = vshrl.u32 %v6140, 7
    %v6142 = vsub.s32 %v976, %v6141
    %v6143 = vrot.slane %v5990, %v6142
    %v6144 = vlaneseq
    %v6145 = vshrl.u32 %v6144, 7
    %v6146 = vsub.s32 %v981, %v6145
    %v6147 = vrot.slane %v5993, %v6146
    %v6148 = vsel %vm986, %v6147, %v6143
    %v6149 = vlaneseq
    %v6150 = vshrl.u32 %v6149, 7
    %v6151 = vsub.s32 %v976, %v6150
    %v6152 = vrot.slane %v5996, %v6151
    %v6153 = vlaneseq
    %v6154 = vshrl.u32 %v6153, 7
    %v6155 = vsub.s32 %v981, %v6154
    %v6156 = vrot.slane %v5999, %v6155
    %v6157 = vsel %vm986, %v6156, %v6152
    %v6158 = vlaneseq
    %v6159 = vshrl.u32 %v6158, 7
    %v6160 = vsub.s32 %v976, %v6159
    %v6161 = vrot.slane %v6002, %v6160
    %v6162 = vlaneseq
    %v6163 = vshrl.u32 %v6162, 7
    %v6164 = vsub.s32 %v981, %v6163
    %v6165 = vrot.slane %v6005, %v6164
    %v6166 = vsel %vm986, %v6165, %v6161
    %v6167 = vlaneseq
    %v6168 = vshrl.u32 %v6167, 7
    %v6169 = vsub.s32 %v976, %v6168
    %v6170 = vrot.slane %v6008, %v6169
    %v6171 = vlaneseq
    %v6172 = vshrl.u32 %v6171, 7
    %v6173 = vsub.s32 %v981, %v6172
    %v6174 = vrot.slane %v6011, %v6173
    %v6175 = vsel %vm986, %v6174, %v6170
    %v6176 = vlaneseq
    %v6177 = vshrl.u32 %v6176, 7
    %v6178 = vsub.s32 %v976, %v6177
    %v6179 = vrot.slane %v6014, %v6178
    %v6180 = vlaneseq
    %v6181 = vshrl.u32 %v6180, 7
    %v6182 = vsub.s32 %v981, %v6181
    %v6183 = vrot.slane %v6017, %v6182
    %v6184 = vsel %vm986, %v6183, %v6179
    %v6185 = vlaneseq
    %v6186 = vshrl.u32 %v6185, 7
    %v6187 = vsub.s32 %v976, %v6186
    %v6188 = vrot.slane %v6020, %v6187
    %v6189 = vlaneseq
    %v6190 = vshrl.u32 %v6189, 7
    %v6191 = vsub.s32 %v981, %v6190
    %v6192 = vrot.slane %v6023, %v6191
    %v6193 = vsel %vm986, %v6192, %v6188
    %v6194 = vlaneseq
    %v6195 = vshrl.u32 %v6194, 7
    %v6196 = vsub.s32 %v976, %v6195
    %v6197 = vrot.slane %v6026, %v6196
    %v6198 = vlaneseq
    %v6199 = vshrl.u32 %v6198, 7
    %v6200 = vsub.s32 %v981, %v6199
    %v6201 = vrot.slane %v6029, %v6200
    %v6202 = vsel %vm986, %v6201, %v6197
    %v6203 = vlaneseq
    %v6204 = vshrl.u32 %v6203, 7
    %v6205 = vsub.s32 %v976, %v6204
    %v6206 = vrot.slane %v6032, %v6205
    %v6207 = vlaneseq
    %v6208 = vshrl.u32 %v6207, 7
    %v6209 = vsub.s32 %v981, %v6208
    %v6210 = vrot.slane %v6035, %v6209
    %v6211 = vsel %vm986, %v6210, %v6206
    %v6212 = vsel %vm1123, %v6085, %v6076
    %v6213 = vsel %vm1125, %v6094, %v6212
    %v6214 = vsel %vm1127, %v6103, %v6213
    %v6215 = vsel %vm1129, %v6112, %v6214
    %v6216 = vsel %vm1131, %v6121, %v6215
    %v6217 = vsel %vm1133, %v6130, %v6216
    %v6218 = vsel %vm1135, %v6139, %v6217
    %v6219 = vsel %vm1123, %v6157, %v6148
    %v6220 = vsel %vm1125, %v6166, %v6219
    %v6221 = vsel %vm1127, %v6175, %v6220
    %v6222 = vsel %vm1129, %v6184, %v6221
    %v6223 = vsel %vm1131, %v6193, %v6222
    %v6224 = vsel %vm1133, %v6202, %v6223
    %v6225 = vsel %vm1135, %v6211, %v6224
    %v6228 = vsel %vm532, %v6218, -1e+30
    %v6229 = vsel %vm533, %v6225, -1e+30
    %v6230 = vsel %vm1148, %v6228, -inf
    %6231 = vmax.xlane.f32.xlu0 %v6230
    %v6232 = vpop.xlane.xlu0 %6231
    %v6233 = vsel %vm1148, %v6229, -inf
    %6234 = vmax.xlane.f32.xlu0 %v6233
    %v6235 = vpop.xlane.xlu0 %6234
    %v6236 = vsub.f32 %v6228, %v6232
    %v6237 = vsub.f32 %v6229, %v6235
    %v6238 = vmul.f32 %v6236, 1.442695
    %v6239 = vpow.pop %v6238
    %v6240 = vmul.f32 %v6237, 1.442695
    %v6241 = vpow.pop %v6240
    %v6242 = vsel %vm1148, %v6239, 0.0
    %6243 = vadd.xlane.f32.xlu0 %v6242
    %v6244 = vpop.xlane.xlu0 %6243
    %v6245 = vsel %vm1148, %v6241, 0.0
    %6246 = vadd.xlane.f32.xlu0 %v6245
    %v6247 = vpop.xlane.xlu0 %6246
    %v6248 = vrcp.pop %v6244
    %v6249 = vrcp.pop %v6247
    %v6250 = vmul.f32 %v6239, %v6248
    %v6251 = vmul.f32 %v6241, %v6249
    %v6252 = vlaneseq
    %v6253 = vshrl.u32 %v6252, 7
    %v6254 = vsub.s32 3, %v6253
    %v6255 = vrot.slane %v529, %v6254
    %6257 = vrot.lane.b32.xlu0 %v6255, 80
    %v6258 = vpop.permute.xlu0 %6257
    %v6260 = vmul.f32 %v778, %v6258
    %v6261 = vmul.f32 %v779, %v6258
    %v6262 = vmul.f32 %v780, %v6258
    %v6263 = vmul.f32 %v781, %v6258
    %v6264 = vmul.f32 %v782, %v6258
    %v6265 = vmul.f32 %v783, %v6258
    %v6266 = vmul.f32 %v784, %v6258
    %v6267 = vmul.f32 %v785, %v6258
    %v6268 = vmul.f32 %v786, %v6258
    %v6269 = vmul.f32 %v787, %v6258
    %v6270 = vmul.f32 %v788, %v6258
    %v6271 = vmul.f32 %v789, %v6258
    %v6272 = vmul.f32 %v790, %v6258
    %v6273 = vmul.f32 %v791, %v6258
    %v6274 = vmul.f32 %v792, %v6258
    %v6275 = vmul.f32 %v793, %v6258
    %v6276 = vmul.f32 %v794, %v6258
    %v6277 = vmul.f32 %v795, %v6258
    %v6278 = vmul.f32 %v796, %v6258
    %v6279 = vmul.f32 %v797, %v6258
    %v6280 = vmul.f32 %v798, %v6258
    %v6281 = vmul.f32 %v799, %v6258
    %v6282 = vmul.f32 %v800, %v6258
    %v6283 = vmul.f32 %v801, %v6258
    %v6284 = vmul.f32 %v802, %v6258
    %v6285 = vmul.f32 %v803, %v6258
    %v6286 = vmul.f32 %v804, %v6258
    %v6287 = vmul.f32 %v805, %v6258
    %v6288 = vmul.f32 %v806, %v6258
    %v6289 = vmul.f32 %v807, %v6258
    %v6290 = vmul.f32 %v808, %v6258
    %v6291 = vmul.f32 %v809, %v6258
    %6324 = vrot.lane.b32.xlu0 %v6260, 48
    %v6325 = vpop.permute.xlu0 %6324
    %6326 = vrot.lane.b32.xlu0 %v6261, 48
    %v6327 = vpop.permute.xlu0 %6326
    %6328 = vrot.lane.b32.xlu0 %v6262, 48
    %v6329 = vpop.permute.xlu0 %6328
    %6330 = vrot.lane.b32.xlu0 %v6263, 48
    %v6331 = vpop.permute.xlu0 %6330
    %6332 = vrot.lane.b32.xlu0 %v6264, 48
    %v6333 = vpop.permute.xlu0 %6332
    %6334 = vrot.lane.b32.xlu0 %v6265, 48
    %v6335 = vpop.permute.xlu0 %6334
    %6336 = vrot.lane.b32.xlu0 %v6266, 48
    %v6337 = vpop.permute.xlu0 %6336
    %6338 = vrot.lane.b32.xlu0 %v6267, 48
    %v6339 = vpop.permute.xlu0 %6338
    %6340 = vrot.lane.b32.xlu0 %v6268, 48
    %v6341 = vpop.permute.xlu0 %6340
    %6342 = vrot.lane.b32.xlu0 %v6269, 48
    %v6343 = vpop.permute.xlu0 %6342
    %6344 = vrot.lane.b32.xlu0 %v6270, 48
    %v6345 = vpop.permute.xlu0 %6344
    %6346 = vrot.lane.b32.xlu0 %v6271, 48
    %v6347 = vpop.permute.xlu0 %6346
    %6348 = vrot.lane.b32.xlu0 %v6272, 48
    %v6349 = vpop.permute.xlu0 %6348
    %6350 = vrot.lane.b32.xlu0 %v6273, 48
    %v6351 = vpop.permute.xlu0 %6350
    %6352 = vrot.lane.b32.xlu0 %v6274, 48
    %v6353 = vpop.permute.xlu0 %6352
    %6354 = vrot.lane.b32.xlu0 %v6275, 48
    %v6355 = vpop.permute.xlu0 %6354
    %6356 = vrot.lane.b32.xlu0 %v6276, 48
    %v6357 = vpop.permute.xlu0 %6356
    %6358 = vrot.lane.b32.xlu0 %v6277, 48
    %v6359 = vpop.permute.xlu0 %6358
    %6360 = vrot.lane.b32.xlu0 %v6278, 48
    %v6361 = vpop.permute.xlu0 %6360
    %6362 = vrot.lane.b32.xlu0 %v6279, 48
    %v6363 = vpop.permute.xlu0 %6362
    %6364 = vrot.lane.b32.xlu0 %v6280, 48
    %v6365 = vpop.permute.xlu0 %6364
    %6366 = vrot.lane.b32.xlu0 %v6281, 48
    %v6367 = vpop.permute.xlu0 %6366
    %6368 = vrot.lane.b32.xlu0 %v6282, 48
    %v6369 = vpop.permute.xlu0 %6368
    %6370 = vrot.lane.b32.xlu0 %v6283, 48
    %v6371 = vpop.permute.xlu0 %6370
    %6372 = vrot.lane.b32.xlu0 %v6284, 48
    %v6373 = vpop.permute.xlu0 %6372
    %6374 = vrot.lane.b32.xlu0 %v6285, 48
    %v6375 = vpop.permute.xlu0 %6374
    %6376 = vrot.lane.b32.xlu0 %v6286, 48
    %v6377 = vpop.permute.xlu0 %6376
    %6378 = vrot.lane.b32.xlu0 %v6287, 48
    %v6379 = vpop.permute.xlu0 %6378
    %6380 = vrot.lane.b32.xlu0 %v6288, 48
    %v6381 = vpop.permute.xlu0 %6380
    %6382 = vrot.lane.b32.xlu0 %v6289, 48
    %v6383 = vpop.permute.xlu0 %6382
    %6384 = vrot.lane.b32.xlu0 %v6290, 48
    %v6385 = vpop.permute.xlu0 %6384
    %6386 = vrot.lane.b32.xlu0 %v6291, 48
    %v6387 = vpop.permute.xlu0 %6386
    %v6420 = vsel %vm846, %v6325, 0.0
    %6421 = vadd.xlane.f32.xlu0 %v6420
    %v6422 = vpop.xlane.xlu0 %6421
    %v6423 = vsel %vm846, %v6327, 0.0
    %6424 = vadd.xlane.f32.xlu0 %v6423
    %v6425 = vpop.xlane.xlu0 %6424
    %v6426 = vsel %vm846, %v6329, 0.0
    %6427 = vadd.xlane.f32.xlu0 %v6426
    %v6428 = vpop.xlane.xlu0 %6427
    %v6429 = vsel %vm846, %v6331, 0.0
    %6430 = vadd.xlane.f32.xlu0 %v6429
    %v6431 = vpop.xlane.xlu0 %6430
    %v6432 = vsel %vm846, %v6333, 0.0
    %6433 = vadd.xlane.f32.xlu0 %v6432
    %v6434 = vpop.xlane.xlu0 %6433
    %v6435 = vsel %vm846, %v6335, 0.0
    %6436 = vadd.xlane.f32.xlu0 %v6435
    %v6437 = vpop.xlane.xlu0 %6436
    %v6438 = vsel %vm846, %v6337, 0.0
    %6439 = vadd.xlane.f32.xlu0 %v6438
    %v6440 = vpop.xlane.xlu0 %6439
    %v6441 = vsel %vm846, %v6339, 0.0
    %6442 = vadd.xlane.f32.xlu0 %v6441
    %v6443 = vpop.xlane.xlu0 %6442
    %v6444 = vsel %vm846, %v6341, 0.0
    %6445 = vadd.xlane.f32.xlu0 %v6444
    %v6446 = vpop.xlane.xlu0 %6445
    %v6447 = vsel %vm846, %v6343, 0.0
    %6448 = vadd.xlane.f32.xlu0 %v6447
    %v6449 = vpop.xlane.xlu0 %6448
    %v6450 = vsel %vm846, %v6345, 0.0
    %6451 = vadd.xlane.f32.xlu0 %v6450
    %v6452 = vpop.xlane.xlu0 %6451
    %v6453 = vsel %vm846, %v6347, 0.0
    %6454 = vadd.xlane.f32.xlu0 %v6453
    %v6455 = vpop.xlane.xlu0 %6454
    %v6456 = vsel %vm846, %v6349, 0.0
    %6457 = vadd.xlane.f32.xlu0 %v6456
    %v6458 = vpop.xlane.xlu0 %6457
    %v6459 = vsel %vm846, %v6351, 0.0
    %6460 = vadd.xlane.f32.xlu0 %v6459
    %v6461 = vpop.xlane.xlu0 %6460
    %v6462 = vsel %vm846, %v6353, 0.0
    %6463 = vadd.xlane.f32.xlu0 %v6462
    %v6464 = vpop.xlane.xlu0 %6463
    %v6465 = vsel %vm846, %v6355, 0.0
    %6466 = vadd.xlane.f32.xlu0 %v6465
    %v6467 = vpop.xlane.xlu0 %6466
    %v6468 = vsel %vm846, %v6357, 0.0
    %6469 = vadd.xlane.f32.xlu0 %v6468
    %v6470 = vpop.xlane.xlu0 %6469
    %v6471 = vsel %vm846, %v6359, 0.0
    %6472 = vadd.xlane.f32.xlu0 %v6471
    %v6473 = vpop.xlane.xlu0 %6472
    %v6474 = vsel %vm846, %v6361, 0.0
    %6475 = vadd.xlane.f32.xlu0 %v6474
    %v6476 = vpop.xlane.xlu0 %6475
    %v6477 = vsel %vm846, %v6363, 0.0
    %6478 = vadd.xlane.f32.xlu0 %v6477
    %v6479 = vpop.xlane.xlu0 %6478
    %v6480 = vsel %vm846, %v6365, 0.0
    %6481 = vadd.xlane.f32.xlu0 %v6480
    %v6482 = vpop.xlane.xlu0 %6481
    %v6483 = vsel %vm846, %v6367, 0.0
    %6484 = vadd.xlane.f32.xlu0 %v6483
    %v6485 = vpop.xlane.xlu0 %6484
    %v6486 = vsel %vm846, %v6369, 0.0
    %6487 = vadd.xlane.f32.xlu0 %v6486
    %v6488 = vpop.xlane.xlu0 %6487
    %v6489 = vsel %vm846, %v6371, 0.0
    %6490 = vadd.xlane.f32.xlu0 %v6489
    %v6491 = vpop.xlane.xlu0 %6490
    %v6492 = vsel %vm846, %v6373, 0.0
    %6493 = vadd.xlane.f32.xlu0 %v6492
    %v6494 = vpop.xlane.xlu0 %6493
    %v6495 = vsel %vm846, %v6375, 0.0
    %6496 = vadd.xlane.f32.xlu0 %v6495
    %v6497 = vpop.xlane.xlu0 %6496
    %v6498 = vsel %vm846, %v6377, 0.0
    %6499 = vadd.xlane.f32.xlu0 %v6498
    %v6500 = vpop.xlane.xlu0 %6499
    %v6501 = vsel %vm846, %v6379, 0.0
    %6502 = vadd.xlane.f32.xlu0 %v6501
    %v6503 = vpop.xlane.xlu0 %6502
    %v6504 = vsel %vm846, %v6381, 0.0
    %6505 = vadd.xlane.f32.xlu0 %v6504
    %v6506 = vpop.xlane.xlu0 %6505
    %v6507 = vsel %vm846, %v6383, 0.0
    %6508 = vadd.xlane.f32.xlu0 %v6507
    %v6509 = vpop.xlane.xlu0 %6508
    %v6510 = vsel %vm846, %v6385, 0.0
    %6511 = vadd.xlane.f32.xlu0 %v6510
    %v6512 = vpop.xlane.xlu0 %6511
    %v6513 = vsel %vm846, %v6387, 0.0
    %6514 = vadd.xlane.f32.xlu0 %v6513
    %v6515 = vpop.xlane.xlu0 %6514
    %v6548 = vlaneseq
    %v6549 = vshrl.u32 %v6548, 7
    %v6550 = vsub.s32 %v976, %v6549
    %v6551 = vrot.slane %v6422, %v6550
    %v6552 = vlaneseq
    %v6553 = vshrl.u32 %v6552, 7
    %v6554 = vsub.s32 %v981, %v6553
    %v6555 = vrot.slane %v6425, %v6554
    %v6556 = vsel %vm986, %v6555, %v6551
    %v6557 = vlaneseq
    %v6558 = vshrl.u32 %v6557, 7
    %v6559 = vsub.s32 %v976, %v6558
    %v6560 = vrot.slane %v6428, %v6559
    %v6561 = vlaneseq
    %v6562 = vshrl.u32 %v6561, 7
    %v6563 = vsub.s32 %v981, %v6562
    %v6564 = vrot.slane %v6431, %v6563
    %v6565 = vsel %vm986, %v6564, %v6560
    %v6566 = vlaneseq
    %v6567 = vshrl.u32 %v6566, 7
    %v6568 = vsub.s32 %v976, %v6567
    %v6569 = vrot.slane %v6434, %v6568
    %v6570 = vlaneseq
    %v6571 = vshrl.u32 %v6570, 7
    %v6572 = vsub.s32 %v981, %v6571
    %v6573 = vrot.slane %v6437, %v6572
    %v6574 = vsel %vm986, %v6573, %v6569
    %v6575 = vlaneseq
    %v6576 = vshrl.u32 %v6575, 7
    %v6577 = vsub.s32 %v976, %v6576
    %v6578 = vrot.slane %v6440, %v6577
    %v6579 = vlaneseq
    %v6580 = vshrl.u32 %v6579, 7
    %v6581 = vsub.s32 %v981, %v6580
    %v6582 = vrot.slane %v6443, %v6581
    %v6583 = vsel %vm986, %v6582, %v6578
    %v6584 = vlaneseq
    %v6585 = vshrl.u32 %v6584, 7
    %v6586 = vsub.s32 %v976, %v6585
    %v6587 = vrot.slane %v6446, %v6586
    %v6588 = vlaneseq
    %v6589 = vshrl.u32 %v6588, 7
    %v6590 = vsub.s32 %v981, %v6589
    %v6591 = vrot.slane %v6449, %v6590
    %v6592 = vsel %vm986, %v6591, %v6587
    %v6593 = vlaneseq
    %v6594 = vshrl.u32 %v6593, 7
    %v6595 = vsub.s32 %v976, %v6594
    %v6596 = vrot.slane %v6452, %v6595
    %v6597 = vlaneseq
    %v6598 = vshrl.u32 %v6597, 7
    %v6599 = vsub.s32 %v981, %v6598
    %v6600 = vrot.slane %v6455, %v6599
    %v6601 = vsel %vm986, %v6600, %v6596
    %v6602 = vlaneseq
    %v6603 = vshrl.u32 %v6602, 7
    %v6604 = vsub.s32 %v976, %v6603
    %v6605 = vrot.slane %v6458, %v6604
    %v6606 = vlaneseq
    %v6607 = vshrl.u32 %v6606, 7
    %v6608 = vsub.s32 %v981, %v6607
    %v6609 = vrot.slane %v6461, %v6608
    %v6610 = vsel %vm986, %v6609, %v6605
    %v6611 = vlaneseq
    %v6612 = vshrl.u32 %v6611, 7
    %v6613 = vsub.s32 %v976, %v6612
    %v6614 = vrot.slane %v6464, %v6613
    %v6615 = vlaneseq
    %v6616 = vshrl.u32 %v6615, 7
    %v6617 = vsub.s32 %v981, %v6616
    %v6618 = vrot.slane %v6467, %v6617
    %v6619 = vsel %vm986, %v6618, %v6614
    %v6620 = vlaneseq
    %v6621 = vshrl.u32 %v6620, 7
    %v6622 = vsub.s32 %v976, %v6621
    %v6623 = vrot.slane %v6470, %v6622
    %v6624 = vlaneseq
    %v6625 = vshrl.u32 %v6624, 7
    %v6626 = vsub.s32 %v981, %v6625
    %v6627 = vrot.slane %v6473, %v6626
    %v6628 = vsel %vm986, %v6627, %v6623
    %v6629 = vlaneseq
    %v6630 = vshrl.u32 %v6629, 7
    %v6631 = vsub.s32 %v976, %v6630
    %v6632 = vrot.slane %v6476, %v6631
    %v6633 = vlaneseq
    %v6634 = vshrl.u32 %v6633, 7
    %v6635 = vsub.s32 %v981, %v6634
    %v6636 = vrot.slane %v6479, %v6635
    %v6637 = vsel %vm986, %v6636, %v6632
    %v6638 = vlaneseq
    %v6639 = vshrl.u32 %v6638, 7
    %v6640 = vsub.s32 %v976, %v6639
    %v6641 = vrot.slane %v6482, %v6640
    %v6642 = vlaneseq
    %v6643 = vshrl.u32 %v6642, 7
    %v6644 = vsub.s32 %v981, %v6643
    %v6645 = vrot.slane %v6485, %v6644
    %v6646 = vsel %vm986, %v6645, %v6641
    %v6647 = vlaneseq
    %v6648 = vshrl.u32 %v6647, 7
    %v6649 = vsub.s32 %v976, %v6648
    %v6650 = vrot.slane %v6488, %v6649
    %v6651 = vlaneseq
    %v6652 = vshrl.u32 %v6651, 7
    %v6653 = vsub.s32 %v981, %v6652
    %v6654 = vrot.slane %v6491, %v6653
    %v6655 = vsel %vm986, %v6654, %v6650
    %v6656 = vlaneseq
    %v6657 = vshrl.u32 %v6656, 7
    %v6658 = vsub.s32 %v976, %v6657
    %v6659 = vrot.slane %v6494, %v6658
    %v6660 = vlaneseq
    %v6661 = vshrl.u32 %v6660, 7
    %v6662 = vsub.s32 %v981, %v6661
    %v6663 = vrot.slane %v6497, %v6662
    %v6664 = vsel %vm986, %v6663, %v6659
    %v6665 = vlaneseq
    %v6666 = vshrl.u32 %v6665, 7
    %v6667 = vsub.s32 %v976, %v6666
    %v6668 = vrot.slane %v6500, %v6667
    %v6669 = vlaneseq
    %v6670 = vshrl.u32 %v6669, 7
    %v6671 = vsub.s32 %v981, %v6670
    %v6672 = vrot.slane %v6503, %v6671
    %v6673 = vsel %vm986, %v6672, %v6668
    %v6674 = vlaneseq
    %v6675 = vshrl.u32 %v6674, 7
    %v6676 = vsub.s32 %v976, %v6675
    %v6677 = vrot.slane %v6506, %v6676
    %v6678 = vlaneseq
    %v6679 = vshrl.u32 %v6678, 7
    %v6680 = vsub.s32 %v981, %v6679
    %v6681 = vrot.slane %v6509, %v6680
    %v6682 = vsel %vm986, %v6681, %v6677
    %v6683 = vlaneseq
    %v6684 = vshrl.u32 %v6683, 7
    %v6685 = vsub.s32 %v976, %v6684
    %v6686 = vrot.slane %v6512, %v6685
    %v6687 = vlaneseq
    %v6688 = vshrl.u32 %v6687, 7
    %v6689 = vsub.s32 %v981, %v6688
    %v6690 = vrot.slane %v6515, %v6689
    %v6691 = vsel %vm986, %v6690, %v6686
    %v6692 = vsel %vm1123, %v6565, %v6556
    %v6693 = vsel %vm1125, %v6574, %v6692
    %v6694 = vsel %vm1127, %v6583, %v6693
    %v6695 = vsel %vm1129, %v6592, %v6694
    %v6696 = vsel %vm1131, %v6601, %v6695
    %v6697 = vsel %vm1133, %v6610, %v6696
    %v6698 = vsel %vm1135, %v6619, %v6697
    %v6699 = vsel %vm1123, %v6637, %v6628
    %v6700 = vsel %vm1125, %v6646, %v6699
    %v6701 = vsel %vm1127, %v6655, %v6700
    %v6702 = vsel %vm1129, %v6664, %v6701
    %v6703 = vsel %vm1131, %v6673, %v6702
    %v6704 = vsel %vm1133, %v6682, %v6703
    %v6705 = vsel %vm1135, %v6691, %v6704
    %v6708 = vsel %vm532, %v6698, -1e+30
    %v6709 = vsel %vm533, %v6705, -1e+30
    %v6710 = vsel %vm1148, %v6708, -inf
    %6711 = vmax.xlane.f32.xlu0 %v6710
    %v6712 = vpop.xlane.xlu0 %6711
    %v6713 = vsel %vm1148, %v6709, -inf
    %6714 = vmax.xlane.f32.xlu0 %v6713
    %v6715 = vpop.xlane.xlu0 %6714
    %v6716 = vsub.f32 %v6708, %v6712
    %v6717 = vsub.f32 %v6709, %v6715
    %v6718 = vmul.f32 %v6716, 1.442695
    %v6719 = vpow.pop %v6718
    %v6720 = vmul.f32 %v6717, 1.442695
    %v6721 = vpow.pop %v6720
    %v6722 = vsel %vm1148, %v6719, 0.0
    %6723 = vadd.xlane.f32.xlu0 %v6722
    %v6724 = vpop.xlane.xlu0 %6723
    %v6725 = vsel %vm1148, %v6721, 0.0
    %6726 = vadd.xlane.f32.xlu0 %v6725
    %v6727 = vpop.xlane.xlu0 %6726
    %v6728 = vrcp.pop %v6724
    %v6729 = vrcp.pop %v6727
    %v6730 = vmul.f32 %v6719, %v6728
    %v6731 = vmul.f32 %v6721, %v6729
    %6734 = vrot.lane.b32.xlu0 %v5770, 16
    %v6735 = vpop.permute.xlu0 %6734
    %6736 = vrot.lane.b32.xlu0 %v5771, 16
    %v6737 = vpop.permute.xlu0 %6736
    %6742 = vrot.lane.b32.xlu0 %v6250, 32
    %v6743 = vpop.permute.xlu0 %6742
    %6744 = vrot.lane.b32.xlu0 %v6251, 32
    %v6745 = vpop.permute.xlu0 %6744
    %6750 = vrot.lane.b32.xlu0 %v6730, 48
    %v6751 = vpop.permute.xlu0 %6750
    %6752 = vrot.lane.b32.xlu0 %v6731, 48
    %v6753 = vpop.permute.xlu0 %6752
    %v6756 = vsel %vm1148, %v5290, %v6735
    %v6757 = vsel %vm1148, %v5291, %v6737
    %v6758 = vsel %vm360, %v6756, %v6743
    %v6759 = vsel %vm360, %v6757, %v6745
    %v6760 = vsel %vm2639, %v6758, %v6751
    %v6761 = vsel %vm2639, %v6759, %v6753
    %6762 = vrot.lane.b32.xlu0 %v434, 72
    %v6763 = vpop.permute.xlu0 %6762
    %6764 = vrot.lane.b32.xlu0 %v439, 72
    %v6765 = vpop.permute.xlu0 %6764
    %6766 = vrot.lane.b32.xlu0 %v2645, 72
    %v6767 = vpop.permute.xlu0 %6766
    %6768 = vrot.lane.b32.xlu0 %v2647, 72
    %v6769 = vpop.permute.xlu0 %6768
    %6770 = vrot.lane.b32.xlu0 %v2651, 72
    %v6771 = vpop.permute.xlu0 %6770
    %6772 = vrot.lane.b32.xlu0 %v2653, 72
    %v6773 = vpop.permute.xlu0 %6772
    %6774 = vrot.lane.b32.xlu0 %v2657, 72
    %v6775 = vpop.permute.xlu0 %6774
    %6776 = vrot.lane.b32.xlu0 %v2659, 72
    %v6777 = vpop.permute.xlu0 %6776
    %v6787 = vsel %vm2662, %v6760, 0
    %v6790 = vsel %vm2662, %v6761, 0
    %6792 = vmatprep.subr.mxu0 0.0
    %6793 = vmatpush1.msra.mxu0 0.0
    %6794 = vmatprep.subr.mxu0 0.0
    %6795 = vmatpush1.msra.mxu0 0.0
    %6796 = vmatprep.subr.mxu0 0.0
    %6797 = vmatpush1.msra.mxu0 0.0
    %6798 = vmatprep.subr.mxu0 0.0
    %6799 = vmatpush1.msra.mxu0 0.0
    %6800 = vmatprep.subr.mxu0 0.0
    %6801 = vmatpush1.msra.mxu0 0.0
    %6802 = vmatprep.subr.mxu0 0.0
    %6803 = vmatpush1.msra.mxu0 0.0
    %6804 = vmatprep.subr.mxu0 0.0
    %6805 = vmatpush1.msra.mxu0 0.0
    %6806 = vmatprep.subr.mxu0 0.0
    %6807 = vmatpush1.msra.mxu0 0.0
    %6808 = vmatprep.subr.mxu0 0.0
    %6809 = vmatpush1.msra.mxu0 %v6777
    %6810 = vmatprep.subr.mxu0 0.0
    %6811 = vmatpush1.msra.mxu0 %v6775
    %6812 = vmatprep.subr.mxu0 0.0
    %6813 = vmatpush1.msra.mxu0 %v6773
    %6814 = vmatprep.subr.mxu0 0.0
    %6815 = vmatpush1.msra.mxu0 %v6771
    %6816 = vmatprep.subr.mxu0 0.0
    %6817 = vmatpush1.msra.mxu0 %v6769
    %6818 = vmatprep.subr.mxu0 0.0
    %6819 = vmatpush1.msra.mxu0 %v6767
    %6820 = vmatprep.subr.mxu0 0.0
    %6821 = vmatpush1.msra.mxu0 %v6765
    %6822 = vmatprep.subr.mxu0 0.0
    %6823 = vmatpush1.msra.mxu0 %v6763
    %6824 = vmatprep.subr.mxu0 0.0
    %6825 = vmatpush2.msra.mxu0 0.0
    %6826 = vmatprep.subr.mxu0 0.0
    %6827 = vmatpush2.msra.mxu0 0.0
    %6828 = vmatprep.subr.mxu0 0.0
    %6829 = vmatpush2.msra.mxu0 0.0
    %6830 = vmatprep.subr.mxu0 0.0
    %6831 = vmatpush2.msra.mxu0 0.0
    %6832 = vmatprep.subr.mxu0 0.0
    %6833 = vmatpush2.msra.mxu0 0.0
    %6834 = vmatprep.subr.mxu0 0.0
    %6835 = vmatpush2.msra.mxu0 0.0
    %6836 = vmatprep.subr.mxu0 0.0
    %6837 = vmatpush2.msra.mxu0 0.0
    %6838 = vmatprep.subr.mxu0 0.0
    %6839 = vmatpush2.msra.mxu0 0.0
    %6840 = vmatprep.subr.mxu0 0.0
    %6841 = vmatpush2.msra.mxu0 0.0
    %6842 = vmatprep.subr.mxu0 0.0
    %6843 = vmatpush2.msra.mxu0 0.0
    %6844 = vmatprep.subr.mxu0 0.0
    %6845 = vmatpush2.msra.mxu0 0.0
    %6846 = vmatprep.subr.mxu0 0.0
    %6847 = vmatpush2.msra.mxu0 0.0
    %6848 = vmatprep.subr.mxu0 0.0
    %6849 = vmatpush2.msra.mxu0 0.0
    %6850 = vmatprep.subr.mxu0 0.0
    %6851 = vmatpush2.msra.mxu0 0.0
    %6852 = vmatprep.subr.mxu0 0.0
    %6853 = vmatpush2.msra.mxu0 0.0
    %6854 = vmatprep.subr.mxu0 0.0
    %6855 = vmatpush2.msra.mxu0 0.0
    %6856 = vmatprep.mubr.f32.mxu0 0.0
    %6857 = vmatmul.mubr.f32.gmra.mxu0 %v6787
    %v6858 = vpop.f32.mrf.mxu0
    %v6859 = vadd.f32 0.0, %v6858
    %v6860 = vpop.f32.mrf.mxu0
    %6861 = vmatprep.mubr.f32.mxu0 0.0
    %6862 = vmatmul.mubr.f32.gmra.mxu0 %v6790
    %v6863 = vpop.f32.mrf.mxu0
    %v6864 = vadd.f32 0.0, %v6863
    %v6865 = vpop.f32.mrf.mxu0
    %6866 = vdwg.mxu0
    %v6867 = vlaneseq
    %v6868 = vshrl.u32 %v6867, 7
    %v6869 = vsub.s32 4, %v6868
    %v6870 = vrot.slane %v529, %v6869
    %6872 = vrot.lane.b32.xlu0 %v6870, 88
    %v6873 = vpop.permute.xlu0 %6872
    %v6875 = vmul.f32 %v778, %v6873
    %v6876 = vmul.f32 %v779, %v6873
    %v6877 = vmul.f32 %v780, %v6873
    %v6878 = vmul.f32 %v781, %v6873
    %v6879 = vmul.f32 %v782, %v6873
    %v6880 = vmul.f32 %v783, %v6873
    %v6881 = vmul.f32 %v784, %v6873
    %v6882 = vmul.f32 %v785, %v6873
    %v6883 = vmul.f32 %v786, %v6873
    %v6884 = vmul.f32 %v787, %v6873
    %v6885 = vmul.f32 %v788, %v6873
    %v6886 = vmul.f32 %v789, %v6873
    %v6887 = vmul.f32 %v790, %v6873
    %v6888 = vmul.f32 %v791, %v6873
    %v6889 = vmul.f32 %v792, %v6873
    %v6890 = vmul.f32 %v793, %v6873
    %v6891 = vmul.f32 %v794, %v6873
    %v6892 = vmul.f32 %v795, %v6873
    %v6893 = vmul.f32 %v796, %v6873
    %v6894 = vmul.f32 %v797, %v6873
    %v6895 = vmul.f32 %v798, %v6873
    %v6896 = vmul.f32 %v799, %v6873
    %v6897 = vmul.f32 %v800, %v6873
    %v6898 = vmul.f32 %v801, %v6873
    %v6899 = vmul.f32 %v802, %v6873
    %v6900 = vmul.f32 %v803, %v6873
    %v6901 = vmul.f32 %v804, %v6873
    %v6902 = vmul.f32 %v805, %v6873
    %v6903 = vmul.f32 %v806, %v6873
    %v6904 = vmul.f32 %v807, %v6873
    %v6905 = vmul.f32 %v808, %v6873
    %v6906 = vmul.f32 %v809, %v6873
    %6939 = vrot.lane.b32.xlu0 %v6875, 40
    %v6940 = vpop.permute.xlu0 %6939
    %6941 = vrot.lane.b32.xlu0 %v6876, 40
    %v6942 = vpop.permute.xlu0 %6941
    %6943 = vrot.lane.b32.xlu0 %v6877, 40
    %v6944 = vpop.permute.xlu0 %6943
    %6945 = vrot.lane.b32.xlu0 %v6878, 40
    %v6946 = vpop.permute.xlu0 %6945
    %6947 = vrot.lane.b32.xlu0 %v6879, 40
    %v6948 = vpop.permute.xlu0 %6947
    %6949 = vrot.lane.b32.xlu0 %v6880, 40
    %v6950 = vpop.permute.xlu0 %6949
    %6951 = vrot.lane.b32.xlu0 %v6881, 40
    %v6952 = vpop.permute.xlu0 %6951
    %6953 = vrot.lane.b32.xlu0 %v6882, 40
    %v6954 = vpop.permute.xlu0 %6953
    %6955 = vrot.lane.b32.xlu0 %v6883, 40
    %v6956 = vpop.permute.xlu0 %6955
    %6957 = vrot.lane.b32.xlu0 %v6884, 40
    %v6958 = vpop.permute.xlu0 %6957
    %6959 = vrot.lane.b32.xlu0 %v6885, 40
    %v6960 = vpop.permute.xlu0 %6959
    %6961 = vrot.lane.b32.xlu0 %v6886, 40
    %v6962 = vpop.permute.xlu0 %6961
    %6963 = vrot.lane.b32.xlu0 %v6887, 40
    %v6964 = vpop.permute.xlu0 %6963
    %6965 = vrot.lane.b32.xlu0 %v6888, 40
    %v6966 = vpop.permute.xlu0 %6965
    %6967 = vrot.lane.b32.xlu0 %v6889, 40
    %v6968 = vpop.permute.xlu0 %6967
    %6969 = vrot.lane.b32.xlu0 %v6890, 40
    %v6970 = vpop.permute.xlu0 %6969
    %6971 = vrot.lane.b32.xlu0 %v6891, 40
    %v6972 = vpop.permute.xlu0 %6971
    %6973 = vrot.lane.b32.xlu0 %v6892, 40
    %v6974 = vpop.permute.xlu0 %6973
    %6975 = vrot.lane.b32.xlu0 %v6893, 40
    %v6976 = vpop.permute.xlu0 %6975
    %6977 = vrot.lane.b32.xlu0 %v6894, 40
    %v6978 = vpop.permute.xlu0 %6977
    %6979 = vrot.lane.b32.xlu0 %v6895, 40
    %v6980 = vpop.permute.xlu0 %6979
    %6981 = vrot.lane.b32.xlu0 %v6896, 40
    %v6982 = vpop.permute.xlu0 %6981
    %6983 = vrot.lane.b32.xlu0 %v6897, 40
    %v6984 = vpop.permute.xlu0 %6983
    %6985 = vrot.lane.b32.xlu0 %v6898, 40
    %v6986 = vpop.permute.xlu0 %6985
    %6987 = vrot.lane.b32.xlu0 %v6899, 40
    %v6988 = vpop.permute.xlu0 %6987
    %6989 = vrot.lane.b32.xlu0 %v6900, 40
    %v6990 = vpop.permute.xlu0 %6989
    %6991 = vrot.lane.b32.xlu0 %v6901, 40
    %v6992 = vpop.permute.xlu0 %6991
    %6993 = vrot.lane.b32.xlu0 %v6902, 40
    %v6994 = vpop.permute.xlu0 %6993
    %6995 = vrot.lane.b32.xlu0 %v6903, 40
    %v6996 = vpop.permute.xlu0 %6995
    %6997 = vrot.lane.b32.xlu0 %v6904, 40
    %v6998 = vpop.permute.xlu0 %6997
    %6999 = vrot.lane.b32.xlu0 %v6905, 40
    %v7000 = vpop.permute.xlu0 %6999
    %7001 = vrot.lane.b32.xlu0 %v6906, 40
    %v7002 = vpop.permute.xlu0 %7001
    %v7035 = vsel %vm2912, %v6940, 0.0
    %7036 = vadd.xlane.f32.xlu0 %v7035
    %v7037 = vpop.xlane.xlu0 %7036
    %v7038 = vsel %vm2912, %v6942, 0.0
    %7039 = vadd.xlane.f32.xlu0 %v7038
    %v7040 = vpop.xlane.xlu0 %7039
    %v7041 = vsel %vm2912, %v6944, 0.0
    %7042 = vadd.xlane.f32.xlu0 %v7041
    %v7043 = vpop.xlane.xlu0 %7042
    %v7044 = vsel %vm2912, %v6946, 0.0
    %7045 = vadd.xlane.f32.xlu0 %v7044
    %v7046 = vpop.xlane.xlu0 %7045
    %v7047 = vsel %vm2912, %v6948, 0.0
    %7048 = vadd.xlane.f32.xlu0 %v7047
    %v7049 = vpop.xlane.xlu0 %7048
    %v7050 = vsel %vm2912, %v6950, 0.0
    %7051 = vadd.xlane.f32.xlu0 %v7050
    %v7052 = vpop.xlane.xlu0 %7051
    %v7053 = vsel %vm2912, %v6952, 0.0
    %7054 = vadd.xlane.f32.xlu0 %v7053
    %v7055 = vpop.xlane.xlu0 %7054
    %v7056 = vsel %vm2912, %v6954, 0.0
    %7057 = vadd.xlane.f32.xlu0 %v7056
    %v7058 = vpop.xlane.xlu0 %7057
    %v7059 = vsel %vm2912, %v6956, 0.0
    %7060 = vadd.xlane.f32.xlu0 %v7059
    %v7061 = vpop.xlane.xlu0 %7060
    %v7062 = vsel %vm2912, %v6958, 0.0
    %7063 = vadd.xlane.f32.xlu0 %v7062
    %v7064 = vpop.xlane.xlu0 %7063
    %v7065 = vsel %vm2912, %v6960, 0.0
    %7066 = vadd.xlane.f32.xlu0 %v7065
    %v7067 = vpop.xlane.xlu0 %7066
    %v7068 = vsel %vm2912, %v6962, 0.0
    %7069 = vadd.xlane.f32.xlu0 %v7068
    %v7070 = vpop.xlane.xlu0 %7069
    %v7071 = vsel %vm2912, %v6964, 0.0
    %7072 = vadd.xlane.f32.xlu0 %v7071
    %v7073 = vpop.xlane.xlu0 %7072
    %v7074 = vsel %vm2912, %v6966, 0.0
    %7075 = vadd.xlane.f32.xlu0 %v7074
    %v7076 = vpop.xlane.xlu0 %7075
    %v7077 = vsel %vm2912, %v6968, 0.0
    %7078 = vadd.xlane.f32.xlu0 %v7077
    %v7079 = vpop.xlane.xlu0 %7078
    %v7080 = vsel %vm2912, %v6970, 0.0
    %7081 = vadd.xlane.f32.xlu0 %v7080
    %v7082 = vpop.xlane.xlu0 %7081
    %v7083 = vsel %vm2912, %v6972, 0.0
    %7084 = vadd.xlane.f32.xlu0 %v7083
    %v7085 = vpop.xlane.xlu0 %7084
    %v7086 = vsel %vm2912, %v6974, 0.0
    %7087 = vadd.xlane.f32.xlu0 %v7086
    %v7088 = vpop.xlane.xlu0 %7087
    %v7089 = vsel %vm2912, %v6976, 0.0
    %7090 = vadd.xlane.f32.xlu0 %v7089
    %v7091 = vpop.xlane.xlu0 %7090
    %v7092 = vsel %vm2912, %v6978, 0.0
    %7093 = vadd.xlane.f32.xlu0 %v7092
    %v7094 = vpop.xlane.xlu0 %7093
    %v7095 = vsel %vm2912, %v6980, 0.0
    %7096 = vadd.xlane.f32.xlu0 %v7095
    %v7097 = vpop.xlane.xlu0 %7096
    %v7098 = vsel %vm2912, %v6982, 0.0
    %7099 = vadd.xlane.f32.xlu0 %v7098
    %v7100 = vpop.xlane.xlu0 %7099
    %v7101 = vsel %vm2912, %v6984, 0.0
    %7102 = vadd.xlane.f32.xlu0 %v7101
    %v7103 = vpop.xlane.xlu0 %7102
    %v7104 = vsel %vm2912, %v6986, 0.0
    %7105 = vadd.xlane.f32.xlu0 %v7104
    %v7106 = vpop.xlane.xlu0 %7105
    %v7107 = vsel %vm2912, %v6988, 0.0
    %7108 = vadd.xlane.f32.xlu0 %v7107
    %v7109 = vpop.xlane.xlu0 %7108
    %v7110 = vsel %vm2912, %v6990, 0.0
    %7111 = vadd.xlane.f32.xlu0 %v7110
    %v7112 = vpop.xlane.xlu0 %7111
    %v7113 = vsel %vm2912, %v6992, 0.0
    %7114 = vadd.xlane.f32.xlu0 %v7113
    %v7115 = vpop.xlane.xlu0 %7114
    %v7116 = vsel %vm2912, %v6994, 0.0
    %7117 = vadd.xlane.f32.xlu0 %v7116
    %v7118 = vpop.xlane.xlu0 %7117
    %v7119 = vsel %vm2912, %v6996, 0.0
    %7120 = vadd.xlane.f32.xlu0 %v7119
    %v7121 = vpop.xlane.xlu0 %7120
    %v7122 = vsel %vm2912, %v6998, 0.0
    %7123 = vadd.xlane.f32.xlu0 %v7122
    %v7124 = vpop.xlane.xlu0 %7123
    %v7125 = vsel %vm2912, %v7000, 0.0
    %7126 = vadd.xlane.f32.xlu0 %v7125
    %v7127 = vpop.xlane.xlu0 %7126
    %v7128 = vsel %vm2912, %v7002, 0.0
    %7129 = vadd.xlane.f32.xlu0 %v7128
    %v7130 = vpop.xlane.xlu0 %7129
    %v7163 = vlaneseq
    %v7164 = vshrl.u32 %v7163, 7
    %v7165 = vsub.s32 %v976, %v7164
    %v7166 = vrot.slane %v7037, %v7165
    %v7167 = vlaneseq
    %v7168 = vshrl.u32 %v7167, 7
    %v7169 = vsub.s32 %v981, %v7168
    %v7170 = vrot.slane %v7040, %v7169
    %v7171 = vsel %vm986, %v7170, %v7166
    %v7172 = vlaneseq
    %v7173 = vshrl.u32 %v7172, 7
    %v7174 = vsub.s32 %v976, %v7173
    %v7175 = vrot.slane %v7043, %v7174
    %v7176 = vlaneseq
    %v7177 = vshrl.u32 %v7176, 7
    %v7178 = vsub.s32 %v981, %v7177
    %v7179 = vrot.slane %v7046, %v7178
    %v7180 = vsel %vm986, %v7179, %v7175
    %v7181 = vlaneseq
    %v7182 = vshrl.u32 %v7181, 7
    %v7183 = vsub.s32 %v976, %v7182
    %v7184 = vrot.slane %v7049, %v7183
    %v7185 = vlaneseq
    %v7186 = vshrl.u32 %v7185, 7
    %v7187 = vsub.s32 %v981, %v7186
    %v7188 = vrot.slane %v7052, %v7187
    %v7189 = vsel %vm986, %v7188, %v7184
    %v7190 = vlaneseq
    %v7191 = vshrl.u32 %v7190, 7
    %v7192 = vsub.s32 %v976, %v7191
    %v7193 = vrot.slane %v7055, %v7192
    %v7194 = vlaneseq
    %v7195 = vshrl.u32 %v7194, 7
    %v7196 = vsub.s32 %v981, %v7195
    %v7197 = vrot.slane %v7058, %v7196
    %v7198 = vsel %vm986, %v7197, %v7193
    %v7199 = vlaneseq
    %v7200 = vshrl.u32 %v7199, 7
    %v7201 = vsub.s32 %v976, %v7200
    %v7202 = vrot.slane %v7061, %v7201
    %v7203 = vlaneseq
    %v7204 = vshrl.u32 %v7203, 7
    %v7205 = vsub.s32 %v981, %v7204
    %v7206 = vrot.slane %v7064, %v7205
    %v7207 = vsel %vm986, %v7206, %v7202
    %v7208 = vlaneseq
    %v7209 = vshrl.u32 %v7208, 7
    %v7210 = vsub.s32 %v976, %v7209
    %v7211 = vrot.slane %v7067, %v7210
    %v7212 = vlaneseq
    %v7213 = vshrl.u32 %v7212, 7
    %v7214 = vsub.s32 %v981, %v7213
    %v7215 = vrot.slane %v7070, %v7214
    %v7216 = vsel %vm986, %v7215, %v7211
    %v7217 = vlaneseq
    %v7218 = vshrl.u32 %v7217, 7
    %v7219 = vsub.s32 %v976, %v7218
    %v7220 = vrot.slane %v7073, %v7219
    %v7221 = vlaneseq
    %v7222 = vshrl.u32 %v7221, 7
    %v7223 = vsub.s32 %v981, %v7222
    %v7224 = vrot.slane %v7076, %v7223
    %v7225 = vsel %vm986, %v7224, %v7220
    %v7226 = vlaneseq
    %v7227 = vshrl.u32 %v7226, 7
    %v7228 = vsub.s32 %v976, %v7227
    %v7229 = vrot.slane %v7079, %v7228
    %v7230 = vlaneseq
    %v7231 = vshrl.u32 %v7230, 7
    %v7232 = vsub.s32 %v981, %v7231
    %v7233 = vrot.slane %v7082, %v7232
    %v7234 = vsel %vm986, %v7233, %v7229
    %v7235 = vlaneseq
    %v7236 = vshrl.u32 %v7235, 7
    %v7237 = vsub.s32 %v976, %v7236
    %v7238 = vrot.slane %v7085, %v7237
    %v7239 = vlaneseq
    %v7240 = vshrl.u32 %v7239, 7
    %v7241 = vsub.s32 %v981, %v7240
    %v7242 = vrot.slane %v7088, %v7241
    %v7243 = vsel %vm986, %v7242, %v7238
    %v7244 = vlaneseq
    %v7245 = vshrl.u32 %v7244, 7
    %v7246 = vsub.s32 %v976, %v7245
    %v7247 = vrot.slane %v7091, %v7246
    %v7248 = vlaneseq
    %v7249 = vshrl.u32 %v7248, 7
    %v7250 = vsub.s32 %v981, %v7249
    %v7251 = vrot.slane %v7094, %v7250
    %v7252 = vsel %vm986, %v7251, %v7247
    %v7253 = vlaneseq
    %v7254 = vshrl.u32 %v7253, 7
    %v7255 = vsub.s32 %v976, %v7254
    %v7256 = vrot.slane %v7097, %v7255
    %v7257 = vlaneseq
    %v7258 = vshrl.u32 %v7257, 7
    %v7259 = vsub.s32 %v981, %v7258
    %v7260 = vrot.slane %v7100, %v7259
    %v7261 = vsel %vm986, %v7260, %v7256
    %v7262 = vlaneseq
    %v7263 = vshrl.u32 %v7262, 7
    %v7264 = vsub.s32 %v976, %v7263
    %v7265 = vrot.slane %v7103, %v7264
    %v7266 = vlaneseq
    %v7267 = vshrl.u32 %v7266, 7
    %v7268 = vsub.s32 %v981, %v7267
    %v7269 = vrot.slane %v7106, %v7268
    %v7270 = vsel %vm986, %v7269, %v7265
    %v7271 = vlaneseq
    %v7272 = vshrl.u32 %v7271, 7
    %v7273 = vsub.s32 %v976, %v7272
    %v7274 = vrot.slane %v7109, %v7273
    %v7275 = vlaneseq
    %v7276 = vshrl.u32 %v7275, 7
    %v7277 = vsub.s32 %v981, %v7276
    %v7278 = vrot.slane %v7112, %v7277
    %v7279 = vsel %vm986, %v7278, %v7274
    %v7280 = vlaneseq
    %v7281 = vshrl.u32 %v7280, 7
    %v7282 = vsub.s32 %v976, %v7281
    %v7283 = vrot.slane %v7115, %v7282
    %v7284 = vlaneseq
    %v7285 = vshrl.u32 %v7284, 7
    %v7286 = vsub.s32 %v981, %v7285
    %v7287 = vrot.slane %v7118, %v7286
    %v7288 = vsel %vm986, %v7287, %v7283
    %v7289 = vlaneseq
    %v7290 = vshrl.u32 %v7289, 7
    %v7291 = vsub.s32 %v976, %v7290
    %v7292 = vrot.slane %v7121, %v7291
    %v7293 = vlaneseq
    %v7294 = vshrl.u32 %v7293, 7
    %v7295 = vsub.s32 %v981, %v7294
    %v7296 = vrot.slane %v7124, %v7295
    %v7297 = vsel %vm986, %v7296, %v7292
    %v7298 = vlaneseq
    %v7299 = vshrl.u32 %v7298, 7
    %v7300 = vsub.s32 %v976, %v7299
    %v7301 = vrot.slane %v7127, %v7300
    %v7302 = vlaneseq
    %v7303 = vshrl.u32 %v7302, 7
    %v7304 = vsub.s32 %v981, %v7303
    %v7305 = vrot.slane %v7130, %v7304
    %v7306 = vsel %vm986, %v7305, %v7301
    %v7307 = vsel %vm1123, %v7180, %v7171
    %v7308 = vsel %vm1125, %v7189, %v7307
    %v7309 = vsel %vm1127, %v7198, %v7308
    %v7310 = vsel %vm1129, %v7207, %v7309
    %v7311 = vsel %vm1131, %v7216, %v7310
    %v7312 = vsel %vm1133, %v7225, %v7311
    %v7313 = vsel %vm1135, %v7234, %v7312
    %v7314 = vsel %vm1123, %v7252, %v7243
    %v7315 = vsel %vm1125, %v7261, %v7314
    %v7316 = vsel %vm1127, %v7270, %v7315
    %v7317 = vsel %vm1129, %v7279, %v7316
    %v7318 = vsel %vm1131, %v7288, %v7317
    %v7319 = vsel %vm1133, %v7297, %v7318
    %v7320 = vsel %vm1135, %v7306, %v7319
    %v7323 = vsel %vm532, %v7313, -1e+30
    %v7324 = vsel %vm533, %v7320, -1e+30
    %v7325 = vsel %vm1148, %v7323, -inf
    %7326 = vmax.xlane.f32.xlu0 %v7325
    %v7327 = vpop.xlane.xlu0 %7326
    %v7328 = vsel %vm1148, %v7324, -inf
    %7329 = vmax.xlane.f32.xlu0 %v7328
    %v7330 = vpop.xlane.xlu0 %7329
    %v7331 = vsub.f32 %v7323, %v7327
    %v7332 = vsub.f32 %v7324, %v7330
    %v7333 = vmul.f32 %v7331, 1.442695
    %v7334 = vpow.pop %v7333
    %v7335 = vmul.f32 %v7332, 1.442695
    %v7336 = vpow.pop %v7335
    %v7337 = vsel %vm1148, %v7334, 0.0
    %7338 = vadd.xlane.f32.xlu0 %v7337
    %v7339 = vpop.xlane.xlu0 %7338
    %v7340 = vsel %vm1148, %v7336, 0.0
    %7341 = vadd.xlane.f32.xlu0 %v7340
    %v7342 = vpop.xlane.xlu0 %7341
    %v7343 = vrcp.pop %v7339
    %v7344 = vrcp.pop %v7342
    %v7345 = vmul.f32 %v7334, %v7343
    %v7346 = vmul.f32 %v7336, %v7344
    %v7347 = vlaneseq
    %v7348 = vshrl.u32 %v7347, 7
    %v7349 = vsub.s32 5, %v7348
    %v7350 = vrot.slane %v529, %v7349
    %7352 = vrot.lane.b32.xlu0 %v7350, 94
    %v7353 = vpop.permute.xlu0 %7352
    %v7355 = vmul.f32 %v778, %v7353
    %v7356 = vmul.f32 %v779, %v7353
    %v7357 = vmul.f32 %v780, %v7353
    %v7358 = vmul.f32 %v781, %v7353
    %v7359 = vmul.f32 %v782, %v7353
    %v7360 = vmul.f32 %v783, %v7353
    %v7361 = vmul.f32 %v784, %v7353
    %v7362 = vmul.f32 %v785, %v7353
    %v7363 = vmul.f32 %v786, %v7353
    %v7364 = vmul.f32 %v787, %v7353
    %v7365 = vmul.f32 %v788, %v7353
    %v7366 = vmul.f32 %v789, %v7353
    %v7367 = vmul.f32 %v790, %v7353
    %v7368 = vmul.f32 %v791, %v7353
    %v7369 = vmul.f32 %v792, %v7353
    %v7370 = vmul.f32 %v793, %v7353
    %v7371 = vmul.f32 %v794, %v7353
    %v7372 = vmul.f32 %v795, %v7353
    %v7373 = vmul.f32 %v796, %v7353
    %v7374 = vmul.f32 %v797, %v7353
    %v7375 = vmul.f32 %v798, %v7353
    %v7376 = vmul.f32 %v799, %v7353
    %v7377 = vmul.f32 %v800, %v7353
    %v7378 = vmul.f32 %v801, %v7353
    %v7379 = vmul.f32 %v802, %v7353
    %v7380 = vmul.f32 %v803, %v7353
    %v7381 = vmul.f32 %v804, %v7353
    %v7382 = vmul.f32 %v805, %v7353
    %v7383 = vmul.f32 %v806, %v7353
    %v7384 = vmul.f32 %v807, %v7353
    %v7385 = vmul.f32 %v808, %v7353
    %v7386 = vmul.f32 %v809, %v7353
    %7419 = vrot.lane.b32.xlu0 %v7355, 34
    %v7420 = vpop.permute.xlu0 %7419
    %7421 = vrot.lane.b32.xlu0 %v7356, 34
    %v7422 = vpop.permute.xlu0 %7421
    %7423 = vrot.lane.b32.xlu0 %v7357, 34
    %v7424 = vpop.permute.xlu0 %7423
    %7425 = vrot.lane.b32.xlu0 %v7358, 34
    %v7426 = vpop.permute.xlu0 %7425
    %7427 = vrot.lane.b32.xlu0 %v7359, 34
    %v7428 = vpop.permute.xlu0 %7427
    %7429 = vrot.lane.b32.xlu0 %v7360, 34
    %v7430 = vpop.permute.xlu0 %7429
    %7431 = vrot.lane.b32.xlu0 %v7361, 34
    %v7432 = vpop.permute.xlu0 %7431
    %7433 = vrot.lane.b32.xlu0 %v7362, 34
    %v7434 = vpop.permute.xlu0 %7433
    %7435 = vrot.lane.b32.xlu0 %v7363, 34
    %v7436 = vpop.permute.xlu0 %7435
    %7437 = vrot.lane.b32.xlu0 %v7364, 34
    %v7438 = vpop.permute.xlu0 %7437
    %7439 = vrot.lane.b32.xlu0 %v7365, 34
    %v7440 = vpop.permute.xlu0 %7439
    %7441 = vrot.lane.b32.xlu0 %v7366, 34
    %v7442 = vpop.permute.xlu0 %7441
    %7443 = vrot.lane.b32.xlu0 %v7367, 34
    %v7444 = vpop.permute.xlu0 %7443
    %7445 = vrot.lane.b32.xlu0 %v7368, 34
    %v7446 = vpop.permute.xlu0 %7445
    %7447 = vrot.lane.b32.xlu0 %v7369, 34
    %v7448 = vpop.permute.xlu0 %7447
    %7449 = vrot.lane.b32.xlu0 %v7370, 34
    %v7450 = vpop.permute.xlu0 %7449
    %7451 = vrot.lane.b32.xlu0 %v7371, 34
    %v7452 = vpop.permute.xlu0 %7451
    %7453 = vrot.lane.b32.xlu0 %v7372, 34
    %v7454 = vpop.permute.xlu0 %7453
    %7455 = vrot.lane.b32.xlu0 %v7373, 34
    %v7456 = vpop.permute.xlu0 %7455
    %7457 = vrot.lane.b32.xlu0 %v7374, 34
    %v7458 = vpop.permute.xlu0 %7457
    %7459 = vrot.lane.b32.xlu0 %v7375, 34
    %v7460 = vpop.permute.xlu0 %7459
    %7461 = vrot.lane.b32.xlu0 %v7376, 34
    %v7462 = vpop.permute.xlu0 %7461
    %7463 = vrot.lane.b32.xlu0 %v7377, 34
    %v7464 = vpop.permute.xlu0 %7463
    %7465 = vrot.lane.b32.xlu0 %v7378, 34
    %v7466 = vpop.permute.xlu0 %7465
    %7467 = vrot.lane.b32.xlu0 %v7379, 34
    %v7468 = vpop.permute.xlu0 %7467
    %7469 = vrot.lane.b32.xlu0 %v7380, 34
    %v7470 = vpop.permute.xlu0 %7469
    %7471 = vrot.lane.b32.xlu0 %v7381, 34
    %v7472 = vpop.permute.xlu0 %7471
    %7473 = vrot.lane.b32.xlu0 %v7382, 34
    %v7474 = vpop.permute.xlu0 %7473
    %7475 = vrot.lane.b32.xlu0 %v7383, 34
    %v7476 = vpop.permute.xlu0 %7475
    %7477 = vrot.lane.b32.xlu0 %v7384, 34
    %v7478 = vpop.permute.xlu0 %7477
    %7479 = vrot.lane.b32.xlu0 %v7385, 34
    %v7480 = vpop.permute.xlu0 %7479
    %7481 = vrot.lane.b32.xlu0 %v7386, 34
    %v7482 = vpop.permute.xlu0 %7481
    %v7515 = vsel %vm2912, %v7420, 0.0
    %7516 = vadd.xlane.f32.xlu0 %v7515
    %v7517 = vpop.xlane.xlu0 %7516
    %v7518 = vsel %vm2912, %v7422, 0.0
    %7519 = vadd.xlane.f32.xlu0 %v7518
    %v7520 = vpop.xlane.xlu0 %7519
    %v7521 = vsel %vm2912, %v7424, 0.0
    %7522 = vadd.xlane.f32.xlu0 %v7521
    %v7523 = vpop.xlane.xlu0 %7522
    %v7524 = vsel %vm2912, %v7426, 0.0
    %7525 = vadd.xlane.f32.xlu0 %v7524
    %v7526 = vpop.xlane.xlu0 %7525
    %v7527 = vsel %vm2912, %v7428, 0.0
    %7528 = vadd.xlane.f32.xlu0 %v7527
    %v7529 = vpop.xlane.xlu0 %7528
    %v7530 = vsel %vm2912, %v7430, 0.0
    %7531 = vadd.xlane.f32.xlu0 %v7530
    %v7532 = vpop.xlane.xlu0 %7531
    %v7533 = vsel %vm2912, %v7432, 0.0
    %7534 = vadd.xlane.f32.xlu0 %v7533
    %v7535 = vpop.xlane.xlu0 %7534
    %v7536 = vsel %vm2912, %v7434, 0.0
    %7537 = vadd.xlane.f32.xlu0 %v7536
    %v7538 = vpop.xlane.xlu0 %7537
    %v7539 = vsel %vm2912, %v7436, 0.0
    %7540 = vadd.xlane.f32.xlu0 %v7539
    %v7541 = vpop.xlane.xlu0 %7540
    %v7542 = vsel %vm2912, %v7438, 0.0
    %7543 = vadd.xlane.f32.xlu0 %v7542
    %v7544 = vpop.xlane.xlu0 %7543
    %v7545 = vsel %vm2912, %v7440, 0.0
    %7546 = vadd.xlane.f32.xlu0 %v7545
    %v7547 = vpop.xlane.xlu0 %7546
    %v7548 = vsel %vm2912, %v7442, 0.0
    %7549 = vadd.xlane.f32.xlu0 %v7548
    %v7550 = vpop.xlane.xlu0 %7549
    %v7551 = vsel %vm2912, %v7444, 0.0
    %7552 = vadd.xlane.f32.xlu0 %v7551
    %v7553 = vpop.xlane.xlu0 %7552
    %v7554 = vsel %vm2912, %v7446, 0.0
    %7555 = vadd.xlane.f32.xlu0 %v7554
    %v7556 = vpop.xlane.xlu0 %7555
    %v7557 = vsel %vm2912, %v7448, 0.0
    %7558 = vadd.xlane.f32.xlu0 %v7557
    %v7559 = vpop.xlane.xlu0 %7558
    %v7560 = vsel %vm2912, %v7450, 0.0
    %7561 = vadd.xlane.f32.xlu0 %v7560
    %v7562 = vpop.xlane.xlu0 %7561
    %v7563 = vsel %vm2912, %v7452, 0.0
    %7564 = vadd.xlane.f32.xlu0 %v7563
    %v7565 = vpop.xlane.xlu0 %7564
    %v7566 = vsel %vm2912, %v7454, 0.0
    %7567 = vadd.xlane.f32.xlu0 %v7566
    %v7568 = vpop.xlane.xlu0 %7567
    %v7569 = vsel %vm2912, %v7456, 0.0
    %7570 = vadd.xlane.f32.xlu0 %v7569
    %v7571 = vpop.xlane.xlu0 %7570
    %v7572 = vsel %vm2912, %v7458, 0.0
    %7573 = vadd.xlane.f32.xlu0 %v7572
    %v7574 = vpop.xlane.xlu0 %7573
    %v7575 = vsel %vm2912, %v7460, 0.0
    %7576 = vadd.xlane.f32.xlu0 %v7575
    %v7577 = vpop.xlane.xlu0 %7576
    %v7578 = vsel %vm2912, %v7462, 0.0
    %7579 = vadd.xlane.f32.xlu0 %v7578
    %v7580 = vpop.xlane.xlu0 %7579
    %v7581 = vsel %vm2912, %v7464, 0.0
    %7582 = vadd.xlane.f32.xlu0 %v7581
    %v7583 = vpop.xlane.xlu0 %7582
    %v7584 = vsel %vm2912, %v7466, 0.0
    %7585 = vadd.xlane.f32.xlu0 %v7584
    %v7586 = vpop.xlane.xlu0 %7585
    %v7587 = vsel %vm2912, %v7468, 0.0
    %7588 = vadd.xlane.f32.xlu0 %v7587
    %v7589 = vpop.xlane.xlu0 %7588
    %v7590 = vsel %vm2912, %v7470, 0.0
    %7591 = vadd.xlane.f32.xlu0 %v7590
    %v7592 = vpop.xlane.xlu0 %7591
    %v7593 = vsel %vm2912, %v7472, 0.0
    %7594 = vadd.xlane.f32.xlu0 %v7593
    %v7595 = vpop.xlane.xlu0 %7594
    %v7596 = vsel %vm2912, %v7474, 0.0
    %7597 = vadd.xlane.f32.xlu0 %v7596
    %v7598 = vpop.xlane.xlu0 %7597
    %v7599 = vsel %vm2912, %v7476, 0.0
    %7600 = vadd.xlane.f32.xlu0 %v7599
    %v7601 = vpop.xlane.xlu0 %7600
    %v7602 = vsel %vm2912, %v7478, 0.0
    %7603 = vadd.xlane.f32.xlu0 %v7602
    %v7604 = vpop.xlane.xlu0 %7603
    %v7605 = vsel %vm2912, %v7480, 0.0
    %7606 = vadd.xlane.f32.xlu0 %v7605
    %v7607 = vpop.xlane.xlu0 %7606
    %v7608 = vsel %vm2912, %v7482, 0.0
    %7609 = vadd.xlane.f32.xlu0 %v7608
    %v7610 = vpop.xlane.xlu0 %7609
    %v7643 = vlaneseq
    %v7644 = vshrl.u32 %v7643, 7
    %v7645 = vsub.s32 %v976, %v7644
    %v7646 = vrot.slane %v7517, %v7645
    %v7647 = vlaneseq
    %v7648 = vshrl.u32 %v7647, 7
    %v7649 = vsub.s32 %v981, %v7648
    %v7650 = vrot.slane %v7520, %v7649
    %v7651 = vsel %vm986, %v7650, %v7646
    %v7652 = vlaneseq
    %v7653 = vshrl.u32 %v7652, 7
    %v7654 = vsub.s32 %v976, %v7653
    %v7655 = vrot.slane %v7523, %v7654
    %v7656 = vlaneseq
    %v7657 = vshrl.u32 %v7656, 7
    %v7658 = vsub.s32 %v981, %v7657
    %v7659 = vrot.slane %v7526, %v7658
    %v7660 = vsel %vm986, %v7659, %v7655
    %v7661 = vlaneseq
    %v7662 = vshrl.u32 %v7661, 7
    %v7663 = vsub.s32 %v976, %v7662
    %v7664 = vrot.slane %v7529, %v7663
    %v7665 = vlaneseq
    %v7666 = vshrl.u32 %v7665, 7
    %v7667 = vsub.s32 %v981, %v7666
    %v7668 = vrot.slane %v7532, %v7667
    %v7669 = vsel %vm986, %v7668, %v7664
    %v7670 = vlaneseq
    %v7671 = vshrl.u32 %v7670, 7
    %v7672 = vsub.s32 %v976, %v7671
    %v7673 = vrot.slane %v7535, %v7672
    %v7674 = vlaneseq
    %v7675 = vshrl.u32 %v7674, 7
    %v7676 = vsub.s32 %v981, %v7675
    %v7677 = vrot.slane %v7538, %v7676
    %v7678 = vsel %vm986, %v7677, %v7673
    %v7679 = vlaneseq
    %v7680 = vshrl.u32 %v7679, 7
    %v7681 = vsub.s32 %v976, %v7680
    %v7682 = vrot.slane %v7541, %v7681
    %v7683 = vlaneseq
    %v7684 = vshrl.u32 %v7683, 7
    %v7685 = vsub.s32 %v981, %v7684
    %v7686 = vrot.slane %v7544, %v7685
    %v7687 = vsel %vm986, %v7686, %v7682
    %v7688 = vlaneseq
    %v7689 = vshrl.u32 %v7688, 7
    %v7690 = vsub.s32 %v976, %v7689
    %v7691 = vrot.slane %v7547, %v7690
    %v7692 = vlaneseq
    %v7693 = vshrl.u32 %v7692, 7
    %v7694 = vsub.s32 %v981, %v7693
    %v7695 = vrot.slane %v7550, %v7694
    %v7696 = vsel %vm986, %v7695, %v7691
    %v7697 = vlaneseq
    %v7698 = vshrl.u32 %v7697, 7
    %v7699 = vsub.s32 %v976, %v7698
    %v7700 = vrot.slane %v7553, %v7699
    %v7701 = vlaneseq
    %v7702 = vshrl.u32 %v7701, 7
    %v7703 = vsub.s32 %v981, %v7702
    %v7704 = vrot.slane %v7556, %v7703
    %v7705 = vsel %vm986, %v7704, %v7700
    %v7706 = vlaneseq
    %v7707 = vshrl.u32 %v7706, 7
    %v7708 = vsub.s32 %v976, %v7707
    %v7709 = vrot.slane %v7559, %v7708
    %v7710 = vlaneseq
    %v7711 = vshrl.u32 %v7710, 7
    %v7712 = vsub.s32 %v981, %v7711
    %v7713 = vrot.slane %v7562, %v7712
    %v7714 = vsel %vm986, %v7713, %v7709
    %v7715 = vlaneseq
    %v7716 = vshrl.u32 %v7715, 7
    %v7717 = vsub.s32 %v976, %v7716
    %v7718 = vrot.slane %v7565, %v7717
    %v7719 = vlaneseq
    %v7720 = vshrl.u32 %v7719, 7
    %v7721 = vsub.s32 %v981, %v7720
    %v7722 = vrot.slane %v7568, %v7721
    %v7723 = vsel %vm986, %v7722, %v7718
    %v7724 = vlaneseq
    %v7725 = vshrl.u32 %v7724, 7
    %v7726 = vsub.s32 %v976, %v7725
    %v7727 = vrot.slane %v7571, %v7726
    %v7728 = vlaneseq
    %v7729 = vshrl.u32 %v7728, 7
    %v7730 = vsub.s32 %v981, %v7729
    %v7731 = vrot.slane %v7574, %v7730
    %v7732 = vsel %vm986, %v7731, %v7727
    %v7733 = vlaneseq
    %v7734 = vshrl.u32 %v7733, 7
    %v7735 = vsub.s32 %v976, %v7734
    %v7736 = vrot.slane %v7577, %v7735
    %v7737 = vlaneseq
    %v7738 = vshrl.u32 %v7737, 7
    %v7739 = vsub.s32 %v981, %v7738
    %v7740 = vrot.slane %v7580, %v7739
    %v7741 = vsel %vm986, %v7740, %v7736
    %v7742 = vlaneseq
    %v7743 = vshrl.u32 %v7742, 7
    %v7744 = vsub.s32 %v976, %v7743
    %v7745 = vrot.slane %v7583, %v7744
    %v7746 = vlaneseq
    %v7747 = vshrl.u32 %v7746, 7
    %v7748 = vsub.s32 %v981, %v7747
    %v7749 = vrot.slane %v7586, %v7748
    %v7750 = vsel %vm986, %v7749, %v7745
    %v7751 = vlaneseq
    %v7752 = vshrl.u32 %v7751, 7
    %v7753 = vsub.s32 %v976, %v7752
    %v7754 = vrot.slane %v7589, %v7753
    %v7755 = vlaneseq
    %v7756 = vshrl.u32 %v7755, 7
    %v7757 = vsub.s32 %v981, %v7756
    %v7758 = vrot.slane %v7592, %v7757
    %v7759 = vsel %vm986, %v7758, %v7754
    %v7760 = vlaneseq
    %v7761 = vshrl.u32 %v7760, 7
    %v7762 = vsub.s32 %v976, %v7761
    %v7763 = vrot.slane %v7595, %v7762
    %v7764 = vlaneseq
    %v7765 = vshrl.u32 %v7764, 7
    %v7766 = vsub.s32 %v981, %v7765
    %v7767 = vrot.slane %v7598, %v7766
    %v7768 = vsel %vm986, %v7767, %v7763
    %v7769 = vlaneseq
    %v7770 = vshrl.u32 %v7769, 7
    %v7771 = vsub.s32 %v976, %v7770
    %v7772 = vrot.slane %v7601, %v7771
    %v7773 = vlaneseq
    %v7774 = vshrl.u32 %v7773, 7
    %v7775 = vsub.s32 %v981, %v7774
    %v7776 = vrot.slane %v7604, %v7775
    %v7777 = vsel %vm986, %v7776, %v7772
    %v7778 = vlaneseq
    %v7779 = vshrl.u32 %v7778, 7
    %v7780 = vsub.s32 %v976, %v7779
    %v7781 = vrot.slane %v7607, %v7780
    %v7782 = vlaneseq
    %v7783 = vshrl.u32 %v7782, 7
    %v7784 = vsub.s32 %v981, %v7783
    %v7785 = vrot.slane %v7610, %v7784
    %v7786 = vsel %vm986, %v7785, %v7781
    %v7787 = vsel %vm1123, %v7660, %v7651
    %v7788 = vsel %vm1125, %v7669, %v7787
    %v7789 = vsel %vm1127, %v7678, %v7788
    %v7790 = vsel %vm1129, %v7687, %v7789
    %v7791 = vsel %vm1131, %v7696, %v7790
    %v7792 = vsel %vm1133, %v7705, %v7791
    %v7793 = vsel %vm1135, %v7714, %v7792
    %v7794 = vsel %vm1123, %v7732, %v7723
    %v7795 = vsel %vm1125, %v7741, %v7794
    %v7796 = vsel %vm1127, %v7750, %v7795
    %v7797 = vsel %vm1129, %v7759, %v7796
    %v7798 = vsel %vm1131, %v7768, %v7797
    %v7799 = vsel %vm1133, %v7777, %v7798
    %v7800 = vsel %vm1135, %v7786, %v7799
    %v7803 = vsel %vm532, %v7793, -1e+30
    %v7804 = vsel %vm533, %v7800, -1e+30
    %v7805 = vsel %vm1148, %v7803, -inf
    %7806 = vmax.xlane.f32.xlu0 %v7805
    %v7807 = vpop.xlane.xlu0 %7806
    %v7808 = vsel %vm1148, %v7804, -inf
    %7809 = vmax.xlane.f32.xlu0 %v7808
    %v7810 = vpop.xlane.xlu0 %7809
    %v7811 = vsub.f32 %v7803, %v7807
    %v7812 = vsub.f32 %v7804, %v7810
    %v7813 = vmul.f32 %v7811, 1.442695
    %v7814 = vpow.pop %v7813
    %v7815 = vmul.f32 %v7812, 1.442695
    %v7816 = vpow.pop %v7815
    %v7817 = vsel %vm1148, %v7814, 0.0
    %7818 = vadd.xlane.f32.xlu0 %v7817
    %v7819 = vpop.xlane.xlu0 %7818
    %v7820 = vsel %vm1148, %v7816, 0.0
    %7821 = vadd.xlane.f32.xlu0 %v7820
    %v7822 = vpop.xlane.xlu0 %7821
    %v7823 = vrcp.pop %v7819
    %v7824 = vrcp.pop %v7822
    %v7825 = vmul.f32 %v7814, %v7823
    %v7826 = vmul.f32 %v7816, %v7824
    %v7827 = vlaneseq
    %v7828 = vshrl.u32 %v7827, 7
    %v7829 = vsub.s32 6, %v7828
    %v7830 = vrot.slane %v529, %v7829
    %7832 = vrot.lane.b32.xlu0 %v7830, 100
    %v7833 = vpop.permute.xlu0 %7832
    %v7835 = vmul.f32 %v778, %v7833
    %v7836 = vmul.f32 %v779, %v7833
    %v7837 = vmul.f32 %v780, %v7833
    %v7838 = vmul.f32 %v781, %v7833
    %v7839 = vmul.f32 %v782, %v7833
    %v7840 = vmul.f32 %v783, %v7833
    %v7841 = vmul.f32 %v784, %v7833
    %v7842 = vmul.f32 %v785, %v7833
    %v7843 = vmul.f32 %v786, %v7833
    %v7844 = vmul.f32 %v787, %v7833
    %v7845 = vmul.f32 %v788, %v7833
    %v7846 = vmul.f32 %v789, %v7833
    %v7847 = vmul.f32 %v790, %v7833
    %v7848 = vmul.f32 %v791, %v7833
    %v7849 = vmul.f32 %v792, %v7833
    %v7850 = vmul.f32 %v793, %v7833
    %v7851 = vmul.f32 %v794, %v7833
    %v7852 = vmul.f32 %v795, %v7833
    %v7853 = vmul.f32 %v796, %v7833
    %v7854 = vmul.f32 %v797, %v7833
    %v7855 = vmul.f32 %v798, %v7833
    %v7856 = vmul.f32 %v799, %v7833
    %v7857 = vmul.f32 %v800, %v7833
    %v7858 = vmul.f32 %v801, %v7833
    %v7859 = vmul.f32 %v802, %v7833
    %v7860 = vmul.f32 %v803, %v7833
    %v7861 = vmul.f32 %v804, %v7833
    %v7862 = vmul.f32 %v805, %v7833
    %v7863 = vmul.f32 %v806, %v7833
    %v7864 = vmul.f32 %v807, %v7833
    %v7865 = vmul.f32 %v808, %v7833
    %v7866 = vmul.f32 %v809, %v7833
    %7899 = vrot.lane.b32.xlu0 %v7835, 28
    %v7900 = vpop.permute.xlu0 %7899
    %7901 = vrot.lane.b32.xlu0 %v7836, 28
    %v7902 = vpop.permute.xlu0 %7901
    %7903 = vrot.lane.b32.xlu0 %v7837, 28
    %v7904 = vpop.permute.xlu0 %7903
    %7905 = vrot.lane.b32.xlu0 %v7838, 28
    %v7906 = vpop.permute.xlu0 %7905
    %7907 = vrot.lane.b32.xlu0 %v7839, 28
    %v7908 = vpop.permute.xlu0 %7907
    %7909 = vrot.lane.b32.xlu0 %v7840, 28
    %v7910 = vpop.permute.xlu0 %7909
    %7911 = vrot.lane.b32.xlu0 %v7841, 28
    %v7912 = vpop.permute.xlu0 %7911
    %7913 = vrot.lane.b32.xlu0 %v7842, 28
    %v7914 = vpop.permute.xlu0 %7913
    %7915 = vrot.lane.b32.xlu0 %v7843, 28
    %v7916 = vpop.permute.xlu0 %7915
    %7917 = vrot.lane.b32.xlu0 %v7844, 28
    %v7918 = vpop.permute.xlu0 %7917
    %7919 = vrot.lane.b32.xlu0 %v7845, 28
    %v7920 = vpop.permute.xlu0 %7919
    %7921 = vrot.lane.b32.xlu0 %v7846, 28
    %v7922 = vpop.permute.xlu0 %7921
    %7923 = vrot.lane.b32.xlu0 %v7847, 28
    %v7924 = vpop.permute.xlu0 %7923
    %7925 = vrot.lane.b32.xlu0 %v7848, 28
    %v7926 = vpop.permute.xlu0 %7925
    %7927 = vrot.lane.b32.xlu0 %v7849, 28
    %v7928 = vpop.permute.xlu0 %7927
    %7929 = vrot.lane.b32.xlu0 %v7850, 28
    %v7930 = vpop.permute.xlu0 %7929
    %7931 = vrot.lane.b32.xlu0 %v7851, 28
    %v7932 = vpop.permute.xlu0 %7931
    %7933 = vrot.lane.b32.xlu0 %v7852, 28
    %v7934 = vpop.permute.xlu0 %7933
    %7935 = vrot.lane.b32.xlu0 %v7853, 28
    %v7936 = vpop.permute.xlu0 %7935
    %7937 = vrot.lane.b32.xlu0 %v7854, 28
    %v7938 = vpop.permute.xlu0 %7937
    %7939 = vrot.lane.b32.xlu0 %v7855, 28
    %v7940 = vpop.permute.xlu0 %7939
    %7941 = vrot.lane.b32.xlu0 %v7856, 28
    %v7942 = vpop.permute.xlu0 %7941
    %7943 = vrot.lane.b32.xlu0 %v7857, 28
    %v7944 = vpop.permute.xlu0 %7943
    %7945 = vrot.lane.b32.xlu0 %v7858, 28
    %v7946 = vpop.permute.xlu0 %7945
    %7947 = vrot.lane.b32.xlu0 %v7859, 28
    %v7948 = vpop.permute.xlu0 %7947
    %7949 = vrot.lane.b32.xlu0 %v7860, 28
    %v7950 = vpop.permute.xlu0 %7949
    %7951 = vrot.lane.b32.xlu0 %v7861, 28
    %v7952 = vpop.permute.xlu0 %7951
    %7953 = vrot.lane.b32.xlu0 %v7862, 28
    %v7954 = vpop.permute.xlu0 %7953
    %7955 = vrot.lane.b32.xlu0 %v7863, 28
    %v7956 = vpop.permute.xlu0 %7955
    %7957 = vrot.lane.b32.xlu0 %v7864, 28
    %v7958 = vpop.permute.xlu0 %7957
    %7959 = vrot.lane.b32.xlu0 %v7865, 28
    %v7960 = vpop.permute.xlu0 %7959
    %7961 = vrot.lane.b32.xlu0 %v7866, 28
    %v7962 = vpop.permute.xlu0 %7961
    %v7995 = vsel %vm2912, %v7900, 0.0
    %7996 = vadd.xlane.f32.xlu0 %v7995
    %v7997 = vpop.xlane.xlu0 %7996
    %v7998 = vsel %vm2912, %v7902, 0.0
    %7999 = vadd.xlane.f32.xlu0 %v7998
    %v8000 = vpop.xlane.xlu0 %7999
    %v8001 = vsel %vm2912, %v7904, 0.0
    %8002 = vadd.xlane.f32.xlu0 %v8001
    %v8003 = vpop.xlane.xlu0 %8002
    %v8004 = vsel %vm2912, %v7906, 0.0
    %8005 = vadd.xlane.f32.xlu0 %v8004
    %v8006 = vpop.xlane.xlu0 %8005
    %v8007 = vsel %vm2912, %v7908, 0.0
    %8008 = vadd.xlane.f32.xlu0 %v8007
    %v8009 = vpop.xlane.xlu0 %8008
    %v8010 = vsel %vm2912, %v7910, 0.0
    %8011 = vadd.xlane.f32.xlu0 %v8010
    %v8012 = vpop.xlane.xlu0 %8011
    %v8013 = vsel %vm2912, %v7912, 0.0
    %8014 = vadd.xlane.f32.xlu0 %v8013
    %v8015 = vpop.xlane.xlu0 %8014
    %v8016 = vsel %vm2912, %v7914, 0.0
    %8017 = vadd.xlane.f32.xlu0 %v8016
    %v8018 = vpop.xlane.xlu0 %8017
    %v8019 = vsel %vm2912, %v7916, 0.0
    %8020 = vadd.xlane.f32.xlu0 %v8019
    %v8021 = vpop.xlane.xlu0 %8020
    %v8022 = vsel %vm2912, %v7918, 0.0
    %8023 = vadd.xlane.f32.xlu0 %v8022
    %v8024 = vpop.xlane.xlu0 %8023
    %v8025 = vsel %vm2912, %v7920, 0.0
    %8026 = vadd.xlane.f32.xlu0 %v8025
    %v8027 = vpop.xlane.xlu0 %8026
    %v8028 = vsel %vm2912, %v7922, 0.0
    %8029 = vadd.xlane.f32.xlu0 %v8028
    %v8030 = vpop.xlane.xlu0 %8029
    %v8031 = vsel %vm2912, %v7924, 0.0
    %8032 = vadd.xlane.f32.xlu0 %v8031
    %v8033 = vpop.xlane.xlu0 %8032
    %v8034 = vsel %vm2912, %v7926, 0.0
    %8035 = vadd.xlane.f32.xlu0 %v8034
    %v8036 = vpop.xlane.xlu0 %8035
    %v8037 = vsel %vm2912, %v7928, 0.0
    %8038 = vadd.xlane.f32.xlu0 %v8037
    %v8039 = vpop.xlane.xlu0 %8038
    %v8040 = vsel %vm2912, %v7930, 0.0
    %8041 = vadd.xlane.f32.xlu0 %v8040
    %v8042 = vpop.xlane.xlu0 %8041
    %v8043 = vsel %vm2912, %v7932, 0.0
    %8044 = vadd.xlane.f32.xlu0 %v8043
    %v8045 = vpop.xlane.xlu0 %8044
    %v8046 = vsel %vm2912, %v7934, 0.0
    %8047 = vadd.xlane.f32.xlu0 %v8046
    %v8048 = vpop.xlane.xlu0 %8047
    %v8049 = vsel %vm2912, %v7936, 0.0
    %8050 = vadd.xlane.f32.xlu0 %v8049
    %v8051 = vpop.xlane.xlu0 %8050
    %v8052 = vsel %vm2912, %v7938, 0.0
    %8053 = vadd.xlane.f32.xlu0 %v8052
    %v8054 = vpop.xlane.xlu0 %8053
    %v8055 = vsel %vm2912, %v7940, 0.0
    %8056 = vadd.xlane.f32.xlu0 %v8055
    %v8057 = vpop.xlane.xlu0 %8056
    %v8058 = vsel %vm2912, %v7942, 0.0
    %8059 = vadd.xlane.f32.xlu0 %v8058
    %v8060 = vpop.xlane.xlu0 %8059
    %v8061 = vsel %vm2912, %v7944, 0.0
    %8062 = vadd.xlane.f32.xlu0 %v8061
    %v8063 = vpop.xlane.xlu0 %8062
    %v8064 = vsel %vm2912, %v7946, 0.0
    %8065 = vadd.xlane.f32.xlu0 %v8064
    %v8066 = vpop.xlane.xlu0 %8065
    %v8067 = vsel %vm2912, %v7948, 0.0
    %8068 = vadd.xlane.f32.xlu0 %v8067
    %v8069 = vpop.xlane.xlu0 %8068
    %v8070 = vsel %vm2912, %v7950, 0.0
    %8071 = vadd.xlane.f32.xlu0 %v8070
    %v8072 = vpop.xlane.xlu0 %8071
    %v8073 = vsel %vm2912, %v7952, 0.0
    %8074 = vadd.xlane.f32.xlu0 %v8073
    %v8075 = vpop.xlane.xlu0 %8074
    %v8076 = vsel %vm2912, %v7954, 0.0
    %8077 = vadd.xlane.f32.xlu0 %v8076
    %v8078 = vpop.xlane.xlu0 %8077
    %v8079 = vsel %vm2912, %v7956, 0.0
    %8080 = vadd.xlane.f32.xlu0 %v8079
    %v8081 = vpop.xlane.xlu0 %8080
    %v8082 = vsel %vm2912, %v7958, 0.0
    %8083 = vadd.xlane.f32.xlu0 %v8082
    %v8084 = vpop.xlane.xlu0 %8083
    %v8085 = vsel %vm2912, %v7960, 0.0
    %8086 = vadd.xlane.f32.xlu0 %v8085
    %v8087 = vpop.xlane.xlu0 %8086
    %v8088 = vsel %vm2912, %v7962, 0.0
    %8089 = vadd.xlane.f32.xlu0 %v8088
    %v8090 = vpop.xlane.xlu0 %8089
    %v8123 = vlaneseq
    %v8124 = vshrl.u32 %v8123, 7
    %v8125 = vsub.s32 %v976, %v8124
    %v8126 = vrot.slane %v7997, %v8125
    %v8127 = vlaneseq
    %v8128 = vshrl.u32 %v8127, 7
    %v8129 = vsub.s32 %v981, %v8128
    %v8130 = vrot.slane %v8000, %v8129
    %v8131 = vsel %vm986, %v8130, %v8126
    %v8132 = vlaneseq
    %v8133 = vshrl.u32 %v8132, 7
    %v8134 = vsub.s32 %v976, %v8133
    %v8135 = vrot.slane %v8003, %v8134
    %v8136 = vlaneseq
    %v8137 = vshrl.u32 %v8136, 7
    %v8138 = vsub.s32 %v981, %v8137
    %v8139 = vrot.slane %v8006, %v8138
    %v8140 = vsel %vm986, %v8139, %v8135
    %v8141 = vlaneseq
    %v8142 = vshrl.u32 %v8141, 7
    %v8143 = vsub.s32 %v976, %v8142
    %v8144 = vrot.slane %v8009, %v8143
    %v8145 = vlaneseq
    %v8146 = vshrl.u32 %v8145, 7
    %v8147 = vsub.s32 %v981, %v8146
    %v8148 = vrot.slane %v8012, %v8147
    %v8149 = vsel %vm986, %v8148, %v8144
    %v8150 = vlaneseq
    %v8151 = vshrl.u32 %v8150, 7
    %v8152 = vsub.s32 %v976, %v8151
    %v8153 = vrot.slane %v8015, %v8152
    %v8154 = vlaneseq
    %v8155 = vshrl.u32 %v8154, 7
    %v8156 = vsub.s32 %v981, %v8155
    %v8157 = vrot.slane %v8018, %v8156
    %v8158 = vsel %vm986, %v8157, %v8153
    %v8159 = vlaneseq
    %v8160 = vshrl.u32 %v8159, 7
    %v8161 = vsub.s32 %v976, %v8160
    %v8162 = vrot.slane %v8021, %v8161
    %v8163 = vlaneseq
    %v8164 = vshrl.u32 %v8163, 7
    %v8165 = vsub.s32 %v981, %v8164
    %v8166 = vrot.slane %v8024, %v8165
    %v8167 = vsel %vm986, %v8166, %v8162
    %v8168 = vlaneseq
    %v8169 = vshrl.u32 %v8168, 7
    %v8170 = vsub.s32 %v976, %v8169
    %v8171 = vrot.slane %v8027, %v8170
    %v8172 = vlaneseq
    %v8173 = vshrl.u32 %v8172, 7
    %v8174 = vsub.s32 %v981, %v8173
    %v8175 = vrot.slane %v8030, %v8174
    %v8176 = vsel %vm986, %v8175, %v8171
    %v8177 = vlaneseq
    %v8178 = vshrl.u32 %v8177, 7
    %v8179 = vsub.s32 %v976, %v8178
    %v8180 = vrot.slane %v8033, %v8179
    %v8181 = vlaneseq
    %v8182 = vshrl.u32 %v8181, 7
    %v8183 = vsub.s32 %v981, %v8182
    %v8184 = vrot.slane %v8036, %v8183
    %v8185 = vsel %vm986, %v8184, %v8180
    %v8186 = vlaneseq
    %v8187 = vshrl.u32 %v8186, 7
    %v8188 = vsub.s32 %v976, %v8187
    %v8189 = vrot.slane %v8039, %v8188
    %v8190 = vlaneseq
    %v8191 = vshrl.u32 %v8190, 7
    %v8192 = vsub.s32 %v981, %v8191
    %v8193 = vrot.slane %v8042, %v8192
    %v8194 = vsel %vm986, %v8193, %v8189
    %v8195 = vlaneseq
    %v8196 = vshrl.u32 %v8195, 7
    %v8197 = vsub.s32 %v976, %v8196
    %v8198 = vrot.slane %v8045, %v8197
    %v8199 = vlaneseq
    %v8200 = vshrl.u32 %v8199, 7
    %v8201 = vsub.s32 %v981, %v8200
    %v8202 = vrot.slane %v8048, %v8201
    %v8203 = vsel %vm986, %v8202, %v8198
    %v8204 = vlaneseq
    %v8205 = vshrl.u32 %v8204, 7
    %v8206 = vsub.s32 %v976, %v8205
    %v8207 = vrot.slane %v8051, %v8206
    %v8208 = vlaneseq
    %v8209 = vshrl.u32 %v8208, 7
    %v8210 = vsub.s32 %v981, %v8209
    %v8211 = vrot.slane %v8054, %v8210
    %v8212 = vsel %vm986, %v8211, %v8207
    %v8213 = vlaneseq
    %v8214 = vshrl.u32 %v8213, 7
    %v8215 = vsub.s32 %v976, %v8214
    %v8216 = vrot.slane %v8057, %v8215
    %v8217 = vlaneseq
    %v8218 = vshrl.u32 %v8217, 7
    %v8219 = vsub.s32 %v981, %v8218
    %v8220 = vrot.slane %v8060, %v8219
    %v8221 = vsel %vm986, %v8220, %v8216
    %v8222 = vlaneseq
    %v8223 = vshrl.u32 %v8222, 7
    %v8224 = vsub.s32 %v976, %v8223
    %v8225 = vrot.slane %v8063, %v8224
    %v8226 = vlaneseq
    %v8227 = vshrl.u32 %v8226, 7
    %v8228 = vsub.s32 %v981, %v8227
    %v8229 = vrot.slane %v8066, %v8228
    %v8230 = vsel %vm986, %v8229, %v8225
    %v8231 = vlaneseq
    %v8232 = vshrl.u32 %v8231, 7
    %v8233 = vsub.s32 %v976, %v8232
    %v8234 = vrot.slane %v8069, %v8233
    %v8235 = vlaneseq
    %v8236 = vshrl.u32 %v8235, 7
    %v8237 = vsub.s32 %v981, %v8236
    %v8238 = vrot.slane %v8072, %v8237
    %v8239 = vsel %vm986, %v8238, %v8234
    %v8240 = vlaneseq
    %v8241 = vshrl.u32 %v8240, 7
    %v8242 = vsub.s32 %v976, %v8241
    %v8243 = vrot.slane %v8075, %v8242
    %v8244 = vlaneseq
    %v8245 = vshrl.u32 %v8244, 7
    %v8246 = vsub.s32 %v981, %v8245
    %v8247 = vrot.slane %v8078, %v8246
    %v8248 = vsel %vm986, %v8247, %v8243
    %v8249 = vlaneseq
    %v8250 = vshrl.u32 %v8249, 7
    %v8251 = vsub.s32 %v976, %v8250
    %v8252 = vrot.slane %v8081, %v8251
    %v8253 = vlaneseq
    %v8254 = vshrl.u32 %v8253, 7
    %v8255 = vsub.s32 %v981, %v8254
    %v8256 = vrot.slane %v8084, %v8255
    %v8257 = vsel %vm986, %v8256, %v8252
    %v8258 = vlaneseq
    %v8259 = vshrl.u32 %v8258, 7
    %v8260 = vsub.s32 %v976, %v8259
    %v8261 = vrot.slane %v8087, %v8260
    %v8262 = vlaneseq
    %v8263 = vshrl.u32 %v8262, 7
    %v8264 = vsub.s32 %v981, %v8263
    %v8265 = vrot.slane %v8090, %v8264
    %v8266 = vsel %vm986, %v8265, %v8261
    %v8267 = vsel %vm1123, %v8140, %v8131
    %v8268 = vsel %vm1125, %v8149, %v8267
    %v8269 = vsel %vm1127, %v8158, %v8268
    %v8270 = vsel %vm1129, %v8167, %v8269
    %v8271 = vsel %vm1131, %v8176, %v8270
    %v8272 = vsel %vm1133, %v8185, %v8271
    %v8273 = vsel %vm1135, %v8194, %v8272
    %v8274 = vsel %vm1123, %v8212, %v8203
    %v8275 = vsel %vm1125, %v8221, %v8274
    %v8276 = vsel %vm1127, %v8230, %v8275
    %v8277 = vsel %vm1129, %v8239, %v8276
    %v8278 = vsel %vm1131, %v8248, %v8277
    %v8279 = vsel %vm1133, %v8257, %v8278
    %v8280 = vsel %vm1135, %v8266, %v8279
    %v8283 = vsel %vm532, %v8273, -1e+30
    %v8284 = vsel %vm533, %v8280, -1e+30
    %v8285 = vsel %vm1148, %v8283, -inf
    %8286 = vmax.xlane.f32.xlu0 %v8285
    %v8287 = vpop.xlane.xlu0 %8286
    %v8288 = vsel %vm1148, %v8284, -inf
    %8289 = vmax.xlane.f32.xlu0 %v8288
    %v8290 = vpop.xlane.xlu0 %8289
    %v8291 = vsub.f32 %v8283, %v8287
    %v8292 = vsub.f32 %v8284, %v8290
    %v8293 = vmul.f32 %v8291, 1.442695
    %v8294 = vpow.pop %v8293
    %v8295 = vmul.f32 %v8292, 1.442695
    %v8296 = vpow.pop %v8295
    %v8297 = vsel %vm1148, %v8294, 0.0
    %8298 = vadd.xlane.f32.xlu0 %v8297
    %v8299 = vpop.xlane.xlu0 %8298
    %v8300 = vsel %vm1148, %v8296, 0.0
    %8301 = vadd.xlane.f32.xlu0 %v8300
    %v8302 = vpop.xlane.xlu0 %8301
    %v8303 = vrcp.pop %v8299
    %v8304 = vrcp.pop %v8302
    %v8305 = vmul.f32 %v8294, %v8303
    %v8306 = vmul.f32 %v8296, %v8304
    %v8307 = vlaneseq
    %v8308 = vshrl.u32 %v8307, 7
    %v8309 = vsub.s32 7, %v8308
    %v8310 = vrot.slane %v529, %v8309
    %8312 = vrot.lane.b32.xlu0 %v8310, 106
    %v8313 = vpop.permute.xlu0 %8312
    %v8315 = vmul.f32 %v778, %v8313
    %v8316 = vmul.f32 %v779, %v8313
    %v8317 = vmul.f32 %v780, %v8313
    %v8318 = vmul.f32 %v781, %v8313
    %v8319 = vmul.f32 %v782, %v8313
    %v8320 = vmul.f32 %v783, %v8313
    %v8321 = vmul.f32 %v784, %v8313
    %v8322 = vmul.f32 %v785, %v8313
    %v8323 = vmul.f32 %v786, %v8313
    %v8324 = vmul.f32 %v787, %v8313
    %v8325 = vmul.f32 %v788, %v8313
    %v8326 = vmul.f32 %v789, %v8313
    %v8327 = vmul.f32 %v790, %v8313
    %v8328 = vmul.f32 %v791, %v8313
    %v8329 = vmul.f32 %v792, %v8313
    %v8330 = vmul.f32 %v793, %v8313
    %v8331 = vmul.f32 %v794, %v8313
    %v8332 = vmul.f32 %v795, %v8313
    %v8333 = vmul.f32 %v796, %v8313
    %v8334 = vmul.f32 %v797, %v8313
    %v8335 = vmul.f32 %v798, %v8313
    %v8336 = vmul.f32 %v799, %v8313
    %v8337 = vmul.f32 %v800, %v8313
    %v8338 = vmul.f32 %v801, %v8313
    %v8339 = vmul.f32 %v802, %v8313
    %v8340 = vmul.f32 %v803, %v8313
    %v8341 = vmul.f32 %v804, %v8313
    %v8342 = vmul.f32 %v805, %v8313
    %v8343 = vmul.f32 %v806, %v8313
    %v8344 = vmul.f32 %v807, %v8313
    %v8345 = vmul.f32 %v808, %v8313
    %v8346 = vmul.f32 %v809, %v8313
    %8379 = vrot.lane.b32.xlu0 %v8315, 22
    %v8380 = vpop.permute.xlu0 %8379
    %8381 = vrot.lane.b32.xlu0 %v8316, 22
    %v8382 = vpop.permute.xlu0 %8381
    %8383 = vrot.lane.b32.xlu0 %v8317, 22
    %v8384 = vpop.permute.xlu0 %8383
    %8385 = vrot.lane.b32.xlu0 %v8318, 22
    %v8386 = vpop.permute.xlu0 %8385
    %8387 = vrot.lane.b32.xlu0 %v8319, 22
    %v8388 = vpop.permute.xlu0 %8387
    %8389 = vrot.lane.b32.xlu0 %v8320, 22
    %v8390 = vpop.permute.xlu0 %8389
    %8391 = vrot.lane.b32.xlu0 %v8321, 22
    %v8392 = vpop.permute.xlu0 %8391
    %8393 = vrot.lane.b32.xlu0 %v8322, 22
    %v8394 = vpop.permute.xlu0 %8393
    %8395 = vrot.lane.b32.xlu0 %v8323, 22
    %v8396 = vpop.permute.xlu0 %8395
    %8397 = vrot.lane.b32.xlu0 %v8324, 22
    %v8398 = vpop.permute.xlu0 %8397
    %8399 = vrot.lane.b32.xlu0 %v8325, 22
    %v8400 = vpop.permute.xlu0 %8399
    %8401 = vrot.lane.b32.xlu0 %v8326, 22
    %v8402 = vpop.permute.xlu0 %8401
    %8403 = vrot.lane.b32.xlu0 %v8327, 22
    %v8404 = vpop.permute.xlu0 %8403
    %8405 = vrot.lane.b32.xlu0 %v8328, 22
    %v8406 = vpop.permute.xlu0 %8405
    %8407 = vrot.lane.b32.xlu0 %v8329, 22
    %v8408 = vpop.permute.xlu0 %8407
    %8409 = vrot.lane.b32.xlu0 %v8330, 22
    %v8410 = vpop.permute.xlu0 %8409
    %8411 = vrot.lane.b32.xlu0 %v8331, 22
    %v8412 = vpop.permute.xlu0 %8411
    %8413 = vrot.lane.b32.xlu0 %v8332, 22
    %v8414 = vpop.permute.xlu0 %8413
    %8415 = vrot.lane.b32.xlu0 %v8333, 22
    %v8416 = vpop.permute.xlu0 %8415
    %8417 = vrot.lane.b32.xlu0 %v8334, 22
    %v8418 = vpop.permute.xlu0 %8417
    %8419 = vrot.lane.b32.xlu0 %v8335, 22
    %v8420 = vpop.permute.xlu0 %8419
    %8421 = vrot.lane.b32.xlu0 %v8336, 22
    %v8422 = vpop.permute.xlu0 %8421
    %8423 = vrot.lane.b32.xlu0 %v8337, 22
    %v8424 = vpop.permute.xlu0 %8423
    %8425 = vrot.lane.b32.xlu0 %v8338, 22
    %v8426 = vpop.permute.xlu0 %8425
    %8427 = vrot.lane.b32.xlu0 %v8339, 22
    %v8428 = vpop.permute.xlu0 %8427
    %8429 = vrot.lane.b32.xlu0 %v8340, 22
    %v8430 = vpop.permute.xlu0 %8429
    %8431 = vrot.lane.b32.xlu0 %v8341, 22
    %v8432 = vpop.permute.xlu0 %8431
    %8433 = vrot.lane.b32.xlu0 %v8342, 22
    %v8434 = vpop.permute.xlu0 %8433
    %8435 = vrot.lane.b32.xlu0 %v8343, 22
    %v8436 = vpop.permute.xlu0 %8435
    %8437 = vrot.lane.b32.xlu0 %v8344, 22
    %v8438 = vpop.permute.xlu0 %8437
    %8439 = vrot.lane.b32.xlu0 %v8345, 22
    %v8440 = vpop.permute.xlu0 %8439
    %8441 = vrot.lane.b32.xlu0 %v8346, 22
    %v8442 = vpop.permute.xlu0 %8441
    %v8475 = vsel %vm2912, %v8380, 0.0
    %8476 = vadd.xlane.f32.xlu0 %v8475
    %v8477 = vpop.xlane.xlu0 %8476
    %v8478 = vsel %vm2912, %v8382, 0.0
    %8479 = vadd.xlane.f32.xlu0 %v8478
    %v8480 = vpop.xlane.xlu0 %8479
    %v8481 = vsel %vm2912, %v8384, 0.0
    %8482 = vadd.xlane.f32.xlu0 %v8481
    %v8483 = vpop.xlane.xlu0 %8482
    %v8484 = vsel %vm2912, %v8386, 0.0
    %8485 = vadd.xlane.f32.xlu0 %v8484
    %v8486 = vpop.xlane.xlu0 %8485
    %v8487 = vsel %vm2912, %v8388, 0.0
    %8488 = vadd.xlane.f32.xlu0 %v8487
    %v8489 = vpop.xlane.xlu0 %8488
    %v8490 = vsel %vm2912, %v8390, 0.0
    %8491 = vadd.xlane.f32.xlu0 %v8490
    %v8492 = vpop.xlane.xlu0 %8491
    %v8493 = vsel %vm2912, %v8392, 0.0
    %8494 = vadd.xlane.f32.xlu0 %v8493
    %v8495 = vpop.xlane.xlu0 %8494
    %v8496 = vsel %vm2912, %v8394, 0.0
    %8497 = vadd.xlane.f32.xlu0 %v8496
    %v8498 = vpop.xlane.xlu0 %8497
    %v8499 = vsel %vm2912, %v8396, 0.0
    %8500 = vadd.xlane.f32.xlu0 %v8499
    %v8501 = vpop.xlane.xlu0 %8500
    %v8502 = vsel %vm2912, %v8398, 0.0
    %8503 = vadd.xlane.f32.xlu0 %v8502
    %v8504 = vpop.xlane.xlu0 %8503
    %v8505 = vsel %vm2912, %v8400, 0.0
    %8506 = vadd.xlane.f32.xlu0 %v8505
    %v8507 = vpop.xlane.xlu0 %8506
    %v8508 = vsel %vm2912, %v8402, 0.0
    %8509 = vadd.xlane.f32.xlu0 %v8508
    %v8510 = vpop.xlane.xlu0 %8509
    %v8511 = vsel %vm2912, %v8404, 0.0
    %8512 = vadd.xlane.f32.xlu0 %v8511
    %v8513 = vpop.xlane.xlu0 %8512
    %v8514 = vsel %vm2912, %v8406, 0.0
    %8515 = vadd.xlane.f32.xlu0 %v8514
    %v8516 = vpop.xlane.xlu0 %8515
    %v8517 = vsel %vm2912, %v8408, 0.0
    %8518 = vadd.xlane.f32.xlu0 %v8517
    %v8519 = vpop.xlane.xlu0 %8518
    %v8520 = vsel %vm2912, %v8410, 0.0
    %8521 = vadd.xlane.f32.xlu0 %v8520
    %v8522 = vpop.xlane.xlu0 %8521
    %v8523 = vsel %vm2912, %v8412, 0.0
    %8524 = vadd.xlane.f32.xlu0 %v8523
    %v8525 = vpop.xlane.xlu0 %8524
    %v8526 = vsel %vm2912, %v8414, 0.0
    %8527 = vadd.xlane.f32.xlu0 %v8526
    %v8528 = vpop.xlane.xlu0 %8527
    %v8529 = vsel %vm2912, %v8416, 0.0
    %8530 = vadd.xlane.f32.xlu0 %v8529
    %v8531 = vpop.xlane.xlu0 %8530
    %v8532 = vsel %vm2912, %v8418, 0.0
    %8533 = vadd.xlane.f32.xlu0 %v8532
    %v8534 = vpop.xlane.xlu0 %8533
    %v8535 = vsel %vm2912, %v8420, 0.0
    %8536 = vadd.xlane.f32.xlu0 %v8535
    %v8537 = vpop.xlane.xlu0 %8536
    %v8538 = vsel %vm2912, %v8422, 0.0
    %8539 = vadd.xlane.f32.xlu0 %v8538
    %v8540 = vpop.xlane.xlu0 %8539
    %v8541 = vsel %vm2912, %v8424, 0.0
    %8542 = vadd.xlane.f32.xlu0 %v8541
    %v8543 = vpop.xlane.xlu0 %8542
    %v8544 = vsel %vm2912, %v8426, 0.0
    %8545 = vadd.xlane.f32.xlu0 %v8544
    %v8546 = vpop.xlane.xlu0 %8545
    %v8547 = vsel %vm2912, %v8428, 0.0
    %8548 = vadd.xlane.f32.xlu0 %v8547
    %v8549 = vpop.xlane.xlu0 %8548
    %v8550 = vsel %vm2912, %v8430, 0.0
    %8551 = vadd.xlane.f32.xlu0 %v8550
    %v8552 = vpop.xlane.xlu0 %8551
    %v8553 = vsel %vm2912, %v8432, 0.0
    %8554 = vadd.xlane.f32.xlu0 %v8553
    %v8555 = vpop.xlane.xlu0 %8554
    %v8556 = vsel %vm2912, %v8434, 0.0
    %8557 = vadd.xlane.f32.xlu0 %v8556
    %v8558 = vpop.xlane.xlu0 %8557
    %v8559 = vsel %vm2912, %v8436, 0.0
    %8560 = vadd.xlane.f32.xlu0 %v8559
    %v8561 = vpop.xlane.xlu0 %8560
    %v8562 = vsel %vm2912, %v8438, 0.0
    %8563 = vadd.xlane.f32.xlu0 %v8562
    %v8564 = vpop.xlane.xlu0 %8563
    %v8565 = vsel %vm2912, %v8440, 0.0
    %8566 = vadd.xlane.f32.xlu0 %v8565
    %v8567 = vpop.xlane.xlu0 %8566
    %v8568 = vsel %vm2912, %v8442, 0.0
    %8569 = vadd.xlane.f32.xlu0 %v8568
    %v8570 = vpop.xlane.xlu0 %8569
    %v8603 = vlaneseq
    %v8604 = vshrl.u32 %v8603, 7
    %v8605 = vsub.s32 %v976, %v8604
    %v8606 = vrot.slane %v8477, %v8605
    %v8607 = vlaneseq
    %v8608 = vshrl.u32 %v8607, 7
    %v8609 = vsub.s32 %v981, %v8608
    %v8610 = vrot.slane %v8480, %v8609
    %v8611 = vsel %vm986, %v8610, %v8606
    %v8612 = vlaneseq
    %v8613 = vshrl.u32 %v8612, 7
    %v8614 = vsub.s32 %v976, %v8613
    %v8615 = vrot.slane %v8483, %v8614
    %v8616 = vlaneseq
    %v8617 = vshrl.u32 %v8616, 7
    %v8618 = vsub.s32 %v981, %v8617
    %v8619 = vrot.slane %v8486, %v8618
    %v8620 = vsel %vm986, %v8619, %v8615
    %v8621 = vlaneseq
    %v8622 = vshrl.u32 %v8621, 7
    %v8623 = vsub.s32 %v976, %v8622
    %v8624 = vrot.slane %v8489, %v8623
    %v8625 = vlaneseq
    %v8626 = vshrl.u32 %v8625, 7
    %v8627 = vsub.s32 %v981, %v8626
    %v8628 = vrot.slane %v8492, %v8627
    %v8629 = vsel %vm986, %v8628, %v8624
    %v8630 = vlaneseq
    %v8631 = vshrl.u32 %v8630, 7
    %v8632 = vsub.s32 %v976, %v8631
    %v8633 = vrot.slane %v8495, %v8632
    %v8634 = vlaneseq
    %v8635 = vshrl.u32 %v8634, 7
    %v8636 = vsub.s32 %v981, %v8635
    %v8637 = vrot.slane %v8498, %v8636
    %v8638 = vsel %vm986, %v8637, %v8633
    %v8639 = vlaneseq
    %v8640 = vshrl.u32 %v8639, 7
    %v8641 = vsub.s32 %v976, %v8640
    %v8642 = vrot.slane %v8501, %v8641
    %v8643 = vlaneseq
    %v8644 = vshrl.u32 %v8643, 7
    %v8645 = vsub.s32 %v981, %v8644
    %v8646 = vrot.slane %v8504, %v8645
    %v8647 = vsel %vm986, %v8646, %v8642
    %v8648 = vlaneseq
    %v8649 = vshrl.u32 %v8648, 7
    %v8650 = vsub.s32 %v976, %v8649
    %v8651 = vrot.slane %v8507, %v8650
    %v8652 = vlaneseq
    %v8653 = vshrl.u32 %v8652, 7
    %v8654 = vsub.s32 %v981, %v8653
    %v8655 = vrot.slane %v8510, %v8654
    %v8656 = vsel %vm986, %v8655, %v8651
    %v8657 = vlaneseq
    %v8658 = vshrl.u32 %v8657, 7
    %v8659 = vsub.s32 %v976, %v8658
    %v8660 = vrot.slane %v8513, %v8659
    %v8661 = vlaneseq
    %v8662 = vshrl.u32 %v8661, 7
    %v8663 = vsub.s32 %v981, %v8662
    %v8664 = vrot.slane %v8516, %v8663
    %v8665 = vsel %vm986, %v8664, %v8660
    %v8666 = vlaneseq
    %v8667 = vshrl.u32 %v8666, 7
    %v8668 = vsub.s32 %v976, %v8667
    %v8669 = vrot.slane %v8519, %v8668
    %v8670 = vlaneseq
    %v8671 = vshrl.u32 %v8670, 7
    %v8672 = vsub.s32 %v981, %v8671
    %v8673 = vrot.slane %v8522, %v8672
    %v8674 = vsel %vm986, %v8673, %v8669
    %v8675 = vlaneseq
    %v8676 = vshrl.u32 %v8675, 7
    %v8677 = vsub.s32 %v976, %v8676
    %v8678 = vrot.slane %v8525, %v8677
    %v8679 = vlaneseq
    %v8680 = vshrl.u32 %v8679, 7
    %v8681 = vsub.s32 %v981, %v8680
    %v8682 = vrot.slane %v8528, %v8681
    %v8683 = vsel %vm986, %v8682, %v8678
    %v8684 = vlaneseq
    %v8685 = vshrl.u32 %v8684, 7
    %v8686 = vsub.s32 %v976, %v8685
    %v8687 = vrot.slane %v8531, %v8686
    %v8688 = vlaneseq
    %v8689 = vshrl.u32 %v8688, 7
    %v8690 = vsub.s32 %v981, %v8689
    %v8691 = vrot.slane %v8534, %v8690
    %v8692 = vsel %vm986, %v8691, %v8687
    %v8693 = vlaneseq
    %v8694 = vshrl.u32 %v8693, 7
    %v8695 = vsub.s32 %v976, %v8694
    %v8696 = vrot.slane %v8537, %v8695
    %v8697 = vlaneseq
    %v8698 = vshrl.u32 %v8697, 7
    %v8699 = vsub.s32 %v981, %v8698
    %v8700 = vrot.slane %v8540, %v8699
    %v8701 = vsel %vm986, %v8700, %v8696
    %v8702 = vlaneseq
    %v8703 = vshrl.u32 %v8702, 7
    %v8704 = vsub.s32 %v976, %v8703
    %v8705 = vrot.slane %v8543, %v8704
    %v8706 = vlaneseq
    %v8707 = vshrl.u32 %v8706, 7
    %v8708 = vsub.s32 %v981, %v8707
    %v8709 = vrot.slane %v8546, %v8708
    %v8710 = vsel %vm986, %v8709, %v8705
    %v8711 = vlaneseq
    %v8712 = vshrl.u32 %v8711, 7
    %v8713 = vsub.s32 %v976, %v8712
    %v8714 = vrot.slane %v8549, %v8713
    %v8715 = vlaneseq
    %v8716 = vshrl.u32 %v8715, 7
    %v8717 = vsub.s32 %v981, %v8716
    %v8718 = vrot.slane %v8552, %v8717
    %v8719 = vsel %vm986, %v8718, %v8714
    %v8720 = vlaneseq
    %v8721 = vshrl.u32 %v8720, 7
    %v8722 = vsub.s32 %v976, %v8721
    %v8723 = vrot.slane %v8555, %v8722
    %v8724 = vlaneseq
    %v8725 = vshrl.u32 %v8724, 7
    %v8726 = vsub.s32 %v981, %v8725
    %v8727 = vrot.slane %v8558, %v8726
    %v8728 = vsel %vm986, %v8727, %v8723
    %v8729 = vlaneseq
    %v8730 = vshrl.u32 %v8729, 7
    %v8731 = vsub.s32 %v976, %v8730
    %v8732 = vrot.slane %v8561, %v8731
    %v8733 = vlaneseq
    %v8734 = vshrl.u32 %v8733, 7
    %v8735 = vsub.s32 %v981, %v8734
    %v8736 = vrot.slane %v8564, %v8735
    %v8737 = vsel %vm986, %v8736, %v8732
    %v8738 = vlaneseq
    %v8739 = vshrl.u32 %v8738, 7
    %v8740 = vsub.s32 %v976, %v8739
    %v8741 = vrot.slane %v8567, %v8740
    %v8742 = vlaneseq
    %v8743 = vshrl.u32 %v8742, 7
    %v8744 = vsub.s32 %v981, %v8743
    %v8745 = vrot.slane %v8570, %v8744
    %v8746 = vsel %vm986, %v8745, %v8741
    %v8747 = vsel %vm1123, %v8620, %v8611
    %v8748 = vsel %vm1125, %v8629, %v8747
    %v8749 = vsel %vm1127, %v8638, %v8748
    %v8750 = vsel %vm1129, %v8647, %v8749
    %v8751 = vsel %vm1131, %v8656, %v8750
    %v8752 = vsel %vm1133, %v8665, %v8751
    %v8753 = vsel %vm1135, %v8674, %v8752
    %v8754 = vsel %vm1123, %v8692, %v8683
    %v8755 = vsel %vm1125, %v8701, %v8754
    %v8756 = vsel %vm1127, %v8710, %v8755
    %v8757 = vsel %vm1129, %v8719, %v8756
    %v8758 = vsel %vm1131, %v8728, %v8757
    %v8759 = vsel %vm1133, %v8737, %v8758
    %v8760 = vsel %vm1135, %v8746, %v8759
    %v8763 = vsel %vm532, %v8753, -1e+30
    %v8764 = vsel %vm533, %v8760, -1e+30
    %v8765 = vsel %vm1148, %v8763, -inf
    %8766 = vmax.xlane.f32.xlu0 %v8765
    %v8767 = vpop.xlane.xlu0 %8766
    %v8768 = vsel %vm1148, %v8764, -inf
    %8769 = vmax.xlane.f32.xlu0 %v8768
    %v8770 = vpop.xlane.xlu0 %8769
    %v8771 = vsub.f32 %v8763, %v8767
    %v8772 = vsub.f32 %v8764, %v8770
    %v8773 = vmul.f32 %v8771, 1.442695
    %v8774 = vpow.pop %v8773
    %v8775 = vmul.f32 %v8772, 1.442695
    %v8776 = vpow.pop %v8775
    %v8777 = vsel %vm1148, %v8774, 0.0
    %8778 = vadd.xlane.f32.xlu0 %v8777
    %v8779 = vpop.xlane.xlu0 %8778
    %v8780 = vsel %vm1148, %v8776, 0.0
    %8781 = vadd.xlane.f32.xlu0 %v8780
    %v8782 = vpop.xlane.xlu0 %8781
    %v8783 = vrcp.pop %v8779
    %v8784 = vrcp.pop %v8782
    %v8785 = vmul.f32 %v8774, %v8783
    %v8786 = vmul.f32 %v8776, %v8784
    %8789 = vrot.lane.b32.xlu0 %v7825, 16
    %v8790 = vpop.permute.xlu0 %8789
    %8791 = vrot.lane.b32.xlu0 %v7826, 16
    %v8792 = vpop.permute.xlu0 %8791
    %8797 = vrot.lane.b32.xlu0 %v8305, 32
    %v8798 = vpop.permute.xlu0 %8797
    %8799 = vrot.lane.b32.xlu0 %v8306, 32
    %v8800 = vpop.permute.xlu0 %8799
    %8805 = vrot.lane.b32.xlu0 %v8785, 48
    %v8806 = vpop.permute.xlu0 %8805
    %8807 = vrot.lane.b32.xlu0 %v8786, 48
    %v8808 = vpop.permute.xlu0 %8807
    %v8811 = vsel %vm1148, %v7345, %v8790
    %v8812 = vsel %vm1148, %v7346, %v8792
    %v8813 = vsel %vm360, %v8811, %v8798
    %v8814 = vsel %vm360, %v8812, %v8800
    %v8815 = vsel %vm2639, %v8813, %v8806
    %v8816 = vsel %vm2639, %v8814, %v8808
    %8817 = vrot.lane.b32.xlu0 %v434, 40
    %v8818 = vpop.permute.xlu0 %8817
    %8819 = vrot.lane.b32.xlu0 %v439, 40
    %v8820 = vpop.permute.xlu0 %8819
    %8821 = vrot.lane.b32.xlu0 %v4696, 40
    %v8822 = vpop.permute.xlu0 %8821
    %8823 = vrot.lane.b32.xlu0 %v4698, 40
    %v8824 = vpop.permute.xlu0 %8823
    %8825 = vrot.lane.b32.xlu0 %v4700, 40
    %v8826 = vpop.permute.xlu0 %8825
    %8827 = vrot.lane.b32.xlu0 %v4702, 40
    %v8828 = vpop.permute.xlu0 %8827
    %8829 = vrot.lane.b32.xlu0 %v4704, 40
    %v8830 = vpop.permute.xlu0 %8829
    %8831 = vrot.lane.b32.xlu0 %v4706, 40
    %v8832 = vpop.permute.xlu0 %8831
    %v8842 = vsel %vm2662, %v8815, 0
    %v8845 = vsel %vm2662, %v8816, 0
    %8847 = vmatprep.subr.mxu0 0.0
    %8848 = vmatpush1.msra.mxu0 0.0
    %8849 = vmatprep.subr.mxu0 0.0
    %8850 = vmatpush1.msra.mxu0 0.0
    %8851 = vmatprep.subr.mxu0 0.0
    %8852 = vmatpush1.msra.mxu0 0.0
    %8853 = vmatprep.subr.mxu0 0.0
    %8854 = vmatpush1.msra.mxu0 0.0
    %8855 = vmatprep.subr.mxu0 0.0
    %8856 = vmatpush1.msra.mxu0 0.0
    %8857 = vmatprep.subr.mxu0 0.0
    %8858 = vmatpush1.msra.mxu0 0.0
    %8859 = vmatprep.subr.mxu0 0.0
    %8860 = vmatpush1.msra.mxu0 0.0
    %8861 = vmatprep.subr.mxu0 0.0
    %8862 = vmatpush1.msra.mxu0 0.0
    %8863 = vmatprep.subr.mxu0 0.0
    %8864 = vmatpush1.msra.mxu0 %v8832
    %8865 = vmatprep.subr.mxu0 0.0
    %8866 = vmatpush1.msra.mxu0 %v8830
    %8867 = vmatprep.subr.mxu0 0.0
    %8868 = vmatpush1.msra.mxu0 %v8828
    %8869 = vmatprep.subr.mxu0 0.0
    %8870 = vmatpush1.msra.mxu0 %v8826
    %8871 = vmatprep.subr.mxu0 0.0
    %8872 = vmatpush1.msra.mxu0 %v8824
    %8873 = vmatprep.subr.mxu0 0.0
    %8874 = vmatpush1.msra.mxu0 %v8822
    %8875 = vmatprep.subr.mxu0 0.0
    %8876 = vmatpush1.msra.mxu0 %v8820
    %8877 = vmatprep.subr.mxu0 0.0
    %8878 = vmatpush1.msra.mxu0 %v8818
    %8879 = vmatprep.subr.mxu0 0.0
    %8880 = vmatpush2.msra.mxu0 0.0
    %8881 = vmatprep.subr.mxu0 0.0
    %8882 = vmatpush2.msra.mxu0 0.0
    %8883 = vmatprep.subr.mxu0 0.0
    %8884 = vmatpush2.msra.mxu0 0.0
    %8885 = vmatprep.subr.mxu0 0.0
    %8886 = vmatpush2.msra.mxu0 0.0
    %8887 = vmatprep.subr.mxu0 0.0
    %8888 = vmatpush2.msra.mxu0 0.0
    %8889 = vmatprep.subr.mxu0 0.0
    %8890 = vmatpush2.msra.mxu0 0.0
    %8891 = vmatprep.subr.mxu0 0.0
    %8892 = vmatpush2.msra.mxu0 0.0
    %8893 = vmatprep.subr.mxu0 0.0
    %8894 = vmatpush2.msra.mxu0 0.0
    %8895 = vmatprep.subr.mxu0 0.0
    %8896 = vmatpush2.msra.mxu0 0.0
    %8897 = vmatprep.subr.mxu0 0.0
    %8898 = vmatpush2.msra.mxu0 0.0
    %8899 = vmatprep.subr.mxu0 0.0
    %8900 = vmatpush2.msra.mxu0 0.0
    %8901 = vmatprep.subr.mxu0 0.0
    %8902 = vmatpush2.msra.mxu0 0.0
    %8903 = vmatprep.subr.mxu0 0.0
    %8904 = vmatpush2.msra.mxu0 0.0
    %8905 = vmatprep.subr.mxu0 0.0
    %8906 = vmatpush2.msra.mxu0 0.0
    %8907 = vmatprep.subr.mxu0 0.0
    %8908 = vmatpush2.msra.mxu0 0.0
    %8909 = vmatprep.subr.mxu0 0.0
    %8910 = vmatpush2.msra.mxu0 0.0
    %8911 = vmatprep.mubr.f32.mxu0 0.0
    %8912 = vmatmul.mubr.f32.gmra.mxu0 %v8842
    %v8913 = vpop.f32.mrf.mxu0
    %v8914 = vadd.f32 0.0, %v8913
    %v8915 = vpop.f32.mrf.mxu0
    %8916 = vmatprep.mubr.f32.mxu0 0.0
    %8917 = vmatmul.mubr.f32.gmra.mxu0 %v8845
    %v8918 = vpop.f32.mrf.mxu0
    %v8919 = vadd.f32 0.0, %v8918
    %v8920 = vpop.f32.mrf.mxu0
    %8921 = vdwg.mxu0
    %8924 = vrot.lane.b32.xlu0 %v4804, 8
    %v8925 = vpop.permute.xlu0 %8924
    %8926 = vrot.lane.b32.xlu0 %v4809, 8
    %v8927 = vpop.permute.xlu0 %8926
    %8932 = vrot.lane.b32.xlu0 %v6859, 14
    %v8933 = vpop.permute.xlu0 %8932
    %8934 = vrot.lane.b32.xlu0 %v6864, 14
    %v8935 = vpop.permute.xlu0 %8934
    %8940 = vrot.lane.b32.xlu0 %v8914, 22
    %v8941 = vpop.permute.xlu0 %8940
    %8942 = vrot.lane.b32.xlu0 %v8919, 22
    %v8943 = vpop.permute.xlu0 %8942
    %v8946 = vsel %vm846, %v2736, %v8925
    %v8947 = vsel %vm846, %v2741, %v8927
    %vm8948 = vcmask 113664
    %v8949 = vsel %vm8948, %v8946, %v8933
    %v8950 = vsel %vm8948, %v8947, %v8935
    %vm8951 = vcmask 179200
    %v8952 = vsel %vm8951, %v8949, %v8941
    %v8953 = vsel %vm8951, %v8950, %v8943
    %vm8954 = vcmask 228352
    %v8955 = vsel %vm8954, %v8952, 0.0
    %v8956 = vsel %vm8954, %v8953, 0.0
    %v8957 = vmul.f32 %v8955, 0.25
    %v8958 = vmul.f32 %v8956, 0.25
    %v8959 = vld [vmem:[%s11] sm:$0x1]
    %v8961 = vlaneseq
    %v8962 = vshrl.u32 %v8961, 7
    %v8963 = vsub.s32 0, %v8962
    %v8964 = vrot.slane %v8959, %v8963
    %v8966 = vadd.f32 %v8957, %v8964
    %v8967 = vadd.f32 %v8958, %v8964
    %8968 = vst [vmem:[#allocation17] sm:$0xff] %v8966
    %8969 = vst [vmem:[#allocation17 + $0x8] sm:$0xff] %v8967
    // Predicated region
    $region86: #{tpu_custom_call.1} parent=1 // pred_check
      _
    $region87: #{tpu_custom_call.1} parent=1 // pred_check_branch
      %8971 = sbr.rel (0) target = $region89
    $region88: #{tpu_custom_call.1} parent=1 // pred_region
      %s8973 = ssub.s32 256, 256
      %8974 = vsyncadd [#allocation4], %s8973
      %s8975 = sshll.u32 [#allocation17], 4
      %s8976 = int_to_ptr.vmem [resolvable:$true] %s8975
      %8981 = dma.vmem_to_hbm [thread:$0]  %s8976, 256, %s12, [#allocation4], 128, 128, 8
    $region89: #{tpu_custom_call.1} parent=1 // pred_fallthru
      _
    // Predicated region
    $region90: #{tpu_custom_call.1} parent=1 // pred_check
      _
    $region91: #{tpu_custom_call.1} parent=1 // pred_check_branch
      %8983 = sbr.rel (0) target = $region93
    $region92: #{tpu_custom_call.1} parent=1 // pred_region
      %8984 = dma.done [#allocation4], 256
    $region93: #{tpu_custom_call.1} parent=1 // pred_fallthru
      _
    %8985 = vsyncpa [#allocation3], 1
    %8986 = vsyncpa [#allocation6], 1
    %8987 = vsyncpa [#allocation9], 1
    %8988 = vsyncpa [#allocation12], 1
    %8989 = vsyncpa [#allocation15], 1
    %8990 = vsyncpa [#allocation4], 1

</llo_original>
